<compile_context>
chip_gen: v5e
topology: v5e:2x2
jax: 0.10.0
libtpu: 0.0.40
codegen_flags: <defaults>
</compile_context>

<pallas_src>
import functools

import jax
import jax.numpy as jnp
from jax import lax
from jax.experimental import pallas as pl
from jax.experimental.pallas import tpu as pltpu

# ---- module config (globals referenced by the PyTorch code) -----------------
VERSION = 0              # cross-attention + ReLU path
DROPOUT_V = 0.1          # eval mode -> identity
EMO_SIZE = 768           # emo_model_name == 'emotion2vec'
SV_SIZE = 192            # sv_model_name  == 'ecapa-tdnn'
HEAD_DIM = SV_SIZE // 4  # 48: MultiheadAttention embed_dim, num_heads=1
N_TOK = 4                # tokens per row after the .view(B, 4, 48)
OUT_SIZE = 256


def _round_up(x, m):
    return ((x + m - 1) // m) * m


# -----------------------------------------------------------------------------
# Fused kernel (one grid step == `tile` rows of BOTH sides)
# -----------------------------------------------------------------------------
def fused_kernel(emo1_ref, sv1_ref, emo2_ref, sv2_ref,
                 wp_ref, bp_ref, wq_ref, bq_ref, wkv_ref, bkv_ref, bo_ref,
                 w0_ref, b0_ref, w1_ref, b1_ref, w2_ref, b2_ref,
                 o1_ref, o2_ref,
                 svn_buf, emop_buf, q_buf, kv_buf, embd_buf):
    f32 = jnp.float32
    bf16 = jnp.bfloat16
    D = HEAD_DIM
    T = N_TOK
    scale = 1.0 / (float(D) ** 0.5)

    def one_side(emo_ref, sv_ref, o_ref):
        emo = emo_ref[...]                       # (tile, 768) f32
        sv = sv_ref[...]                         # (tile, 192) f32

        # F.normalize(p=2, dim=1): x * rsqrt(max(||x||^2, eps^2))   (EUP)
        emo_n = emo * lax.rsqrt(
            jnp.maximum(jnp.sum(emo * emo, axis=-1, keepdims=True), 1e-24))
        svn_buf[...] = sv * lax.rsqrt(
            jnp.maximum(jnp.sum(sv * sv, axis=-1, keepdims=True), 1e-24))

        # emo_projection 768 -> 192 (bf16 weights, f32 accumulate, MXU)
        emop_buf[...] = jnp.dot(emo_n.astype(bf16), wp_ref[...],
                                preferred_element_type=f32) + bp_ref[...]

        # Token-wise Q / K / (V @ out_proj) via block-diagonal packed weights,
        # applied straight to the lane-contiguous (tile,192) activations.
        q_buf[...] = jnp.dot(svn_buf[...].astype(bf16), wq_ref[...],
                             preferred_element_type=f32) + bq_ref[...]
        kv_buf[...] = jnp.dot(emop_buf[...].astype(bf16), wkv_ref[...],
                              preferred_element_type=f32) + bkv_ref[...]

        bo = bo_ref[...]                         # (1, 48)

        # 4x4 per-row attention on VPU/XLU/EUP; K/V slices re-loaded per use
        # from VMEM scratch to keep register pressure low.
        for i in range(T):
            qi = q_buf[:, i * D:(i + 1) * D]     # (tile, 48)
            s = [jnp.sum(qi * kv_buf[:, j * D:(j + 1) * D],
                         axis=-1, keepdims=True) * scale
                 for j in range(T)]              # 4 x (tile, 1)
            m = jnp.maximum(jnp.maximum(s[0], s[1]), jnp.maximum(s[2], s[3]))
            p = [jnp.exp(sj - m) for sj in s]
            inv = pl.reciprocal(p[0] + p[1] + p[2] + p[3], approx=True)  # EUP
            ctx = (p[0] * inv) * kv_buf[:, SV_SIZE:SV_SIZE + D]
            for j in range(1, T):
                ctx = ctx + (p[j] * inv) * kv_buf[:, SV_SIZE + j * D:
                                                  SV_SIZE + (j + 1) * D]
            # out_proj weight already folded into V; only its bias remains.
            embd_buf[:, i * D:(i + 1) * D] = ctx + bo

        # flow_network MLP 192 -> 1024 -> 512 -> 256 (ReLU, dropout = id)
        h = jnp.dot(embd_buf[...].astype(bf16), w0_ref[...],
                    preferred_element_type=f32) + b0_ref[...]
        h = jnp.maximum(h, 0.0)
        h = jnp.dot(h.astype(bf16), w1_ref[...],
                    preferred_element_type=f32) + b1_ref[...]
        h = jnp.maximum(h, 0.0)
        o_ref[...] = jnp.dot(h.astype(bf16), w2_ref[...],
                             preferred_element_type=f32) + b2_ref[...]

    one_side(emo1_ref, sv1_ref, o1_ref)
    one_side(emo2_ref, sv2_ref, o2_ref)


# -----------------------------------------------------------------------------
# pallas_call wrapper: row-tiled grid, resident weights, sublane-padded rows
# -----------------------------------------------------------------------------
def run_fused(p, emo1, sv1, emo2, sv2, row_tile=256):
    # row_tile: 256 fills the v6e/v7x MXU M-dim; 128 is plenty on v5e.
    B = emo1.shape[0]
    tile = min(row_tile, _round_up(B, 8))
    Bp = _round_up(B, tile)

    def pad(x):
        return x if Bp == B else jnp.pad(x, ((0, Bp - B), (0, 0)))

    emo1p, sv1p, emo2p, sv2p = pad(emo1), pad(sv1), pad(emo2), pad(sv2)

    def row_spec(width):
        return pl.BlockSpec((tile, width), lambda i: (i, 0))

    def w_spec(arr):
        # full-array block, constant index -> weights stay resident in VMEM
        return pl.BlockSpec(arr.shape, lambda i: (0,) * arr.ndim)

    weights = (p['wp'], p['bp'], p['wq'], p['bq'], p['wkv'], p['bkv'],
               p['bo'], p['w0'], p['b0'], p['w1'], p['b1'], p['w2'], p['b2'])

    in_specs = ([row_spec(EMO_SIZE), row_spec(SV_SIZE),
                 row_spec(EMO_SIZE), row_spec(SV_SIZE)]
                + [w_spec(w) for w in weights])
    out_specs = (pl.BlockSpec((tile, OUT_SIZE), lambda i: (i, 0)),
                 pl.BlockSpec((tile, OUT_SIZE), lambda i: (i, 0)))

    flops_per_row = 2 * (EMO_SIZE * SV_SIZE            # emo_projection
                         + SV_SIZE * SV_SIZE           # Q (block-diag)
                         + SV_SIZE * 2 * SV_SIZE       # K | V@Wo (block-diag)
                         + N_TOK * N_TOK * 2 * HEAD_DIM  # scores + ctx
                         + SV_SIZE * 1024 + 1024 * 512 + 512 * 256)  # MLP
    weight_bytes = sum(int(w.size) * w.dtype.itemsize for w in weights)
    cost = pl.CostEstimate(
        flops=2 * Bp * flops_per_row,
        transcendentals=2 * Bp * (2 + N_TOK * N_TOK + N_TOK),
        bytes_accessed=2 * Bp * (EMO_SIZE + SV_SIZE + OUT_SIZE) * 4
                       + weight_bytes)

    out1, out2 = pl.pallas_call(
        fused_kernel,
        out_shape=(jax.ShapeDtypeStruct((Bp, OUT_SIZE), jnp.float32),
                   jax.ShapeDtypeStruct((Bp, OUT_SIZE), jnp.float32)),
        grid=(Bp // tile,),
        in_specs=in_specs,
        out_specs=out_specs,
        scratch_shapes=[
            pltpu.VMEM((tile, SV_SIZE), jnp.float32),       # svn_buf
            pltpu.VMEM((tile, SV_SIZE), jnp.float32),       # emop_buf
            pltpu.VMEM((tile, SV_SIZE), jnp.float32),       # q_buf
            pltpu.VMEM((tile, 2 * SV_SIZE), jnp.float32),   # kv_buf (K | V@Wo)
            pltpu.VMEM((tile, SV_SIZE), jnp.float32),       # embd_buf
        ],
        compiler_params=pltpu.CompilerParams(
            dimension_semantics=("parallel",),
            vmem_limit_bytes=32 * 1024 * 1024),
        cost_estimate=cost,
    )(emo1p, sv1p, emo2p, sv2p, *weights)

    # Padded rows are sliced away before returning (never observable).
    return out1[:B], out2[:B]


# -----------------------------------------------------------------------------
# Parameter init (PyTorch Linear convention) + one-time kernel packing
# -----------------------------------------------------------------------------
def init_raw_params(key):
    ks = jax.random.split(key, 8)

    def lin(k, out_f, in_f):
        bound = 1.0 / (in_f ** 0.5)
        kw, kb = jax.random.split(k)
        w = jax.random.uniform(kw, (out_f, in_f), jnp.float32, -bound, bound)
        b = jax.random.uniform(kb, (out_f,), jnp.float32, -bound, bound)
        return w, b

    raw = {}
    raw['wp'], raw['bp'] = lin(ks[0], SV_SIZE, EMO_SIZE)    # emo_projection
    raw['wq'], raw['bq'] = lin(ks[1], HEAD_DIM, HEAD_DIM)   # attention q/k/v
    raw['wk'], raw['bk'] = lin(ks[2], HEAD_DIM, HEAD_DIM)
    raw['wv'], raw['bv'] = lin(ks[3], HEAD_DIM, HEAD_DIM)
    raw['wo'], raw['bo'] = lin(ks[4], HEAD_DIM, HEAD_DIM)   # attention out_proj
    raw['w0'], raw['b0'] = lin(ks[5], 1024, SV_SIZE)        # flow_network
    raw['w1'], raw['b1'] = lin(ks[6], 512, 1024)
    raw['w2'], raw['b2'] = lin(ks[7], 256, 512)
    return raw


def pack_params(raw):
    """Kernel-ready layout, built ONCE: transposed to (in,out), token-wise
    projections packed block-diagonally, out_proj folded into V, big matmul
    weights cast to bf16 (f32 accumulation at use sites)."""
    bf16 = jnp.bfloat16

    def bd4(w):  # (48,48) in (in,out) layout -> (192,192) block-diagonal
        z = jnp.zeros_like(w)
        rows = [jnp.concatenate([w if j == t else z for j in range(N_TOK)],
                                axis=1) for t in range(N_TOK)]
        return jnp.concatenate(rows, axis=0)

    wq_io = raw['wq'].T
    wk_io = raw['wk'].T
    wvo_io = raw['wv'].T @ raw['wo'].T        # fold out_proj into V
    bvo = raw['bv'] @ raw['wo'].T

    return {
        'wp': raw['wp'].T.astype(bf16),
        'bp': raw['bp'][None, :],
        'wq': bd4(wq_io).astype(bf16),                                 # (192,192)
        'bq': jnp.tile(raw['bq'], N_TOK)[None, :],                     # (1,192)
        'wkv': jnp.concatenate([bd4(wk_io), bd4(wvo_io)],
                               axis=1).astype(bf16),                   # (192,384)
        'bkv': jnp.concatenate([jnp.tile(raw['bk'], N_TOK),
                                jnp.tile(bvo, N_TOK)])[None, :],       # (1,384)
        'bo': raw['bo'][None, :],                                      # (1,48)
        'w0': raw['w0'].T.astype(bf16), 'b0': raw['b0'][None, :],
        'w1': raw['w1'].T.astype(bf16), 'b1': raw['b1'][None, :],
        'w2': raw['w2'].T.astype(bf16), 'b2': raw['b2'][None, :],
    }


# -----------------------------------------------------------------------------
# Full forward (eval mode); no wrapper-side concatenation
# -----------------------------------------------------------------------------
@jax.jit
def emo_speech_auth_forward(p, emo_embd1, sv_embd1, emo_embd2, sv_embd2):
    return run_fused(p, emo_embd1, sv_embd1, emo_embd2, sv_embd2)


# -----------------------------------------------------------------------------
# Pure-JAX reference (original PyTorch math, exact softmax, bf16 weights)
# -----------------------------------------------------------------------------
def reference_forward(raw, emo1, sv1, emo2, sv2):
    f32 = jnp.float32

    def q(w):  # match the kernel's bf16 weight storage
        return w.astype(jnp.bfloat16).astype(f32)

    def norm(x):
        return x * lax.rsqrt(
            jnp.maximum(jnp.sum(x * x, axis=-1, keepdims=True), 1e-24))

    def one_side(emo, sv):
        B = emo.shape[0]
        emo_n, sv_n = norm(emo), norm(sv)
        emo_p = emo_n @ q(raw['wp']).T + raw['bp']
        qt = sv_n.reshape(B, N_TOK, HEAD_DIM)
        kv = emo_p.reshape(B, N_TOK, HEAD_DIM)
        Q = qt @ q(raw['wq']).T + raw['bq']
        K = kv @ q(raw['wk']).T + raw['bk']
        V = kv @ q(raw['wv']).T + raw['bv']
        s = jnp.einsum('bqe,bke->bqk', Q, K) / jnp.sqrt(jnp.float32(HEAD_DIM))
        a = jax.nn.softmax(s, axis=-1)
        ctx = jnp.einsum('bqk,bke->bqe', a, V) @ q(raw['wo']).T + raw['bo']
        x = ctx.reshape(B, SV_SIZE)
        h = jax.nn.relu(x @ q(raw['w0']).T + raw['b0'])
        h = jax.nn.relu(h @ q(raw['w1']).T + raw['b1'])
        return h @ q(raw['w2']).T + raw['b2']

    return one_side(emo1, sv1), one_side(emo2, sv2)


if __name__ == "__main__":
    key = jax.random.PRNGKey(0)
    k_in, k_par = jax.random.split(key)
    k1, k2, k3, k4 = jax.random.split(k_in, 4)

    B = 2
    emo_embd1 = jax.random.normal(k1, (B, EMO_SIZE), jnp.float32)
    sv_embd1 = jax.random.normal(k2, (B, SV_SIZE), jnp.float32)
    emo_embd2 = jax.random.normal(k3, (B, EMO_SIZE), jnp.float32)
    sv_embd2 = jax.random.normal(k4, (B, SV_SIZE), jnp.float32)

    raw = init_raw_params(k_par)
    params = pack_params(raw)

    x1, x2 = emo_speech_auth_forward(params, emo_embd1, sv_embd1,
                                     emo_embd2, sv_embd2)
    jax.block_until_ready((x1, x2))
    assert x1.shape == (B, OUT_SIZE) and x2.shape == (B, OUT_SIZE)

    # Correctness vs. original (unfolded, exact-softmax) math with matching
    # bf16 weight quantization; kernel adds bf16-activation casts, folded
    # V@out_proj rounding and an approx softmax reciprocal.
    r1, r2 = reference_forward(raw, emo_embd1, sv_embd1, emo_embd2, sv_embd2)
    err = max(float(jnp.max(jnp.abs(x1 - r1))), float(jnp.max(jnp.abs(x2 - r2))))
    assert jnp.allclose(x1, r1, atol=2e-2, rtol=1e-1), err
    assert jnp.allclose(x2, r2, atol=2e-2, rtol=1e-1), err

    print("KERNEL_OK")
</pallas_src>

<mosaic_0001>
module attributes {stable_mosaic.version = 11 : i64} {
  func.func @fused_kernel(%arg0: i32, %arg1: memref<8x768xf32, #tpu.memory_space<vmem>>, %arg2: memref<8x192xf32, #tpu.memory_space<vmem>>, %arg3: memref<8x768xf32, #tpu.memory_space<vmem>>, %arg4: memref<8x192xf32, #tpu.memory_space<vmem>>, %arg5: memref<768x192xbf16, #tpu.memory_space<vmem>>, %arg6: memref<1x192xf32, #tpu.memory_space<vmem>>, %arg7: memref<192x192xbf16, #tpu.memory_space<vmem>>, %arg8: memref<1x192xf32, #tpu.memory_space<vmem>>, %arg9: memref<192x384xbf16, #tpu.memory_space<vmem>>, %arg10: memref<1x384xf32, #tpu.memory_space<vmem>>, %arg11: memref<1x48xf32, #tpu.memory_space<vmem>>, %arg12: memref<192x1024xbf16, #tpu.memory_space<vmem>>, %arg13: memref<1x1024xf32, #tpu.memory_space<vmem>>, %arg14: memref<1024x512xbf16, #tpu.memory_space<vmem>>, %arg15: memref<1x512xf32, #tpu.memory_space<vmem>>, %arg16: memref<512x256xbf16, #tpu.memory_space<vmem>>, %arg17: memref<1x256xf32, #tpu.memory_space<vmem>>, %arg18: memref<8x256xf32, #tpu.memory_space<vmem>>, %arg19: memref<8x256xf32, #tpu.memory_space<vmem>>, %arg20: memref<8x192xf32, #tpu.memory_space<vmem>>, %arg21: memref<8x192xf32, #tpu.memory_space<vmem>>, %arg22: memref<8x192xf32, #tpu.memory_space<vmem>>, %arg23: memref<8x384xf32, #tpu.memory_space<vmem>>, %arg24: memref<8x192xf32, #tpu.memory_space<vmem>>) attributes {dimension_semantics = [#tpu.dimension_semantics<parallel>], iteration_bounds = array<i64: 1>, scalar_prefetch = 0 : i64, scratch_operands = 5 : i64, tpu.core_type = #tpu.core_type<tc>, window_params = [{transform_indices = @transform_0, window_bounds = array<i64: 8, 768>}, {transform_indices = @transform_1, window_bounds = array<i64: 8, 192>}, {transform_indices = @transform_2, window_bounds = array<i64: 8, 768>}, {transform_indices = @transform_3, window_bounds = array<i64: 8, 192>}, {pipeline_mode = #tpu.pipeline_mode<synchronous>, transform_indices = @transform_4, window_bounds = array<i64: 768, 192>}, {pipeline_mode = #tpu.pipeline_mode<synchronous>, transform_indices = @transform_5, window_bounds = array<i64: 1, 192>}, {pipeline_mode = #tpu.pipeline_mode<synchronous>, transform_indices = @transform_6, window_bounds = array<i64: 192, 192>}, {pipeline_mode = #tpu.pipeline_mode<synchronous>, transform_indices = @transform_7, window_bounds = array<i64: 1, 192>}, {pipeline_mode = #tpu.pipeline_mode<synchronous>, transform_indices = @transform_8, window_bounds = array<i64: 192, 384>}, {pipeline_mode = #tpu.pipeline_mode<synchronous>, transform_indices = @transform_9, window_bounds = array<i64: 1, 384>}, {pipeline_mode = #tpu.pipeline_mode<synchronous>, transform_indices = @transform_10, window_bounds = array<i64: 1, 48>}, {pipeline_mode = #tpu.pipeline_mode<synchronous>, transform_indices = @transform_11, window_bounds = array<i64: 192, 1024>}, {pipeline_mode = #tpu.pipeline_mode<synchronous>, transform_indices = @transform_12, window_bounds = array<i64: 1, 1024>}, {pipeline_mode = #tpu.pipeline_mode<synchronous>, transform_indices = @transform_13, window_bounds = array<i64: 1024, 512>}, {pipeline_mode = #tpu.pipeline_mode<synchronous>, transform_indices = @transform_14, window_bounds = array<i64: 1, 512>}, {pipeline_mode = #tpu.pipeline_mode<synchronous>, transform_indices = @transform_15, window_bounds = array<i64: 512, 256>}, {pipeline_mode = #tpu.pipeline_mode<synchronous>, transform_indices = @transform_16, window_bounds = array<i64: 1, 256>}, {transform_indices = @transform_17, window_bounds = array<i64: 8, 256>}, {transform_indices = @transform_18, window_bounds = array<i64: 8, 256>}]} {
    %c0 = arith.constant 0 : index
    %c0_0 = arith.constant 0 : index
    %0 = vector.load %arg1[%c0, %c0_0] : memref<8x768xf32, #tpu.memory_space<vmem>>, vector<8x768xf32>
    %c0_1 = arith.constant 0 : index
    %c0_2 = arith.constant 0 : index
    %1 = vector.load %arg2[%c0_1, %c0_2] : memref<8x192xf32, #tpu.memory_space<vmem>>, vector<8x192xf32>
    %2 = arith.mulf %0, %0 : vector<8x768xf32>
    %cst = arith.constant dense<0.000000e+00> : vector<8xf32>
    %3 = vector.multi_reduction <add>, %2, %cst [1] : vector<8x768xf32> to vector<8xf32>
    %4 = vector.shape_cast %3 : vector<8xf32> to vector<8x1xf32>
    %cst_3 = arith.constant 1.000000e-24 : f32
    %5 = vector.broadcast %cst_3 : f32 to vector<8x1xf32>
    %6 = arith.maximumf %4, %5 : vector<8x1xf32>
    %7 = math.rsqrt %6 : vector<8x1xf32>
    %8 = vector.broadcast %7 : vector<8x1xf32> to vector<8x768xf32>
    %9 = arith.mulf %0, %8 : vector<8x768xf32>
    %10 = arith.mulf %1, %1 : vector<8x192xf32>
    %cst_4 = arith.constant dense<0.000000e+00> : vector<8xf32>
    %11 = vector.multi_reduction <add>, %10, %cst_4 [1] : vector<8x192xf32> to vector<8xf32>
    %12 = vector.shape_cast %11 : vector<8xf32> to vector<8x1xf32>
    %cst_5 = arith.constant 1.000000e-24 : f32
    %13 = vector.broadcast %cst_5 : f32 to vector<8x1xf32>
    %14 = arith.maximumf %12, %13 : vector<8x1xf32>
    %15 = math.rsqrt %14 : vector<8x1xf32>
    %16 = vector.broadcast %15 : vector<8x1xf32> to vector<8x192xf32>
    %17 = arith.mulf %1, %16 : vector<8x192xf32>
    %c0_6 = arith.constant 0 : index
    %c0_7 = arith.constant 0 : index
    %18 = vector.load %arg20[%c0_6, %c0_7] : memref<8x192xf32, #tpu.memory_space<vmem>>, vector<8x192xf32>
    tpu.vector_store %arg20[%c0_6, %c0_7], %17 {strides = array<i32>} : memref<8x192xf32, #tpu.memory_space<vmem>>, vector<8x192xf32>,
    %19 = arith.truncf %9 : vector<8x768xf32> to vector<8x768xbf16>
    %c0_8 = arith.constant 0 : index
    %c0_9 = arith.constant 0 : index
    %20 = vector.load %arg5[%c0_8, %c0_9] : memref<768x192xbf16, #tpu.memory_space<vmem>>, vector<768x192xbf16>
    %cst_10 = arith.constant dense<0.000000e+00> : vector<8x192xf32>
    %21 = tpu.matmul %19, %20, %cst_10 {dimension_numbers = #tpu.dot_dimension_numbers<[1], [0], [0], [1], [0, 0, 1, 1], [], []>} : vector<8x768xbf16>, vector<768x192xbf16>, vector<8x192xf32> -> vector<8x192xf32>
    %c0_11 = arith.constant 0 : index
    %c0_12 = arith.constant 0 : index
    %22 = vector.load %arg6[%c0_11, %c0_12] : memref<1x192xf32, #tpu.memory_space<vmem>>, vector<1x192xf32>
    %23 = vector.broadcast %22 : vector<1x192xf32> to vector<8x192xf32>
    %24 = arith.addf %21, %23 : vector<8x192xf32>
    %c0_13 = arith.constant 0 : index
    %c0_14 = arith.constant 0 : index
    %25 = vector.load %arg21[%c0_13, %c0_14] : memref<8x192xf32, #tpu.memory_space<vmem>>, vector<8x192xf32>
    tpu.vector_store %arg21[%c0_13, %c0_14], %24 {strides = array<i32>} : memref<8x192xf32, #tpu.memory_space<vmem>>, vector<8x192xf32>,
    %c0_15 = arith.constant 0 : index
    %c0_16 = arith.constant 0 : index
    %26 = vector.load %arg20[%c0_15, %c0_16] : memref<8x192xf32, #tpu.memory_space<vmem>>, vector<8x192xf32>
    %27 = arith.truncf %26 : vector<8x192xf32> to vector<8x192xbf16>
    %c0_17 = arith.constant 0 : index
    %c0_18 = arith.constant 0 : index
    %28 = vector.load %arg7[%c0_17, %c0_18] : memref<192x192xbf16, #tpu.memory_space<vmem>>, vector<192x192xbf16>
    %cst_19 = arith.constant dense<0.000000e+00> : vector<8x192xf32>
    %29 = tpu.matmul %27, %28, %cst_19 {dimension_numbers = #tpu.dot_dimension_numbers<[1], [0], [0], [1], [0, 0, 1, 1], [], []>} : vector<8x192xbf16>, vector<192x192xbf16>, vector<8x192xf32> -> vector<8x192xf32>
    %c0_20 = arith.constant 0 : index
    %c0_21 = arith.constant 0 : index
    %30 = vector.load %arg8[%c0_20, %c0_21] : memref<1x192xf32, #tpu.memory_space<vmem>>, vector<1x192xf32>
    %31 = vector.broadcast %30 : vector<1x192xf32> to vector<8x192xf32>
    %32 = arith.addf %29, %31 : vector<8x192xf32>
    %c0_22 = arith.constant 0 : index
    %c0_23 = arith.constant 0 : index
    %33 = vector.load %arg22[%c0_22, %c0_23] : memref<8x192xf32, #tpu.memory_space<vmem>>, vector<8x192xf32>
    tpu.vector_store %arg22[%c0_22, %c0_23], %32 {strides = array<i32>} : memref<8x192xf32, #tpu.memory_space<vmem>>, vector<8x192xf32>,
    %c0_24 = arith.constant 0 : index
    %c0_25 = arith.constant 0 : index
    %34 = vector.load %arg21[%c0_24, %c0_25] : memref<8x192xf32, #tpu.memory_space<vmem>>, vector<8x192xf32>
    %35 = arith.truncf %34 : vector<8x192xf32> to vector<8x192xbf16>
    %c0_26 = arith.constant 0 : index
    %c0_27 = arith.constant 0 : index
    %36 = vector.load %arg9[%c0_26, %c0_27] : memref<192x384xbf16, #tpu.memory_space<vmem>>, vector<192x384xbf16>
    %cst_28 = arith.constant dense<0.000000e+00> : vector<8x384xf32>
    %37 = tpu.matmul %35, %36, %cst_28 {dimension_numbers = #tpu.dot_dimension_numbers<[1], [0], [0], [1], [0, 0, 1, 1], [], []>} : vector<8x192xbf16>, vector<192x384xbf16>, vector<8x384xf32> -> vector<8x384xf32>
    %c0_29 = arith.constant 0 : index
    %c0_30 = arith.constant 0 : index
    %38 = vector.load %arg10[%c0_29, %c0_30] : memref<1x384xf32, #tpu.memory_space<vmem>>, vector<1x384xf32>
    %39 = vector.broadcast %38 : vector<1x384xf32> to vector<8x384xf32>
    %40 = arith.addf %37, %39 : vector<8x384xf32>
    %c0_31 = arith.constant 0 : index
    %c0_32 = arith.constant 0 : index
    %41 = vector.load %arg23[%c0_31, %c0_32] : memref<8x384xf32, #tpu.memory_space<vmem>>, vector<8x384xf32>
    tpu.vector_store %arg23[%c0_31, %c0_32], %40 {strides = array<i32>} : memref<8x384xf32, #tpu.memory_space<vmem>>, vector<8x384xf32>,
    %c0_33 = arith.constant 0 : index
    %c0_34 = arith.constant 0 : index
    %42 = vector.load %arg11[%c0_33, %c0_34] : memref<1x48xf32, #tpu.memory_space<vmem>>, vector<1x48xf32>
    %c0_35 = arith.constant 0 : index
    %c0_36 = arith.constant 0 : index
    %43 = vector.load %arg22[%c0_35, %c0_36] : memref<8x192xf32, #tpu.memory_space<vmem>>, vector<8x48xf32>
    %c0_37 = arith.constant 0 : index
    %c0_38 = arith.constant 0 : index
    %44 = vector.load %arg23[%c0_37, %c0_38] : memref<8x384xf32, #tpu.memory_space<vmem>>, vector<8x48xf32>
    %45 = arith.mulf %43, %44 : vector<8x48xf32>
    %cst_39 = arith.constant dense<0.000000e+00> : vector<8xf32>
    %46 = vector.multi_reduction <add>, %45, %cst_39 [1] : vector<8x48xf32> to vector<8xf32>
    %47 = vector.shape_cast %46 : vector<8xf32> to vector<8x1xf32>
    %cst_40 = arith.constant 0.144337565 : f32
    %48 = vector.broadcast %cst_40 : f32 to vector<8x1xf32>
    %49 = arith.mulf %47, %48 : vector<8x1xf32>
    %c0_41 = arith.constant 0 : index
    %c48 = arith.constant 48 : index
    %50 = vector.load %arg23[%c0_41, %c48] : memref<8x384xf32, #tpu.memory_space<vmem>>, vector<8x48xf32>
    %51 = arith.mulf %43, %50 : vector<8x48xf32>
    %cst_42 = arith.constant dense<0.000000e+00> : vector<8xf32>
    %52 = vector.multi_reduction <add>, %51, %cst_42 [1] : vector<8x48xf32> to vector<8xf32>
    %53 = vector.shape_cast %52 : vector<8xf32> to vector<8x1xf32>
    %cst_43 = arith.constant 0.144337565 : f32
    %54 = vector.broadcast %cst_43 : f32 to vector<8x1xf32>
    %55 = arith.mulf %53, %54 : vector<8x1xf32>
    %c0_44 = arith.constant 0 : index
    %c96 = arith.constant 96 : index
    %56 = vector.load %arg23[%c0_44, %c96] : memref<8x384xf32, #tpu.memory_space<vmem>>, vector<8x48xf32>
    %57 = arith.mulf %43, %56 : vector<8x48xf32>
    %cst_45 = arith.constant dense<0.000000e+00> : vector<8xf32>
    %58 = vector.multi_reduction <add>, %57, %cst_45 [1] : vector<8x48xf32> to vector<8xf32>
    %59 = vector.shape_cast %58 : vector<8xf32> to vector<8x1xf32>
    %cst_46 = arith.constant 0.144337565 : f32
    %60 = vector.broadcast %cst_46 : f32 to vector<8x1xf32>
    %61 = arith.mulf %59, %60 : vector<8x1xf32>
    %c0_47 = arith.constant 0 : index
    %c144 = arith.constant 144 : index
    %62 = vector.load %arg23[%c0_47, %c144] : memref<8x384xf32, #tpu.memory_space<vmem>>, vector<8x48xf32>
    %63 = arith.mulf %43, %62 : vector<8x48xf32>
    %cst_48 = arith.constant dense<0.000000e+00> : vector<8xf32>
    %64 = vector.multi_reduction <add>, %63, %cst_48 [1] : vector<8x48xf32> to vector<8xf32>
    %65 = vector.shape_cast %64 : vector<8xf32> to vector<8x1xf32>
    %cst_49 = arith.constant 0.144337565 : f32
    %66 = vector.broadcast %cst_49 : f32 to vector<8x1xf32>
    %67 = arith.mulf %65, %66 : vector<8x1xf32>
    %68 = arith.maximumf %49, %55 : vector<8x1xf32>
    %69 = arith.maximumf %61, %67 : vector<8x1xf32>
    %70 = arith.maximumf %68, %69 : vector<8x1xf32>
    %71 = arith.subf %49, %70 : vector<8x1xf32>
    %72 = math.exp %71 : vector<8x1xf32>
    %73 = arith.subf %55, %70 : vector<8x1xf32>
    %74 = math.exp %73 : vector<8x1xf32>
    %75 = arith.subf %61, %70 : vector<8x1xf32>
    %76 = math.exp %75 : vector<8x1xf32>
    %77 = arith.subf %67, %70 : vector<8x1xf32>
    %78 = math.exp %77 : vector<8x1xf32>
    %79 = arith.addf %72, %74 : vector<8x1xf32>
    %80 = arith.addf %79, %76 : vector<8x1xf32>
    %81 = arith.addf %80, %78 : vector<8x1xf32>
    %82 = tpu.reciprocal %81 {approx = true} : vector<8x1xf32> -> vector<8x1xf32>
    %83 = arith.mulf %72, %82 : vector<8x1xf32>
    %c0_50 = arith.constant 0 : index
    %c192 = arith.constant 192 : index
    %84 = vector.load %arg23[%c0_50, %c192] : memref<8x384xf32, #tpu.memory_space<vmem>>, vector<8x48xf32>
    %85 = vector.broadcast %83 : vector<8x1xf32> to vector<8x48xf32>
    %86 = arith.mulf %85, %84 : vector<8x48xf32>
    %87 = arith.mulf %74, %82 : vector<8x1xf32>
    %c0_51 = arith.constant 0 : index
    %c240 = arith.constant 240 : index
    %88 = vector.load %arg23[%c0_51, %c240] : memref<8x384xf32, #tpu.memory_space<vmem>>, vector<8x48xf32>
    %89 = vector.broadcast %87 : vector<8x1xf32> to vector<8x48xf32>
    %90 = arith.mulf %89, %88 : vector<8x48xf32>
    %91 = arith.addf %86, %90 : vector<8x48xf32>
    %92 = arith.mulf %76, %82 : vector<8x1xf32>
    %c0_52 = arith.constant 0 : index
    %c288 = arith.constant 288 : index
    %93 = vector.load %arg23[%c0_52, %c288] : memref<8x384xf32, #tpu.memory_space<vmem>>, vector<8x48xf32>
    %94 = vector.broadcast %92 : vector<8x1xf32> to vector<8x48xf32>
    %95 = arith.mulf %94, %93 : vector<8x48xf32>
    %96 = arith.addf %91, %95 : vector<8x48xf32>
    %97 = arith.mulf %78, %82 : vector<8x1xf32>
    %c0_53 = arith.constant 0 : index
    %c336 = arith.constant 336 : index
    %98 = vector.load %arg23[%c0_53, %c336] : memref<8x384xf32, #tpu.memory_space<vmem>>, vector<8x48xf32>
    %99 = vector.broadcast %97 : vector<8x1xf32> to vector<8x48xf32>
    %100 = arith.mulf %99, %98 : vector<8x48xf32>
    %101 = arith.addf %96, %100 : vector<8x48xf32>
    %102 = vector.broadcast %42 : vector<1x48xf32> to vector<8x48xf32>
    %103 = arith.addf %101, %102 : vector<8x48xf32>
    %c0_54 = arith.constant 0 : index
    %c0_55 = arith.constant 0 : index
    %104 = vector.load %arg24[%c0_54, %c0_55] : memref<8x192xf32, #tpu.memory_space<vmem>>, vector<8x48xf32>
    tpu.vector_store %arg24[%c0_54, %c0_55], %103 {strides = array<i32>} : memref<8x192xf32, #tpu.memory_space<vmem>>, vector<8x48xf32>,
    %c0_56 = arith.constant 0 : index
    %c48_57 = arith.constant 48 : index
    %105 = vector.load %arg22[%c0_56, %c48_57] : memref<8x192xf32, #tpu.memory_space<vmem>>, vector<8x48xf32>
    %c0_58 = arith.constant 0 : index
    %c0_59 = arith.constant 0 : index
    %106 = vector.load %arg23[%c0_58, %c0_59] : memref<8x384xf32, #tpu.memory_space<vmem>>, vector<8x48xf32>
    %107 = arith.mulf %105, %106 : vector<8x48xf32>
    %cst_60 = arith.constant dense<0.000000e+00> : vector<8xf32>
    %108 = vector.multi_reduction <add>, %107, %cst_60 [1] : vector<8x48xf32> to vector<8xf32>
    %109 = vector.shape_cast %108 : vector<8xf32> to vector<8x1xf32>
    %cst_61 = arith.constant 0.144337565 : f32
    %110 = vector.broadcast %cst_61 : f32 to vector<8x1xf32>
    %111 = arith.mulf %109, %110 : vector<8x1xf32>
    %c0_62 = arith.constant 0 : index
    %c48_63 = arith.constant 48 : index
    %112 = vector.load %arg23[%c0_62, %c48_63] : memref<8x384xf32, #tpu.memory_space<vmem>>, vector<8x48xf32>
    %113 = arith.mulf %105, %112 : vector<8x48xf32>
    %cst_64 = arith.constant dense<0.000000e+00> : vector<8xf32>
    %114 = vector.multi_reduction <add>, %113, %cst_64 [1] : vector<8x48xf32> to vector<8xf32>
    %115 = vector.shape_cast %114 : vector<8xf32> to vector<8x1xf32>
    %cst_65 = arith.constant 0.144337565 : f32
    %116 = vector.broadcast %cst_65 : f32 to vector<8x1xf32>
    %117 = arith.mulf %115, %116 : vector<8x1xf32>
    %c0_66 = arith.constant 0 : index
    %c96_67 = arith.constant 96 : index
    %118 = vector.load %arg23[%c0_66, %c96_67] : memref<8x384xf32, #tpu.memory_space<vmem>>, vector<8x48xf32>
    %119 = arith.mulf %105, %118 : vector<8x48xf32>
    %cst_68 = arith.constant dense<0.000000e+00> : vector<8xf32>
    %120 = vector.multi_reduction <add>, %119, %cst_68 [1] : vector<8x48xf32> to vector<8xf32>
    %121 = vector.shape_cast %120 : vector<8xf32> to vector<8x1xf32>
    %cst_69 = arith.constant 0.144337565 : f32
    %122 = vector.broadcast %cst_69 : f32 to vector<8x1xf32>
    %123 = arith.mulf %121, %122 : vector<8x1xf32>
    %c0_70 = arith.constant 0 : index
    %c144_71 = arith.constant 144 : index
    %124 = vector.load %arg23[%c0_70, %c144_71] : memref<8x384xf32, #tpu.memory_space<vmem>>, vector<8x48xf32>
    %125 = arith.mulf %105, %124 : vector<8x48xf32>
    %cst_72 = arith.constant dense<0.000000e+00> : vector<8xf32>
    %126 = vector.multi_reduction <add>, %125, %cst_72 [1] : vector<8x48xf32> to vector<8xf32>
    %127 = vector.shape_cast %126 : vector<8xf32> to vector<8x1xf32>
    %cst_73 = arith.constant 0.144337565 : f32
    %128 = vector.broadcast %cst_73 : f32 to vector<8x1xf32>
    %129 = arith.mulf %127, %128 : vector<8x1xf32>
    %130 = arith.maximumf %111, %117 : vector<8x1xf32>
    %131 = arith.maximumf %123, %129 : vector<8x1xf32>
    %132 = arith.maximumf %130, %131 : vector<8x1xf32>
    %133 = arith.subf %111, %132 : vector<8x1xf32>
    %134 = math.exp %133 : vector<8x1xf32>
    %135 = arith.subf %117, %132 : vector<8x1xf32>
    %136 = math.exp %135 : vector<8x1xf32>
    %137 = arith.subf %123, %132 : vector<8x1xf32>
    %138 = math.exp %137 : vector<8x1xf32>
    %139 = arith.subf %129, %132 : vector<8x1xf32>
    %140 = math.exp %139 : vector<8x1xf32>
    %141 = arith.addf %134, %136 : vector<8x1xf32>
    %142 = arith.addf %141, %138 : vector<8x1xf32>
    %143 = arith.addf %142, %140 : vector<8x1xf32>
    %144 = tpu.reciprocal %143 {approx = true} : vector<8x1xf32> -> vector<8x1xf32>
    %145 = arith.mulf %134, %144 : vector<8x1xf32>
    %c0_74 = arith.constant 0 : index
    %c192_75 = arith.constant 192 : index
    %146 = vector.load %arg23[%c0_74, %c192_75] : memref<8x384xf32, #tpu.memory_space<vmem>>, vector<8x48xf32>
    %147 = vector.broadcast %145 : vector<8x1xf32> to vector<8x48xf32>
    %148 = arith.mulf %147, %146 : vector<8x48xf32>
    %149 = arith.mulf %136, %144 : vector<8x1xf32>
    %c0_76 = arith.constant 0 : index
    %c240_77 = arith.constant 240 : index
    %150 = vector.load %arg23[%c0_76, %c240_77] : memref<8x384xf32, #tpu.memory_space<vmem>>, vector<8x48xf32>
    %151 = vector.broadcast %149 : vector<8x1xf32> to vector<8x48xf32>
    %152 = arith.mulf %151, %150 : vector<8x48xf32>
    %153 = arith.addf %148, %152 : vector<8x48xf32>
    %154 = arith.mulf %138, %144 : vector<8x1xf32>
    %c0_78 = arith.constant 0 : index
    %c288_79 = arith.constant 288 : index
    %155 = vector.load %arg23[%c0_78, %c288_79] : memref<8x384xf32, #tpu.memory_space<vmem>>, vector<8x48xf32>
    %156 = vector.broadcast %154 : vector<8x1xf32> to vector<8x48xf32>
    %157 = arith.mulf %156, %155 : vector<8x48xf32>
    %158 = arith.addf %153, %157 : vector<8x48xf32>
    %159 = arith.mulf %140, %144 : vector<8x1xf32>
    %c0_80 = arith.constant 0 : index
    %c336_81 = arith.constant 336 : index
    %160 = vector.load %arg23[%c0_80, %c336_81] : memref<8x384xf32, #tpu.memory_space<vmem>>, vector<8x48xf32>
    %161 = vector.broadcast %159 : vector<8x1xf32> to vector<8x48xf32>
    %162 = arith.mulf %161, %160 : vector<8x48xf32>
    %163 = arith.addf %158, %162 : vector<8x48xf32>
    %164 = vector.broadcast %42 : vector<1x48xf32> to vector<8x48xf32>
    %165 = arith.addf %163, %164 : vector<8x48xf32>
    %c0_82 = arith.constant 0 : index
    %c48_83 = arith.constant 48 : index
    %166 = vector.load %arg24[%c0_82, %c48_83] : memref<8x192xf32, #tpu.memory_space<vmem>>, vector<8x48xf32>
    tpu.vector_store %arg24[%c0_82, %c48_83], %165 {strides = array<i32>} : memref<8x192xf32, #tpu.memory_space<vmem>>, vector<8x48xf32>,
    %c0_84 = arith.constant 0 : index
    %c96_85 = arith.constant 96 : index
    %167 = vector.load %arg22[%c0_84, %c96_85] : memref<8x192xf32, #tpu.memory_space<vmem>>, vector<8x48xf32>
    %c0_86 = arith.constant 0 : index
    %c0_87 = arith.constant 0 : index
    %168 = vector.load %arg23[%c0_86, %c0_87] : memref<8x384xf32, #tpu.memory_space<vmem>>, vector<8x48xf32>
    %169 = arith.mulf %167, %168 : vector<8x48xf32>
    %cst_88 = arith.constant dense<0.000000e+00> : vector<8xf32>
    %170 = vector.multi_reduction <add>, %169, %cst_88 [1] : vector<8x48xf32> to vector<8xf32>
    %171 = vector.shape_cast %170 : vector<8xf32> to vector<8x1xf32>
    %cst_89 = arith.constant 0.144337565 : f32
    %172 = vector.broadcast %cst_89 : f32 to vector<8x1xf32>
    %173 = arith.mulf %171, %172 : vector<8x1xf32>
    %c0_90 = arith.constant 0 : index
    %c48_91 = arith.constant 48 : index
    %174 = vector.load %arg23[%c0_90, %c48_91] : memref<8x384xf32, #tpu.memory_space<vmem>>, vector<8x48xf32>
    %175 = arith.mulf %167, %174 : vector<8x48xf32>
    %cst_92 = arith.constant dense<0.000000e+00> : vector<8xf32>
    %176 = vector.multi_reduction <add>, %175, %cst_92 [1] : vector<8x48xf32> to vector<8xf32>
    %177 = vector.shape_cast %176 : vector<8xf32> to vector<8x1xf32>
    %cst_93 = arith.constant 0.144337565 : f32
    %178 = vector.broadcast %cst_93 : f32 to vector<8x1xf32>
    %179 = arith.mulf %177, %178 : vector<8x1xf32>
    %c0_94 = arith.constant 0 : index
    %c96_95 = arith.constant 96 : index
    %180 = vector.load %arg23[%c0_94, %c96_95] : memref<8x384xf32, #tpu.memory_space<vmem>>, vector<8x48xf32>
    %181 = arith.mulf %167, %180 : vector<8x48xf32>
    %cst_96 = arith.constant dense<0.000000e+00> : vector<8xf32>
    %182 = vector.multi_reduction <add>, %181, %cst_96 [1] : vector<8x48xf32> to vector<8xf32>
    %183 = vector.shape_cast %182 : vector<8xf32> to vector<8x1xf32>
    %cst_97 = arith.constant 0.144337565 : f32
    %184 = vector.broadcast %cst_97 : f32 to vector<8x1xf32>
    %185 = arith.mulf %183, %184 : vector<8x1xf32>
    %c0_98 = arith.constant 0 : index
    %c144_99 = arith.constant 144 : index
    %186 = vector.load %arg23[%c0_98, %c144_99] : memref<8x384xf32, #tpu.memory_space<vmem>>, vector<8x48xf32>
    %187 = arith.mulf %167, %186 : vector<8x48xf32>
    %cst_100 = arith.constant dense<0.000000e+00> : vector<8xf32>
    %188 = vector.multi_reduction <add>, %187, %cst_100 [1] : vector<8x48xf32> to vector<8xf32>
    %189 = vector.shape_cast %188 : vector<8xf32> to vector<8x1xf32>
    %cst_101 = arith.constant 0.144337565 : f32
    %190 = vector.broadcast %cst_101 : f32 to vector<8x1xf32>
    %191 = arith.mulf %189, %190 : vector<8x1xf32>
    %192 = arith.maximumf %173, %179 : vector<8x1xf32>
    %193 = arith.maximumf %185, %191 : vector<8x1xf32>
    %194 = arith.maximumf %192, %193 : vector<8x1xf32>
    %195 = arith.subf %173, %194 : vector<8x1xf32>
    %196 = math.exp %195 : vector<8x1xf32>
    %197 = arith.subf %179, %194 : vector<8x1xf32>
    %198 = math.exp %197 : vector<8x1xf32>
    %199 = arith.subf %185, %194 : vector<8x1xf32>
    %200 = math.exp %199 : vector<8x1xf32>
    %201 = arith.subf %191, %194 : vector<8x1xf32>
    %202 = math.exp %201 : vector<8x1xf32>
    %203 = arith.addf %196, %198 : vector<8x1xf32>
    %204 = arith.addf %203, %200 : vector<8x1xf32>
    %205 = arith.addf %204, %202 : vector<8x1xf32>
    %206 = tpu.reciprocal %205 {approx = true} : vector<8x1xf32> -> vector<8x1xf32>
    %207 = arith.mulf %196, %206 : vector<8x1xf32>
    %c0_102 = arith.constant 0 : index
    %c192_103 = arith.constant 192 : index
    %208 = vector.load %arg23[%c0_102, %c192_103] : memref<8x384xf32, #tpu.memory_space<vmem>>, vector<8x48xf32>
    %209 = vector.broadcast %207 : vector<8x1xf32> to vector<8x48xf32>
    %210 = arith.mulf %209, %208 : vector<8x48xf32>
    %211 = arith.mulf %198, %206 : vector<8x1xf32>
    %c0_104 = arith.constant 0 : index
    %c240_105 = arith.constant 240 : index
    %212 = vector.load %arg23[%c0_104, %c240_105] : memref<8x384xf32, #tpu.memory_space<vmem>>, vector<8x48xf32>
    %213 = vector.broadcast %211 : vector<8x1xf32> to vector<8x48xf32>
    %214 = arith.mulf %213, %212 : vector<8x48xf32>
    %215 = arith.addf %210, %214 : vector<8x48xf32>
    %216 = arith.mulf %200, %206 : vector<8x1xf32>
    %c0_106 = arith.constant 0 : index
    %c288_107 = arith.constant 288 : index
    %217 = vector.load %arg23[%c0_106, %c288_107] : memref<8x384xf32, #tpu.memory_space<vmem>>, vector<8x48xf32>
    %218 = vector.broadcast %216 : vector<8x1xf32> to vector<8x48xf32>
    %219 = arith.mulf %218, %217 : vector<8x48xf32>
    %220 = arith.addf %215, %219 : vector<8x48xf32>
    %221 = arith.mulf %202, %206 : vector<8x1xf32>
    %c0_108 = arith.constant 0 : index
    %c336_109 = arith.constant 336 : index
    %222 = vector.load %arg23[%c0_108, %c336_109] : memref<8x384xf32, #tpu.memory_space<vmem>>, vector<8x48xf32>
    %223 = vector.broadcast %221 : vector<8x1xf32> to vector<8x48xf32>
    %224 = arith.mulf %223, %222 : vector<8x48xf32>
    %225 = arith.addf %220, %224 : vector<8x48xf32>
    %226 = vector.broadcast %42 : vector<1x48xf32> to vector<8x48xf32>
    %227 = arith.addf %225, %226 : vector<8x48xf32>
    %c0_110 = arith.constant 0 : index
    %c96_111 = arith.constant 96 : index
    %228 = vector.load %arg24[%c0_110, %c96_111] : memref<8x192xf32, #tpu.memory_space<vmem>>, vector<8x48xf32>
    tpu.vector_store %arg24[%c0_110, %c96_111], %227 {strides = array<i32>} : memref<8x192xf32, #tpu.memory_space<vmem>>, vector<8x48xf32>,
    %c0_112 = arith.constant 0 : index
    %c144_113 = arith.constant 144 : index
    %229 = vector.load %arg22[%c0_112, %c144_113] : memref<8x192xf32, #tpu.memory_space<vmem>>, vector<8x48xf32>
    %c0_114 = arith.constant 0 : index
    %c0_115 = arith.constant 0 : index
    %230 = vector.load %arg23[%c0_114, %c0_115] : memref<8x384xf32, #tpu.memory_space<vmem>>, vector<8x48xf32>
    %231 = arith.mulf %229, %230 : vector<8x48xf32>
    %cst_116 = arith.constant dense<0.000000e+00> : vector<8xf32>
    %232 = vector.multi_reduction <add>, %231, %cst_116 [1] : vector<8x48xf32> to vector<8xf32>
    %233 = vector.shape_cast %232 : vector<8xf32> to vector<8x1xf32>
    %cst_117 = arith.constant 0.144337565 : f32
    %234 = vector.broadcast %cst_117 : f32 to vector<8x1xf32>
    %235 = arith.mulf %233, %234 : vector<8x1xf32>
    %c0_118 = arith.constant 0 : index
    %c48_119 = arith.constant 48 : index
    %236 = vector.load %arg23[%c0_118, %c48_119] : memref<8x384xf32, #tpu.memory_space<vmem>>, vector<8x48xf32>
    %237 = arith.mulf %229, %236 : vector<8x48xf32>
    %cst_120 = arith.constant dense<0.000000e+00> : vector<8xf32>
    %238 = vector.multi_reduction <add>, %237, %cst_120 [1] : vector<8x48xf32> to vector<8xf32>
    %239 = vector.shape_cast %238 : vector<8xf32> to vector<8x1xf32>
    %cst_121 = arith.constant 0.144337565 : f32
    %240 = vector.broadcast %cst_121 : f32 to vector<8x1xf32>
    %241 = arith.mulf %239, %240 : vector<8x1xf32>
    %c0_122 = arith.constant 0 : index
    %c96_123 = arith.constant 96 : index
    %242 = vector.load %arg23[%c0_122, %c96_123] : memref<8x384xf32, #tpu.memory_space<vmem>>, vector<8x48xf32>
    %243 = arith.mulf %229, %242 : vector<8x48xf32>
    %cst_124 = arith.constant dense<0.000000e+00> : vector<8xf32>
    %244 = vector.multi_reduction <add>, %243, %cst_124 [1] : vector<8x48xf32> to vector<8xf32>
    %245 = vector.shape_cast %244 : vector<8xf32> to vector<8x1xf32>
    %cst_125 = arith.constant 0.144337565 : f32
    %246 = vector.broadcast %cst_125 : f32 to vector<8x1xf32>
    %247 = arith.mulf %245, %246 : vector<8x1xf32>
    %c0_126 = arith.constant 0 : index
    %c144_127 = arith.constant 144 : index
    %248 = vector.load %arg23[%c0_126, %c144_127] : memref<8x384xf32, #tpu.memory_space<vmem>>, vector<8x48xf32>
    %249 = arith.mulf %229, %248 : vector<8x48xf32>
    %cst_128 = arith.constant dense<0.000000e+00> : vector<8xf32>
    %250 = vector.multi_reduction <add>, %249, %cst_128 [1] : vector<8x48xf32> to vector<8xf32>
    %251 = vector.shape_cast %250 : vector<8xf32> to vector<8x1xf32>
    %cst_129 = arith.constant 0.144337565 : f32
    %252 = vector.broadcast %cst_129 : f32 to vector<8x1xf32>
    %253 = arith.mulf %251, %252 : vector<8x1xf32>
    %254 = arith.maximumf %235, %241 : vector<8x1xf32>
    %255 = arith.maximumf %247, %253 : vector<8x1xf32>
    %256 = arith.maximumf %254, %255 : vector<8x1xf32>
    %257 = arith.subf %235, %256 : vector<8x1xf32>
    %258 = math.exp %257 : vector<8x1xf32>
    %259 = arith.subf %241, %256 : vector<8x1xf32>
    %260 = math.exp %259 : vector<8x1xf32>
    %261 = arith.subf %247, %256 : vector<8x1xf32>
    %262 = math.exp %261 : vector<8x1xf32>
    %263 = arith.subf %253, %256 : vector<8x1xf32>
    %264 = math.exp %263 : vector<8x1xf32>
    %265 = arith.addf %258, %260 : vector<8x1xf32>
    %266 = arith.addf %265, %262 : vector<8x1xf32>
    %267 = arith.addf %266, %264 : vector<8x1xf32>
    %268 = tpu.reciprocal %267 {approx = true} : vector<8x1xf32> -> vector<8x1xf32>
    %269 = arith.mulf %258, %268 : vector<8x1xf32>
    %c0_130 = arith.constant 0 : index
    %c192_131 = arith.constant 192 : index
    %270 = vector.load %arg23[%c0_130, %c192_131] : memref<8x384xf32, #tpu.memory_space<vmem>>, vector<8x48xf32>
    %271 = vector.broadcast %269 : vector<8x1xf32> to vector<8x48xf32>
    %272 = arith.mulf %271, %270 : vector<8x48xf32>
    %273 = arith.mulf %260, %268 : vector<8x1xf32>
    %c0_132 = arith.constant 0 : index
    %c240_133 = arith.constant 240 : index
    %274 = vector.load %arg23[%c0_132, %c240_133] : memref<8x384xf32, #tpu.memory_space<vmem>>, vector<8x48xf32>
    %275 = vector.broadcast %273 : vector<8x1xf32> to vector<8x48xf32>
    %276 = arith.mulf %275, %274 : vector<8x48xf32>
    %277 = arith.addf %272, %276 : vector<8x48xf32>
    %278 = arith.mulf %262, %268 : vector<8x1xf32>
    %c0_134 = arith.constant 0 : index
    %c288_135 = arith.constant 288 : index
    %279 = vector.load %arg23[%c0_134, %c288_135] : memref<8x384xf32, #tpu.memory_space<vmem>>, vector<8x48xf32>
    %280 = vector.broadcast %278 : vector<8x1xf32> to vector<8x48xf32>
    %281 = arith.mulf %280, %279 : vector<8x48xf32>
    %282 = arith.addf %277, %281 : vector<8x48xf32>
    %283 = arith.mulf %264, %268 : vector<8x1xf32>
    %c0_136 = arith.constant 0 : index
    %c336_137 = arith.constant 336 : index
    %284 = vector.load %arg23[%c0_136, %c336_137] : memref<8x384xf32, #tpu.memory_space<vmem>>, vector<8x48xf32>
    %285 = vector.broadcast %283 : vector<8x1xf32> to vector<8x48xf32>
    %286 = arith.mulf %285, %284 : vector<8x48xf32>
    %287 = arith.addf %282, %286 : vector<8x48xf32>
    %288 = vector.broadcast %42 : vector<1x48xf32> to vector<8x48xf32>
    %289 = arith.addf %287, %288 : vector<8x48xf32>
    %c0_138 = arith.constant 0 : index
    %c144_139 = arith.constant 144 : index
    %290 = vector.load %arg24[%c0_138, %c144_139] : memref<8x192xf32, #tpu.memory_space<vmem>>, vector<8x48xf32>
    tpu.vector_store %arg24[%c0_138, %c144_139], %289 {strides = array<i32>} : memref<8x192xf32, #tpu.memory_space<vmem>>, vector<8x48xf32>,
    %c0_140 = arith.constant 0 : index
    %c0_141 = arith.constant 0 : index
    %291 = vector.load %arg24[%c0_140, %c0_141] : memref<8x192xf32, #tpu.memory_space<vmem>>, vector<8x192xf32>
    %292 = arith.truncf %291 : vector<8x192xf32> to vector<8x192xbf16>
    %c0_142 = arith.constant 0 : index
    %c0_143 = arith.constant 0 : index
    %293 = vector.load %arg12[%c0_142, %c0_143] : memref<192x1024xbf16, #tpu.memory_space<vmem>>, vector<192x1024xbf16>
    %cst_144 = arith.constant dense<0.000000e+00> : vector<8x1024xf32>
    %294 = tpu.matmul %292, %293, %cst_144 {dimension_numbers = #tpu.dot_dimension_numbers<[1], [0], [0], [1], [0, 0, 1, 1], [], []>} : vector<8x192xbf16>, vector<192x1024xbf16>, vector<8x1024xf32> -> vector<8x1024xf32>
    %c0_145 = arith.constant 0 : index
    %c0_146 = arith.constant 0 : index
    %295 = vector.load %arg13[%c0_145, %c0_146] : memref<1x1024xf32, #tpu.memory_space<vmem>>, vector<1x1024xf32>
    %296 = vector.broadcast %295 : vector<1x1024xf32> to vector<8x1024xf32>
    %297 = arith.addf %294, %296 : vector<8x1024xf32>
    %cst_147 = arith.constant 0.000000e+00 : f32
    %298 = vector.broadcast %cst_147 : f32 to vector<8x1024xf32>
    %299 = arith.maximumf %297, %298 : vector<8x1024xf32>
    %300 = arith.truncf %299 : vector<8x1024xf32> to vector<8x1024xbf16>
    %c0_148 = arith.constant 0 : index
    %c0_149 = arith.constant 0 : index
    %301 = vector.load %arg14[%c0_148, %c0_149] : memref<1024x512xbf16, #tpu.memory_space<vmem>>, vector<1024x512xbf16>
    %cst_150 = arith.constant dense<0.000000e+00> : vector<8x512xf32>
    %302 = tpu.matmul %300, %301, %cst_150 {dimension_numbers = #tpu.dot_dimension_numbers<[1], [0], [0], [1], [0, 0, 1, 1], [], []>} : vector<8x1024xbf16>, vector<1024x512xbf16>, vector<8x512xf32> -> vector<8x512xf32>
    %c0_151 = arith.constant 0 : index
    %c0_152 = arith.constant 0 : index
    %303 = vector.load %arg15[%c0_151, %c0_152] : memref<1x512xf32, #tpu.memory_space<vmem>>, vector<1x512xf32>
    %304 = vector.broadcast %303 : vector<1x512xf32> to vector<8x512xf32>
    %305 = arith.addf %302, %304 : vector<8x512xf32>
    %cst_153 = arith.constant 0.000000e+00 : f32
    %306 = vector.broadcast %cst_153 : f32 to vector<8x512xf32>
    %307 = arith.maximumf %305, %306 : vector<8x512xf32>
    %308 = arith.truncf %307 : vector<8x512xf32> to vector<8x512xbf16>
    %c0_154 = arith.constant 0 : index
    %c0_155 = arith.constant 0 : index
    %309 = vector.load %arg16[%c0_154, %c0_155] : memref<512x256xbf16, #tpu.memory_space<vmem>>, vector<512x256xbf16>
    %cst_156 = arith.constant dense<0.000000e+00> : vector<8x256xf32>
    %310 = tpu.matmul %308, %309, %cst_156 {dimension_numbers = #tpu.dot_dimension_numbers<[1], [0], [0], [1], [0, 0, 1, 1], [], []>} : vector<8x512xbf16>, vector<512x256xbf16>, vector<8x256xf32> -> vector<8x256xf32>
    %c0_157 = arith.constant 0 : index
    %c0_158 = arith.constant 0 : index
    %311 = vector.load %arg17[%c0_157, %c0_158] : memref<1x256xf32, #tpu.memory_space<vmem>>, vector<1x256xf32>
    %312 = vector.broadcast %311 : vector<1x256xf32> to vector<8x256xf32>
    %313 = arith.addf %310, %312 : vector<8x256xf32>
    %c0_159 = arith.constant 0 : index
    %c0_160 = arith.constant 0 : index
    %314 = vector.load %arg18[%c0_159, %c0_160] : memref<8x256xf32, #tpu.memory_space<vmem>>, vector<8x256xf32>
    tpu.vector_store %arg18[%c0_159, %c0_160], %313 {strides = array<i32>} : memref<8x256xf32, #tpu.memory_space<vmem>>, vector<8x256xf32>,
    %c0_161 = arith.constant 0 : index
    %c0_162 = arith.constant 0 : index
    %315 = vector.load %arg3[%c0_161, %c0_162] : memref<8x768xf32, #tpu.memory_space<vmem>>, vector<8x768xf32>
    %c0_163 = arith.constant 0 : index
    %c0_164 = arith.constant 0 : index
    %316 = vector.load %arg4[%c0_163, %c0_164] : memref<8x192xf32, #tpu.memory_space<vmem>>, vector<8x192xf32>
    %317 = arith.mulf %315, %315 : vector<8x768xf32>
    %cst_165 = arith.constant dense<0.000000e+00> : vector<8xf32>
    %318 = vector.multi_reduction <add>, %317, %cst_165 [1] : vector<8x768xf32> to vector<8xf32>
    %319 = vector.shape_cast %318 : vector<8xf32> to vector<8x1xf32>
    %cst_166 = arith.constant 1.000000e-24 : f32
    %320 = vector.broadcast %cst_166 : f32 to vector<8x1xf32>
    %321 = arith.maximumf %319, %320 : vector<8x1xf32>
    %322 = math.rsqrt %321 : vector<8x1xf32>
    %323 = vector.broadcast %322 : vector<8x1xf32> to vector<8x768xf32>
    %324 = arith.mulf %315, %323 : vector<8x768xf32>
    %325 = arith.mulf %316, %316 : vector<8x192xf32>
    %cst_167 = arith.constant dense<0.000000e+00> : vector<8xf32>
    %326 = vector.multi_reduction <add>, %325, %cst_167 [1] : vector<8x192xf32> to vector<8xf32>
    %327 = vector.shape_cast %326 : vector<8xf32> to vector<8x1xf32>
    %cst_168 = arith.constant 1.000000e-24 : f32
    %328 = vector.broadcast %cst_168 : f32 to vector<8x1xf32>
    %329 = arith.maximumf %327, %328 : vector<8x1xf32>
    %330 = math.rsqrt %329 : vector<8x1xf32>
    %331 = vector.broadcast %330 : vector<8x1xf32> to vector<8x192xf32>
    %332 = arith.mulf %316, %331 : vector<8x192xf32>
    %c0_169 = arith.constant 0 : index
    %c0_170 = arith.constant 0 : index
    %333 = vector.load %arg20[%c0_169, %c0_170] : memref<8x192xf32, #tpu.memory_space<vmem>>, vector<8x192xf32>
    tpu.vector_store %arg20[%c0_169, %c0_170], %332 {strides = array<i32>} : memref<8x192xf32, #tpu.memory_space<vmem>>, vector<8x192xf32>,
    %334 = arith.truncf %324 : vector<8x768xf32> to vector<8x768xbf16>
    %c0_171 = arith.constant 0 : index
    %c0_172 = arith.constant 0 : index
    %335 = vector.load %arg5[%c0_171, %c0_172] : memref<768x192xbf16, #tpu.memory_space<vmem>>, vector<768x192xbf16>
    %cst_173 = arith.constant dense<0.000000e+00> : vector<8x192xf32>
    %336 = tpu.matmul %334, %335, %cst_173 {dimension_numbers = #tpu.dot_dimension_numbers<[1], [0], [0], [1], [0, 0, 1, 1], [], []>} : vector<8x768xbf16>, vector<768x192xbf16>, vector<8x192xf32> -> vector<8x192xf32>
    %c0_174 = arith.constant 0 : index
    %c0_175 = arith.constant 0 : index
    %337 = vector.load %arg6[%c0_174, %c0_175] : memref<1x192xf32, #tpu.memory_space<vmem>>, vector<1x192xf32>
    %338 = vector.broadcast %337 : vector<1x192xf32> to vector<8x192xf32>
    %339 = arith.addf %336, %338 : vector<8x192xf32>
    %c0_176 = arith.constant 0 : index
    %c0_177 = arith.constant 0 : index
    %340 = vector.load %arg21[%c0_176, %c0_177] : memref<8x192xf32, #tpu.memory_space<vmem>>, vector<8x192xf32>
    tpu.vector_store %arg21[%c0_176, %c0_177], %339 {strides = array<i32>} : memref<8x192xf32, #tpu.memory_space<vmem>>, vector<8x192xf32>,
    %c0_178 = arith.constant 0 : index
    %c0_179 = arith.constant 0 : index
    %341 = vector.load %arg20[%c0_178, %c0_179] : memref<8x192xf32, #tpu.memory_space<vmem>>, vector<8x192xf32>
    %342 = arith.truncf %341 : vector<8x192xf32> to vector<8x192xbf16>
    %c0_180 = arith.constant 0 : index
    %c0_181 = arith.constant 0 : index
    %343 = vector.load %arg7[%c0_180, %c0_181] : memref<192x192xbf16, #tpu.memory_space<vmem>>, vector<192x192xbf16>
    %cst_182 = arith.constant dense<0.000000e+00> : vector<8x192xf32>
    %344 = tpu.matmul %342, %343, %cst_182 {dimension_numbers = #tpu.dot_dimension_numbers<[1], [0], [0], [1], [0, 0, 1, 1], [], []>} : vector<8x192xbf16>, vector<192x192xbf16>, vector<8x192xf32> -> vector<8x192xf32>
    %c0_183 = arith.constant 0 : index
    %c0_184 = arith.constant 0 : index
    %345 = vector.load %arg8[%c0_183, %c0_184] : memref<1x192xf32, #tpu.memory_space<vmem>>, vector<1x192xf32>
    %346 = vector.broadcast %345 : vector<1x192xf32> to vector<8x192xf32>
    %347 = arith.addf %344, %346 : vector<8x192xf32>
    %c0_185 = arith.constant 0 : index
    %c0_186 = arith.constant 0 : index
    %348 = vector.load %arg22[%c0_185, %c0_186] : memref<8x192xf32, #tpu.memory_space<vmem>>, vector<8x192xf32>
    tpu.vector_store %arg22[%c0_185, %c0_186], %347 {strides = array<i32>} : memref<8x192xf32, #tpu.memory_space<vmem>>, vector<8x192xf32>,
    %c0_187 = arith.constant 0 : index
    %c0_188 = arith.constant 0 : index
    %349 = vector.load %arg21[%c0_187, %c0_188] : memref<8x192xf32, #tpu.memory_space<vmem>>, vector<8x192xf32>
    %350 = arith.truncf %349 : vector<8x192xf32> to vector<8x192xbf16>
    %c0_189 = arith.constant 0 : index
    %c0_190 = arith.constant 0 : index
    %351 = vector.load %arg9[%c0_189, %c0_190] : memref<192x384xbf16, #tpu.memory_space<vmem>>, vector<192x384xbf16>
    %cst_191 = arith.constant dense<0.000000e+00> : vector<8x384xf32>
    %352 = tpu.matmul %350, %351, %cst_191 {dimension_numbers = #tpu.dot_dimension_numbers<[1], [0], [0], [1], [0, 0, 1, 1], [], []>} : vector<8x192xbf16>, vector<192x384xbf16>, vector<8x384xf32> -> vector<8x384xf32>
    %c0_192 = arith.constant 0 : index
    %c0_193 = arith.constant 0 : index
    %353 = vector.load %arg10[%c0_192, %c0_193] : memref<1x384xf32, #tpu.memory_space<vmem>>, vector<1x384xf32>
    %354 = vector.broadcast %353 : vector<1x384xf32> to vector<8x384xf32>
    %355 = arith.addf %352, %354 : vector<8x384xf32>
    %c0_194 = arith.constant 0 : index
    %c0_195 = arith.constant 0 : index
    %356 = vector.load %arg23[%c0_194, %c0_195] : memref<8x384xf32, #tpu.memory_space<vmem>>, vector<8x384xf32>
    tpu.vector_store %arg23[%c0_194, %c0_195], %355 {strides = array<i32>} : memref<8x384xf32, #tpu.memory_space<vmem>>, vector<8x384xf32>,
    %c0_196 = arith.constant 0 : index
    %c0_197 = arith.constant 0 : index
    %357 = vector.load %arg11[%c0_196, %c0_197] : memref<1x48xf32, #tpu.memory_space<vmem>>, vector<1x48xf32>
    %c0_198 = arith.constant 0 : index
    %c0_199 = arith.constant 0 : index
    %358 = vector.load %arg22[%c0_198, %c0_199] : memref<8x192xf32, #tpu.memory_space<vmem>>, vector<8x48xf32>
    %c0_200 = arith.constant 0 : index
    %c0_201 = arith.constant 0 : index
    %359 = vector.load %arg23[%c0_200, %c0_201] : memref<8x384xf32, #tpu.memory_space<vmem>>, vector<8x48xf32>
    %360 = arith.mulf %358, %359 : vector<8x48xf32>
    %cst_202 = arith.constant dense<0.000000e+00> : vector<8xf32>
    %361 = vector.multi_reduction <add>, %360, %cst_202 [1] : vector<8x48xf32> to vector<8xf32>
    %362 = vector.shape_cast %361 : vector<8xf32> to vector<8x1xf32>
    %cst_203 = arith.constant 0.144337565 : f32
    %363 = vector.broadcast %cst_203 : f32 to vector<8x1xf32>
    %364 = arith.mulf %362, %363 : vector<8x1xf32>
    %c0_204 = arith.constant 0 : index
    %c48_205 = arith.constant 48 : index
    %365 = vector.load %arg23[%c0_204, %c48_205] : memref<8x384xf32, #tpu.memory_space<vmem>>, vector<8x48xf32>
    %366 = arith.mulf %358, %365 : vector<8x48xf32>
    %cst_206 = arith.constant dense<0.000000e+00> : vector<8xf32>
    %367 = vector.multi_reduction <add>, %366, %cst_206 [1] : vector<8x48xf32> to vector<8xf32>
    %368 = vector.shape_cast %367 : vector<8xf32> to vector<8x1xf32>
    %cst_207 = arith.constant 0.144337565 : f32
    %369 = vector.broadcast %cst_207 : f32 to vector<8x1xf32>
    %370 = arith.mulf %368, %369 : vector<8x1xf32>
    %c0_208 = arith.constant 0 : index
    %c96_209 = arith.constant 96 : index
    %371 = vector.load %arg23[%c0_208, %c96_209] : memref<8x384xf32, #tpu.memory_space<vmem>>, vector<8x48xf32>
    %372 = arith.mulf %358, %371 : vector<8x48xf32>
    %cst_210 = arith.constant dense<0.000000e+00> : vector<8xf32>
    %373 = vector.multi_reduction <add>, %372, %cst_210 [1] : vector<8x48xf32> to vector<8xf32>
    %374 = vector.shape_cast %373 : vector<8xf32> to vector<8x1xf32>
    %cst_211 = arith.constant 0.144337565 : f32
    %375 = vector.broadcast %cst_211 : f32 to vector<8x1xf32>
    %376 = arith.mulf %374, %375 : vector<8x1xf32>
    %c0_212 = arith.constant 0 : index
    %c144_213 = arith.constant 144 : index
    %377 = vector.load %arg23[%c0_212, %c144_213] : memref<8x384xf32, #tpu.memory_space<vmem>>, vector<8x48xf32>
    %378 = arith.mulf %358, %377 : vector<8x48xf32>
    %cst_214 = arith.constant dense<0.000000e+00> : vector<8xf32>
    %379 = vector.multi_reduction <add>, %378, %cst_214 [1] : vector<8x48xf32> to vector<8xf32>
    %380 = vector.shape_cast %379 : vector<8xf32> to vector<8x1xf32>
    %cst_215 = arith.constant 0.144337565 : f32
    %381 = vector.broadcast %cst_215 : f32 to vector<8x1xf32>
    %382 = arith.mulf %380, %381 : vector<8x1xf32>
    %383 = arith.maximumf %364, %370 : vector<8x1xf32>
    %384 = arith.maximumf %376, %382 : vector<8x1xf32>
    %385 = arith.maximumf %383, %384 : vector<8x1xf32>
    %386 = arith.subf %364, %385 : vector<8x1xf32>
    %387 = math.exp %386 : vector<8x1xf32>
    %388 = arith.subf %370, %385 : vector<8x1xf32>
    %389 = math.exp %388 : vector<8x1xf32>
    %390 = arith.subf %376, %385 : vector<8x1xf32>
    %391 = math.exp %390 : vector<8x1xf32>
    %392 = arith.subf %382, %385 : vector<8x1xf32>
    %393 = math.exp %392 : vector<8x1xf32>
    %394 = arith.addf %387, %389 : vector<8x1xf32>
    %395 = arith.addf %394, %391 : vector<8x1xf32>
    %396 = arith.addf %395, %393 : vector<8x1xf32>
    %397 = tpu.reciprocal %396 {approx = true} : vector<8x1xf32> -> vector<8x1xf32>
    %398 = arith.mulf %387, %397 : vector<8x1xf32>
    %c0_216 = arith.constant 0 : index
    %c192_217 = arith.constant 192 : index
    %399 = vector.load %arg23[%c0_216, %c192_217] : memref<8x384xf32, #tpu.memory_space<vmem>>, vector<8x48xf32>
    %400 = vector.broadcast %398 : vector<8x1xf32> to vector<8x48xf32>
    %401 = arith.mulf %400, %399 : vector<8x48xf32>
    %402 = arith.mulf %389, %397 : vector<8x1xf32>
    %c0_218 = arith.constant 0 : index
    %c240_219 = arith.constant 240 : index
    %403 = vector.load %arg23[%c0_218, %c240_219] : memref<8x384xf32, #tpu.memory_space<vmem>>, vector<8x48xf32>
    %404 = vector.broadcast %402 : vector<8x1xf32> to vector<8x48xf32>
    %405 = arith.mulf %404, %403 : vector<8x48xf32>
    %406 = arith.addf %401, %405 : vector<8x48xf32>
    %407 = arith.mulf %391, %397 : vector<8x1xf32>
    %c0_220 = arith.constant 0 : index
    %c288_221 = arith.constant 288 : index
    %408 = vector.load %arg23[%c0_220, %c288_221] : memref<8x384xf32, #tpu.memory_space<vmem>>, vector<8x48xf32>
    %409 = vector.broadcast %407 : vector<8x1xf32> to vector<8x48xf32>
    %410 = arith.mulf %409, %408 : vector<8x48xf32>
    %411 = arith.addf %406, %410 : vector<8x48xf32>
    %412 = arith.mulf %393, %397 : vector<8x1xf32>
    %c0_222 = arith.constant 0 : index
    %c336_223 = arith.constant 336 : index
    %413 = vector.load %arg23[%c0_222, %c336_223] : memref<8x384xf32, #tpu.memory_space<vmem>>, vector<8x48xf32>
    %414 = vector.broadcast %412 : vector<8x1xf32> to vector<8x48xf32>
    %415 = arith.mulf %414, %413 : vector<8x48xf32>
    %416 = arith.addf %411, %415 : vector<8x48xf32>
    %417 = vector.broadcast %357 : vector<1x48xf32> to vector<8x48xf32>
    %418 = arith.addf %416, %417 : vector<8x48xf32>
    %c0_224 = arith.constant 0 : index
    %c0_225 = arith.constant 0 : index
    %419 = vector.load %arg24[%c0_224, %c0_225] : memref<8x192xf32, #tpu.memory_space<vmem>>, vector<8x48xf32>
    tpu.vector_store %arg24[%c0_224, %c0_225], %418 {strides = array<i32>} : memref<8x192xf32, #tpu.memory_space<vmem>>, vector<8x48xf32>,
    %c0_226 = arith.constant 0 : index
    %c48_227 = arith.constant 48 : index
    %420 = vector.load %arg22[%c0_226, %c48_227] : memref<8x192xf32, #tpu.memory_space<vmem>>, vector<8x48xf32>
    %c0_228 = arith.constant 0 : index
    %c0_229 = arith.constant 0 : index
    %421 = vector.load %arg23[%c0_228, %c0_229] : memref<8x384xf32, #tpu.memory_space<vmem>>, vector<8x48xf32>
    %422 = arith.mulf %420, %421 : vector<8x48xf32>
    %cst_230 = arith.constant dense<0.000000e+00> : vector<8xf32>
    %423 = vector.multi_reduction <add>, %422, %cst_230 [1] : vector<8x48xf32> to vector<8xf32>
    %424 = vector.shape_cast %423 : vector<8xf32> to vector<8x1xf32>
    %cst_231 = arith.constant 0.144337565 : f32
    %425 = vector.broadcast %cst_231 : f32 to vector<8x1xf32>
    %426 = arith.mulf %424, %425 : vector<8x1xf32>
    %c0_232 = arith.constant 0 : index
    %c48_233 = arith.constant 48 : index
    %427 = vector.load %arg23[%c0_232, %c48_233] : memref<8x384xf32, #tpu.memory_space<vmem>>, vector<8x48xf32>
    %428 = arith.mulf %420, %427 : vector<8x48xf32>
    %cst_234 = arith.constant dense<0.000000e+00> : vector<8xf32>
    %429 = vector.multi_reduction <add>, %428, %cst_234 [1] : vector<8x48xf32> to vector<8xf32>
    %430 = vector.shape_cast %429 : vector<8xf32> to vector<8x1xf32>
    %cst_235 = arith.constant 0.144337565 : f32
    %431 = vector.broadcast %cst_235 : f32 to vector<8x1xf32>
    %432 = arith.mulf %430, %431 : vector<8x1xf32>
    %c0_236 = arith.constant 0 : index
    %c96_237 = arith.constant 96 : index
    %433 = vector.load %arg23[%c0_236, %c96_237] : memref<8x384xf32, #tpu.memory_space<vmem>>, vector<8x48xf32>
    %434 = arith.mulf %420, %433 : vector<8x48xf32>
    %cst_238 = arith.constant dense<0.000000e+00> : vector<8xf32>
    %435 = vector.multi_reduction <add>, %434, %cst_238 [1] : vector<8x48xf32> to vector<8xf32>
    %436 = vector.shape_cast %435 : vector<8xf32> to vector<8x1xf32>
    %cst_239 = arith.constant 0.144337565 : f32
    %437 = vector.broadcast %cst_239 : f32 to vector<8x1xf32>
    %438 = arith.mulf %436, %437 : vector<8x1xf32>
    %c0_240 = arith.constant 0 : index
    %c144_241 = arith.constant 144 : index
    %439 = vector.load %arg23[%c0_240, %c144_241] : memref<8x384xf32, #tpu.memory_space<vmem>>, vector<8x48xf32>
    %440 = arith.mulf %420, %439 : vector<8x48xf32>
    %cst_242 = arith.constant dense<0.000000e+00> : vector<8xf32>
    %441 = vector.multi_reduction <add>, %440, %cst_242 [1] : vector<8x48xf32> to vector<8xf32>
    %442 = vector.shape_cast %441 : vector<8xf32> to vector<8x1xf32>
    %cst_243 = arith.constant 0.144337565 : f32
    %443 = vector.broadcast %cst_243 : f32 to vector<8x1xf32>
    %444 = arith.mulf %442, %443 : vector<8x1xf32>
    %445 = arith.maximumf %426, %432 : vector<8x1xf32>
    %446 = arith.maximumf %438, %444 : vector<8x1xf32>
    %447 = arith.maximumf %445, %446 : vector<8x1xf32>
    %448 = arith.subf %426, %447 : vector<8x1xf32>
    %449 = math.exp %448 : vector<8x1xf32>
    %450 = arith.subf %432, %447 : vector<8x1xf32>
    %451 = math.exp %450 : vector<8x1xf32>
    %452 = arith.subf %438, %447 : vector<8x1xf32>
    %453 = math.exp %452 : vector<8x1xf32>
    %454 = arith.subf %444, %447 : vector<8x1xf32>
    %455 = math.exp %454 : vector<8x1xf32>
    %456 = arith.addf %449, %451 : vector<8x1xf32>
    %457 = arith.addf %456, %453 : vector<8x1xf32>
    %458 = arith.addf %457, %455 : vector<8x1xf32>
    %459 = tpu.reciprocal %458 {approx = true} : vector<8x1xf32> -> vector<8x1xf32>
    %460 = arith.mulf %449, %459 : vector<8x1xf32>
    %c0_244 = arith.constant 0 : index
    %c192_245 = arith.constant 192 : index
    %461 = vector.load %arg23[%c0_244, %c192_245] : memref<8x384xf32, #tpu.memory_space<vmem>>, vector<8x48xf32>
    %462 = vector.broadcast %460 : vector<8x1xf32> to vector<8x48xf32>
    %463 = arith.mulf %462, %461 : vector<8x48xf32>
    %464 = arith.mulf %451, %459 : vector<8x1xf32>
    %c0_246 = arith.constant 0 : index
    %c240_247 = arith.constant 240 : index
    %465 = vector.load %arg23[%c0_246, %c240_247] : memref<8x384xf32, #tpu.memory_space<vmem>>, vector<8x48xf32>
    %466 = vector.broadcast %464 : vector<8x1xf32> to vector<8x48xf32>
    %467 = arith.mulf %466, %465 : vector<8x48xf32>
    %468 = arith.addf %463, %467 : vector<8x48xf32>
    %469 = arith.mulf %453, %459 : vector<8x1xf32>
    %c0_248 = arith.constant 0 : index
    %c288_249 = arith.constant 288 : index
    %470 = vector.load %arg23[%c0_248, %c288_249] : memref<8x384xf32, #tpu.memory_space<vmem>>, vector<8x48xf32>
    %471 = vector.broadcast %469 : vector<8x1xf32> to vector<8x48xf32>
    %472 = arith.mulf %471, %470 : vector<8x48xf32>
    %473 = arith.addf %468, %472 : vector<8x48xf32>
    %474 = arith.mulf %455, %459 : vector<8x1xf32>
    %c0_250 = arith.constant 0 : index
    %c336_251 = arith.constant 336 : index
    %475 = vector.load %arg23[%c0_250, %c336_251] : memref<8x384xf32, #tpu.memory_space<vmem>>, vector<8x48xf32>
    %476 = vector.broadcast %474 : vector<8x1xf32> to vector<8x48xf32>
    %477 = arith.mulf %476, %475 : vector<8x48xf32>
    %478 = arith.addf %473, %477 : vector<8x48xf32>
    %479 = vector.broadcast %357 : vector<1x48xf32> to vector<8x48xf32>
    %480 = arith.addf %478, %479 : vector<8x48xf32>
    %c0_252 = arith.constant 0 : index
    %c48_253 = arith.constant 48 : index
    %481 = vector.load %arg24[%c0_252, %c48_253] : memref<8x192xf32, #tpu.memory_space<vmem>>, vector<8x48xf32>
    tpu.vector_store %arg24[%c0_252, %c48_253], %480 {strides = array<i32>} : memref<8x192xf32, #tpu.memory_space<vmem>>, vector<8x48xf32>,
    %c0_254 = arith.constant 0 : index
    %c96_255 = arith.constant 96 : index
    %482 = vector.load %arg22[%c0_254, %c96_255] : memref<8x192xf32, #tpu.memory_space<vmem>>, vector<8x48xf32>
    %c0_256 = arith.constant 0 : index
    %c0_257 = arith.constant 0 : index
    %483 = vector.load %arg23[%c0_256, %c0_257] : memref<8x384xf32, #tpu.memory_space<vmem>>, vector<8x48xf32>
    %484 = arith.mulf %482, %483 : vector<8x48xf32>
    %cst_258 = arith.constant dense<0.000000e+00> : vector<8xf32>
    %485 = vector.multi_reduction <add>, %484, %cst_258 [1] : vector<8x48xf32> to vector<8xf32>
    %486 = vector.shape_cast %485 : vector<8xf32> to vector<8x1xf32>
    %cst_259 = arith.constant 0.144337565 : f32
    %487 = vector.broadcast %cst_259 : f32 to vector<8x1xf32>
    %488 = arith.mulf %486, %487 : vector<8x1xf32>
    %c0_260 = arith.constant 0 : index
    %c48_261 = arith.constant 48 : index
    %489 = vector.load %arg23[%c0_260, %c48_261] : memref<8x384xf32, #tpu.memory_space<vmem>>, vector<8x48xf32>
    %490 = arith.mulf %482, %489 : vector<8x48xf32>
    %cst_262 = arith.constant dense<0.000000e+00> : vector<8xf32>
    %491 = vector.multi_reduction <add>, %490, %cst_262 [1] : vector<8x48xf32> to vector<8xf32>
    %492 = vector.shape_cast %491 : vector<8xf32> to vector<8x1xf32>
    %cst_263 = arith.constant 0.144337565 : f32
    %493 = vector.broadcast %cst_263 : f32 to vector<8x1xf32>
    %494 = arith.mulf %492, %493 : vector<8x1xf32>
    %c0_264 = arith.constant 0 : index
    %c96_265 = arith.constant 96 : index
    %495 = vector.load %arg23[%c0_264, %c96_265] : memref<8x384xf32, #tpu.memory_space<vmem>>, vector<8x48xf32>
    %496 = arith.mulf %482, %495 : vector<8x48xf32>
    %cst_266 = arith.constant dense<0.000000e+00> : vector<8xf32>
    %497 = vector.multi_reduction <add>, %496, %cst_266 [1] : vector<8x48xf32> to vector<8xf32>
    %498 = vector.shape_cast %497 : vector<8xf32> to vector<8x1xf32>
    %cst_267 = arith.constant 0.144337565 : f32
    %499 = vector.broadcast %cst_267 : f32 to vector<8x1xf32>
    %500 = arith.mulf %498, %499 : vector<8x1xf32>
    %c0_268 = arith.constant 0 : index
    %c144_269 = arith.constant 144 : index
    %501 = vector.load %arg23[%c0_268, %c144_269] : memref<8x384xf32, #tpu.memory_space<vmem>>, vector<8x48xf32>
    %502 = arith.mulf %482, %501 : vector<8x48xf32>
    %cst_270 = arith.constant dense<0.000000e+00> : vector<8xf32>
    %503 = vector.multi_reduction <add>, %502, %cst_270 [1] : vector<8x48xf32> to vector<8xf32>
    %504 = vector.shape_cast %503 : vector<8xf32> to vector<8x1xf32>
    %cst_271 = arith.constant 0.144337565 : f32
    %505 = vector.broadcast %cst_271 : f32 to vector<8x1xf32>
    %506 = arith.mulf %504, %505 : vector<8x1xf32>
    %507 = arith.maximumf %488, %494 : vector<8x1xf32>
    %508 = arith.maximumf %500, %506 : vector<8x1xf32>
    %509 = arith.maximumf %507, %508 : vector<8x1xf32>
    %510 = arith.subf %488, %509 : vector<8x1xf32>
    %511 = math.exp %510 : vector<8x1xf32>
    %512 = arith.subf %494, %509 : vector<8x1xf32>
    %513 = math.exp %512 : vector<8x1xf32>
    %514 = arith.subf %500, %509 : vector<8x1xf32>
    %515 = math.exp %514 : vector<8x1xf32>
    %516 = arith.subf %506, %509 : vector<8x1xf32>
    %517 = math.exp %516 : vector<8x1xf32>
    %518 = arith.addf %511, %513 : vector<8x1xf32>
    %519 = arith.addf %518, %515 : vector<8x1xf32>
    %520 = arith.addf %519, %517 : vector<8x1xf32>
    %521 = tpu.reciprocal %520 {approx = true} : vector<8x1xf32> -> vector<8x1xf32>
    %522 = arith.mulf %511, %521 : vector<8x1xf32>
    %c0_272 = arith.constant 0 : index
    %c192_273 = arith.constant 192 : index
    %523 = vector.load %arg23[%c0_272, %c192_273] : memref<8x384xf32, #tpu.memory_space<vmem>>, vector<8x48xf32>
    %524 = vector.broadcast %522 : vector<8x1xf32> to vector<8x48xf32>
    %525 = arith.mulf %524, %523 : vector<8x48xf32>
    %526 = arith.mulf %513, %521 : vector<8x1xf32>
    %c0_274 = arith.constant 0 : index
    %c240_275 = arith.constant 240 : index
    %527 = vector.load %arg23[%c0_274, %c240_275] : memref<8x384xf32, #tpu.memory_space<vmem>>, vector<8x48xf32>
    %528 = vector.broadcast %526 : vector<8x1xf32> to vector<8x48xf32>
    %529 = arith.mulf %528, %527 : vector<8x48xf32>
    %530 = arith.addf %525, %529 : vector<8x48xf32>
    %531 = arith.mulf %515, %521 : vector<8x1xf32>
    %c0_276 = arith.constant 0 : index
    %c288_277 = arith.constant 288 : index
    %532 = vector.load %arg23[%c0_276, %c288_277] : memref<8x384xf32, #tpu.memory_space<vmem>>, vector<8x48xf32>
    %533 = vector.broadcast %531 : vector<8x1xf32> to vector<8x48xf32>
    %534 = arith.mulf %533, %532 : vector<8x48xf32>
    %535 = arith.addf %530, %534 : vector<8x48xf32>
    %536 = arith.mulf %517, %521 : vector<8x1xf32>
    %c0_278 = arith.constant 0 : index
    %c336_279 = arith.constant 336 : index
    %537 = vector.load %arg23[%c0_278, %c336_279] : memref<8x384xf32, #tpu.memory_space<vmem>>, vector<8x48xf32>
    %538 = vector.broadcast %536 : vector<8x1xf32> to vector<8x48xf32>
    %539 = arith.mulf %538, %537 : vector<8x48xf32>
    %540 = arith.addf %535, %539 : vector<8x48xf32>
    %541 = vector.broadcast %357 : vector<1x48xf32> to vector<8x48xf32>
    %542 = arith.addf %540, %541 : vector<8x48xf32>
    %c0_280 = arith.constant 0 : index
    %c96_281 = arith.constant 96 : index
    %543 = vector.load %arg24[%c0_280, %c96_281] : memref<8x192xf32, #tpu.memory_space<vmem>>, vector<8x48xf32>
    tpu.vector_store %arg24[%c0_280, %c96_281], %542 {strides = array<i32>} : memref<8x192xf32, #tpu.memory_space<vmem>>, vector<8x48xf32>,
    %c0_282 = arith.constant 0 : index
    %c144_283 = arith.constant 144 : index
    %544 = vector.load %arg22[%c0_282, %c144_283] : memref<8x192xf32, #tpu.memory_space<vmem>>, vector<8x48xf32>
    %c0_284 = arith.constant 0 : index
    %c0_285 = arith.constant 0 : index
    %545 = vector.load %arg23[%c0_284, %c0_285] : memref<8x384xf32, #tpu.memory_space<vmem>>, vector<8x48xf32>
    %546 = arith.mulf %544, %545 : vector<8x48xf32>
    %cst_286 = arith.constant dense<0.000000e+00> : vector<8xf32>
    %547 = vector.multi_reduction <add>, %546, %cst_286 [1] : vector<8x48xf32> to vector<8xf32>
    %548 = vector.shape_cast %547 : vector<8xf32> to vector<8x1xf32>
    %cst_287 = arith.constant 0.144337565 : f32
    %549 = vector.broadcast %cst_287 : f32 to vector<8x1xf32>
    %550 = arith.mulf %548, %549 : vector<8x1xf32>
    %c0_288 = arith.constant 0 : index
    %c48_289 = arith.constant 48 : index
    %551 = vector.load %arg23[%c0_288, %c48_289] : memref<8x384xf32, #tpu.memory_space<vmem>>, vector<8x48xf32>
    %552 = arith.mulf %544, %551 : vector<8x48xf32>
    %cst_290 = arith.constant dense<0.000000e+00> : vector<8xf32>
    %553 = vector.multi_reduction <add>, %552, %cst_290 [1] : vector<8x48xf32> to vector<8xf32>
    %554 = vector.shape_cast %553 : vector<8xf32> to vector<8x1xf32>
    %cst_291 = arith.constant 0.144337565 : f32
    %555 = vector.broadcast %cst_291 : f32 to vector<8x1xf32>
    %556 = arith.mulf %554, %555 : vector<8x1xf32>
    %c0_292 = arith.constant 0 : index
    %c96_293 = arith.constant 96 : index
    %557 = vector.load %arg23[%c0_292, %c96_293] : memref<8x384xf32, #tpu.memory_space<vmem>>, vector<8x48xf32>
    %558 = arith.mulf %544, %557 : vector<8x48xf32>
    %cst_294 = arith.constant dense<0.000000e+00> : vector<8xf32>
    %559 = vector.multi_reduction <add>, %558, %cst_294 [1] : vector<8x48xf32> to vector<8xf32>
    %560 = vector.shape_cast %559 : vector<8xf32> to vector<8x1xf32>
    %cst_295 = arith.constant 0.144337565 : f32
    %561 = vector.broadcast %cst_295 : f32 to vector<8x1xf32>
    %562 = arith.mulf %560, %561 : vector<8x1xf32>
    %c0_296 = arith.constant 0 : index
    %c144_297 = arith.constant 144 : index
    %563 = vector.load %arg23[%c0_296, %c144_297] : memref<8x384xf32, #tpu.memory_space<vmem>>, vector<8x48xf32>
    %564 = arith.mulf %544, %563 : vector<8x48xf32>
    %cst_298 = arith.constant dense<0.000000e+00> : vector<8xf32>
    %565 = vector.multi_reduction <add>, %564, %cst_298 [1] : vector<8x48xf32> to vector<8xf32>
    %566 = vector.shape_cast %565 : vector<8xf32> to vector<8x1xf32>
    %cst_299 = arith.constant 0.144337565 : f32
    %567 = vector.broadcast %cst_299 : f32 to vector<8x1xf32>
    %568 = arith.mulf %566, %567 : vector<8x1xf32>
    %569 = arith.maximumf %550, %556 : vector<8x1xf32>
    %570 = arith.maximumf %562, %568 : vector<8x1xf32>
    %571 = arith.maximumf %569, %570 : vector<8x1xf32>
    %572 = arith.subf %550, %571 : vector<8x1xf32>
    %573 = math.exp %572 : vector<8x1xf32>
    %574 = arith.subf %556, %571 : vector<8x1xf32>
    %575 = math.exp %574 : vector<8x1xf32>
    %576 = arith.subf %562, %571 : vector<8x1xf32>
    %577 = math.exp %576 : vector<8x1xf32>
    %578 = arith.subf %568, %571 : vector<8x1xf32>
    %579 = math.exp %578 : vector<8x1xf32>
    %580 = arith.addf %573, %575 : vector<8x1xf32>
    %581 = arith.addf %580, %577 : vector<8x1xf32>
    %582 = arith.addf %581, %579 : vector<8x1xf32>
    %583 = tpu.reciprocal %582 {approx = true} : vector<8x1xf32> -> vector<8x1xf32>
    %584 = arith.mulf %573, %583 : vector<8x1xf32>
    %c0_300 = arith.constant 0 : index
    %c192_301 = arith.constant 192 : index
    %585 = vector.load %arg23[%c0_300, %c192_301] : memref<8x384xf32, #tpu.memory_space<vmem>>, vector<8x48xf32>
    %586 = vector.broadcast %584 : vector<8x1xf32> to vector<8x48xf32>
    %587 = arith.mulf %586, %585 : vector<8x48xf32>
    %588 = arith.mulf %575, %583 : vector<8x1xf32>
    %c0_302 = arith.constant 0 : index
    %c240_303 = arith.constant 240 : index
    %589 = vector.load %arg23[%c0_302, %c240_303] : memref<8x384xf32, #tpu.memory_space<vmem>>, vector<8x48xf32>
    %590 = vector.broadcast %588 : vector<8x1xf32> to vector<8x48xf32>
    %591 = arith.mulf %590, %589 : vector<8x48xf32>
    %592 = arith.addf %587, %591 : vector<8x48xf32>
    %593 = arith.mulf %577, %583 : vector<8x1xf32>
    %c0_304 = arith.constant 0 : index
    %c288_305 = arith.constant 288 : index
    %594 = vector.load %arg23[%c0_304, %c288_305] : memref<8x384xf32, #tpu.memory_space<vmem>>, vector<8x48xf32>
    %595 = vector.broadcast %593 : vector<8x1xf32> to vector<8x48xf32>
    %596 = arith.mulf %595, %594 : vector<8x48xf32>
    %597 = arith.addf %592, %596 : vector<8x48xf32>
    %598 = arith.mulf %579, %583 : vector<8x1xf32>
    %c0_306 = arith.constant 0 : index
    %c336_307 = arith.constant 336 : index
    %599 = vector.load %arg23[%c0_306, %c336_307] : memref<8x384xf32, #tpu.memory_space<vmem>>, vector<8x48xf32>
    %600 = vector.broadcast %598 : vector<8x1xf32> to vector<8x48xf32>
    %601 = arith.mulf %600, %599 : vector<8x48xf32>
    %602 = arith.addf %597, %601 : vector<8x48xf32>
    %603 = vector.broadcast %357 : vector<1x48xf32> to vector<8x48xf32>
    %604 = arith.addf %602, %603 : vector<8x48xf32>
    %c0_308 = arith.constant 0 : index
    %c144_309 = arith.constant 144 : index
    %605 = vector.load %arg24[%c0_308, %c144_309] : memref<8x192xf32, #tpu.memory_space<vmem>>, vector<8x48xf32>
    tpu.vector_store %arg24[%c0_308, %c144_309], %604 {strides = array<i32>} : memref<8x192xf32, #tpu.memory_space<vmem>>, vector<8x48xf32>,
    %c0_310 = arith.constant 0 : index
    %c0_311 = arith.constant 0 : index
    %606 = vector.load %arg24[%c0_310, %c0_311] : memref<8x192xf32, #tpu.memory_space<vmem>>, vector<8x192xf32>
    %607 = arith.truncf %606 : vector<8x192xf32> to vector<8x192xbf16>
    %c0_312 = arith.constant 0 : index
    %c0_313 = arith.constant 0 : index
    %608 = vector.load %arg12[%c0_312, %c0_313] : memref<192x1024xbf16, #tpu.memory_space<vmem>>, vector<192x1024xbf16>
    %cst_314 = arith.constant dense<0.000000e+00> : vector<8x1024xf32>
    %609 = tpu.matmul %607, %608, %cst_314 {dimension_numbers = #tpu.dot_dimension_numbers<[1], [0], [0], [1], [0, 0, 1, 1], [], []>} : vector<8x192xbf16>, vector<192x1024xbf16>, vector<8x1024xf32> -> vector<8x1024xf32>
    %c0_315 = arith.constant 0 : index
    %c0_316 = arith.constant 0 : index
    %610 = vector.load %arg13[%c0_315, %c0_316] : memref<1x1024xf32, #tpu.memory_space<vmem>>, vector<1x1024xf32>
    %611 = vector.broadcast %610 : vector<1x1024xf32> to vector<8x1024xf32>
    %612 = arith.addf %609, %611 : vector<8x1024xf32>
    %cst_317 = arith.constant 0.000000e+00 : f32
    %613 = vector.broadcast %cst_317 : f32 to vector<8x1024xf32>
    %614 = arith.maximumf %612, %613 : vector<8x1024xf32>
    %615 = arith.truncf %614 : vector<8x1024xf32> to vector<8x1024xbf16>
    %c0_318 = arith.constant 0 : index
    %c0_319 = arith.constant 0 : index
    %616 = vector.load %arg14[%c0_318, %c0_319] : memref<1024x512xbf16, #tpu.memory_space<vmem>>, vector<1024x512xbf16>
    %cst_320 = arith.constant dense<0.000000e+00> : vector<8x512xf32>
    %617 = tpu.matmul %615, %616, %cst_320 {dimension_numbers = #tpu.dot_dimension_numbers<[1], [0], [0], [1], [0, 0, 1, 1], [], []>} : vector<8x1024xbf16>, vector<1024x512xbf16>, vector<8x512xf32> -> vector<8x512xf32>
    %c0_321 = arith.constant 0 : index
    %c0_322 = arith.constant 0 : index
    %618 = vector.load %arg15[%c0_321, %c0_322] : memref<1x512xf32, #tpu.memory_space<vmem>>, vector<1x512xf32>
    %619 = vector.broadcast %618 : vector<1x512xf32> to vector<8x512xf32>
    %620 = arith.addf %617, %619 : vector<8x512xf32>
    %cst_323 = arith.constant 0.000000e+00 : f32
    %621 = vector.broadcast %cst_323 : f32 to vector<8x512xf32>
    %622 = arith.maximumf %620, %621 : vector<8x512xf32>
    %623 = arith.truncf %622 : vector<8x512xf32> to vector<8x512xbf16>
    %c0_324 = arith.constant 0 : index
    %c0_325 = arith.constant 0 : index
    %624 = vector.load %arg16[%c0_324, %c0_325] : memref<512x256xbf16, #tpu.memory_space<vmem>>, vector<512x256xbf16>
    %cst_326 = arith.constant dense<0.000000e+00> : vector<8x256xf32>
    %625 = tpu.matmul %623, %624, %cst_326 {dimension_numbers = #tpu.dot_dimension_numbers<[1], [0], [0], [1], [0, 0, 1, 1], [], []>} : vector<8x512xbf16>, vector<512x256xbf16>, vector<8x256xf32> -> vector<8x256xf32>
    %c0_327 = arith.constant 0 : index
    %c0_328 = arith.constant 0 : index
    %626 = vector.load %arg17[%c0_327, %c0_328] : memref<1x256xf32, #tpu.memory_space<vmem>>, vector<1x256xf32>
    %627 = vector.broadcast %626 : vector<1x256xf32> to vector<8x256xf32>
    %628 = arith.addf %625, %627 : vector<8x256xf32>
    %c0_329 = arith.constant 0 : index
    %c0_330 = arith.constant 0 : index
    %629 = vector.load %arg19[%c0_329, %c0_330] : memref<8x256xf32, #tpu.memory_space<vmem>>, vector<8x256xf32>
    tpu.vector_store %arg19[%c0_329, %c0_330], %628 {strides = array<i32>} : memref<8x256xf32, #tpu.memory_space<vmem>>, vector<8x256xf32>,
    return
  }
  func.func @transform_0(%arg0: i32) -> (i32, i32) {
    %c0_i32 = arith.constant 0 : i32
    %c0_i32_0 = arith.constant 0 : i32
    return %arg0, %c0_i32 : i32, i32
  }
  func.func @transform_1(%arg0: i32) -> (i32, i32) {
    %c0_i32 = arith.constant 0 : i32
    %c0_i32_0 = arith.constant 0 : i32
    return %arg0, %c0_i32 : i32, i32
  }
  func.func @transform_2(%arg0: i32) -> (i32, i32) {
    %c0_i32 = arith.constant 0 : i32
    %c0_i32_0 = arith.constant 0 : i32
    return %arg0, %c0_i32 : i32, i32
  }
  func.func @transform_3(%arg0: i32) -> (i32, i32) {
    %c0_i32 = arith.constant 0 : i32
    %c0_i32_0 = arith.constant 0 : i32
    return %arg0, %c0_i32 : i32, i32
  }
  func.func @transform_4(%arg0: i32) -> (i32, i32) {
    %c0_i32 = arith.constant 0 : i32
    %c0_i32_0 = arith.constant 0 : i32
    %c0_i32_1 = arith.constant 0 : i32
    return %c0_i32, %c0_i32_0 : i32, i32
  }
  func.func @transform_5(%arg0: i32) -> (i32, i32) {
    %c0_i32 = arith.constant 0 : i32
    %c0_i32_0 = arith.constant 0 : i32
    %c0_i32_1 = arith.constant 0 : i32
    return %c0_i32, %c0_i32_0 : i32, i32
  }
  func.func @transform_6(%arg0: i32) -> (i32, i32) {
    %c0_i32 = arith.constant 0 : i32
    %c0_i32_0 = arith.constant 0 : i32
    %c0_i32_1 = arith.constant 0 : i32
    return %c0_i32, %c0_i32_0 : i32, i32
  }
  func.func @transform_7(%arg0: i32) -> (i32, i32) {
    %c0_i32 = arith.constant 0 : i32
    %c0_i32_0 = arith.constant 0 : i32
    %c0_i32_1 = arith.constant 0 : i32
    return %c0_i32, %c0_i32_0 : i32, i32
  }
  func.func @transform_8(%arg0: i32) -> (i32, i32) {
    %c0_i32 = arith.constant 0 : i32
    %c0_i32_0 = arith.constant 0 : i32
    %c0_i32_1 = arith.constant 0 : i32
    return %c0_i32, %c0_i32_0 : i32, i32
  }
  func.func @transform_9(%arg0: i32) -> (i32, i32) {
    %c0_i32 = arith.constant 0 : i32
    %c0_i32_0 = arith.constant 0 : i32
    %c0_i32_1 = arith.constant 0 : i32
    return %c0_i32, %c0_i32_0 : i32, i32
  }
  func.func @transform_10(%arg0: i32) -> (i32, i32) {
    %c0_i32 = arith.constant 0 : i32
    %c0_i32_0 = arith.constant 0 : i32
    %c0_i32_1 = arith.constant 0 : i32
    return %c0_i32, %c0_i32_0 : i32, i32
  }
  func.func @transform_11(%arg0: i32) -> (i32, i32) {
    %c0_i32 = arith.constant 0 : i32
    %c0_i32_0 = arith.constant 0 : i32
    %c0_i32_1 = arith.constant 0 : i32
    return %c0_i32, %c0_i32_0 : i32, i32
  }
  func.func @transform_12(%arg0: i32) -> (i32, i32) {
    %c0_i32 = arith.constant 0 : i32
    %c0_i32_0 = arith.constant 0 : i32
    %c0_i32_1 = arith.constant 0 : i32
    return %c0_i32, %c0_i32_0 : i32, i32
  }
  func.func @transform_13(%arg0: i32) -> (i32, i32) {
    %c0_i32 = arith.constant 0 : i32
    %c0_i32_0 = arith.constant 0 : i32
    %c0_i32_1 = arith.constant 0 : i32
    return %c0_i32, %c0_i32_0 : i32, i32
  }
  func.func @transform_14(%arg0: i32) -> (i32, i32) {
    %c0_i32 = arith.constant 0 : i32
    %c0_i32_0 = arith.constant 0 : i32
    %c0_i32_1 = arith.constant 0 : i32
    return %c0_i32, %c0_i32_0 : i32, i32
  }
  func.func @transform_15(%arg0: i32) -> (i32, i32) {
    %c0_i32 = arith.constant 0 : i32
    %c0_i32_0 = arith.constant 0 : i32
    %c0_i32_1 = arith.constant 0 : i32
    return %c0_i32, %c0_i32_0 : i32, i32
  }
  func.func @transform_16(%arg0: i32) -> (i32, i32) {
    %c0_i32 = arith.constant 0 : i32
    %c0_i32_0 = arith.constant 0 : i32
    %c0_i32_1 = arith.constant 0 : i32
    return %c0_i32, %c0_i32_0 : i32, i32
  }
  func.func @transform_17(%arg0: i32) -> (i32, i32) {
    %c0_i32 = arith.constant 0 : i32
    %c0_i32_0 = arith.constant 0 : i32
    return %arg0, %c0_i32 : i32, i32
  }
  func.func @transform_18(%arg0: i32) -> (i32, i32) {
    %c0_i32 = arith.constant 0 : i32
    %c0_i32_0 = arith.constant 0 : i32
    return %arg0, %c0_i32 : i32, i32
  }
}

</mosaic_0001>

<llo_original>
// kernel: emo_speech_auth_forward.1
$region0: #{emo_speech_auth_forward.1}
  #allocation0 [shape = 'u32[]', space=smem, size = 0x4, offset = 0x4, fixed_abs, tag = 'smem constant byte address 0x4 - core index']
  #allocation1 [shape = 'u32[72,128]{1,0:T(1,128)}', space=vmem, size = 0x9000, scoped, tag = 'internal scratch']
  #allocation2 [shape = 'f32[8,192]{1,0:T(8,128)}', space=vmem, size = 0x2000, scoped, tag = 'scratch operand']
  #allocation3 [shape = 'f32[8,192]{1,0:T(8,128)}', space=vmem, size = 0x2000, scoped, tag = 'scratch operand']
  #allocation4 [shape = 'f32[8,192]{1,0:T(8,128)}', space=vmem, size = 0x2000, scoped, tag = 'scratch operand']
  #allocation5 [shape = 'f32[8,384]{1,0:T(8,128)}', space=vmem, size = 0x3000, scoped, tag = 'scratch operand']
  #allocation6 [shape = 'f32[8,192]{1,0:T(8,128)}', space=vmem, size = 0x2000, scoped, tag = 'scratch operand']
  %s0 = inlined_call_operand.vmem [shape: f32[8,768], index: 0, kind: input, shape index: {}]
  %s1 = inlined_call_operand.vmem [shape: f32[8,192], index: 1, kind: input, shape index: {}]
  %s2 = inlined_call_operand.vmem [shape: f32[8,768], index: 2, kind: input, shape index: {}]
  %s3 = inlined_call_operand.vmem [shape: f32[8,192], index: 3, kind: input, shape index: {}]
  %s4 = inlined_call_operand.vmem [shape: bf16[768,192], index: 4, kind: input, shape index: {}]
  %s5 = inlined_call_operand.hbm [shape: f32[1,192], index: 5, kind: input, shape index: {}]
  %s6 = inlined_call_operand.vmem [shape: bf16[192,192], index: 6, kind: input, shape index: {}]
  %s7 = inlined_call_operand.hbm [shape: f32[1,192], index: 7, kind: input, shape index: {}]
  %s8 = inlined_call_operand.hbm [shape: bf16[192,384], index: 8, kind: input, shape index: {}]
  %s9 = inlined_call_operand.hbm [shape: f32[1,384], index: 9, kind: input, shape index: {}]
  %s10 = inlined_call_operand.hbm [shape: f32[1,48], index: 10, kind: input, shape index: {}]
  %s11 = inlined_call_operand.vmem [shape: bf16[192,1024], index: 11, kind: input, shape index: {}]
  %s12 = inlined_call_operand.vmem [shape: f32[1,1024], index: 12, kind: input, shape index: {}]
  %s13 = inlined_call_operand.hbm [shape: bf16[1024,512], index: 13, kind: input, shape index: {}]
  %s14 = inlined_call_operand.vmem [shape: f32[1,512], index: 14, kind: input, shape index: {}]
  %s15 = inlined_call_operand.vmem [shape: bf16[512,256], index: 15, kind: input, shape index: {}]
  %s16 = inlined_call_operand.hbm [shape: f32[1,256], index: 16, kind: input, shape index: {}]
  %s17 = inlined_call_operand.vmem [shape: f32[8,256], index: 17, kind: output, shape index: {0}]
  %s18 = inlined_call_operand.vmem [shape: f32[8,256], index: 18, kind: output, shape index: {1}]
  %19 = xla_tuple %s17, %s18
  %s20 = sld [smem:[#allocation0]]
  $region114: #{emo_speech_auth_forward.1} parent=0
    _
  %s22 = ssub.s32 1, %s20
  %s23 = scalar_select 0, %s22, %s20
  $region1: #{emo_speech_auth_forward.1} parent=0
    #allocation7 [shape = 'u8[1024]{0}', space=vmem, size = 0x400, scoped, tag = 'input window, operand 5, single buffered']
    #allocation8 [shape = 's32[1]{0}', space=sflag, size = 0x4, scoped, tag = 'scoped memory for emo_speech_auth_forward.1']
    #allocation9 [shape = 'u8[1024]{0}', space=vmem, size = 0x400, scoped, tag = 'input window, operand 7, single buffered']
    #allocation10 [shape = 's32[1]{0}', space=sflag, size = 0x4, scoped, tag = 'scoped memory for emo_speech_auth_forward.1']
    #allocation11 [shape = 'u8[147456]{0}', space=vmem, size = 0x24000, scoped, tag = 'input window, operand 8, single buffered']
    #allocation12 [shape = 'u8[1536]{0}', space=vmem, size = 0x800, scoped, tag = 'input window, operand 9, single buffered']
    #allocation13 [shape = 's32[1]{0}', space=sflag, size = 0x4, scoped, tag = 'scoped memory for emo_speech_auth_forward.1']
    #allocation14 [shape = 'u8[512]{0}', space=vmem, size = 0x400, scoped, tag = 'input window, operand 10, single buffered']
    #allocation15 [shape = 'u8[1048576]{0}', space=vmem, size = 0x100000, scoped, tag = 'input window, operand 13, single buffered']
    #allocation16 [shape = 's32[1]{0}', space=sflag, size = 0x4, scoped, tag = 'scoped memory for emo_speech_auth_forward.1']
    #allocation17 [shape = 'u8[1024]{0}', space=vmem, size = 0x400, scoped, tag = 'input window, operand 16, single buffered']
    %24 = vsyncpa [#allocation8], 0
    %25 = vsyncpa [#allocation10], 0
    %26 = vsyncpa [#allocation13], 0
    %27 = vsyncpa [#allocation16], 0
    // Predicated region
    $region2: #{emo_speech_auth_forward.1} parent=1 // pred_check
      _
    $region3: #{emo_speech_auth_forward.1} parent=1 // pred_check_branch
      %29 = sbr.rel (0) target = $region5
    $region4: #{emo_speech_auth_forward.1} parent=1 // pred_region
      _
    $region5: #{emo_speech_auth_forward.1} parent=1 // pred_fallthru
      _
    // Predicated region
    $region6: #{emo_speech_auth_forward.1} parent=1 // pred_check
      _
    $region7: #{emo_speech_auth_forward.1} parent=1 // pred_check_branch
      %31 = sbr.rel (0) target = $region9
    $region8: #{emo_speech_auth_forward.1} parent=1 // pred_region
      _
    $region9: #{emo_speech_auth_forward.1} parent=1 // pred_fallthru
      _
    // Predicated region
    $region10: #{emo_speech_auth_forward.1} parent=1 // pred_check
      _
    $region11: #{emo_speech_auth_forward.1} parent=1 // pred_check_branch
      %33 = sbr.rel (0) target = $region13
    $region12: #{emo_speech_auth_forward.1} parent=1 // pred_region
      _
    $region13: #{emo_speech_auth_forward.1} parent=1 // pred_fallthru
      _
    // Predicated region
    $region14: #{emo_speech_auth_forward.1} parent=1 // pred_check
      _
    $region15: #{emo_speech_auth_forward.1} parent=1 // pred_check_branch
      %35 = sbr.rel (0) target = $region17
    $region16: #{emo_speech_auth_forward.1} parent=1 // pred_region
      _
    $region17: #{emo_speech_auth_forward.1} parent=1 // pred_fallthru
      _
    // Predicated region
    $region18: #{emo_speech_auth_forward.1} parent=1 // pred_check
      _
    $region19: #{emo_speech_auth_forward.1} parent=1 // pred_check_branch
      %37 = sbr.rel (0) target = $region21
    $region20: #{emo_speech_auth_forward.1} parent=1 // pred_region
      _
    $region21: #{emo_speech_auth_forward.1} parent=1 // pred_fallthru
      _
    // Predicated region
    $region22: #{emo_speech_auth_forward.1} parent=1 // pred_check
      _
    $region23: #{emo_speech_auth_forward.1} parent=1 // pred_check_branch
      %39 = sbr.rel (0) target = $region25
    $region24: #{emo_speech_auth_forward.1} parent=1 // pred_region
      %41 = vsyncadd [#allocation8], 0
      %s43 = sshll.u32 %s5, 4
      %s44 = int_to_ptr.hbm [resolvable:$true] %s43
      %s45 = sshll.u32 [#allocation7], 4
      %s46 = int_to_ptr.vmem [resolvable:$true] %s45
      %48 = dma.hbm_to_vmem [thread:$0]  %s44, 32, %s46, [#allocation8]
    $region25: #{emo_speech_auth_forward.1} parent=1 // pred_fallthru
      _
    // Predicated region
    $region26: #{emo_speech_auth_forward.1} parent=1 // pred_check
      _
    $region27: #{emo_speech_auth_forward.1} parent=1 // pred_check_branch
      %50 = sbr.rel (0) target = $region29
    $region28: #{emo_speech_auth_forward.1} parent=1 // pred_region
      _
    $region29: #{emo_speech_auth_forward.1} parent=1 // pred_fallthru
      _
    // Predicated region
    $region30: #{emo_speech_auth_forward.1} parent=1 // pred_check
      _
    $region31: #{emo_speech_auth_forward.1} parent=1 // pred_check_branch
      %52 = sbr.rel (0) target = $region33
    $region32: #{emo_speech_auth_forward.1} parent=1 // pred_region
      %54 = vsyncadd [#allocation10], 0
      %s56 = sshll.u32 %s7, 4
      %s57 = int_to_ptr.hbm [resolvable:$true] %s56
      %s58 = sshll.u32 [#allocation9], 4
      %s59 = int_to_ptr.vmem [resolvable:$true] %s58
      %61 = dma.hbm_to_vmem [thread:$0]  %s57, 32, %s59, [#allocation10]
    $region33: #{emo_speech_auth_forward.1} parent=1 // pred_fallthru
      _
    // Predicated region
    $region34: #{emo_speech_auth_forward.1} parent=1 // pred_check
      _
    $region35: #{emo_speech_auth_forward.1} parent=1 // pred_check_branch
      %63 = sbr.rel (0) target = $region37
    $region36: #{emo_speech_auth_forward.1} parent=1 // pred_region
      %65 = vsyncadd [#allocation10], 0
      %s66 = sshll.u32 %s8, 4
      %s67 = int_to_ptr.hbm [resolvable:$true] %s66
      %s68 = sshll.u32 [#allocation11], 4
      %s69 = int_to_ptr.vmem [resolvable:$true] %s68
      %74 = dma.hbm_to_vmem [thread:$0]  %s67, 4608, %s69, [#allocation10], 192, 192, 12
    $region37: #{emo_speech_auth_forward.1} parent=1 // pred_fallthru
      _
    // Predicated region
    $region38: #{emo_speech_auth_forward.1} parent=1 // pred_check
      _
    $region39: #{emo_speech_auth_forward.1} parent=1 // pred_check_branch
      %76 = sbr.rel (0) target = $region41
    $region40: #{emo_speech_auth_forward.1} parent=1 // pred_region
      %78 = vsyncadd [#allocation13], 0
      %s80 = sshll.u32 %s9, 4
      %s81 = int_to_ptr.hbm [resolvable:$true] %s80
      %s82 = sshll.u32 [#allocation12], 4
      %s83 = int_to_ptr.vmem [resolvable:$true] %s82
      %85 = dma.hbm_to_vmem [thread:$0]  %s81, 48, %s83, [#allocation13]
    $region41: #{emo_speech_auth_forward.1} parent=1 // pred_fallthru
      _
    // Predicated region
    $region42: #{emo_speech_auth_forward.1} parent=1 // pred_check
      _
    $region43: #{emo_speech_auth_forward.1} parent=1 // pred_check_branch
      %87 = sbr.rel (0) target = $region45
    $region44: #{emo_speech_auth_forward.1} parent=1 // pred_region
      %89 = vsyncadd [#allocation13], 0
      %s91 = sshll.u32 %s10, 4
      %s92 = int_to_ptr.hbm [resolvable:$true] %s91
      %s93 = sshll.u32 [#allocation14], 4
      %s94 = int_to_ptr.vmem [resolvable:$true] %s93
      %96 = dma.hbm_to_vmem [thread:$0]  %s92, 16, %s94, [#allocation13]
    $region45: #{emo_speech_auth_forward.1} parent=1 // pred_fallthru
      _
    // Predicated region
    $region46: #{emo_speech_auth_forward.1} parent=1 // pred_check
      _
    $region47: #{emo_speech_auth_forward.1} parent=1 // pred_check_branch
      %98 = sbr.rel (0) target = $region49
    $region48: #{emo_speech_auth_forward.1} parent=1 // pred_region
      _
    $region49: #{emo_speech_auth_forward.1} parent=1 // pred_fallthru
      _
    // Predicated region
    $region50: #{emo_speech_auth_forward.1} parent=1 // pred_check
      _
    $region51: #{emo_speech_auth_forward.1} parent=1 // pred_check_branch
      %100 = sbr.rel (0) target = $region53
    $region52: #{emo_speech_auth_forward.1} parent=1 // pred_region
      _
    $region53: #{emo_speech_auth_forward.1} parent=1 // pred_fallthru
      _
    // Predicated region
    $region54: #{emo_speech_auth_forward.1} parent=1 // pred_check
      _
    $region55: #{emo_speech_auth_forward.1} parent=1 // pred_check_branch
      %102 = sbr.rel (0) target = $region57
    $region56: #{emo_speech_auth_forward.1} parent=1 // pred_region
      %104 = vsyncadd [#allocation16], 0
      %s105 = sshll.u32 %s13, 4
      %s106 = int_to_ptr.hbm [resolvable:$true] %s105
      %s107 = sshll.u32 [#allocation15], 4
      %s108 = int_to_ptr.vmem [resolvable:$true] %s107
      %113 = dma.hbm_to_vmem [thread:$0]  %s106, 32768, %s108, [#allocation16], 256, 256, 16
    $region57: #{emo_speech_auth_forward.1} parent=1 // pred_fallthru
      _
    // Predicated region
    $region58: #{emo_speech_auth_forward.1} parent=1 // pred_check
      _
    $region59: #{emo_speech_auth_forward.1} parent=1 // pred_check_branch
      %115 = sbr.rel (0) target = $region61
    $region60: #{emo_speech_auth_forward.1} parent=1 // pred_region
      _
    $region61: #{emo_speech_auth_forward.1} parent=1 // pred_fallthru
      _
    // Predicated region
    $region62: #{emo_speech_auth_forward.1} parent=1 // pred_check
      _
    $region63: #{emo_speech_auth_forward.1} parent=1 // pred_check_branch
      %117 = sbr.rel (0) target = $region65
    $region64: #{emo_speech_auth_forward.1} parent=1 // pred_region
      _
    $region65: #{emo_speech_auth_forward.1} parent=1 // pred_fallthru
      _
    // Predicated region
    $region66: #{emo_speech_auth_forward.1} parent=1 // pred_check
      _
    $region67: #{emo_speech_auth_forward.1} parent=1 // pred_check_branch
      %119 = sbr.rel (0) target = $region69
    $region68: #{emo_speech_auth_forward.1} parent=1 // pred_region
      %121 = vsyncadd [#allocation16], 0
      %s123 = sshll.u32 %s16, 4
      %s124 = int_to_ptr.hbm [resolvable:$true] %s123
      %s125 = sshll.u32 [#allocation17], 4
      %s126 = int_to_ptr.vmem [resolvable:$true] %s125
      %128 = dma.hbm_to_vmem [thread:$0]  %s124, 32, %s126, [#allocation16]
    $region69: #{emo_speech_auth_forward.1} parent=1 // pred_fallthru
      _
    // Predicated region
    $region70: #{emo_speech_auth_forward.1} parent=1 // pred_check
      _
    $region71: #{emo_speech_auth_forward.1} parent=1 // pred_check_branch
      %130 = sbr.rel (0) target = $region73
    $region72: #{emo_speech_auth_forward.1} parent=1 // pred_region
      %132 = dma.done [#allocation8], 32
    $region73: #{emo_speech_auth_forward.1} parent=1 // pred_fallthru
      _
    // Predicated region
    $region74: #{emo_speech_auth_forward.1} parent=1 // pred_check
      _
    $region75: #{emo_speech_auth_forward.1} parent=1 // pred_check_branch
      %134 = sbr.rel (0) target = $region77
    $region76: #{emo_speech_auth_forward.1} parent=1 // pred_region
      %136 = dma.done [#allocation10], 32
    $region77: #{emo_speech_auth_forward.1} parent=1 // pred_fallthru
      _
    // Predicated region
    $region78: #{emo_speech_auth_forward.1} parent=1 // pred_check
      _
    $region79: #{emo_speech_auth_forward.1} parent=1 // pred_check_branch
      %138 = sbr.rel (0) target = $region81
    $region80: #{emo_speech_auth_forward.1} parent=1 // pred_region
      %140 = dma.done [#allocation10], 4608
    $region81: #{emo_speech_auth_forward.1} parent=1 // pred_fallthru
      _
    // Predicated region
    $region82: #{emo_speech_auth_forward.1} parent=1 // pred_check
      _
    $region83: #{emo_speech_auth_forward.1} parent=1 // pred_check_branch
      %142 = sbr.rel (0) target = $region85
    $region84: #{emo_speech_auth_forward.1} parent=1 // pred_region
      %144 = dma.done [#allocation13], 48
    $region85: #{emo_speech_auth_forward.1} parent=1 // pred_fallthru
      _
    // Predicated region
    $region86: #{emo_speech_auth_forward.1} parent=1 // pred_check
      _
    $region87: #{emo_speech_auth_forward.1} parent=1 // pred_check_branch
      %146 = sbr.rel (0) target = $region89
    $region88: #{emo_speech_auth_forward.1} parent=1 // pred_region
      %148 = dma.done [#allocation13], 16
    $region89: #{emo_speech_auth_forward.1} parent=1 // pred_fallthru
      _
    // Predicated region
    $region90: #{emo_speech_auth_forward.1} parent=1 // pred_check
      _
    $region91: #{emo_speech_auth_forward.1} parent=1 // pred_check_branch
      %150 = sbr.rel (0) target = $region93
    $region92: #{emo_speech_auth_forward.1} parent=1 // pred_region
      %152 = dma.done [#allocation16], 32768
    $region93: #{emo_speech_auth_forward.1} parent=1 // pred_fallthru
      _
    // Predicated region
    $region94: #{emo_speech_auth_forward.1} parent=1 // pred_check
      _
    $region95: #{emo_speech_auth_forward.1} parent=1 // pred_check_branch
      %154 = sbr.rel (0) target = $region97
    $region96: #{emo_speech_auth_forward.1} parent=1 // pred_region
      %156 = dma.done [#allocation16], 32
    $region97: #{emo_speech_auth_forward.1} parent=1 // pred_fallthru
      _
    %v158 = vld [vmem:[%s0] sm:$0xff]
    %v159 = vld [vmem:[%s0 + $0x8] sm:$0xff]
    %v160 = vld [vmem:[%s0 + $0x10] sm:$0xff]
    %v161 = vld [vmem:[%s0 + $0x18] sm:$0xff]
    %v162 = vld [vmem:[%s0 + $0x20] sm:$0xff]
    %v163 = vld [vmem:[%s0 + $0x28] sm:$0xff]
    %v164 = vld [vmem:[%s1] sm:$0xff]
    %v165 = vld [vmem:[%s1 + $0x8] sm:$0xff]
    %v166 = vmul.f32 %v158, %v158
    %v167 = vmul.f32 %v159, %v159
    %v168 = vmul.f32 %v160, %v160
    %v169 = vmul.f32 %v161, %v161
    %v170 = vmul.f32 %v162, %v162
    %v171 = vmul.f32 %v163, %v163
    %v172 = vadd.f32 %v166, %v167
    %v173 = vadd.f32 %v172, %v168
    %v174 = vadd.f32 %v173, %v169
    %v175 = vadd.f32 %v174, %v170
    %v176 = vadd.f32 %v175, %v171
    %177 = vadd.xlane.f32.xlu0 %v176
    %v178 = vpop.xlane.xlu0 %177
    %v179 = vmax.f32 %v178, 1e-24
    %v180 = vrsqrt.pop %v179
    %v181 = vmul.f32 %v180, %v179
    %v182 = vmul.f32 %v181, %v180
    %v183 = vmul.f32 0.5, %v182
    %v184 = vsub.f32 1.5, %v183
    %v185 = vmul.f32 %v180, %v184
    %vm186 = vweird.f32 %v179
    %vm187 = vweird.f32 %v180
    %vm188 = vmor %vm186, %vm187
    %v189 = vsel %vm188, %v180, %v185
    %v190 = vmul.f32 %v158, %v189
    %v191 = vmul.f32 %v159, %v189
    %v192 = vmul.f32 %v160, %v189
    %v193 = vmul.f32 %v161, %v189
    %v194 = vmul.f32 %v162, %v189
    %v195 = vmul.f32 %v163, %v189
    %v196 = vmul.f32 %v164, %v164
    %v197 = vmul.f32 %v165, %v165
    %vm198 = vcmask 523264
    %v199 = vsel %vm198, %v197, 0.0
    %v200 = vadd.f32 %v196, %v199
    %201 = vadd.xlane.f32.xlu0 %v200
    %v202 = vpop.xlane.xlu0 %201
    %v203 = vmax.f32 %v202, 1e-24
    %v204 = vrsqrt.pop %v203
    %v205 = vmul.f32 %v204, %v203
    %v206 = vmul.f32 %v205, %v204
    %v207 = vmul.f32 0.5, %v206
    %v208 = vsub.f32 1.5, %v207
    %v209 = vmul.f32 %v204, %v208
    %vm210 = vweird.f32 %v203
    %vm211 = vweird.f32 %v204
    %vm212 = vmor %vm210, %vm211
    %v213 = vsel %vm212, %v204, %v209
    %v214 = vmul.f32 %v164, %v213
    %v215 = vmul.f32 %v165, %v213
    %216 = vst [vmem:[#allocation2] sm:$0xff] %v214
    %217 = vst.msk [vmem:[#allocation2 + $0x8] sm:$0xff] %vm198, %v215
    %v218 = vpack.c.bf16 %v190, %v190
    %v219 = vpack.c.bf16 %v191, %v191
    %v220 = vpack.c.bf16 %v192, %v192
    %v221 = vpack.c.bf16 %v193, %v193
    %v222 = vpack.c.bf16 %v194, %v194
    %v223 = vpack.c.bf16 %v195, %v195
    %v224 = vld [vmem:[%s4] sm:$0xff]
    %v225 = vld [vmem:[%s4 + $0x8] sm:$0xff]
    %v226 = vld [vmem:[%s4 + $0x10] sm:$0xff]
    %v227 = vld [vmem:[%s4 + $0x18] sm:$0xff]
    %v228 = vld [vmem:[%s4 + $0x20] sm:$0xff]
    %v229 = vld [vmem:[%s4 + $0x28] sm:$0xff]
    %v230 = vld [vmem:[%s4 + $0x30] sm:$0xff]
    %v231 = vld [vmem:[%s4 + $0x38] sm:$0xff]
    %v232 = vld [vmem:[%s4 + $0x40] sm:$0xff]
    %v233 = vld [vmem:[%s4 + $0x48] sm:$0xff]
    %v234 = vld [vmem:[%s4 + $0x50] sm:$0xff]
    %v235 = vld [vmem:[%s4 + $0x58] sm:$0xff]
    %v236 = vld [vmem:[%s4 + $0x60] sm:$0xff]
    %v237 = vld [vmem:[%s4 + $0x68] sm:$0xff]
    %v238 = vld [vmem:[%s4 + $0x70] sm:$0xff]
    %v239 = vld [vmem:[%s4 + $0x78] sm:$0xff]
    %v240 = vld [vmem:[%s4 + $0x80] sm:$0xff]
    %v241 = vld [vmem:[%s4 + $0x88] sm:$0xff]
    %v242 = vld [vmem:[%s4 + $0x90] sm:$0xff]
    %v243 = vld [vmem:[%s4 + $0x98] sm:$0xff]
    %v244 = vld [vmem:[%s4 + $0xa0] sm:$0xff]
    %v245 = vld [vmem:[%s4 + $0xa8] sm:$0xff]
    %v246 = vld [vmem:[%s4 + $0xb0] sm:$0xff]
    %v247 = vld [vmem:[%s4 + $0xb8] sm:$0xff]
    %v248 = vld [vmem:[%s4 + $0xc0] sm:$0xff]
    %v249 = vld [vmem:[%s4 + $0xc8] sm:$0xff]
    %v250 = vld [vmem:[%s4 + $0xd0] sm:$0xff]
    %v251 = vld [vmem:[%s4 + $0xd8] sm:$0xff]
    %v252 = vld [vmem:[%s4 + $0xe0] sm:$0xff]
    %v253 = vld [vmem:[%s4 + $0xe8] sm:$0xff]
    %v254 = vld [vmem:[%s4 + $0xf0] sm:$0xff]
    %v255 = vld [vmem:[%s4 + $0xf8] sm:$0xff]
    %v256 = vld [vmem:[%s4 + $0x100] sm:$0xff]
    %v257 = vld [vmem:[%s4 + $0x108] sm:$0xff]
    %v258 = vld [vmem:[%s4 + $0x110] sm:$0xff]
    %v259 = vld [vmem:[%s4 + $0x118] sm:$0xff]
    %v260 = vld [vmem:[%s4 + $0x120] sm:$0xff]
    %v261 = vld [vmem:[%s4 + $0x128] sm:$0xff]
    %v262 = vld [vmem:[%s4 + $0x130] sm:$0xff]
    %v263 = vld [vmem:[%s4 + $0x138] sm:$0xff]
    %v264 = vld [vmem:[%s4 + $0x140] sm:$0xff]
    %v265 = vld [vmem:[%s4 + $0x148] sm:$0xff]
    %v266 = vld [vmem:[%s4 + $0x150] sm:$0xff]
    %v267 = vld [vmem:[%s4 + $0x158] sm:$0xff]
    %v268 = vld [vmem:[%s4 + $0x160] sm:$0xff]
    %v269 = vld [vmem:[%s4 + $0x168] sm:$0xff]
    %v270 = vld [vmem:[%s4 + $0x170] sm:$0xff]
    %v271 = vld [vmem:[%s4 + $0x178] sm:$0xff]
    %v272 = vld [vmem:[%s4 + $0x180] sm:$0xff]
    %v273 = vld [vmem:[%s4 + $0x188] sm:$0xff]
    %v274 = vld [vmem:[%s4 + $0x190] sm:$0xff]
    %v275 = vld [vmem:[%s4 + $0x198] sm:$0xff]
    %v276 = vld [vmem:[%s4 + $0x1a0] sm:$0xff]
    %v277 = vld [vmem:[%s4 + $0x1a8] sm:$0xff]
    %v278 = vld [vmem:[%s4 + $0x1b0] sm:$0xff]
    %v279 = vld [vmem:[%s4 + $0x1b8] sm:$0xff]
    %v280 = vld [vmem:[%s4 + $0x1c0] sm:$0xff]
    %v281 = vld [vmem:[%s4 + $0x1c8] sm:$0xff]
    %v282 = vld [vmem:[%s4 + $0x1d0] sm:$0xff]
    %v283 = vld [vmem:[%s4 + $0x1d8] sm:$0xff]
    %v284 = vld [vmem:[%s4 + $0x1e0] sm:$0xff]
    %v285 = vld [vmem:[%s4 + $0x1e8] sm:$0xff]
    %v286 = vld [vmem:[%s4 + $0x1f0] sm:$0xff]
    %v287 = vld [vmem:[%s4 + $0x1f8] sm:$0xff]
    %v288 = vld [vmem:[%s4 + $0x200] sm:$0xff]
    %v289 = vld [vmem:[%s4 + $0x208] sm:$0xff]
    %v290 = vld [vmem:[%s4 + $0x210] sm:$0xff]
    %v291 = vld [vmem:[%s4 + $0x218] sm:$0xff]
    %v292 = vld [vmem:[%s4 + $0x220] sm:$0xff]
    %v293 = vld [vmem:[%s4 + $0x228] sm:$0xff]
    %v294 = vld [vmem:[%s4 + $0x230] sm:$0xff]
    %v295 = vld [vmem:[%s4 + $0x238] sm:$0xff]
    %v296 = vld [vmem:[%s4 + $0x240] sm:$0xff]
    %v297 = vld [vmem:[%s4 + $0x248] sm:$0xff]
    %v298 = vld [vmem:[%s4 + $0x250] sm:$0xff]
    %v299 = vld [vmem:[%s4 + $0x258] sm:$0xff]
    %v300 = vld [vmem:[%s4 + $0x260] sm:$0xff]
    %v301 = vld [vmem:[%s4 + $0x268] sm:$0xff]
    %v302 = vld [vmem:[%s4 + $0x270] sm:$0xff]
    %v303 = vld [vmem:[%s4 + $0x278] sm:$0xff]
    %v304 = vld [vmem:[%s4 + $0x280] sm:$0xff]
    %v305 = vld [vmem:[%s4 + $0x288] sm:$0xff]
    %v306 = vld [vmem:[%s4 + $0x290] sm:$0xff]
    %v307 = vld [vmem:[%s4 + $0x298] sm:$0xff]
    %v308 = vld [vmem:[%s4 + $0x2a0] sm:$0xff]
    %v309 = vld [vmem:[%s4 + $0x2a8] sm:$0xff]
    %v310 = vld [vmem:[%s4 + $0x2b0] sm:$0xff]
    %v311 = vld [vmem:[%s4 + $0x2b8] sm:$0xff]
    %v312 = vld [vmem:[%s4 + $0x2c0] sm:$0xff]
    %v313 = vld [vmem:[%s4 + $0x2c8] sm:$0xff]
    %v314 = vld [vmem:[%s4 + $0x2d0] sm:$0xff]
    %v315 = vld [vmem:[%s4 + $0x2d8] sm:$0xff]
    %v316 = vld [vmem:[%s4 + $0x2e0] sm:$0xff]
    %v317 = vld [vmem:[%s4 + $0x2e8] sm:$0xff]
    %v318 = vld [vmem:[%s4 + $0x2f0] sm:$0xff]
    %v319 = vld [vmem:[%s4 + $0x2f8] sm:$0xff]
    %v320 = vld [vmem:[#allocation7] sm:$0x3]
    %v322 = vperm.slane %v320, 0
    %v323 = vperm.slane %v320, 1
    %v422 = vunpack.c.l.b16 %v224
    %v423 = vunpack.c.h.b16 %v224
    %v424 = vunpack.c.l.b16 %v225
    %v425 = vunpack.c.h.b16 %v225
    %v426 = vunpack.c.l.b16 %v226
    %v427 = vunpack.c.h.b16 %v226
    %v428 = vunpack.c.l.b16 %v227
    %v429 = vunpack.c.h.b16 %v227
    %v430 = vunpack.c.l.b16 %v228
    %v431 = vunpack.c.h.b16 %v228
    %v432 = vunpack.c.l.b16 %v229
    %v433 = vunpack.c.h.b16 %v229
    %v434 = vunpack.c.l.b16 %v230
    %v435 = vunpack.c.h.b16 %v230
    %v436 = vunpack.c.l.b16 %v231
    %v437 = vunpack.c.h.b16 %v231
    %v438 = vunpack.c.l.b16 %v232
    %v439 = vunpack.c.h.b16 %v232
    %v440 = vunpack.c.l.b16 %v233
    %v441 = vunpack.c.h.b16 %v233
    %v442 = vunpack.c.l.b16 %v234
    %v443 = vunpack.c.h.b16 %v234
    %v444 = vunpack.c.l.b16 %v235
    %v445 = vunpack.c.h.b16 %v235
    %v446 = vunpack.c.l.b16 %v236
    %v447 = vunpack.c.h.b16 %v236
    %v448 = vunpack.c.l.b16 %v237
    %v449 = vunpack.c.h.b16 %v237
    %v450 = vunpack.c.l.b16 %v238
    %v451 = vunpack.c.h.b16 %v238
    %v452 = vunpack.c.l.b16 %v239
    %v453 = vunpack.c.h.b16 %v239
    %v454 = vunpack.c.l.b16 %v240
    %v455 = vunpack.c.h.b16 %v240
    %v456 = vunpack.c.l.b16 %v241
    %v457 = vunpack.c.h.b16 %v241
    %v458 = vunpack.c.l.b16 %v242
    %v459 = vunpack.c.h.b16 %v242
    %v460 = vunpack.c.l.b16 %v243
    %v461 = vunpack.c.h.b16 %v243
    %v462 = vunpack.c.l.b16 %v244
    %v463 = vunpack.c.h.b16 %v244
    %v464 = vunpack.c.l.b16 %v245
    %v465 = vunpack.c.h.b16 %v245
    %v466 = vunpack.c.l.b16 %v246
    %v467 = vunpack.c.h.b16 %v246
    %v468 = vunpack.c.l.b16 %v247
    %v469 = vunpack.c.h.b16 %v247
    %v470 = vunpack.c.l.b16 %v248
    %v471 = vunpack.c.h.b16 %v248
    %v472 = vunpack.c.l.b16 %v249
    %v473 = vunpack.c.h.b16 %v249
    %v474 = vunpack.c.l.b16 %v250
    %v475 = vunpack.c.h.b16 %v250
    %v476 = vunpack.c.l.b16 %v251
    %v477 = vunpack.c.h.b16 %v251
    %v478 = vunpack.c.l.b16 %v252
    %v479 = vunpack.c.h.b16 %v252
    %v480 = vunpack.c.l.b16 %v253
    %v481 = vunpack.c.h.b16 %v253
    %v482 = vunpack.c.l.b16 %v254
    %v483 = vunpack.c.h.b16 %v254
    %v484 = vunpack.c.l.b16 %v255
    %v485 = vunpack.c.h.b16 %v255
    %v486 = vunpack.c.l.b16 %v256
    %v487 = vunpack.c.h.b16 %v256
    %v488 = vunpack.c.l.b16 %v257
    %v489 = vunpack.c.h.b16 %v257
    %v490 = vunpack.c.l.b16 %v258
    %v491 = vunpack.c.h.b16 %v258
    %v492 = vunpack.c.l.b16 %v259
    %v493 = vunpack.c.h.b16 %v259
    %v494 = vunpack.c.l.b16 %v260
    %v495 = vunpack.c.h.b16 %v260
    %v496 = vunpack.c.l.b16 %v261
    %v497 = vunpack.c.h.b16 %v261
    %v498 = vunpack.c.l.b16 %v262
    %v499 = vunpack.c.h.b16 %v262
    %v500 = vunpack.c.l.b16 %v263
    %v501 = vunpack.c.h.b16 %v263
    %v502 = vunpack.c.l.b16 %v264
    %v503 = vunpack.c.h.b16 %v264
    %v504 = vunpack.c.l.b16 %v265
    %v505 = vunpack.c.h.b16 %v265
    %v506 = vunpack.c.l.b16 %v266
    %v507 = vunpack.c.h.b16 %v266
    %v508 = vunpack.c.l.b16 %v267
    %v509 = vunpack.c.h.b16 %v267
    %v510 = vunpack.c.l.b16 %v268
    %v511 = vunpack.c.h.b16 %v268
    %v512 = vunpack.c.l.b16 %v269
    %v513 = vunpack.c.h.b16 %v269
    %v514 = vunpack.c.l.b16 %v270
    %v515 = vunpack.c.h.b16 %v270
    %v516 = vunpack.c.l.b16 %v271
    %v517 = vunpack.c.h.b16 %v271
    %v518 = vunpack.c.l.b16 %v272
    %v519 = vunpack.c.h.b16 %v272
    %v520 = vunpack.c.l.b16 %v273
    %v521 = vunpack.c.h.b16 %v273
    %v522 = vunpack.c.l.b16 %v274
    %v523 = vunpack.c.h.b16 %v274
    %v524 = vunpack.c.l.b16 %v275
    %v525 = vunpack.c.h.b16 %v275
    %v526 = vunpack.c.l.b16 %v276
    %v527 = vunpack.c.h.b16 %v276
    %v528 = vunpack.c.l.b16 %v277
    %v529 = vunpack.c.h.b16 %v277
    %v530 = vunpack.c.l.b16 %v278
    %v531 = vunpack.c.h.b16 %v278
    %v532 = vunpack.c.l.b16 %v279
    %v533 = vunpack.c.h.b16 %v279
    %v534 = vunpack.c.l.b16 %v280
    %v535 = vunpack.c.h.b16 %v280
    %v536 = vunpack.c.l.b16 %v281
    %v537 = vunpack.c.h.b16 %v281
    %v538 = vunpack.c.l.b16 %v282
    %v539 = vunpack.c.h.b16 %v282
    %v540 = vunpack.c.l.b16 %v283
    %v541 = vunpack.c.h.b16 %v283
    %v542 = vunpack.c.l.b16 %v284
    %v543 = vunpack.c.h.b16 %v284
    %v544 = vunpack.c.l.b16 %v285
    %v545 = vunpack.c.h.b16 %v285
    %v546 = vunpack.c.l.b16 %v286
    %v547 = vunpack.c.h.b16 %v286
    %v548 = vunpack.c.l.b16 %v287
    %v549 = vunpack.c.h.b16 %v287
    %v550 = vunpack.c.l.b16 %v288
    %v551 = vunpack.c.h.b16 %v288
    %v552 = vunpack.c.l.b16 %v289
    %v553 = vunpack.c.h.b16 %v289
    %v554 = vunpack.c.l.b16 %v290
    %v555 = vunpack.c.h.b16 %v290
    %v556 = vunpack.c.l.b16 %v291
    %v557 = vunpack.c.h.b16 %v291
    %v558 = vunpack.c.l.b16 %v292
    %v559 = vunpack.c.h.b16 %v292
    %v560 = vunpack.c.l.b16 %v293
    %v561 = vunpack.c.h.b16 %v293
    %v562 = vunpack.c.l.b16 %v294
    %v563 = vunpack.c.h.b16 %v294
    %v564 = vunpack.c.l.b16 %v295
    %v565 = vunpack.c.h.b16 %v295
    %v566 = vunpack.c.l.b16 %v296
    %v567 = vunpack.c.h.b16 %v296
    %v568 = vunpack.c.l.b16 %v297
    %v569 = vunpack.c.h.b16 %v297
    %v570 = vunpack.c.l.b16 %v298
    %v571 = vunpack.c.h.b16 %v298
    %v572 = vunpack.c.l.b16 %v299
    %v573 = vunpack.c.h.b16 %v299
    %v574 = vunpack.c.l.b16 %v300
    %v575 = vunpack.c.h.b16 %v300
    %v576 = vunpack.c.l.b16 %v301
    %v577 = vunpack.c.h.b16 %v301
    %v578 = vunpack.c.l.b16 %v302
    %v579 = vunpack.c.h.b16 %v302
    %v580 = vunpack.c.l.b16 %v303
    %v581 = vunpack.c.h.b16 %v303
    %v582 = vunpack.c.l.b16 %v304
    %v583 = vunpack.c.h.b16 %v304
    %v584 = vunpack.c.l.b16 %v305
    %v585 = vunpack.c.h.b16 %v305
    %v586 = vunpack.c.l.b16 %v306
    %v587 = vunpack.c.h.b16 %v306
    %v588 = vunpack.c.l.b16 %v307
    %v589 = vunpack.c.h.b16 %v307
    %v590 = vunpack.c.l.b16 %v308
    %v591 = vunpack.c.h.b16 %v308
    %v592 = vunpack.c.l.b16 %v309
    %v593 = vunpack.c.h.b16 %v309
    %v594 = vunpack.c.l.b16 %v310
    %v595 = vunpack.c.h.b16 %v310
    %v596 = vunpack.c.l.b16 %v311
    %v597 = vunpack.c.h.b16 %v311
    %v598 = vunpack.c.l.b16 %v312
    %v599 = vunpack.c.h.b16 %v312
    %v600 = vunpack.c.l.b16 %v313
    %v601 = vunpack.c.h.b16 %v313
    %v602 = vunpack.c.l.b16 %v314
    %v603 = vunpack.c.h.b16 %v314
    %v604 = vunpack.c.l.b16 %v315
    %v605 = vunpack.c.h.b16 %v315
    %v606 = vunpack.c.l.b16 %v316
    %v607 = vunpack.c.h.b16 %v316
    %v608 = vunpack.c.l.b16 %v317
    %v609 = vunpack.c.h.b16 %v317
    %v610 = vunpack.c.l.b16 %v318
    %v611 = vunpack.c.h.b16 %v318
    %v612 = vunpack.c.l.b16 %v319
    %v613 = vunpack.c.h.b16 %v319
    %v614 = vpack.c.b16 %v424, %v422
    %v615 = vpack.c.b16 %v425, %v423
    %v616 = vpack.c.b16 %v428, %v426
    %v617 = vpack.c.b16 %v429, %v427
    %v618 = vpack.c.b16 %v432, %v430
    %v619 = vpack.c.b16 %v433, %v431
    %v620 = vpack.c.b16 %v436, %v434
    %v621 = vpack.c.b16 %v437, %v435
    %v622 = vpack.c.b16 %v440, %v438
    %v623 = vpack.c.b16 %v441, %v439
    %v624 = vpack.c.b16 %v444, %v442
    %v625 = vpack.c.b16 %v445, %v443
    %v626 = vpack.c.b16 %v448, %v446
    %v627 = vpack.c.b16 %v449, %v447
    %v628 = vpack.c.b16 %v452, %v450
    %v629 = vpack.c.b16 %v453, %v451
    %v630 = vpack.c.b16 %v456, %v454
    %v631 = vpack.c.b16 %v457, %v455
    %v632 = vpack.c.b16 %v460, %v458
    %v633 = vpack.c.b16 %v461, %v459
    %v634 = vpack.c.b16 %v464, %v462
    %v635 = vpack.c.b16 %v465, %v463
    %v636 = vpack.c.b16 %v468, %v466
    %v637 = vpack.c.b16 %v469, %v467
    %v638 = vpack.c.b16 %v472, %v470
    %v639 = vpack.c.b16 %v473, %v471
    %v640 = vpack.c.b16 %v476, %v474
    %v641 = vpack.c.b16 %v477, %v475
    %v642 = vpack.c.b16 %v480, %v478
    %v643 = vpack.c.b16 %v481, %v479
    %v644 = vpack.c.b16 %v484, %v482
    %v645 = vpack.c.b16 %v485, %v483
    %v646 = vpack.c.b16 %v488, %v486
    %v647 = vpack.c.b16 %v489, %v487
    %v648 = vpack.c.b16 %v492, %v490
    %v649 = vpack.c.b16 %v493, %v491
    %v650 = vpack.c.b16 %v496, %v494
    %v651 = vpack.c.b16 %v497, %v495
    %v652 = vpack.c.b16 %v500, %v498
    %v653 = vpack.c.b16 %v501, %v499
    %v654 = vpack.c.b16 %v504, %v502
    %v655 = vpack.c.b16 %v505, %v503
    %v656 = vpack.c.b16 %v508, %v506
    %v657 = vpack.c.b16 %v509, %v507
    %v658 = vpack.c.b16 %v512, %v510
    %v659 = vpack.c.b16 %v513, %v511
    %v660 = vpack.c.b16 %v516, %v514
    %v661 = vpack.c.b16 %v517, %v515
    %v662 = vpack.c.b16 %v520, %v518
    %v663 = vpack.c.b16 %v521, %v519
    %v664 = vpack.c.b16 %v524, %v522
    %v665 = vpack.c.b16 %v525, %v523
    %v666 = vpack.c.b16 %v528, %v526
    %v667 = vpack.c.b16 %v529, %v527
    %v668 = vpack.c.b16 %v532, %v530
    %v669 = vpack.c.b16 %v533, %v531
    %v670 = vpack.c.b16 %v536, %v534
    %v671 = vpack.c.b16 %v537, %v535
    %v672 = vpack.c.b16 %v540, %v538
    %v673 = vpack.c.b16 %v541, %v539
    %v674 = vpack.c.b16 %v544, %v542
    %v675 = vpack.c.b16 %v545, %v543
    %v676 = vpack.c.b16 %v548, %v546
    %v677 = vpack.c.b16 %v549, %v547
    %v678 = vpack.c.b16 %v552, %v550
    %v679 = vpack.c.b16 %v553, %v551
    %v680 = vpack.c.b16 %v556, %v554
    %v681 = vpack.c.b16 %v557, %v555
    %v682 = vpack.c.b16 %v560, %v558
    %v683 = vpack.c.b16 %v561, %v559
    %v684 = vpack.c.b16 %v564, %v562
    %v685 = vpack.c.b16 %v565, %v563
    %v686 = vpack.c.b16 %v568, %v566
    %v687 = vpack.c.b16 %v569, %v567
    %v688 = vpack.c.b16 %v572, %v570
    %v689 = vpack.c.b16 %v573, %v571
    %v690 = vpack.c.b16 %v576, %v574
    %v691 = vpack.c.b16 %v577, %v575
    %v692 = vpack.c.b16 %v580, %v578
    %v693 = vpack.c.b16 %v581, %v579
    %v694 = vpack.c.b16 %v584, %v582
    %v695 = vpack.c.b16 %v585, %v583
    %v696 = vpack.c.b16 %v588, %v586
    %v697 = vpack.c.b16 %v589, %v587
    %v698 = vpack.c.b16 %v592, %v590
    %v699 = vpack.c.b16 %v593, %v591
    %v700 = vpack.c.b16 %v596, %v594
    %v701 = vpack.c.b16 %v597, %v595
    %v702 = vpack.c.b16 %v600, %v598
    %v703 = vpack.c.b16 %v601, %v599
    %v704 = vpack.c.b16 %v604, %v602
    %v705 = vpack.c.b16 %v605, %v603
    %v706 = vpack.c.b16 %v608, %v606
    %v707 = vpack.c.b16 %v609, %v607
    %v708 = vpack.c.b16 %v612, %v610
    %v709 = vpack.c.b16 %v613, %v611
    %806 = vmatpush.bf16.msra.mxu0 %v628
    %807 = vmatpush.bf16.msra.mxu0 %v626
    %808 = vmatpush.bf16.msra.mxu0 %v624
    %809 = vmatpush.bf16.msra.mxu0 %v622
    %810 = vmatpush.bf16.msra.mxu0 %v620
    %811 = vmatpush.bf16.msra.mxu0 %v618
    %812 = vmatpush.bf16.msra.mxu0 %v616
    %813 = vmatpush.bf16.msra.mxu0 %v614
    %814 = vmatmul.bf16.gmra.mxu0 %v218
    %v815 = vpop.f32.mrf.mxu0
    %v816 = vadd.f32 %v322, %v815
    %v817 = vpop.f32.mrf.mxu0
    %818 = vdwg.mxu0
    %819 = vmatpush.bf16.msra.mxu0 %v644
    %820 = vmatpush.bf16.msra.mxu0 %v642
    %821 = vmatpush.bf16.msra.mxu0 %v640
    %822 = vmatpush.bf16.msra.mxu0 %v638
    %823 = vmatpush.bf16.msra.mxu0 %v636
    %824 = vmatpush.bf16.msra.mxu0 %v634
    %825 = vmatpush.bf16.msra.mxu0 %v632
    %826 = vmatpush.bf16.msra.mxu0 %v630
    %827 = vmatmul.bf16.gmra.mxu0 %v219
    %v828 = vpop.f32.mrf.mxu0
    %v829 = vadd.f32 %v816, %v828
    %v830 = vpop.f32.mrf.mxu0
    %831 = vdwg.mxu0
    %832 = vmatpush.bf16.msra.mxu0 %v660
    %833 = vmatpush.bf16.msra.mxu0 %v658
    %834 = vmatpush.bf16.msra.mxu0 %v656
    %835 = vmatpush.bf16.msra.mxu0 %v654
    %836 = vmatpush.bf16.msra.mxu0 %v652
    %837 = vmatpush.bf16.msra.mxu0 %v650
    %838 = vmatpush.bf16.msra.mxu0 %v648
    %839 = vmatpush.bf16.msra.mxu0 %v646
    %840 = vmatmul.bf16.gmra.mxu0 %v220
    %v841 = vpop.f32.mrf.mxu0
    %v842 = vadd.f32 %v829, %v841
    %v843 = vpop.f32.mrf.mxu0
    %844 = vdwg.mxu0
    %845 = vmatpush.bf16.msra.mxu0 %v676
    %846 = vmatpush.bf16.msra.mxu0 %v674
    %847 = vmatpush.bf16.msra.mxu0 %v672
    %848 = vmatpush.bf16.msra.mxu0 %v670
    %849 = vmatpush.bf16.msra.mxu0 %v668
    %850 = vmatpush.bf16.msra.mxu0 %v666
    %851 = vmatpush.bf16.msra.mxu0 %v664
    %852 = vmatpush.bf16.msra.mxu0 %v662
    %853 = vmatmul.bf16.gmra.mxu0 %v221
    %v854 = vpop.f32.mrf.mxu0
    %v855 = vadd.f32 %v842, %v854
    %v856 = vpop.f32.mrf.mxu0
    %857 = vdwg.mxu0
    %858 = vmatpush.bf16.msra.mxu0 %v692
    %859 = vmatpush.bf16.msra.mxu0 %v690
    %860 = vmatpush.bf16.msra.mxu0 %v688
    %861 = vmatpush.bf16.msra.mxu0 %v686
    %862 = vmatpush.bf16.msra.mxu0 %v684
    %863 = vmatpush.bf16.msra.mxu0 %v682
    %864 = vmatpush.bf16.msra.mxu0 %v680
    %865 = vmatpush.bf16.msra.mxu0 %v678
    %866 = vmatmul.bf16.gmra.mxu0 %v222
    %v867 = vpop.f32.mrf.mxu0
    %v868 = vadd.f32 %v855, %v867
    %v869 = vpop.f32.mrf.mxu0
    %870 = vdwg.mxu0
    %871 = vmatpush.bf16.msra.mxu0 %v708
    %872 = vmatpush.bf16.msra.mxu0 %v706
    %873 = vmatpush.bf16.msra.mxu0 %v704
    %874 = vmatpush.bf16.msra.mxu0 %v702
    %875 = vmatpush.bf16.msra.mxu0 %v700
    %876 = vmatpush.bf16.msra.mxu0 %v698
    %877 = vmatpush.bf16.msra.mxu0 %v696
    %878 = vmatpush.bf16.msra.mxu0 %v694
    %879 = vmatmul.bf16.gmra.mxu0 %v223
    %v880 = vpop.f32.mrf.mxu0
    %v881 = vadd.f32 %v868, %v880
    %v882 = vpop.f32.mrf.mxu0
    %883 = vdwg.mxu0
    %884 = vmatpush.bf16.msra.mxu0 %v629
    %885 = vmatpush.bf16.msra.mxu0 %v627
    %886 = vmatpush.bf16.msra.mxu0 %v625
    %887 = vmatpush.bf16.msra.mxu0 %v623
    %888 = vmatpush.bf16.msra.mxu0 %v621
    %889 = vmatpush.bf16.msra.mxu0 %v619
    %890 = vmatpush.bf16.msra.mxu0 %v617
    %891 = vmatpush.bf16.msra.mxu0 %v615
    %892 = vmatmul.bf16.gmra.mxu0 %v218
    %v893 = vpop.f32.mrf.mxu0
    %v894 = vadd.f32 %v323, %v893
    %v895 = vpop.f32.mrf.mxu0
    %896 = vdwg.mxu0
    %897 = vmatpush.bf16.msra.mxu0 %v645
    %898 = vmatpush.bf16.msra.mxu0 %v643
    %899 = vmatpush.bf16.msra.mxu0 %v641
    %900 = vmatpush.bf16.msra.mxu0 %v639
    %901 = vmatpush.bf16.msra.mxu0 %v637
    %902 = vmatpush.bf16.msra.mxu0 %v635
    %903 = vmatpush.bf16.msra.mxu0 %v633
    %904 = vmatpush.bf16.msra.mxu0 %v631
    %905 = vmatmul.bf16.gmra.mxu0 %v219
    %v906 = vpop.f32.mrf.mxu0
    %v907 = vadd.f32 %v894, %v906
    %v908 = vpop.f32.mrf.mxu0
    %909 = vdwg.mxu0
    %910 = vmatpush.bf16.msra.mxu0 %v661
    %911 = vmatpush.bf16.msra.mxu0 %v659
    %912 = vmatpush.bf16.msra.mxu0 %v657
    %913 = vmatpush.bf16.msra.mxu0 %v655
    %914 = vmatpush.bf16.msra.mxu0 %v653
    %915 = vmatpush.bf16.msra.mxu0 %v651
    %916 = vmatpush.bf16.msra.mxu0 %v649
    %917 = vmatpush.bf16.msra.mxu0 %v647
    %918 = vmatmul.bf16.gmra.mxu0 %v220
    %v919 = vpop.f32.mrf.mxu0
    %v920 = vadd.f32 %v907, %v919
    %v921 = vpop.f32.mrf.mxu0
    %922 = vdwg.mxu0
    %923 = vmatpush.bf16.msra.mxu0 %v677
    %924 = vmatpush.bf16.msra.mxu0 %v675
    %925 = vmatpush.bf16.msra.mxu0 %v673
    %926 = vmatpush.bf16.msra.mxu0 %v671
    %927 = vmatpush.bf16.msra.mxu0 %v669
    %928 = vmatpush.bf16.msra.mxu0 %v667
    %929 = vmatpush.bf16.msra.mxu0 %v665
    %930 = vmatpush.bf16.msra.mxu0 %v663
    %931 = vmatmul.bf16.gmra.mxu0 %v221
    %v932 = vpop.f32.mrf.mxu0
    %v933 = vadd.f32 %v920, %v932
    %v934 = vpop.f32.mrf.mxu0
    %935 = vdwg.mxu0
    %936 = vmatpush.bf16.msra.mxu0 %v693
    %937 = vmatpush.bf16.msra.mxu0 %v691
    %938 = vmatpush.bf16.msra.mxu0 %v689
    %939 = vmatpush.bf16.msra.mxu0 %v687
    %940 = vmatpush.bf16.msra.mxu0 %v685
    %941 = vmatpush.bf16.msra.mxu0 %v683
    %942 = vmatpush.bf16.msra.mxu0 %v681
    %943 = vmatpush.bf16.msra.mxu0 %v679
    %944 = vmatmul.bf16.gmra.mxu0 %v222
    %v945 = vpop.f32.mrf.mxu0
    %v946 = vadd.f32 %v933, %v945
    %v947 = vpop.f32.mrf.mxu0
    %948 = vdwg.mxu0
    %949 = vmatpush.bf16.msra.mxu0 %v709
    %950 = vmatpush.bf16.msra.mxu0 %v707
    %951 = vmatpush.bf16.msra.mxu0 %v705
    %952 = vmatpush.bf16.msra.mxu0 %v703
    %953 = vmatpush.bf16.msra.mxu0 %v701
    %954 = vmatpush.bf16.msra.mxu0 %v699
    %955 = vmatpush.bf16.msra.mxu0 %v697
    %956 = vmatpush.bf16.msra.mxu0 %v695
    %957 = vmatmul.bf16.gmra.mxu0 %v223
    %v958 = vpop.f32.mrf.mxu0
    %v959 = vadd.f32 %v946, %v958
    %v960 = vpop.f32.mrf.mxu0
    %961 = vdwg.mxu0
    %962 = vst [vmem:[#allocation3] sm:$0xff] %v881
    %963 = vst.msk [vmem:[#allocation3 + $0x8] sm:$0xff] %vm198, %v959
    %v964 = vld [vmem:[#allocation2] sm:$0xff]
    %v965 = vld [vmem:[#allocation2 + $0x8] sm:$0xff]
    %v966 = vpack.c.bf16 %v964, %v964
    %v967 = vpack.c.bf16 %v965, %v965
    %v968 = vld [vmem:[%s6] sm:$0xff]
    %v969 = vld [vmem:[%s6 + $0x8] sm:$0xff]
    %v970 = vld [vmem:[%s6 + $0x10] sm:$0xff]
    %v971 = vld [vmem:[%s6 + $0x18] sm:$0xff]
    %v972 = vld [vmem:[%s6 + $0x20] sm:$0xff]
    %v973 = vld [vmem:[%s6 + $0x28] sm:$0xff]
    %v974 = vld [vmem:[%s6 + $0x30] sm:$0xff]
    %v975 = vld [vmem:[%s6 + $0x38] sm:$0xff]
    %v976 = vld [vmem:[%s6 + $0x40] sm:$0xff]
    %v977 = vld [vmem:[%s6 + $0x48] sm:$0xff]
    %v978 = vld [vmem:[%s6 + $0x50] sm:$0xff]
    %v979 = vld [vmem:[%s6 + $0x58] sm:$0xff]
    %v980 = vld [vmem:[%s6 + $0x60] sm:$0xff]
    %v981 = vld [vmem:[%s6 + $0x68] sm:$0xff]
    %v982 = vld [vmem:[%s6 + $0x70] sm:$0xff]
    %v983 = vld [vmem:[%s6 + $0x78] sm:$0xff]
    %v984 = vld [vmem:[%s6 + $0x80] sm:$0xff]
    %v985 = vld [vmem:[%s6 + $0x88] sm:$0xff]
    %v986 = vld [vmem:[%s6 + $0x90] sm:$0xff]
    %v987 = vld [vmem:[%s6 + $0x98] sm:$0xff]
    %v988 = vld [vmem:[%s6 + $0xa0] sm:$0xff]
    %v989 = vld [vmem:[%s6 + $0xa8] sm:$0xff]
    %v990 = vld [vmem:[%s6 + $0xb0] sm:$0xff]
    %v991 = vld [vmem:[%s6 + $0xb8] sm:$0xff]
    %v992 = vld [vmem:[#allocation9] sm:$0x3]
    %v994 = vperm.slane %v992, 0
    %v995 = vperm.slane %v992, 1
    %v1022 = vunpack.c.l.b16 %v968
    %v1023 = vunpack.c.h.b16 %v968
    %v1024 = vunpack.c.l.b16 %v969
    %v1025 = vunpack.c.h.b16 %v969
    %v1026 = vunpack.c.l.b16 %v970
    %v1027 = vunpack.c.h.b16 %v970
    %v1028 = vunpack.c.l.b16 %v971
    %v1029 = vunpack.c.h.b16 %v971
    %v1030 = vunpack.c.l.b16 %v972
    %v1031 = vunpack.c.h.b16 %v972
    %v1032 = vunpack.c.l.b16 %v973
    %v1033 = vunpack.c.h.b16 %v973
    %v1034 = vunpack.c.l.b16 %v974
    %v1035 = vunpack.c.h.b16 %v974
    %v1036 = vunpack.c.l.b16 %v975
    %v1037 = vunpack.c.h.b16 %v975
    %v1038 = vunpack.c.l.b16 %v976
    %v1039 = vunpack.c.h.b16 %v976
    %v1040 = vunpack.c.l.b16 %v977
    %v1041 = vunpack.c.h.b16 %v977
    %v1042 = vunpack.c.l.b16 %v978
    %v1043 = vunpack.c.h.b16 %v978
    %v1044 = vunpack.c.l.b16 %v979
    %v1045 = vunpack.c.h.b16 %v979
    %v1046 = vunpack.c.l.b16 %v980
    %v1047 = vunpack.c.h.b16 %v980
    %v1048 = vunpack.c.l.b16 %v981
    %v1049 = vunpack.c.h.b16 %v981
    %v1050 = vunpack.c.l.b16 %v982
    %v1051 = vunpack.c.h.b16 %v982
    %v1052 = vunpack.c.l.b16 %v983
    %v1053 = vunpack.c.h.b16 %v983
    %v1054 = vunpack.c.l.b16 %v984
    %v1055 = vunpack.c.h.b16 %v984
    %v1056 = vunpack.c.l.b16 %v985
    %v1057 = vunpack.c.h.b16 %v985
    %v1058 = vunpack.c.l.b16 %v986
    %v1059 = vunpack.c.h.b16 %v986
    %v1060 = vunpack.c.l.b16 %v987
    %v1061 = vunpack.c.h.b16 %v987
    %v1062 = vunpack.c.l.b16 %v988
    %v1063 = vunpack.c.h.b16 %v988
    %v1064 = vunpack.c.l.b16 %v989
    %v1065 = vunpack.c.h.b16 %v989
    %v1066 = vunpack.c.l.b16 %v990
    %v1067 = vunpack.c.h.b16 %v990
    %v1068 = vunpack.c.l.b16 %v991
    %v1069 = vunpack.c.h.b16 %v991
    %v1070 = vpack.c.b16 %v1024, %v1022
    %v1071 = vpack.c.b16 %v1025, %v1023
    %v1072 = vpack.c.b16 %v1028, %v1026
    %v1073 = vpack.c.b16 %v1029, %v1027
    %v1074 = vpack.c.b16 %v1032, %v1030
    %v1075 = vpack.c.b16 %v1033, %v1031
    %v1076 = vpack.c.b16 %v1036, %v1034
    %v1077 = vpack.c.b16 %v1037, %v1035
    %v1078 = vpack.c.b16 %v1040, %v1038
    %v1079 = vpack.c.b16 %v1041, %v1039
    %v1080 = vpack.c.b16 %v1044, %v1042
    %v1081 = vpack.c.b16 %v1045, %v1043
    %v1082 = vpack.c.b16 %v1048, %v1046
    %v1083 = vpack.c.b16 %v1049, %v1047
    %v1084 = vpack.c.b16 %v1052, %v1050
    %v1085 = vpack.c.b16 %v1053, %v1051
    %v1086 = vpack.c.b16 %v1056, %v1054
    %v1087 = vpack.c.b16 %v1057, %v1055
    %v1088 = vpack.c.b16 %v1060, %v1058
    %v1089 = vpack.c.b16 %v1061, %v1059
    %v1090 = vpack.c.b16 %v1064, %v1062
    %v1091 = vpack.c.b16 %v1065, %v1063
    %v1092 = vpack.c.b16 %v1068, %v1066
    %v1093 = vpack.c.b16 %v1069, %v1067
    %v1119 = vsel %vm198, %v967, 0
    %1121 = vmatpush.bf16.msra.mxu0 %v1084
    %1122 = vmatpush.bf16.msra.mxu0 %v1082
    %1123 = vmatpush.bf16.msra.mxu0 %v1080
    %1124 = vmatpush.bf16.msra.mxu0 %v1078
    %1125 = vmatpush.bf16.msra.mxu0 %v1076
    %1126 = vmatpush.bf16.msra.mxu0 %v1074
    %1127 = vmatpush.bf16.msra.mxu0 %v1072
    %1128 = vmatpush.bf16.msra.mxu0 %v1070
    %1129 = vmatmul.bf16.gmra.mxu0 %v966
    %v1130 = vpop.f32.mrf.mxu0
    %v1131 = vadd.f32 %v994, %v1130
    %v1132 = vpop.f32.mrf.mxu0
    %1133 = vdwg.mxu0
    %1134 = vmatpush.bf16.msra.mxu0 0
    %1135 = vmatpush.bf16.msra.mxu0 0
    %1136 = vmatpush.bf16.msra.mxu0 0
    %1137 = vmatpush.bf16.msra.mxu0 0
    %1138 = vmatpush.bf16.msra.mxu0 %v1092
    %1139 = vmatpush.bf16.msra.mxu0 %v1090
    %1140 = vmatpush.bf16.msra.mxu0 %v1088
    %1141 = vmatpush.bf16.msra.mxu0 %v1086
    %1142 = vmatmul.bf16.gmra.mxu0 %v1119
    %v1143 = vpop.f32.mrf.mxu0
    %v1144 = vadd.f32 %v1131, %v1143
    %v1145 = vpop.f32.mrf.mxu0
    %1146 = vdwg.mxu0
    %1147 = vmatpush.bf16.msra.mxu0 %v1085
    %1148 = vmatpush.bf16.msra.mxu0 %v1083
    %1149 = vmatpush.bf16.msra.mxu0 %v1081
    %1150 = vmatpush.bf16.msra.mxu0 %v1079
    %1151 = vmatpush.bf16.msra.mxu0 %v1077
    %1152 = vmatpush.bf16.msra.mxu0 %v1075
    %1153 = vmatpush.bf16.msra.mxu0 %v1073
    %1154 = vmatpush.bf16.msra.mxu0 %v1071
    %1155 = vmatmul.bf16.gmra.mxu0 %v966
    %v1156 = vpop.f32.mrf.mxu0
    %v1157 = vadd.f32 %v995, %v1156
    %v1158 = vpop.f32.mrf.mxu0
    %1159 = vdwg.mxu0
    %1160 = vmatpush.bf16.msra.mxu0 0
    %1161 = vmatpush.bf16.msra.mxu0 0
    %1162 = vmatpush.bf16.msra.mxu0 0
    %1163 = vmatpush.bf16.msra.mxu0 0
    %1164 = vmatpush.bf16.msra.mxu0 %v1093
    %1165 = vmatpush.bf16.msra.mxu0 %v1091
    %1166 = vmatpush.bf16.msra.mxu0 %v1089
    %1167 = vmatpush.bf16.msra.mxu0 %v1087
    %1168 = vmatmul.bf16.gmra.mxu0 %v1119
    %v1169 = vpop.f32.mrf.mxu0
    %v1170 = vadd.f32 %v1157, %v1169
    %v1171 = vpop.f32.mrf.mxu0
    %1172 = vdwg.mxu0
    %1173 = vst [vmem:[#allocation4] sm:$0xff] %v1144
    %1174 = vst.msk [vmem:[#allocation4 + $0x8] sm:$0xff] %vm198, %v1170
    %v1175 = vld [vmem:[#allocation3] sm:$0xff]
    %v1176 = vld [vmem:[#allocation3 + $0x8] sm:$0xff]
    %v1177 = vpack.c.bf16 %v1175, %v1175
    %v1178 = vpack.c.bf16 %v1176, %v1176
    %v1179 = vld [vmem:[#allocation11] sm:$0xff]
    %v1180 = vld [vmem:[#allocation11 + $0x8] sm:$0xf]
    %v1181 = vld [vmem:[#allocation11 + $0xc] sm:$0xff]
    %v1182 = vld [vmem:[#allocation11 + $0x14] sm:$0xf]
    %v1183 = vld [vmem:[#allocation11 + $0x18] sm:$0xff]
    %v1184 = vld [vmem:[#allocation11 + $0x20] sm:$0xf]
    %v1185 = vld [vmem:[#allocation11 + $0x24] sm:$0xff]
    %v1186 = vld [vmem:[#allocation11 + $0x2c] sm:$0xf]
    %v1187 = vld [vmem:[#allocation11 + $0x30] sm:$0xff]
    %v1188 = vld [vmem:[#allocation11 + $0x38] sm:$0xf]
    %v1189 = vld [vmem:[#allocation11 + $0x3c] sm:$0xff]
    %v1190 = vld [vmem:[#allocation11 + $0x44] sm:$0xf]
    %v1191 = vld [vmem:[#allocation11 + $0x48] sm:$0xff]
    %v1192 = vld [vmem:[#allocation11 + $0x50] sm:$0xf]
    %v1193 = vld [vmem:[#allocation11 + $0x54] sm:$0xff]
    %v1194 = vld [vmem:[#allocation11 + $0x5c] sm:$0xf]
    %v1195 = vld [vmem:[#allocation11 + $0x60] sm:$0xff]
    %v1196 = vld [vmem:[#allocation11 + $0x68] sm:$0xf]
    %v1197 = vld [vmem:[#allocation11 + $0x6c] sm:$0xff]
    %v1198 = vld [vmem:[#allocation11 + $0x74] sm:$0xf]
    %v1199 = vld [vmem:[#allocation11 + $0x78] sm:$0xff]
    %v1200 = vld [vmem:[#allocation11 + $0x80] sm:$0xf]
    %v1201 = vld [vmem:[#allocation11 + $0x84] sm:$0xff]
    %v1202 = vld [vmem:[#allocation11 + $0x8c] sm:$0xf]
    %v1203 = vld [vmem:[#allocation11 + $0x90] sm:$0xff]
    %v1204 = vld [vmem:[#allocation11 + $0x98] sm:$0xf]
    %v1205 = vld [vmem:[#allocation11 + $0x9c] sm:$0xff]
    %v1206 = vld [vmem:[#allocation11 + $0xa4] sm:$0xf]
    %v1207 = vld [vmem:[#allocation11 + $0xa8] sm:$0xff]
    %v1208 = vld [vmem:[#allocation11 + $0xb0] sm:$0xf]
    %v1209 = vld [vmem:[#allocation11 + $0xb4] sm:$0xff]
    %v1210 = vld [vmem:[#allocation11 + $0xbc] sm:$0xf]
    %v1211 = vld [vmem:[#allocation11 + $0xc0] sm:$0xff]
    %v1212 = vld [vmem:[#allocation11 + $0xc8] sm:$0xf]
    %v1213 = vld [vmem:[#allocation11 + $0xcc] sm:$0xff]
    %v1214 = vld [vmem:[#allocation11 + $0xd4] sm:$0xf]
    %v1215 = vld [vmem:[#allocation11 + $0xd8] sm:$0xff]
    %v1216 = vld [vmem:[#allocation11 + $0xe0] sm:$0xf]
    %v1217 = vld [vmem:[#allocation11 + $0xe4] sm:$0xff]
    %v1218 = vld [vmem:[#allocation11 + $0xec] sm:$0xf]
    %v1219 = vld [vmem:[#allocation11 + $0xf0] sm:$0xff]
    %v1220 = vld [vmem:[#allocation11 + $0xf8] sm:$0xf]
    %v1221 = vld [vmem:[#allocation11 + $0xfc] sm:$0xff]
    %v1222 = vld [vmem:[#allocation11 + $0x104] sm:$0xf]
    %v1223 = vld [vmem:[#allocation11 + $0x108] sm:$0xff]
    %v1224 = vld [vmem:[#allocation11 + $0x110] sm:$0xf]
    %v1225 = vld [vmem:[#allocation11 + $0x114] sm:$0xff]
    %v1226 = vld [vmem:[#allocation11 + $0x11c] sm:$0xf]
    %v1227 = vld [vmem:[#allocation12] sm:$0x7]
    %v1229 = vperm.slane %v1227, 0
    %v1230 = vperm.slane %v1227, 1
    %v1231 = vperm.slane %v1227, 2
    %v1283 = vunpack.c.l.b16 %v1179
    %v1284 = vunpack.c.h.b16 %v1179
    %v1285 = vunpack.c.l.b16 %v1180
    %v1286 = vunpack.c.l.b16 %v1181
    %v1287 = vunpack.c.h.b16 %v1181
    %v1288 = vunpack.c.l.b16 %v1182
    %v1289 = vunpack.c.l.b16 %v1183
    %v1290 = vunpack.c.h.b16 %v1183
    %v1291 = vunpack.c.l.b16 %v1184
    %v1292 = vunpack.c.l.b16 %v1185
    %v1293 = vunpack.c.h.b16 %v1185
    %v1294 = vunpack.c.l.b16 %v1186
    %v1295 = vunpack.c.l.b16 %v1187
    %v1296 = vunpack.c.h.b16 %v1187
    %v1297 = vunpack.c.l.b16 %v1188
    %v1298 = vunpack.c.l.b16 %v1189
    %v1299 = vunpack.c.h.b16 %v1189
    %v1300 = vunpack.c.l.b16 %v1190
    %v1301 = vunpack.c.l.b16 %v1191
    %v1302 = vunpack.c.h.b16 %v1191
    %v1303 = vunpack.c.l.b16 %v1192
    %v1304 = vunpack.c.l.b16 %v1193
    %v1305 = vunpack.c.h.b16 %v1193
    %v1306 = vunpack.c.l.b16 %v1194
    %v1307 = vunpack.c.l.b16 %v1195
    %v1308 = vunpack.c.h.b16 %v1195
    %v1309 = vunpack.c.l.b16 %v1196
    %v1310 = vunpack.c.l.b16 %v1197
    %v1311 = vunpack.c.h.b16 %v1197
    %v1312 = vunpack.c.l.b16 %v1198
    %v1313 = vunpack.c.l.b16 %v1199
    %v1314 = vunpack.c.h.b16 %v1199
    %v1315 = vunpack.c.l.b16 %v1200
    %v1316 = vunpack.c.l.b16 %v1201
    %v1317 = vunpack.c.h.b16 %v1201
    %v1318 = vunpack.c.l.b16 %v1202
    %v1319 = vunpack.c.l.b16 %v1203
    %v1320 = vunpack.c.h.b16 %v1203
    %v1321 = vunpack.c.l.b16 %v1204
    %v1322 = vunpack.c.l.b16 %v1205
    %v1323 = vunpack.c.h.b16 %v1205
    %v1324 = vunpack.c.l.b16 %v1206
    %v1325 = vunpack.c.l.b16 %v1207
    %v1326 = vunpack.c.h.b16 %v1207
    %v1327 = vunpack.c.l.b16 %v1208
    %v1328 = vunpack.c.l.b16 %v1209
    %v1329 = vunpack.c.h.b16 %v1209
    %v1330 = vunpack.c.l.b16 %v1210
    %v1331 = vunpack.c.l.b16 %v1211
    %v1332 = vunpack.c.h.b16 %v1211
    %v1333 = vunpack.c.l.b16 %v1212
    %v1334 = vunpack.c.l.b16 %v1213
    %v1335 = vunpack.c.h.b16 %v1213
    %v1336 = vunpack.c.l.b16 %v1214
    %v1337 = vunpack.c.l.b16 %v1215
    %v1338 = vunpack.c.h.b16 %v1215
    %v1339 = vunpack.c.l.b16 %v1216
    %v1340 = vunpack.c.l.b16 %v1217
    %v1341 = vunpack.c.h.b16 %v1217
    %v1342 = vunpack.c.l.b16 %v1218
    %v1343 = vunpack.c.l.b16 %v1219
    %v1344 = vunpack.c.h.b16 %v1219
    %v1345 = vunpack.c.l.b16 %v1220
    %v1346 = vunpack.c.l.b16 %v1221
    %v1347 = vunpack.c.h.b16 %v1221
    %v1348 = vunpack.c.l.b16 %v1222
    %v1349 = vunpack.c.l.b16 %v1223
    %v1350 = vunpack.c.h.b16 %v1223
    %v1351 = vunpack.c.l.b16 %v1224
    %v1352 = vunpack.c.l.b16 %v1225
    %v1353 = vunpack.c.h.b16 %v1225
    %v1354 = vunpack.c.l.b16 %v1226
    %v1355 = vpack.c.b16 %v1286, %v1283
    %v1356 = vpack.c.b16 %v1287, %v1284
    %v1357 = vpack.c.b16 %v1288, %v1285
    %v1358 = vpack.c.b16 %v1292, %v1289
    %v1359 = vpack.c.b16 %v1293, %v1290
    %v1360 = vpack.c.b16 %v1294, %v1291
    %v1361 = vpack.c.b16 %v1298, %v1295
    %v1362 = vpack.c.b16 %v1299, %v1296
    %v1363 = vpack.c.b16 %v1300, %v1297
    %v1364 = vpack.c.b16 %v1304, %v1301
    %v1365 = vpack.c.b16 %v1305, %v1302
    %v1366 = vpack.c.b16 %v1306, %v1303
    %v1367 = vpack.c.b16 %v1310, %v1307
    %v1368 = vpack.c.b16 %v1311, %v1308
    %v1369 = vpack.c.b16 %v1312, %v1309
    %v1370 = vpack.c.b16 %v1316, %v1313
    %v1371 = vpack.c.b16 %v1317, %v1314
    %v1372 = vpack.c.b16 %v1318, %v1315
    %v1373 = vpack.c.b16 %v1322, %v1319
    %v1374 = vpack.c.b16 %v1323, %v1320
    %v1375 = vpack.c.b16 %v1324, %v1321
    %v1376 = vpack.c.b16 %v1328, %v1325
    %v1377 = vpack.c.b16 %v1329, %v1326
    %v1378 = vpack.c.b16 %v1330, %v1327
    %v1379 = vpack.c.b16 %v1334, %v1331
    %v1380 = vpack.c.b16 %v1335, %v1332
    %v1381 = vpack.c.b16 %v1336, %v1333
    %v1382 = vpack.c.b16 %v1340, %v1337
    %v1383 = vpack.c.b16 %v1341, %v1338
    %v1384 = vpack.c.b16 %v1342, %v1339
    %v1385 = vpack.c.b16 %v1346, %v1343
    %v1386 = vpack.c.b16 %v1347, %v1344
    %v1387 = vpack.c.b16 %v1348, %v1345
    %v1388 = vpack.c.b16 %v1352, %v1349
    %v1389 = vpack.c.b16 %v1353, %v1350
    %v1390 = vpack.c.b16 %v1354, %v1351
    %v1428 = vsel %vm198, %v1178, 0
    %1430 = vmatpush.bf16.msra.mxu0 %v1376
    %1431 = vmatpush.bf16.msra.mxu0 %v1373
    %1432 = vmatpush.bf16.msra.mxu0 %v1370
    %1433 = vmatpush.bf16.msra.mxu0 %v1367
    %1434 = vmatpush.bf16.msra.mxu0 %v1364
    %1435 = vmatpush.bf16.msra.mxu0 %v1361
    %1436 = vmatpush.bf16.msra.mxu0 %v1358
    %1437 = vmatpush.bf16.msra.mxu0 %v1355
    %1438 = vmatmul.bf16.gmra.mxu0 %v1177
    %v1439 = vpop.f32.mrf.mxu0
    %v1440 = vadd.f32 %v1229, %v1439
    %v1441 = vpop.f32.mrf.mxu0
    %1442 = vdwg.mxu0
    %1443 = vmatpush.bf16.msra.mxu0 0
    %1444 = vmatpush.bf16.msra.mxu0 0
    %1445 = vmatpush.bf16.msra.mxu0 0
    %1446 = vmatpush.bf16.msra.mxu0 0
    %1447 = vmatpush.bf16.msra.mxu0 %v1388
    %1448 = vmatpush.bf16.msra.mxu0 %v1385
    %1449 = vmatpush.bf16.msra.mxu0 %v1382
    %1450 = vmatpush.bf16.msra.mxu0 %v1379
    %1451 = vmatmul.bf16.gmra.mxu0 %v1428
    %v1452 = vpop.f32.mrf.mxu0
    %v1453 = vadd.f32 %v1440, %v1452
    %v1454 = vpop.f32.mrf.mxu0
    %1455 = vdwg.mxu0
    %1456 = vmatpush.bf16.msra.mxu0 %v1377
    %1457 = vmatpush.bf16.msra.mxu0 %v1374
    %1458 = vmatpush.bf16.msra.mxu0 %v1371
    %1459 = vmatpush.bf16.msra.mxu0 %v1368
    %1460 = vmatpush.bf16.msra.mxu0 %v1365
    %1461 = vmatpush.bf16.msra.mxu0 %v1362
    %1462 = vmatpush.bf16.msra.mxu0 %v1359
    %1463 = vmatpush.bf16.msra.mxu0 %v1356
    %1464 = vmatmul.bf16.gmra.mxu0 %v1177
    %v1465 = vpop.f32.mrf.mxu0
    %v1466 = vadd.f32 %v1230, %v1465
    %v1467 = vpop.f32.mrf.mxu0
    %1468 = vdwg.mxu0
    %1469 = vmatpush.bf16.msra.mxu0 0
    %1470 = vmatpush.bf16.msra.mxu0 0
    %1471 = vmatpush.bf16.msra.mxu0 0
    %1472 = vmatpush.bf16.msra.mxu0 0
    %1473 = vmatpush.bf16.msra.mxu0 %v1389
    %1474 = vmatpush.bf16.msra.mxu0 %v1386
    %1475 = vmatpush.bf16.msra.mxu0 %v1383
    %1476 = vmatpush.bf16.msra.mxu0 %v1380
    %1477 = vmatmul.bf16.gmra.mxu0 %v1428
    %v1478 = vpop.f32.mrf.mxu0
    %v1479 = vadd.f32 %v1466, %v1478
    %v1480 = vpop.f32.mrf.mxu0
    %1481 = vdwg.mxu0
    %1482 = vmatpush.bf16.msra.mxu0 %v1378
    %1483 = vmatpush.bf16.msra.mxu0 %v1375
    %1484 = vmatpush.bf16.msra.mxu0 %v1372
    %1485 = vmatpush.bf16.msra.mxu0 %v1369
    %1486 = vmatpush.bf16.msra.mxu0 %v1366
    %1487 = vmatpush.bf16.msra.mxu0 %v1363
    %1488 = vmatpush.bf16.msra.mxu0 %v1360
    %1489 = vmatpush.bf16.msra.mxu0 %v1357
    %1490 = vmatmul.bf16.gmra.mxu0 %v1177
    %v1491 = vpop.f32.mrf.mxu0
    %v1492 = vadd.f32 %v1231, %v1491
    %v1493 = vpop.f32.mrf.mxu0
    %1494 = vdwg.mxu0
    %1495 = vmatpush.bf16.msra.mxu0 0
    %1496 = vmatpush.bf16.msra.mxu0 0
    %1497 = vmatpush.bf16.msra.mxu0 0
    %1498 = vmatpush.bf16.msra.mxu0 0
    %1499 = vmatpush.bf16.msra.mxu0 %v1390
    %1500 = vmatpush.bf16.msra.mxu0 %v1387
    %1501 = vmatpush.bf16.msra.mxu0 %v1384
    %1502 = vmatpush.bf16.msra.mxu0 %v1381
    %1503 = vmatmul.bf16.gmra.mxu0 %v1428
    %v1504 = vpop.f32.mrf.mxu0
    %v1505 = vadd.f32 %v1492, %v1504
    %v1506 = vpop.f32.mrf.mxu0
    %1507 = vdwg.mxu0
    %1508 = vst [vmem:[#allocation5] sm:$0xff] %v1453
    %1509 = vst [vmem:[#allocation5 + $0x8] sm:$0xff] %v1479
    %1510 = vst [vmem:[#allocation5 + $0x10] sm:$0xff] %v1505
    %v1511 = vld [vmem:[#allocation14] sm:$0x1]
    %v1512 = vld [vmem:[#allocation4] sm:$0xff]
    %v1513 = vld [vmem:[#allocation5] sm:$0xff]
    %v1514 = vmul.f32 %v1512, %v1513
    %vm1515 = vcmask 392192
    %v1516 = vsel %vm1515, %v1514, 0.0
    %1517 = vadd.xlane.f32.xlu0 %v1516
    %v1518 = vpop.xlane.xlu0 %1517
    %v1519 = vmul.f32 %v1518, 0.14433756
    %1521 = vrot.lane.b32.xlu0 %v1513, 80
    %v1522 = vpop.permute.xlu0 %1521
    %v1524 = vmul.f32 %v1512, %v1522
    %v1525 = vsel %vm1515, %v1524, 0.0
    %1526 = vadd.xlane.f32.xlu0 %v1525
    %v1527 = vpop.xlane.xlu0 %1526
    %v1528 = vmul.f32 %v1527, 0.14433756
    %v1529 = vld [vmem:[#allocation5 + $0x8] sm:$0xff]
    %1531 = vrot.lane.b32.xlu0 %v1513, 32
    %v1532 = vpop.permute.xlu0 %1531
    %1533 = vrot.lane.b32.xlu0 %v1529, 32
    %v1534 = vpop.permute.xlu0 %1533
    %vm1535 = vcmask 261120
    %v1536 = vsel %vm1535, %v1532, %v1534
    %v1538 = vmul.f32 %v1512, %v1536
    %v1539 = vsel %vm1515, %v1538, 0.0
    %1540 = vadd.xlane.f32.xlu0 %v1539
    %v1541 = vpop.xlane.xlu0 %1540
    %v1542 = vmul.f32 %v1541, 0.14433756
    %1543 = vrot.lane.b32.xlu0 %v1529, 112
    %v1544 = vpop.permute.xlu0 %1543
    %v1546 = vmul.f32 %v1512, %v1544
    %v1547 = vsel %vm1515, %v1546, 0.0
    %1548 = vadd.xlane.f32.xlu0 %v1547
    %v1549 = vpop.xlane.xlu0 %1548
    %v1550 = vmul.f32 %v1549, 0.14433756
    %v1551 = vmax.f32 %v1519, %v1528
    %v1552 = vmax.f32 %v1542, %v1550
    %v1553 = vmax.f32 %v1551, %v1552
    %v1554 = vsub.f32 %v1519, %v1553
    %v1555 = vmul.f32 %v1554, 1.442695
    %v1556 = vpow.pop %v1555
    %v1557 = vsub.f32 %v1528, %v1553
    %v1558 = vmul.f32 %v1557, 1.442695
    %v1559 = vpow.pop %v1558
    %v1560 = vsub.f32 %v1542, %v1553
    %v1561 = vmul.f32 %v1560, 1.442695
    %v1562 = vpow.pop %v1561
    %v1563 = vsub.f32 %v1550, %v1553
    %v1564 = vmul.f32 %v1563, 1.442695
    %v1565 = vpow.pop %v1564
    %v1566 = vadd.f32 %v1556, %v1559
    %v1567 = vadd.f32 %v1566, %v1562
    %v1568 = vadd.f32 %v1567, %v1565
    %v1569 = vrcp.pop %v1568
    %v1570 = vmul.f32 %v1556, %v1569
    %v1571 = vmul.f32 %v1570, %v1529
    %v1572 = vmul.f32 %v1559, %v1569
    %v1573 = vld [vmem:[#allocation5 + $0x8] sm:$0xff]
    %v1574 = vld [vmem:[#allocation5 + $0x10] sm:$0xff]
    %v1575 = vmul.f32 %v1572, %v1573
    %v1576 = vmul.f32 %v1572, %v1574
    %1579 = vrot.lane.b32.xlu0 %v1575, 80
    %v1580 = vpop.permute.xlu0 %1579
    %1581 = vrot.lane.b32.xlu0 %v1576, 80
    %v1582 = vpop.permute.xlu0 %1581
    %vm1583 = vcmask 654336
    %v1584 = vsel %vm1583, %v1580, %v1582
    %v1586 = vadd.f32 %v1571, %v1584
    %v1587 = vmul.f32 %v1562, %v1569
    %v1588 = vmul.f32 %v1587, %v1574
    %1590 = vrot.lane.b32.xlu0 %v1588, 32
    %v1591 = vpop.permute.xlu0 %1590
    %v1593 = vadd.f32 %v1586, %v1591
    %v1594 = vmul.f32 %v1565, %v1569
    %v1595 = vmul.f32 %v1594, %v1574
    %1597 = vrot.lane.b32.xlu0 %v1595, 112
    %v1598 = vpop.permute.xlu0 %1597
    %v1600 = vadd.f32 %v1593, %v1598
    %v1602 = vperm.slane %v1511, 0
    %1603 = vrot.lane.b32.xlu0 %v1602, 64
    %v1604 = vpop.permute.xlu0 %1603
    %v1606 = vadd.f32 %v1600, %v1604
    %1608 = vrot.lane.b32.xlu0 %v1606, 64
    %v1609 = vpop.permute.xlu0 %1608
    %1611 = vst.msk [vmem:[#allocation6] sm:$0xff] %vm1515, %v1609
    %v1612 = vld [vmem:[#allocation4] sm:$0xff]
    %v1613 = vld [vmem:[#allocation5] sm:$0xff]
    %1615 = vrot.lane.b32.xlu0 %v1613, 48
    %v1616 = vpop.permute.xlu0 %1615
    %v1618 = vmul.f32 %v1612, %v1616
    %1620 = vrot.lane.b32.xlu0 %v1618, 80
    %v1621 = vpop.permute.xlu0 %1620
    %v1623 = vsel %vm1515, %v1621, 0.0
    %1624 = vadd.xlane.f32.xlu0 %v1623
    %v1625 = vpop.xlane.xlu0 %1624
    %v1626 = vmul.f32 %v1625, 0.14433756
    %v1627 = vmul.f32 %v1612, %v1613
    %1629 = vrot.lane.b32.xlu0 %v1627, 80
    %v1630 = vpop.permute.xlu0 %1629
    %v1632 = vsel %vm1515, %v1630, 0.0
    %1633 = vadd.xlane.f32.xlu0 %v1632
    %v1634 = vpop.xlane.xlu0 %1633
    %v1635 = vmul.f32 %v1634, 0.14433756
    %v1636 = vld [vmem:[#allocation5 + $0x8] sm:$0xff]
    %1638 = vrot.lane.b32.xlu0 %v1613, 80
    %v1639 = vpop.permute.xlu0 %1638
    %1640 = vrot.lane.b32.xlu0 %v1636, 80
    %v1641 = vpop.permute.xlu0 %1640
    %v1642 = vsel %vm1583, %v1639, %v1641
    %v1644 = vmul.f32 %v1612, %v1642
    %1646 = vrot.lane.b32.xlu0 %v1644, 80
    %v1647 = vpop.permute.xlu0 %1646
    %v1649 = vsel %vm1515, %v1647, 0.0
    %1650 = vadd.xlane.f32.xlu0 %v1649
    %v1651 = vpop.xlane.xlu0 %1650
    %v1652 = vmul.f32 %v1651, 0.14433756
    %1653 = vrot.lane.b32.xlu0 %v1636, 32
    %v1654 = vpop.permute.xlu0 %1653
    %v1656 = vmul.f32 %v1612, %v1654
    %1658 = vrot.lane.b32.xlu0 %v1656, 80
    %v1659 = vpop.permute.xlu0 %1658
    %v1661 = vsel %vm1515, %v1659, 0.0
    %1662 = vadd.xlane.f32.xlu0 %v1661
    %v1663 = vpop.xlane.xlu0 %1662
    %v1664 = vmul.f32 %v1663, 0.14433756
    %v1665 = vmax.f32 %v1626, %v1635
    %v1666 = vmax.f32 %v1652, %v1664
    %v1667 = vmax.f32 %v1665, %v1666
    %v1668 = vsub.f32 %v1626, %v1667
    %v1669 = vmul.f32 %v1668, 1.442695
    %v1670 = vpow.pop %v1669
    %v1671 = vsub.f32 %v1635, %v1667
    %v1672 = vmul.f32 %v1671, 1.442695
    %v1673 = vpow.pop %v1672
    %v1674 = vsub.f32 %v1652, %v1667
    %v1675 = vmul.f32 %v1674, 1.442695
    %v1676 = vpow.pop %v1675
    %v1677 = vsub.f32 %v1664, %v1667
    %v1678 = vmul.f32 %v1677, 1.442695
    %v1679 = vpow.pop %v1678
    %v1680 = vadd.f32 %v1670, %v1673
    %v1681 = vadd.f32 %v1680, %v1676
    %v1682 = vadd.f32 %v1681, %v1679
    %v1683 = vrcp.pop %v1682
    %v1684 = vmul.f32 %v1670, %v1683
    %v1685 = vmul.f32 %v1684, %v1636
    %v1686 = vmul.f32 %v1673, %v1683
    %v1687 = vld [vmem:[#allocation5 + $0x8] sm:$0xff]
    %v1688 = vld [vmem:[#allocation5 + $0x10] sm:$0xff]
    %v1689 = vmul.f32 %v1686, %v1687
    %v1690 = vmul.f32 %v1686, %v1688
    %1693 = vrot.lane.b32.xlu0 %v1689, 80
    %v1694 = vpop.permute.xlu0 %1693
    %1695 = vrot.lane.b32.xlu0 %v1690, 80
    %v1696 = vpop.permute.xlu0 %1695
    %v1697 = vsel %vm1583, %v1694, %v1696
    %v1699 = vadd.f32 %v1685, %v1697
    %v1700 = vmul.f32 %v1676, %v1683
    %v1701 = vmul.f32 %v1700, %v1688
    %1703 = vrot.lane.b32.xlu0 %v1701, 32
    %v1704 = vpop.permute.xlu0 %1703
    %v1706 = vadd.f32 %v1699, %v1704
    %v1707 = vmul.f32 %v1679, %v1683
    %v1708 = vmul.f32 %v1707, %v1688
    %1710 = vrot.lane.b32.xlu0 %v1708, 112
    %v1711 = vpop.permute.xlu0 %1710
    %v1713 = vadd.f32 %v1706, %v1711
    %v1714 = vadd.f32 %v1713, %v1604
    %1716 = vrot.lane.b32.xlu0 %v1714, 112
    %v1717 = vpop.permute.xlu0 %1716
    %vm1719 = vcmask 785792
    %1720 = vst.msk [vmem:[#allocation6] sm:$0xff] %vm1719, %v1717
    %v1721 = vld [vmem:[#allocation4] sm:$0xff]
    %v1722 = vld [vmem:[#allocation4 + $0x8] sm:$0xff]
    %v1723 = vld [vmem:[#allocation5] sm:$0xff]
    %1725 = vrot.lane.b32.xlu0 %v1723, 96
    %v1726 = vpop.permute.xlu0 %1725
    %v1728 = vmul.f32 %v1721, %v1726
    %v1729 = vmul.f32 %v1722, %v1726
    %1732 = vrot.lane.b32.xlu0 %v1728, 32
    %v1733 = vpop.permute.xlu0 %1732
    %1734 = vrot.lane.b32.xlu0 %v1729, 32
    %v1735 = vpop.permute.xlu0 %1734
    %v1736 = vsel %vm1535, %v1733, %v1735
    %v1738 = vsel %vm1515, %v1736, 0.0
    %1739 = vadd.xlane.f32.xlu0 %v1738
    %v1740 = vpop.xlane.xlu0 %1739
    %v1741 = vmul.f32 %v1740, 0.14433756
    %1742 = vrot.lane.b32.xlu0 %v1723, 48
    %v1743 = vpop.permute.xlu0 %1742
    %v1745 = vmul.f32 %v1721, %v1743
    %v1746 = vmul.f32 %v1722, %v1743
    %1749 = vrot.lane.b32.xlu0 %v1745, 32
    %v1750 = vpop.permute.xlu0 %1749
    %1751 = vrot.lane.b32.xlu0 %v1746, 32
    %v1752 = vpop.permute.xlu0 %1751
    %v1753 = vsel %vm1535, %v1750, %v1752
    %v1755 = vsel %vm1515, %v1753, 0.0
    %1756 = vadd.xlane.f32.xlu0 %v1755
    %v1757 = vpop.xlane.xlu0 %1756
    %v1758 = vmul.f32 %v1757, 0.14433756
    %v1759 = vld [vmem:[#allocation5 + $0x8] sm:$0xff]
    %v1760 = vmul.f32 %v1721, %v1723
    %v1761 = vmul.f32 %v1722, %v1759
    %1764 = vrot.lane.b32.xlu0 %v1760, 32
    %v1765 = vpop.permute.xlu0 %1764
    %1766 = vrot.lane.b32.xlu0 %v1761, 32
    %v1767 = vpop.permute.xlu0 %1766
    %v1768 = vsel %vm1535, %v1765, %v1767
    %v1770 = vsel %vm1515, %v1768, 0.0
    %1771 = vadd.xlane.f32.xlu0 %v1770
    %v1772 = vpop.xlane.xlu0 %1771
    %v1773 = vmul.f32 %v1772, 0.14433756
    %1775 = vrot.lane.b32.xlu0 %v1759, 80
    %v1776 = vpop.permute.xlu0 %1775
    %v1778 = vmul.f32 %v1721, %v1776
    %v1779 = vmul.f32 %v1722, %v1776
    %1782 = vrot.lane.b32.xlu0 %v1778, 32
    %v1783 = vpop.permute.xlu0 %1782
    %1784 = vrot.lane.b32.xlu0 %v1779, 32
    %v1785 = vpop.permute.xlu0 %1784
    %v1786 = vsel %vm1535, %v1783, %v1785
    %v1788 = vsel %vm1515, %v1786, 0.0
    %1789 = vadd.xlane.f32.xlu0 %v1788
    %v1790 = vpop.xlane.xlu0 %1789
    %v1791 = vmul.f32 %v1790, 0.14433756
    %v1792 = vmax.f32 %v1741, %v1758
    %v1793 = vmax.f32 %v1773, %v1791
    %v1794 = vmax.f32 %v1792, %v1793
    %v1795 = vsub.f32 %v1741, %v1794
    %v1796 = vmul.f32 %v1795, 1.442695
    %v1797 = vpow.pop %v1796
    %v1798 = vsub.f32 %v1758, %v1794
    %v1799 = vmul.f32 %v1798, 1.442695
    %v1800 = vpow.pop %v1799
    %v1801 = vsub.f32 %v1773, %v1794
    %v1802 = vmul.f32 %v1801, 1.442695
    %v1803 = vpow.pop %v1802
    %v1804 = vsub.f32 %v1791, %v1794
    %v1805 = vmul.f32 %v1804, 1.442695
    %v1806 = vpow.pop %v1805
    %v1807 = vadd.f32 %v1797, %v1800
    %v1808 = vadd.f32 %v1807, %v1803
    %v1809 = vadd.f32 %v1808, %v1806
    %v1810 = vrcp.pop %v1809
    %v1811 = vmul.f32 %v1797, %v1810
    %v1812 = vmul.f32 %v1811, %v1759
    %v1813 = vmul.f32 %v1800, %v1810
    %v1814 = vld [vmem:[#allocation5 + $0x8] sm:$0xff]
    %v1815 = vld [vmem:[#allocation5 + $0x10] sm:$0xff]
    %v1816 = vmul.f32 %v1813, %v1814
    %v1817 = vmul.f32 %v1813, %v1815
    %1820 = vrot.lane.b32.xlu0 %v1816, 80
    %v1821 = vpop.permute.xlu0 %1820
    %1822 = vrot.lane.b32.xlu0 %v1817, 80
    %v1823 = vpop.permute.xlu0 %1822
    %v1824 = vsel %vm1583, %v1821, %v1823
    %v1826 = vadd.f32 %v1812, %v1824
    %v1827 = vmul.f32 %v1803, %v1810
    %v1828 = vmul.f32 %v1827, %v1815
    %1830 = vrot.lane.b32.xlu0 %v1828, 32
    %v1831 = vpop.permute.xlu0 %1830
    %v1833 = vadd.f32 %v1826, %v1831
    %v1834 = vmul.f32 %v1806, %v1810
    %v1835 = vmul.f32 %v1834, %v1815
    %1837 = vrot.lane.b32.xlu0 %v1835, 112
    %v1838 = vpop.permute.xlu0 %1837
    %v1840 = vadd.f32 %v1833, %v1838
    %v1841 = vadd.f32 %v1840, %v1604
    %1843 = vrot.lane.b32.xlu0 %v1841, 32
    %v1844 = vpop.permute.xlu0 %1843
    %vm1846 = vcmask 1048320
    %1847 = vst.msk [vmem:[#allocation6] sm:$0xff] %vm1846, %v1844
    %vm1848 = vcmask 130048
    %1849 = vst.msk [vmem:[#allocation6 + $0x8] sm:$0xff] %vm1848, %v1844
    %v1850 = vld [vmem:[#allocation4 + $0x8] sm:$0xff]
    %v1851 = vld [vmem:[#allocation5] sm:$0xff]
    %1853 = vrot.lane.b32.xlu0 %v1851, 16
    %v1854 = vpop.permute.xlu0 %1853
    %v1856 = vmul.f32 %v1850, %v1854
    %1858 = vrot.lane.b32.xlu0 %v1856, 112
    %v1859 = vpop.permute.xlu0 %1858
    %v1861 = vsel %vm1515, %v1859, 0.0
    %1862 = vadd.xlane.f32.xlu0 %v1861
    %v1863 = vpop.xlane.xlu0 %1862
    %v1864 = vmul.f32 %v1863, 0.14433756
    %1865 = vrot.lane.b32.xlu0 %v1851, 96
    %v1866 = vpop.permute.xlu0 %1865
    %v1868 = vmul.f32 %v1850, %v1866
    %1870 = vrot.lane.b32.xlu0 %v1868, 112
    %v1871 = vpop.permute.xlu0 %1870
    %v1873 = vsel %vm1515, %v1871, 0.0
    %1874 = vadd.xlane.f32.xlu0 %v1873
    %v1875 = vpop.xlane.xlu0 %1874
    %v1876 = vmul.f32 %v1875, 0.14433756
    %v1877 = vld [vmem:[#allocation5 + $0x8] sm:$0xff]
    %1879 = vrot.lane.b32.xlu0 %v1851, 48
    %v1880 = vpop.permute.xlu0 %1879
    %1881 = vrot.lane.b32.xlu0 %v1877, 48
    %v1882 = vpop.permute.xlu0 %1881
    %v1883 = vsel %vm1515, %v1880, %v1882
    %v1885 = vmul.f32 %v1850, %v1883
    %1887 = vrot.lane.b32.xlu0 %v1885, 112
    %v1888 = vpop.permute.xlu0 %1887
    %v1890 = vsel %vm1515, %v1888, 0.0
    %1891 = vadd.xlane.f32.xlu0 %v1890
    %v1892 = vpop.xlane.xlu0 %1891
    %v1893 = vmul.f32 %v1892, 0.14433756
    %v1894 = vmul.f32 %v1850, %v1877
    %1896 = vrot.lane.b32.xlu0 %v1894, 112
    %v1897 = vpop.permute.xlu0 %1896
    %v1899 = vsel %vm1515, %v1897, 0.0
    %1900 = vadd.xlane.f32.xlu0 %v1899
    %v1901 = vpop.xlane.xlu0 %1900
    %v1902 = vmul.f32 %v1901, 0.14433756
    %v1903 = vmax.f32 %v1864, %v1876
    %v1904 = vmax.f32 %v1893, %v1902
    %v1905 = vmax.f32 %v1903, %v1904
    %v1906 = vsub.f32 %v1864, %v1905
    %v1907 = vmul.f32 %v1906, 1.442695
    %v1908 = vpow.pop %v1907
    %v1909 = vsub.f32 %v1876, %v1905
    %v1910 = vmul.f32 %v1909, 1.442695
    %v1911 = vpow.pop %v1910
    %v1912 = vsub.f32 %v1893, %v1905
    %v1913 = vmul.f32 %v1912, 1.442695
    %v1914 = vpow.pop %v1913
    %v1915 = vsub.f32 %v1902, %v1905
    %v1916 = vmul.f32 %v1915, 1.442695
    %v1917 = vpow.pop %v1916
    %v1918 = vadd.f32 %v1908, %v1911
    %v1919 = vadd.f32 %v1918, %v1914
    %v1920 = vadd.f32 %v1919, %v1917
    %v1921 = vrcp.pop %v1920
    %v1922 = vmul.f32 %v1908, %v1921
    %v1923 = vmul.f32 %v1922, %v1877
    %v1924 = vmul.f32 %v1911, %v1921
    %v1925 = vld [vmem:[#allocation5 + $0x8] sm:$0xff]
    %v1926 = vld [vmem:[#allocation5 + $0x10] sm:$0xff]
    %v1927 = vmul.f32 %v1924, %v1925
    %v1928 = vmul.f32 %v1924, %v1926
    %1931 = vrot.lane.b32.xlu0 %v1927, 80
    %v1932 = vpop.permute.xlu0 %1931
    %1933 = vrot.lane.b32.xlu0 %v1928, 80
    %v1934 = vpop.permute.xlu0 %1933
    %v1935 = vsel %vm1583, %v1932, %v1934
    %v1937 = vadd.f32 %v1923, %v1935
    %v1938 = vmul.f32 %v1914, %v1921
    %v1939 = vmul.f32 %v1938, %v1926
    %1941 = vrot.lane.b32.xlu0 %v1939, 32
    %v1942 = vpop.permute.xlu0 %1941
    %v1944 = vadd.f32 %v1937, %v1942
    %v1945 = vmul.f32 %v1917, %v1921
    %v1946 = vmul.f32 %v1945, %v1926
    %1948 = vrot.lane.b32.xlu0 %v1946, 112
    %v1949 = vpop.permute.xlu0 %1948
    %v1951 = vadd.f32 %v1944, %v1949
    %v1952 = vadd.f32 %v1951, %v1604
    %1954 = vrot.lane.b32.xlu0 %v1952, 80
    %v1955 = vpop.permute.xlu0 %1954
    %vm1957 = vcmask 523392
    %1958 = vst.msk [vmem:[#allocation6 + $0x8] sm:$0xff] %vm1957, %v1955
    %v1959 = vld [vmem:[#allocation6] sm:$0xff]
    %v1960 = vld [vmem:[#allocation6 + $0x8] sm:$0xff]
    %v1961 = vpack.c.bf16 %v1959, %v1959
    %v1962 = vpack.c.bf16 %v1960, %v1960
    %v1963 = vld [vmem:[%s11] sm:$0xff]
    %v1964 = vld [vmem:[%s11 + $0x8] sm:$0xff]
    %v1965 = vld [vmem:[%s11 + $0x10] sm:$0xff]
    %v1966 = vld [vmem:[%s11 + $0x18] sm:$0xff]
    %v1967 = vld [vmem:[%s11 + $0x20] sm:$0xff]
    %v1968 = vld [vmem:[%s11 + $0x28] sm:$0xff]
    %v1969 = vld [vmem:[%s11 + $0x30] sm:$0xff]
    %v1970 = vld [vmem:[%s11 + $0x38] sm:$0xff]
    %v1971 = vld [vmem:[%s11 + $0x40] sm:$0xff]
    %v1972 = vld [vmem:[%s11 + $0x48] sm:$0xff]
    %v1973 = vld [vmem:[%s11 + $0x50] sm:$0xff]
    %v1974 = vld [vmem:[%s11 + $0x58] sm:$0xff]
    %v1975 = vld [vmem:[%s11 + $0x60] sm:$0xff]
    %v1976 = vld [vmem:[%s11 + $0x68] sm:$0xff]
    %v1977 = vld [vmem:[%s11 + $0x70] sm:$0xff]
    %v1978 = vld [vmem:[%s11 + $0x78] sm:$0xff]
    %v1979 = vld [vmem:[%s11 + $0x80] sm:$0xff]
    %v1980 = vld [vmem:[%s11 + $0x88] sm:$0xff]
    %v1981 = vld [vmem:[%s11 + $0x90] sm:$0xff]
    %v1982 = vld [vmem:[%s11 + $0x98] sm:$0xff]
    %v1983 = vld [vmem:[%s11 + $0xa0] sm:$0xff]
    %v1984 = vld [vmem:[%s11 + $0xa8] sm:$0xff]
    %v1985 = vld [vmem:[%s11 + $0xb0] sm:$0xff]
    %v1986 = vld [vmem:[%s11 + $0xb8] sm:$0xff]
    %v1987 = vld [vmem:[%s11 + $0xc0] sm:$0xff]
    %v1988 = vld [vmem:[%s11 + $0xc8] sm:$0xff]
    %v1989 = vld [vmem:[%s11 + $0xd0] sm:$0xff]
    %v1990 = vld [vmem:[%s11 + $0xd8] sm:$0xff]
    %v1991 = vld [vmem:[%s11 + $0xe0] sm:$0xff]
    %v1992 = vld [vmem:[%s11 + $0xe8] sm:$0xff]
    %v1993 = vld [vmem:[%s11 + $0xf0] sm:$0xff]
    %v1994 = vld [vmem:[%s11 + $0xf8] sm:$0xff]
    %v1995 = vld [vmem:[%s11 + $0x100] sm:$0xff]
    %v1996 = vld [vmem:[%s11 + $0x108] sm:$0xff]
    %v1997 = vld [vmem:[%s11 + $0x110] sm:$0xff]
    %v1998 = vld [vmem:[%s11 + $0x118] sm:$0xff]
    %v1999 = vld [vmem:[%s11 + $0x120] sm:$0xff]
    %v2000 = vld [vmem:[%s11 + $0x128] sm:$0xff]
    %v2001 = vld [vmem:[%s11 + $0x130] sm:$0xff]
    %v2002 = vld [vmem:[%s11 + $0x138] sm:$0xff]
    %v2003 = vld [vmem:[%s11 + $0x140] sm:$0xff]
    %v2004 = vld [vmem:[%s11 + $0x148] sm:$0xff]
    %v2005 = vld [vmem:[%s11 + $0x150] sm:$0xff]
    %v2006 = vld [vmem:[%s11 + $0x158] sm:$0xff]
    %v2007 = vld [vmem:[%s11 + $0x160] sm:$0xff]
    %v2008 = vld [vmem:[%s11 + $0x168] sm:$0xff]
    %v2009 = vld [vmem:[%s11 + $0x170] sm:$0xff]
    %v2010 = vld [vmem:[%s11 + $0x178] sm:$0xff]
    %v2011 = vld [vmem:[%s11 + $0x180] sm:$0xff]
    %v2012 = vld [vmem:[%s11 + $0x188] sm:$0xff]
    %v2013 = vld [vmem:[%s11 + $0x190] sm:$0xff]
    %v2014 = vld [vmem:[%s11 + $0x198] sm:$0xff]
    %v2015 = vld [vmem:[%s11 + $0x1a0] sm:$0xff]
    %v2016 = vld [vmem:[%s11 + $0x1a8] sm:$0xff]
    %v2017 = vld [vmem:[%s11 + $0x1b0] sm:$0xff]
    %v2018 = vld [vmem:[%s11 + $0x1b8] sm:$0xff]
    %v2019 = vld [vmem:[%s11 + $0x1c0] sm:$0xff]
    %v2020 = vld [vmem:[%s11 + $0x1c8] sm:$0xff]
    %v2021 = vld [vmem:[%s11 + $0x1d0] sm:$0xff]
    %v2022 = vld [vmem:[%s11 + $0x1d8] sm:$0xff]
    %v2023 = vld [vmem:[%s11 + $0x1e0] sm:$0xff]
    %v2024 = vld [vmem:[%s11 + $0x1e8] sm:$0xff]
    %v2025 = vld [vmem:[%s11 + $0x1f0] sm:$0xff]
    %v2026 = vld [vmem:[%s11 + $0x1f8] sm:$0xff]
    %v2027 = vld [vmem:[%s11 + $0x200] sm:$0xff]
    %v2028 = vld [vmem:[%s11 + $0x208] sm:$0xff]
    %v2029 = vld [vmem:[%s11 + $0x210] sm:$0xff]
    %v2030 = vld [vmem:[%s11 + $0x218] sm:$0xff]
    %v2031 = vld [vmem:[%s11 + $0x220] sm:$0xff]
    %v2032 = vld [vmem:[%s11 + $0x228] sm:$0xff]
    %v2033 = vld [vmem:[%s11 + $0x230] sm:$0xff]
    %v2034 = vld [vmem:[%s11 + $0x238] sm:$0xff]
    %v2035 = vld [vmem:[%s11 + $0x240] sm:$0xff]
    %v2036 = vld [vmem:[%s11 + $0x248] sm:$0xff]
    %v2037 = vld [vmem:[%s11 + $0x250] sm:$0xff]
    %v2038 = vld [vmem:[%s11 + $0x258] sm:$0xff]
    %v2039 = vld [vmem:[%s11 + $0x260] sm:$0xff]
    %v2040 = vld [vmem:[%s11 + $0x268] sm:$0xff]
    %v2041 = vld [vmem:[%s11 + $0x270] sm:$0xff]
    %v2042 = vld [vmem:[%s11 + $0x278] sm:$0xff]
    %v2043 = vld [vmem:[%s11 + $0x280] sm:$0xff]
    %v2044 = vld [vmem:[%s11 + $0x288] sm:$0xff]
    %v2045 = vld [vmem:[%s11 + $0x290] sm:$0xff]
    %v2046 = vld [vmem:[%s11 + $0x298] sm:$0xff]
    %v2047 = vld [vmem:[%s11 + $0x2a0] sm:$0xff]
    %v2048 = vld [vmem:[%s11 + $0x2a8] sm:$0xff]
    %v2049 = vld [vmem:[%s11 + $0x2b0] sm:$0xff]
    %v2050 = vld [vmem:[%s11 + $0x2b8] sm:$0xff]
    %v2051 = vld [vmem:[%s11 + $0x2c0] sm:$0xff]
    %v2052 = vld [vmem:[%s11 + $0x2c8] sm:$0xff]
    %v2053 = vld [vmem:[%s11 + $0x2d0] sm:$0xff]
    %v2054 = vld [vmem:[%s11 + $0x2d8] sm:$0xff]
    %v2055 = vld [vmem:[%s11 + $0x2e0] sm:$0xff]
    %v2056 = vld [vmem:[%s11 + $0x2e8] sm:$0xff]
    %v2057 = vld [vmem:[%s11 + $0x2f0] sm:$0xff]
    %v2058 = vld [vmem:[%s11 + $0x2f8] sm:$0xff]
    %v2059 = vld [vmem:[%s12] sm:$0xff]
    %v2061 = vperm.slane %v2059, 0
    %v2062 = vperm.slane %v2059, 1
    %v2063 = vperm.slane %v2059, 2
    %v2064 = vperm.slane %v2059, 3
    %v2065 = vperm.slane %v2059, 4
    %v2066 = vperm.slane %v2059, 5
    %v2067 = vperm.slane %v2059, 6
    %v2068 = vperm.slane %v2059, 7
    %v2173 = vunpack.c.l.b16 %v1963
    %v2174 = vunpack.c.h.b16 %v1963
    %v2175 = vunpack.c.l.b16 %v1964
    %v2176 = vunpack.c.h.b16 %v1964
    %v2177 = vunpack.c.l.b16 %v1965
    %v2178 = vunpack.c.h.b16 %v1965
    %v2179 = vunpack.c.l.b16 %v1966
    %v2180 = vunpack.c.h.b16 %v1966
    %v2181 = vunpack.c.l.b16 %v1967
    %v2182 = vunpack.c.h.b16 %v1967
    %v2183 = vunpack.c.l.b16 %v1968
    %v2184 = vunpack.c.h.b16 %v1968
    %v2185 = vunpack.c.l.b16 %v1969
    %v2186 = vunpack.c.h.b16 %v1969
    %v2187 = vunpack.c.l.b16 %v1970
    %v2188 = vunpack.c.h.b16 %v1970
    %v2189 = vunpack.c.l.b16 %v1971
    %v2190 = vunpack.c.h.b16 %v1971
    %v2191 = vunpack.c.l.b16 %v1972
    %v2192 = vunpack.c.h.b16 %v1972
    %v2193 = vunpack.c.l.b16 %v1973
    %v2194 = vunpack.c.h.b16 %v1973
    %v2195 = vunpack.c.l.b16 %v1974
    %v2196 = vunpack.c.h.b16 %v1974
    %v2197 = vunpack.c.l.b16 %v1975
    %v2198 = vunpack.c.h.b16 %v1975
    %v2199 = vunpack.c.l.b16 %v1976
    %v2200 = vunpack.c.h.b16 %v1976
    %v2201 = vunpack.c.l.b16 %v1977
    %v2202 = vunpack.c.h.b16 %v1977
    %v2203 = vunpack.c.l.b16 %v1978
    %v2204 = vunpack.c.h.b16 %v1978
    %v2205 = vunpack.c.l.b16 %v1979
    %v2206 = vunpack.c.h.b16 %v1979
    %v2207 = vunpack.c.l.b16 %v1980
    %v2208 = vunpack.c.h.b16 %v1980
    %v2209 = vunpack.c.l.b16 %v1981
    %v2210 = vunpack.c.h.b16 %v1981
    %v2211 = vunpack.c.l.b16 %v1982
    %v2212 = vunpack.c.h.b16 %v1982
    %v2213 = vunpack.c.l.b16 %v1983
    %v2214 = vunpack.c.h.b16 %v1983
    %v2215 = vunpack.c.l.b16 %v1984
    %v2216 = vunpack.c.h.b16 %v1984
    %v2217 = vunpack.c.l.b16 %v1985
    %v2218 = vunpack.c.h.b16 %v1985
    %v2219 = vunpack.c.l.b16 %v1986
    %v2220 = vunpack.c.h.b16 %v1986
    %v2221 = vunpack.c.l.b16 %v1987
    %v2222 = vunpack.c.h.b16 %v1987
    %v2223 = vunpack.c.l.b16 %v1988
    %v2224 = vunpack.c.h.b16 %v1988
    %v2225 = vunpack.c.l.b16 %v1989
    %v2226 = vunpack.c.h.b16 %v1989
    %v2227 = vunpack.c.l.b16 %v1990
    %v2228 = vunpack.c.h.b16 %v1990
    %v2229 = vunpack.c.l.b16 %v1991
    %v2230 = vunpack.c.h.b16 %v1991
    %v2231 = vunpack.c.l.b16 %v1992
    %v2232 = vunpack.c.h.b16 %v1992
    %v2233 = vunpack.c.l.b16 %v1993
    %v2234 = vunpack.c.h.b16 %v1993
    %v2235 = vunpack.c.l.b16 %v1994
    %v2236 = vunpack.c.h.b16 %v1994
    %v2237 = vunpack.c.l.b16 %v1995
    %v2238 = vunpack.c.h.b16 %v1995
    %v2239 = vunpack.c.l.b16 %v1996
    %v2240 = vunpack.c.h.b16 %v1996
    %v2241 = vunpack.c.l.b16 %v1997
    %v2242 = vunpack.c.h.b16 %v1997
    %v2243 = vunpack.c.l.b16 %v1998
    %v2244 = vunpack.c.h.b16 %v1998
    %v2245 = vunpack.c.l.b16 %v1999
    %v2246 = vunpack.c.h.b16 %v1999
    %v2247 = vunpack.c.l.b16 %v2000
    %v2248 = vunpack.c.h.b16 %v2000
    %v2249 = vunpack.c.l.b16 %v2001
    %v2250 = vunpack.c.h.b16 %v2001
    %v2251 = vunpack.c.l.b16 %v2002
    %v2252 = vunpack.c.h.b16 %v2002
    %v2253 = vunpack.c.l.b16 %v2003
    %v2254 = vunpack.c.h.b16 %v2003
    %v2255 = vunpack.c.l.b16 %v2004
    %v2256 = vunpack.c.h.b16 %v2004
    %v2257 = vunpack.c.l.b16 %v2005
    %v2258 = vunpack.c.h.b16 %v2005
    %v2259 = vunpack.c.l.b16 %v2006
    %v2260 = vunpack.c.h.b16 %v2006
    %v2261 = vunpack.c.l.b16 %v2007
    %v2262 = vunpack.c.h.b16 %v2007
    %v2263 = vunpack.c.l.b16 %v2008
    %v2264 = vunpack.c.h.b16 %v2008
    %v2265 = vunpack.c.l.b16 %v2009
    %v2266 = vunpack.c.h.b16 %v2009
    %v2267 = vunpack.c.l.b16 %v2010
    %v2268 = vunpack.c.h.b16 %v2010
    %v2269 = vunpack.c.l.b16 %v2011
    %v2270 = vunpack.c.h.b16 %v2011
    %v2271 = vunpack.c.l.b16 %v2012
    %v2272 = vunpack.c.h.b16 %v2012
    %v2273 = vunpack.c.l.b16 %v2013
    %v2274 = vunpack.c.h.b16 %v2013
    %v2275 = vunpack.c.l.b16 %v2014
    %v2276 = vunpack.c.h.b16 %v2014
    %v2277 = vunpack.c.l.b16 %v2015
    %v2278 = vunpack.c.h.b16 %v2015
    %v2279 = vunpack.c.l.b16 %v2016
    %v2280 = vunpack.c.h.b16 %v2016
    %v2281 = vunpack.c.l.b16 %v2017
    %v2282 = vunpack.c.h.b16 %v2017
    %v2283 = vunpack.c.l.b16 %v2018
    %v2284 = vunpack.c.h.b16 %v2018
    %v2285 = vunpack.c.l.b16 %v2019
    %v2286 = vunpack.c.h.b16 %v2019
    %v2287 = vunpack.c.l.b16 %v2020
    %v2288 = vunpack.c.h.b16 %v2020
    %v2289 = vunpack.c.l.b16 %v2021
    %v2290 = vunpack.c.h.b16 %v2021
    %v2291 = vunpack.c.l.b16 %v2022
    %v2292 = vunpack.c.h.b16 %v2022
    %v2293 = vunpack.c.l.b16 %v2023
    %v2294 = vunpack.c.h.b16 %v2023
    %v2295 = vunpack.c.l.b16 %v2024
    %v2296 = vunpack.c.h.b16 %v2024
    %v2297 = vunpack.c.l.b16 %v2025
    %v2298 = vunpack.c.h.b16 %v2025
    %v2299 = vunpack.c.l.b16 %v2026
    %v2300 = vunpack.c.h.b16 %v2026
    %v2301 = vunpack.c.l.b16 %v2027
    %v2302 = vunpack.c.h.b16 %v2027
    %v2303 = vunpack.c.l.b16 %v2028
    %v2304 = vunpack.c.h.b16 %v2028
    %v2305 = vunpack.c.l.b16 %v2029
    %v2306 = vunpack.c.h.b16 %v2029
    %v2307 = vunpack.c.l.b16 %v2030
    %v2308 = vunpack.c.h.b16 %v2030
    %v2309 = vunpack.c.l.b16 %v2031
    %v2310 = vunpack.c.h.b16 %v2031
    %v2311 = vunpack.c.l.b16 %v2032
    %v2312 = vunpack.c.h.b16 %v2032
    %v2313 = vunpack.c.l.b16 %v2033
    %v2314 = vunpack.c.h.b16 %v2033
    %v2315 = vunpack.c.l.b16 %v2034
    %v2316 = vunpack.c.h.b16 %v2034
    %v2317 = vunpack.c.l.b16 %v2035
    %v2318 = vunpack.c.h.b16 %v2035
    %v2319 = vunpack.c.l.b16 %v2036
    %v2320 = vunpack.c.h.b16 %v2036
    %v2321 = vunpack.c.l.b16 %v2037
    %v2322 = vunpack.c.h.b16 %v2037
    %v2323 = vunpack.c.l.b16 %v2038
    %v2324 = vunpack.c.h.b16 %v2038
    %v2325 = vunpack.c.l.b16 %v2039
    %v2326 = vunpack.c.h.b16 %v2039
    %v2327 = vunpack.c.l.b16 %v2040
    %v2328 = vunpack.c.h.b16 %v2040
    %v2329 = vunpack.c.l.b16 %v2041
    %v2330 = vunpack.c.h.b16 %v2041
    %v2331 = vunpack.c.l.b16 %v2042
    %v2332 = vunpack.c.h.b16 %v2042
    %v2333 = vunpack.c.l.b16 %v2043
    %v2334 = vunpack.c.h.b16 %v2043
    %v2335 = vunpack.c.l.b16 %v2044
    %v2336 = vunpack.c.h.b16 %v2044
    %v2337 = vunpack.c.l.b16 %v2045
    %v2338 = vunpack.c.h.b16 %v2045
    %v2339 = vunpack.c.l.b16 %v2046
    %v2340 = vunpack.c.h.b16 %v2046
    %v2341 = vunpack.c.l.b16 %v2047
    %v2342 = vunpack.c.h.b16 %v2047
    %v2343 = vunpack.c.l.b16 %v2048
    %v2344 = vunpack.c.h.b16 %v2048
    %v2345 = vunpack.c.l.b16 %v2049
    %v2346 = vunpack.c.h.b16 %v2049
    %v2347 = vunpack.c.l.b16 %v2050
    %v2348 = vunpack.c.h.b16 %v2050
    %v2349 = vunpack.c.l.b16 %v2051
    %v2350 = vunpack.c.h.b16 %v2051
    %v2351 = vunpack.c.l.b16 %v2052
    %v2352 = vunpack.c.h.b16 %v2052
    %v2353 = vunpack.c.l.b16 %v2053
    %v2354 = vunpack.c.h.b16 %v2053
    %v2355 = vunpack.c.l.b16 %v2054
    %v2356 = vunpack.c.h.b16 %v2054
    %v2357 = vunpack.c.l.b16 %v2055
    %v2358 = vunpack.c.h.b16 %v2055
    %v2359 = vunpack.c.l.b16 %v2056
    %v2360 = vunpack.c.h.b16 %v2056
    %v2361 = vunpack.c.l.b16 %v2057
    %v2362 = vunpack.c.h.b16 %v2057
    %v2363 = vunpack.c.l.b16 %v2058
    %v2364 = vunpack.c.h.b16 %v2058
    %v2365 = vpack.c.b16 %v2181, %v2173
    %v2366 = vpack.c.b16 %v2182, %v2174
    %v2367 = vpack.c.b16 %v2183, %v2175
    %v2368 = vpack.c.b16 %v2184, %v2176
    %v2369 = vpack.c.b16 %v2185, %v2177
    %v2370 = vpack.c.b16 %v2186, %v2178
    %v2371 = vpack.c.b16 %v2187, %v2179
    %v2372 = vpack.c.b16 %v2188, %v2180
    %v2373 = vpack.c.b16 %v2197, %v2189
    %v2374 = vpack.c.b16 %v2198, %v2190
    %v2375 = vpack.c.b16 %v2199, %v2191
    %v2376 = vpack.c.b16 %v2200, %v2192
    %v2377 = vpack.c.b16 %v2201, %v2193
    %v2378 = vpack.c.b16 %v2202, %v2194
    %v2379 = vpack.c.b16 %v2203, %v2195
    %v2380 = vpack.c.b16 %v2204, %v2196
    %v2381 = vpack.c.b16 %v2213, %v2205
    %v2382 = vpack.c.b16 %v2214, %v2206
    %v2383 = vpack.c.b16 %v2215, %v2207
    %v2384 = vpack.c.b16 %v2216, %v2208
    %v2385 = vpack.c.b16 %v2217, %v2209
    %v2386 = vpack.c.b16 %v2218, %v2210
    %v2387 = vpack.c.b16 %v2219, %v2211
    %v2388 = vpack.c.b16 %v2220, %v2212
    %v2389 = vpack.c.b16 %v2229, %v2221
    %v2390 = vpack.c.b16 %v2230, %v2222
    %v2391 = vpack.c.b16 %v2231, %v2223
    %v2392 = vpack.c.b16 %v2232, %v2224
    %v2393 = vpack.c.b16 %v2233, %v2225
    %v2394 = vpack.c.b16 %v2234, %v2226
    %v2395 = vpack.c.b16 %v2235, %v2227
    %v2396 = vpack.c.b16 %v2236, %v2228
    %v2397 = vpack.c.b16 %v2245, %v2237
    %v2398 = vpack.c.b16 %v2246, %v2238
    %v2399 = vpack.c.b16 %v2247, %v2239
    %v2400 = vpack.c.b16 %v2248, %v2240
    %v2401 = vpack.c.b16 %v2249, %v2241
    %v2402 = vpack.c.b16 %v2250, %v2242
    %v2403 = vpack.c.b16 %v2251, %v2243
    %v2404 = vpack.c.b16 %v2252, %v2244
    %v2405 = vpack.c.b16 %v2261, %v2253
    %v2406 = vpack.c.b16 %v2262, %v2254
    %v2407 = vpack.c.b16 %v2263, %v2255
    %v2408 = vpack.c.b16 %v2264, %v2256
    %v2409 = vpack.c.b16 %v2265, %v2257
    %v2410 = vpack.c.b16 %v2266, %v2258
    %v2411 = vpack.c.b16 %v2267, %v2259
    %v2412 = vpack.c.b16 %v2268, %v2260
    %v2413 = vpack.c.b16 %v2277, %v2269
    %v2414 = vpack.c.b16 %v2278, %v2270
    %v2415 = vpack.c.b16 %v2279, %v2271
    %v2416 = vpack.c.b16 %v2280, %v2272
    %v2417 = vpack.c.b16 %v2281, %v2273
    %v2418 = vpack.c.b16 %v2282, %v2274
    %v2419 = vpack.c.b16 %v2283, %v2275
    %v2420 = vpack.c.b16 %v2284, %v2276
    %v2421 = vpack.c.b16 %v2293, %v2285
    %v2422 = vpack.c.b16 %v2294, %v2286
    %v2423 = vpack.c.b16 %v2295, %v2287
    %v2424 = vpack.c.b16 %v2296, %v2288
    %v2425 = vpack.c.b16 %v2297, %v2289
    %v2426 = vpack.c.b16 %v2298, %v2290
    %v2427 = vpack.c.b16 %v2299, %v2291
    %v2428 = vpack.c.b16 %v2300, %v2292
    %v2429 = vpack.c.b16 %v2309, %v2301
    %v2430 = vpack.c.b16 %v2310, %v2302
    %v2431 = vpack.c.b16 %v2311, %v2303
    %v2432 = vpack.c.b16 %v2312, %v2304
    %v2433 = vpack.c.b16 %v2313, %v2305
    %v2434 = vpack.c.b16 %v2314, %v2306
    %v2435 = vpack.c.b16 %v2315, %v2307
    %v2436 = vpack.c.b16 %v2316, %v2308
    %v2437 = vpack.c.b16 %v2325, %v2317
    %v2438 = vpack.c.b16 %v2326, %v2318
    %v2439 = vpack.c.b16 %v2327, %v2319
    %v2440 = vpack.c.b16 %v2328, %v2320
    %v2441 = vpack.c.b16 %v2329, %v2321
    %v2442 = vpack.c.b16 %v2330, %v2322
    %v2443 = vpack.c.b16 %v2331, %v2323
    %v2444 = vpack.c.b16 %v2332, %v2324
    %v2445 = vpack.c.b16 %v2341, %v2333
    %v2446 = vpack.c.b16 %v2342, %v2334
    %v2447 = vpack.c.b16 %v2343, %v2335
    %v2448 = vpack.c.b16 %v2344, %v2336
    %v2449 = vpack.c.b16 %v2345, %v2337
    %v2450 = vpack.c.b16 %v2346, %v2338
    %v2451 = vpack.c.b16 %v2347, %v2339
    %v2452 = vpack.c.b16 %v2348, %v2340
    %v2453 = vpack.c.b16 %v2357, %v2349
    %v2454 = vpack.c.b16 %v2358, %v2350
    %v2455 = vpack.c.b16 %v2359, %v2351
    %v2456 = vpack.c.b16 %v2360, %v2352
    %v2457 = vpack.c.b16 %v2361, %v2353
    %v2458 = vpack.c.b16 %v2362, %v2354
    %v2459 = vpack.c.b16 %v2363, %v2355
    %v2460 = vpack.c.b16 %v2364, %v2356
    %v2558 = vsel %vm198, %v1962, 0
    %2560 = vmatpush.bf16.msra.mxu0 %v2421
    %2561 = vmatpush.bf16.msra.mxu0 %v2413
    %2562 = vmatpush.bf16.msra.mxu0 %v2405
    %2563 = vmatpush.bf16.msra.mxu0 %v2397
    %2564 = vmatpush.bf16.msra.mxu0 %v2389
    %2565 = vmatpush.bf16.msra.mxu0 %v2381
    %2566 = vmatpush.bf16.msra.mxu0 %v2373
    %2567 = vmatpush.bf16.msra.mxu0 %v2365
    %2568 = vmatmul.bf16.gmra.mxu0 %v1961
    %v2569 = vpop.f32.mrf.mxu0
    %v2570 = vadd.f32 %v2061, %v2569
    %v2571 = vpop.f32.mrf.mxu0
    %2572 = vdwg.mxu0
    %2573 = vmatpush.bf16.msra.mxu0 0
    %2574 = vmatpush.bf16.msra.mxu0 0
    %2575 = vmatpush.bf16.msra.mxu0 0
    %2576 = vmatpush.bf16.msra.mxu0 0
    %2577 = vmatpush.bf16.msra.mxu0 %v2453
    %2578 = vmatpush.bf16.msra.mxu0 %v2445
    %2579 = vmatpush.bf16.msra.mxu0 %v2437
    %2580 = vmatpush.bf16.msra.mxu0 %v2429
    %2581 = vmatmul.bf16.gmra.mxu0 %v2558
    %v2582 = vpop.f32.mrf.mxu0
    %v2583 = vadd.f32 %v2570, %v2582
    %v2584 = vpop.f32.mrf.mxu0
    %2585 = vdwg.mxu0
    %2586 = vmatpush.bf16.msra.mxu0 %v2422
    %2587 = vmatpush.bf16.msra.mxu0 %v2414
    %2588 = vmatpush.bf16.msra.mxu0 %v2406
    %2589 = vmatpush.bf16.msra.mxu0 %v2398
    %2590 = vmatpush.bf16.msra.mxu0 %v2390
    %2591 = vmatpush.bf16.msra.mxu0 %v2382
    %2592 = vmatpush.bf16.msra.mxu0 %v2374
    %2593 = vmatpush.bf16.msra.mxu0 %v2366
    %2594 = vmatmul.bf16.gmra.mxu0 %v1961
    %v2595 = vpop.f32.mrf.mxu0
    %v2596 = vadd.f32 %v2062, %v2595
    %v2597 = vpop.f32.mrf.mxu0
    %2598 = vdwg.mxu0
    %2599 = vmatpush.bf16.msra.mxu0 0
    %2600 = vmatpush.bf16.msra.mxu0 0
    %2601 = vmatpush.bf16.msra.mxu0 0
    %2602 = vmatpush.bf16.msra.mxu0 0
    %2603 = vmatpush.bf16.msra.mxu0 %v2454
    %2604 = vmatpush.bf16.msra.mxu0 %v2446
    %2605 = vmatpush.bf16.msra.mxu0 %v2438
    %2606 = vmatpush.bf16.msra.mxu0 %v2430
    %2607 = vmatmul.bf16.gmra.mxu0 %v2558
    %v2608 = vpop.f32.mrf.mxu0
    %v2609 = vadd.f32 %v2596, %v2608
    %v2610 = vpop.f32.mrf.mxu0
    %2611 = vdwg.mxu0
    %2612 = vmatpush.bf16.msra.mxu0 %v2423
    %2613 = vmatpush.bf16.msra.mxu0 %v2415
    %2614 = vmatpush.bf16.msra.mxu0 %v2407
    %2615 = vmatpush.bf16.msra.mxu0 %v2399
    %2616 = vmatpush.bf16.msra.mxu0 %v2391
    %2617 = vmatpush.bf16.msra.mxu0 %v2383
    %2618 = vmatpush.bf16.msra.mxu0 %v2375
    %2619 = vmatpush.bf16.msra.mxu0 %v2367
    %2620 = vmatmul.bf16.gmra.mxu0 %v1961
    %v2621 = vpop.f32.mrf.mxu0
    %v2622 = vadd.f32 %v2063, %v2621
    %v2623 = vpop.f32.mrf.mxu0
    %2624 = vdwg.mxu0
    %2625 = vmatpush.bf16.msra.mxu0 0
    %2626 = vmatpush.bf16.msra.mxu0 0
    %2627 = vmatpush.bf16.msra.mxu0 0
    %2628 = vmatpush.bf16.msra.mxu0 0
    %2629 = vmatpush.bf16.msra.mxu0 %v2455
    %2630 = vmatpush.bf16.msra.mxu0 %v2447
    %2631 = vmatpush.bf16.msra.mxu0 %v2439
    %2632 = vmatpush.bf16.msra.mxu0 %v2431
    %2633 = vmatmul.bf16.gmra.mxu0 %v2558
    %v2634 = vpop.f32.mrf.mxu0
    %v2635 = vadd.f32 %v2622, %v2634
    %v2636 = vpop.f32.mrf.mxu0
    %2637 = vdwg.mxu0
    %2638 = vmatpush.bf16.msra.mxu0 %v2424
    %2639 = vmatpush.bf16.msra.mxu0 %v2416
    %2640 = vmatpush.bf16.msra.mxu0 %v2408
    %2641 = vmatpush.bf16.msra.mxu0 %v2400
    %2642 = vmatpush.bf16.msra.mxu0 %v2392
    %2643 = vmatpush.bf16.msra.mxu0 %v2384
    %2644 = vmatpush.bf16.msra.mxu0 %v2376
    %2645 = vmatpush.bf16.msra.mxu0 %v2368
    %2646 = vmatmul.bf16.gmra.mxu0 %v1961
    %v2647 = vpop.f32.mrf.mxu0
    %v2648 = vadd.f32 %v2064, %v2647
    %v2649 = vpop.f32.mrf.mxu0
    %2650 = vdwg.mxu0
    %2651 = vmatpush.bf16.msra.mxu0 0
    %2652 = vmatpush.bf16.msra.mxu0 0
    %2653 = vmatpush.bf16.msra.mxu0 0
    %2654 = vmatpush.bf16.msra.mxu0 0
    %2655 = vmatpush.bf16.msra.mxu0 %v2456
    %2656 = vmatpush.bf16.msra.mxu0 %v2448
    %2657 = vmatpush.bf16.msra.mxu0 %v2440
    %2658 = vmatpush.bf16.msra.mxu0 %v2432
    %2659 = vmatmul.bf16.gmra.mxu0 %v2558
    %v2660 = vpop.f32.mrf.mxu0
    %v2661 = vadd.f32 %v2648, %v2660
    %v2662 = vpop.f32.mrf.mxu0
    %2663 = vdwg.mxu0
    %2664 = vmatpush.bf16.msra.mxu0 %v2425
    %2665 = vmatpush.bf16.msra.mxu0 %v2417
    %2666 = vmatpush.bf16.msra.mxu0 %v2409
    %2667 = vmatpush.bf16.msra.mxu0 %v2401
    %2668 = vmatpush.bf16.msra.mxu0 %v2393
    %2669 = vmatpush.bf16.msra.mxu0 %v2385
    %2670 = vmatpush.bf16.msra.mxu0 %v2377
    %2671 = vmatpush.bf16.msra.mxu0 %v2369
    %2672 = vmatmul.bf16.gmra.mxu0 %v1961
    %v2673 = vpop.f32.mrf.mxu0
    %v2674 = vadd.f32 %v2065, %v2673
    %v2675 = vpop.f32.mrf.mxu0
    %2676 = vdwg.mxu0
    %2677 = vmatpush.bf16.msra.mxu0 0
    %2678 = vmatpush.bf16.msra.mxu0 0
    %2679 = vmatpush.bf16.msra.mxu0 0
    %2680 = vmatpush.bf16.msra.mxu0 0
    %2681 = vmatpush.bf16.msra.mxu0 %v2457
    %2682 = vmatpush.bf16.msra.mxu0 %v2449
    %2683 = vmatpush.bf16.msra.mxu0 %v2441
    %2684 = vmatpush.bf16.msra.mxu0 %v2433
    %2685 = vmatmul.bf16.gmra.mxu0 %v2558
    %v2686 = vpop.f32.mrf.mxu0
    %v2687 = vadd.f32 %v2674, %v2686
    %v2688 = vpop.f32.mrf.mxu0
    %2689 = vdwg.mxu0
    %2690 = vmatpush.bf16.msra.mxu0 %v2426
    %2691 = vmatpush.bf16.msra.mxu0 %v2418
    %2692 = vmatpush.bf16.msra.mxu0 %v2410
    %2693 = vmatpush.bf16.msra.mxu0 %v2402
    %2694 = vmatpush.bf16.msra.mxu0 %v2394
    %2695 = vmatpush.bf16.msra.mxu0 %v2386
    %2696 = vmatpush.bf16.msra.mxu0 %v2378
    %2697 = vmatpush.bf16.msra.mxu0 %v2370
    %2698 = vmatmul.bf16.gmra.mxu0 %v1961
    %v2699 = vpop.f32.mrf.mxu0
    %v2700 = vadd.f32 %v2066, %v2699
    %v2701 = vpop.f32.mrf.mxu0
    %2702 = vdwg.mxu0
    %2703 = vmatpush.bf16.msra.mxu0 0
    %2704 = vmatpush.bf16.msra.mxu0 0
    %2705 = vmatpush.bf16.msra.mxu0 0
    %2706 = vmatpush.bf16.msra.mxu0 0
    %2707 = vmatpush.bf16.msra.mxu0 %v2458
    %2708 = vmatpush.bf16.msra.mxu0 %v2450
    %2709 = vmatpush.bf16.msra.mxu0 %v2442
    %2710 = vmatpush.bf16.msra.mxu0 %v2434
    %2711 = vmatmul.bf16.gmra.mxu0 %v2558
    %v2712 = vpop.f32.mrf.mxu0
    %v2713 = vadd.f32 %v2700, %v2712
    %v2714 = vpop.f32.mrf.mxu0
    %2715 = vdwg.mxu0
    %2716 = vmatpush.bf16.msra.mxu0 %v2427
    %2717 = vmatpush.bf16.msra.mxu0 %v2419
    %2718 = vmatpush.bf16.msra.mxu0 %v2411
    %2719 = vmatpush.bf16.msra.mxu0 %v2403
    %2720 = vmatpush.bf16.msra.mxu0 %v2395
    %2721 = vmatpush.bf16.msra.mxu0 %v2387
    %2722 = vmatpush.bf16.msra.mxu0 %v2379
    %2723 = vmatpush.bf16.msra.mxu0 %v2371
    %2724 = vmatmul.bf16.gmra.mxu0 %v1961
    %v2725 = vpop.f32.mrf.mxu0
    %v2726 = vadd.f32 %v2067, %v2725
    %v2727 = vpop.f32.mrf.mxu0
    %2728 = vdwg.mxu0
    %2729 = vmatpush.bf16.msra.mxu0 0
    %2730 = vmatpush.bf16.msra.mxu0 0
    %2731 = vmatpush.bf16.msra.mxu0 0
    %2732 = vmatpush.bf16.msra.mxu0 0
    %2733 = vmatpush.bf16.msra.mxu0 %v2459
    %2734 = vmatpush.bf16.msra.mxu0 %v2451
    %2735 = vmatpush.bf16.msra.mxu0 %v2443
    %2736 = vmatpush.bf16.msra.mxu0 %v2435
    %2737 = vmatmul.bf16.gmra.mxu0 %v2558
    %v2738 = vpop.f32.mrf.mxu0
    %v2739 = vadd.f32 %v2726, %v2738
    %v2740 = vpop.f32.mrf.mxu0
    %2741 = vdwg.mxu0
    %2742 = vmatpush.bf16.msra.mxu0 %v2428
    %2743 = vmatpush.bf16.msra.mxu0 %v2420
    %2744 = vmatpush.bf16.msra.mxu0 %v2412
    %2745 = vmatpush.bf16.msra.mxu0 %v2404
    %2746 = vmatpush.bf16.msra.mxu0 %v2396
    %2747 = vmatpush.bf16.msra.mxu0 %v2388
    %2748 = vmatpush.bf16.msra.mxu0 %v2380
    %2749 = vmatpush.bf16.msra.mxu0 %v2372
    %2750 = vmatmul.bf16.gmra.mxu0 %v1961
    %v2751 = vpop.f32.mrf.mxu0
    %v2752 = vadd.f32 %v2068, %v2751
    %v2753 = vpop.f32.mrf.mxu0
    %2754 = vdwg.mxu0
    %2755 = vmatpush.bf16.msra.mxu0 0
    %2756 = vmatpush.bf16.msra.mxu0 0
    %2757 = vmatpush.bf16.msra.mxu0 0
    %2758 = vmatpush.bf16.msra.mxu0 0
    %2759 = vmatpush.bf16.msra.mxu0 %v2460
    %2760 = vmatpush.bf16.msra.mxu0 %v2452
    %2761 = vmatpush.bf16.msra.mxu0 %v2444
    %2762 = vmatpush.bf16.msra.mxu0 %v2436
    %2763 = vmatmul.bf16.gmra.mxu0 %v2558
    %v2764 = vpop.f32.mrf.mxu0
    %v2765 = vadd.f32 %v2752, %v2764
    %v2766 = vpop.f32.mrf.mxu0
    %2767 = vdwg.mxu0
    %v2768 = vmax.f32 %v2583, 0.0
    %v2769 = vmax.f32 %v2609, 0.0
    %v2770 = vmax.f32 %v2635, 0.0
    %v2771 = vmax.f32 %v2661, 0.0
    %v2772 = vmax.f32 %v2687, 0.0
    %v2773 = vmax.f32 %v2713, 0.0
    %v2774 = vmax.f32 %v2739, 0.0
    %v2775 = vmax.f32 %v2765, 0.0
    %v2776 = vpack.c.bf16 %v2768, %v2768
    %v2777 = vpack.c.bf16 %v2769, %v2769
    %v2778 = vpack.c.bf16 %v2770, %v2770
    %v2779 = vpack.c.bf16 %v2771, %v2771
    %v2780 = vpack.c.bf16 %v2772, %v2772
    %v2781 = vpack.c.bf16 %v2773, %v2773
    %v2782 = vpack.c.bf16 %v2774, %v2774
    %v2783 = vpack.c.bf16 %v2775, %v2775
    %v2784 = vld [vmem:[#allocation15] sm:$0xff]
    %v2785 = vld [vmem:[#allocation15 + $0x8] sm:$0xff]
    %v2786 = vld [vmem:[#allocation15 + $0x10] sm:$0xff]
    %v2787 = vld [vmem:[#allocation15 + $0x18] sm:$0xff]
    %v2788 = vld [vmem:[#allocation15 + $0x20] sm:$0xff]
    %v2789 = vld [vmem:[#allocation15 + $0x28] sm:$0xff]
    %v2790 = vld [vmem:[#allocation15 + $0x30] sm:$0xff]
    %v2791 = vld [vmem:[#allocation15 + $0x38] sm:$0xff]
    %v2792 = vld [vmem:[#allocation15 + $0x40] sm:$0xff]
    %v2793 = vld [vmem:[#allocation15 + $0x48] sm:$0xff]
    %v2794 = vld [vmem:[#allocation15 + $0x50] sm:$0xff]
    %v2795 = vld [vmem:[#allocation15 + $0x58] sm:$0xff]
    %v2796 = vld [vmem:[#allocation15 + $0x60] sm:$0xff]
    %v2797 = vld [vmem:[#allocation15 + $0x68] sm:$0xff]
    %v2798 = vld [vmem:[#allocation15 + $0x70] sm:$0xff]
    %v2799 = vld [vmem:[#allocation15 + $0x78] sm:$0xff]
    %v2800 = vld [vmem:[#allocation15 + $0x80] sm:$0xff]
    %v2801 = vld [vmem:[#allocation15 + $0x88] sm:$0xff]
    %v2802 = vld [vmem:[#allocation15 + $0x90] sm:$0xff]
    %v2803 = vld [vmem:[#allocation15 + $0x98] sm:$0xff]
    %v2804 = vld [vmem:[#allocation15 + $0xa0] sm:$0xff]
    %v2805 = vld [vmem:[#allocation15 + $0xa8] sm:$0xff]
    %v2806 = vld [vmem:[#allocation15 + $0xb0] sm:$0xff]
    %v2807 = vld [vmem:[#allocation15 + $0xb8] sm:$0xff]
    %v2808 = vld [vmem:[#allocation15 + $0xc0] sm:$0xff]
    %v2809 = vld [vmem:[#allocation15 + $0xc8] sm:$0xff]
    %v2810 = vld [vmem:[#allocation15 + $0xd0] sm:$0xff]
    %v2811 = vld [vmem:[#allocation15 + $0xd8] sm:$0xff]
    %v2812 = vld [vmem:[#allocation15 + $0xe0] sm:$0xff]
    %v2813 = vld [vmem:[#allocation15 + $0xe8] sm:$0xff]
    %v2814 = vld [vmem:[#allocation15 + $0xf0] sm:$0xff]
    %v2815 = vld [vmem:[#allocation15 + $0xf8] sm:$0xff]
    %v2816 = vld [vmem:[#allocation15 + $0x100] sm:$0xff]
    %v2817 = vld [vmem:[#allocation15 + $0x108] sm:$0xff]
    %v2818 = vld [vmem:[#allocation15 + $0x110] sm:$0xff]
    %v2819 = vld [vmem:[#allocation15 + $0x118] sm:$0xff]
    %v2820 = vld [vmem:[#allocation15 + $0x120] sm:$0xff]
    %v2821 = vld [vmem:[#allocation15 + $0x128] sm:$0xff]
    %v2822 = vld [vmem:[#allocation15 + $0x130] sm:$0xff]
    %v2823 = vld [vmem:[#allocation15 + $0x138] sm:$0xff]
    %v2824 = vld [vmem:[#allocation15 + $0x140] sm:$0xff]
    %v2825 = vld [vmem:[#allocation15 + $0x148] sm:$0xff]
    %v2826 = vld [vmem:[#allocation15 + $0x150] sm:$0xff]
    %v2827 = vld [vmem:[#allocation15 + $0x158] sm:$0xff]
    %v2828 = vld [vmem:[#allocation15 + $0x160] sm:$0xff]
    %v2829 = vld [vmem:[#allocation15 + $0x168] sm:$0xff]
    %v2830 = vld [vmem:[#allocation15 + $0x170] sm:$0xff]
    %v2831 = vld [vmem:[#allocation15 + $0x178] sm:$0xff]
    %v2832 = vld [vmem:[#allocation15 + $0x180] sm:$0xff]
    %v2833 = vld [vmem:[#allocation15 + $0x188] sm:$0xff]
    %v2834 = vld [vmem:[#allocation15 + $0x190] sm:$0xff]
    %v2835 = vld [vmem:[#allocation15 + $0x198] sm:$0xff]
    %v2836 = vld [vmem:[#allocation15 + $0x1a0] sm:$0xff]
    %v2837 = vld [vmem:[#allocation15 + $0x1a8] sm:$0xff]
    %v2838 = vld [vmem:[#allocation15 + $0x1b0] sm:$0xff]
    %v2839 = vld [vmem:[#allocation15 + $0x1b8] sm:$0xff]
    %v2840 = vld [vmem:[#allocation15 + $0x1c0] sm:$0xff]
    %v2841 = vld [vmem:[#allocation15 + $0x1c8] sm:$0xff]
    %v2842 = vld [vmem:[#allocation15 + $0x1d0] sm:$0xff]
    %v2843 = vld [vmem:[#allocation15 + $0x1d8] sm:$0xff]
    %v2844 = vld [vmem:[#allocation15 + $0x1e0] sm:$0xff]
    %v2845 = vld [vmem:[#allocation15 + $0x1e8] sm:$0xff]
    %v2846 = vld [vmem:[#allocation15 + $0x1f0] sm:$0xff]
    %v2847 = vld [vmem:[#allocation15 + $0x1f8] sm:$0xff]
    %v2848 = vld [vmem:[#allocation15 + $0x200] sm:$0xff]
    %v2849 = vld [vmem:[#allocation15 + $0x208] sm:$0xff]
    %v2850 = vld [vmem:[#allocation15 + $0x210] sm:$0xff]
    %v2851 = vld [vmem:[#allocation15 + $0x218] sm:$0xff]
    %v2852 = vld [vmem:[#allocation15 + $0x220] sm:$0xff]
    %v2853 = vld [vmem:[#allocation15 + $0x228] sm:$0xff]
    %v2854 = vld [vmem:[#allocation15 + $0x230] sm:$0xff]
    %v2855 = vld [vmem:[#allocation15 + $0x238] sm:$0xff]
    %v2856 = vld [vmem:[#allocation15 + $0x240] sm:$0xff]
    %v2857 = vld [vmem:[#allocation15 + $0x248] sm:$0xff]
    %v2858 = vld [vmem:[#allocation15 + $0x250] sm:$0xff]
    %v2859 = vld [vmem:[#allocation15 + $0x258] sm:$0xff]
    %v2860 = vld [vmem:[#allocation15 + $0x260] sm:$0xff]
    %v2861 = vld [vmem:[#allocation15 + $0x268] sm:$0xff]
    %v2862 = vld [vmem:[#allocation15 + $0x270] sm:$0xff]
    %v2863 = vld [vmem:[#allocation15 + $0x278] sm:$0xff]
    %v2864 = vld [vmem:[#allocation15 + $0x280] sm:$0xff]
    %v2865 = vld [vmem:[#allocation15 + $0x288] sm:$0xff]
    %v2866 = vld [vmem:[#allocation15 + $0x290] sm:$0xff]
    %v2867 = vld [vmem:[#allocation15 + $0x298] sm:$0xff]
    %v2868 = vld [vmem:[#allocation15 + $0x2a0] sm:$0xff]
    %v2869 = vld [vmem:[#allocation15 + $0x2a8] sm:$0xff]
    %v2870 = vld [vmem:[#allocation15 + $0x2b0] sm:$0xff]
    %v2871 = vld [vmem:[#allocation15 + $0x2b8] sm:$0xff]
    %v2872 = vld [vmem:[#allocation15 + $0x2c0] sm:$0xff]
    %v2873 = vld [vmem:[#allocation15 + $0x2c8] sm:$0xff]
    %v2874 = vld [vmem:[#allocation15 + $0x2d0] sm:$0xff]
    %v2875 = vld [vmem:[#allocation15 + $0x2d8] sm:$0xff]
    %v2876 = vld [vmem:[#allocation15 + $0x2e0] sm:$0xff]
    %v2877 = vld [vmem:[#allocation15 + $0x2e8] sm:$0xff]
    %v2878 = vld [vmem:[#allocation15 + $0x2f0] sm:$0xff]
    %v2879 = vld [vmem:[#allocation15 + $0x2f8] sm:$0xff]
    %v2880 = vld [vmem:[#allocation15 + $0x300] sm:$0xff]
    %v2881 = vld [vmem:[#allocation15 + $0x308] sm:$0xff]
    %v2882 = vld [vmem:[#allocation15 + $0x310] sm:$0xff]
    %v2883 = vld [vmem:[#allocation15 + $0x318] sm:$0xff]
    %v2884 = vld [vmem:[#allocation15 + $0x320] sm:$0xff]
    %v2885 = vld [vmem:[#allocation15 + $0x328] sm:$0xff]
    %v2886 = vld [vmem:[#allocation15 + $0x330] sm:$0xff]
    %v2887 = vld [vmem:[#allocation15 + $0x338] sm:$0xff]
    %v2888 = vld [vmem:[#allocation15 + $0x340] sm:$0xff]
    %v2889 = vld [vmem:[#allocation15 + $0x348] sm:$0xff]
    %v2890 = vld [vmem:[#allocation15 + $0x350] sm:$0xff]
    %v2891 = vld [vmem:[#allocation15 + $0x358] sm:$0xff]
    %v2892 = vld [vmem:[#allocation15 + $0x360] sm:$0xff]
    %v2893 = vld [vmem:[#allocation15 + $0x368] sm:$0xff]
    %v2894 = vld [vmem:[#allocation15 + $0x370] sm:$0xff]
    %v2895 = vld [vmem:[#allocation15 + $0x378] sm:$0xff]
    %v2896 = vld [vmem:[#allocation15 + $0x380] sm:$0xff]
    %v2897 = vld [vmem:[#allocation15 + $0x388] sm:$0xff]
    %v2898 = vld [vmem:[#allocation15 + $0x390] sm:$0xff]
    %v2899 = vld [vmem:[#allocation15 + $0x398] sm:$0xff]
    %v2900 = vld [vmem:[#allocation15 + $0x3a0] sm:$0xff]
    %v2901 = vld [vmem:[#allocation15 + $0x3a8] sm:$0xff]
    %v2902 = vld [vmem:[#allocation15 + $0x3b0] sm:$0xff]
    %v2903 = vld [vmem:[#allocation15 + $0x3b8] sm:$0xff]
    %v2904 = vld [vmem:[#allocation15 + $0x3c0] sm:$0xff]
    %v2905 = vld [vmem:[#allocation15 + $0x3c8] sm:$0xff]
    %v2906 = vld [vmem:[#allocation15 + $0x3d0] sm:$0xff]
    %v2907 = vld [vmem:[#allocation15 + $0x3d8] sm:$0xff]
    %v2908 = vld [vmem:[#allocation15 + $0x3e0] sm:$0xff]
    %v2909 = vld [vmem:[#allocation15 + $0x3e8] sm:$0xff]
    %v2910 = vld [vmem:[#allocation15 + $0x3f0] sm:$0xff]
    %v2911 = vld [vmem:[#allocation15 + $0x3f8] sm:$0xff]
    %v2912 = vld [vmem:[#allocation15 + $0x400] sm:$0xff]
    %v2913 = vld [vmem:[#allocation15 + $0x408] sm:$0xff]
    %v2914 = vld [vmem:[#allocation15 + $0x410] sm:$0xff]
    %v2915 = vld [vmem:[#allocation15 + $0x418] sm:$0xff]
    %v2916 = vld [vmem:[#allocation15 + $0x420] sm:$0xff]
    %v2917 = vld [vmem:[#allocation15 + $0x428] sm:$0xff]
    %v2918 = vld [vmem:[#allocation15 + $0x430] sm:$0xff]
    %v2919 = vld [vmem:[#allocation15 + $0x438] sm:$0xff]
    %v2920 = vld [vmem:[#allocation15 + $0x440] sm:$0xff]
    %v2921 = vld [vmem:[#allocation15 + $0x448] sm:$0xff]
    %v2922 = vld [vmem:[#allocation15 + $0x450] sm:$0xff]
    %v2923 = vld [vmem:[#allocation15 + $0x458] sm:$0xff]
    %v2924 = vld [vmem:[#allocation15 + $0x460] sm:$0xff]
    %v2925 = vld [vmem:[#allocation15 + $0x468] sm:$0xff]
    %v2926 = vld [vmem:[#allocation15 + $0x470] sm:$0xff]
    %v2927 = vld [vmem:[#allocation15 + $0x478] sm:$0xff]
    %v2928 = vld [vmem:[#allocation15 + $0x480] sm:$0xff]
    %v2929 = vld [vmem:[#allocation15 + $0x488] sm:$0xff]
    %v2930 = vld [vmem:[#allocation15 + $0x490] sm:$0xff]
    %v2931 = vld [vmem:[#allocation15 + $0x498] sm:$0xff]
    %v2932 = vld [vmem:[#allocation15 + $0x4a0] sm:$0xff]
    %v2933 = vld [vmem:[#allocation15 + $0x4a8] sm:$0xff]
    %v2934 = vld [vmem:[#allocation15 + $0x4b0] sm:$0xff]
    %v2935 = vld [vmem:[#allocation15 + $0x4b8] sm:$0xff]
    %v2936 = vld [vmem:[#allocation15 + $0x4c0] sm:$0xff]
    %v2937 = vld [vmem:[#allocation15 + $0x4c8] sm:$0xff]
    %v2938 = vld [vmem:[#allocation15 + $0x4d0] sm:$0xff]
    %v2939 = vld [vmem:[#allocation15 + $0x4d8] sm:$0xff]
    %v2940 = vld [vmem:[#allocation15 + $0x4e0] sm:$0xff]
    %v2941 = vld [vmem:[#allocation15 + $0x4e8] sm:$0xff]
    %v2942 = vld [vmem:[#allocation15 + $0x4f0] sm:$0xff]
    %v2943 = vld [vmem:[#allocation15 + $0x4f8] sm:$0xff]
    %v2944 = vld [vmem:[#allocation15 + $0x500] sm:$0xff]
    %v2945 = vld [vmem:[#allocation15 + $0x508] sm:$0xff]
    %v2946 = vld [vmem:[#allocation15 + $0x510] sm:$0xff]
    %v2947 = vld [vmem:[#allocation15 + $0x518] sm:$0xff]
    %v2948 = vld [vmem:[#allocation15 + $0x520] sm:$0xff]
    %v2949 = vld [vmem:[#allocation15 + $0x528] sm:$0xff]
    %v2950 = vld [vmem:[#allocation15 + $0x530] sm:$0xff]
    %v2951 = vld [vmem:[#allocation15 + $0x538] sm:$0xff]
    %v2952 = vld [vmem:[#allocation15 + $0x540] sm:$0xff]
    %v2953 = vld [vmem:[#allocation15 + $0x548] sm:$0xff]
    %v2954 = vld [vmem:[#allocation15 + $0x550] sm:$0xff]
    %v2955 = vld [vmem:[#allocation15 + $0x558] sm:$0xff]
    %v2956 = vld [vmem:[#allocation15 + $0x560] sm:$0xff]
    %v2957 = vld [vmem:[#allocation15 + $0x568] sm:$0xff]
    %v2958 = vld [vmem:[#allocation15 + $0x570] sm:$0xff]
    %v2959 = vld [vmem:[#allocation15 + $0x578] sm:$0xff]
    %v2960 = vld [vmem:[#allocation15 + $0x580] sm:$0xff]
    %v2961 = vld [vmem:[#allocation15 + $0x588] sm:$0xff]
    %v2962 = vld [vmem:[#allocation15 + $0x590] sm:$0xff]
    %v2963 = vld [vmem:[#allocation15 + $0x598] sm:$0xff]
    %v2964 = vld [vmem:[#allocation15 + $0x5a0] sm:$0xff]
    %v2965 = vld [vmem:[#allocation15 + $0x5a8] sm:$0xff]
    %v2966 = vld [vmem:[#allocation15 + $0x5b0] sm:$0xff]
    %v2967 = vld [vmem:[#allocation15 + $0x5b8] sm:$0xff]
    %v2968 = vld [vmem:[#allocation15 + $0x5c0] sm:$0xff]
    %v2969 = vld [vmem:[#allocation15 + $0x5c8] sm:$0xff]
    %v2970 = vld [vmem:[#allocation15 + $0x5d0] sm:$0xff]
    %v2971 = vld [vmem:[#allocation15 + $0x5d8] sm:$0xff]
    %v2972 = vld [vmem:[#allocation15 + $0x5e0] sm:$0xff]
    %v2973 = vld [vmem:[#allocation15 + $0x5e8] sm:$0xff]
    %v2974 = vld [vmem:[#allocation15 + $0x5f0] sm:$0xff]
    %v2975 = vld [vmem:[#allocation15 + $0x5f8] sm:$0xff]
    %v2976 = vld [vmem:[#allocation15 + $0x600] sm:$0xff]
    %v2977 = vld [vmem:[#allocation15 + $0x608] sm:$0xff]
    %v2978 = vld [vmem:[#allocation15 + $0x610] sm:$0xff]
    %v2979 = vld [vmem:[#allocation15 + $0x618] sm:$0xff]
    %v2980 = vld [vmem:[#allocation15 + $0x620] sm:$0xff]
    %v2981 = vld [vmem:[#allocation15 + $0x628] sm:$0xff]
    %v2982 = vld [vmem:[#allocation15 + $0x630] sm:$0xff]
    %v2983 = vld [vmem:[#allocation15 + $0x638] sm:$0xff]
    %v2984 = vld [vmem:[#allocation15 + $0x640] sm:$0xff]
    %v2985 = vld [vmem:[#allocation15 + $0x648] sm:$0xff]
    %v2986 = vld [vmem:[#allocation15 + $0x650] sm:$0xff]
    %v2987 = vld [vmem:[#allocation15 + $0x658] sm:$0xff]
    %v2988 = vld [vmem:[#allocation15 + $0x660] sm:$0xff]
    %v2989 = vld [vmem:[#allocation15 + $0x668] sm:$0xff]
    %v2990 = vld [vmem:[#allocation15 + $0x670] sm:$0xff]
    %v2991 = vld [vmem:[#allocation15 + $0x678] sm:$0xff]
    %v2992 = vld [vmem:[#allocation15 + $0x680] sm:$0xff]
    %v2993 = vld [vmem:[#allocation15 + $0x688] sm:$0xff]
    %v2994 = vld [vmem:[#allocation15 + $0x690] sm:$0xff]
    %v2995 = vld [vmem:[#allocation15 + $0x698] sm:$0xff]
    %v2996 = vld [vmem:[#allocation15 + $0x6a0] sm:$0xff]
    %v2997 = vld [vmem:[#allocation15 + $0x6a8] sm:$0xff]
    %v2998 = vld [vmem:[#allocation15 + $0x6b0] sm:$0xff]
    %v2999 = vld [vmem:[#allocation15 + $0x6b8] sm:$0xff]
    %v3000 = vld [vmem:[#allocation15 + $0x6c0] sm:$0xff]
    %v3001 = vld [vmem:[#allocation15 + $0x6c8] sm:$0xff]
    %v3002 = vld [vmem:[#allocation15 + $0x6d0] sm:$0xff]
    %v3003 = vld [vmem:[#allocation15 + $0x6d8] sm:$0xff]
    %v3004 = vld [vmem:[#allocation15 + $0x6e0] sm:$0xff]
    %v3005 = vld [vmem:[#allocation15 + $0x6e8] sm:$0xff]
    %v3006 = vld [vmem:[#allocation15 + $0x6f0] sm:$0xff]
    %v3007 = vld [vmem:[#allocation15 + $0x6f8] sm:$0xff]
    %v3008 = vld [vmem:[#allocation15 + $0x700] sm:$0xff]
    %v3009 = vld [vmem:[#allocation15 + $0x708] sm:$0xff]
    %v3010 = vld [vmem:[#allocation15 + $0x710] sm:$0xff]
    %v3011 = vld [vmem:[#allocation15 + $0x718] sm:$0xff]
    %v3012 = vld [vmem:[#allocation15 + $0x720] sm:$0xff]
    %v3013 = vld [vmem:[#allocation15 + $0x728] sm:$0xff]
    %v3014 = vld [vmem:[#allocation15 + $0x730] sm:$0xff]
    %v3015 = vld [vmem:[#allocation15 + $0x738] sm:$0xff]
    %v3016 = vld [vmem:[#allocation15 + $0x740] sm:$0xff]
    %v3017 = vld [vmem:[#allocation15 + $0x748] sm:$0xff]
    %v3018 = vld [vmem:[#allocation15 + $0x750] sm:$0xff]
    %v3019 = vld [vmem:[#allocation15 + $0x758] sm:$0xff]
    %v3020 = vld [vmem:[#allocation15 + $0x760] sm:$0xff]
    %v3021 = vld [vmem:[#allocation15 + $0x768] sm:$0xff]
    %v3022 = vld [vmem:[#allocation15 + $0x770] sm:$0xff]
    %v3023 = vld [vmem:[#allocation15 + $0x778] sm:$0xff]
    %v3024 = vld [vmem:[#allocation15 + $0x780] sm:$0xff]
    %v3025 = vld [vmem:[#allocation15 + $0x788] sm:$0xff]
    %v3026 = vld [vmem:[#allocation15 + $0x790] sm:$0xff]
    %v3027 = vld [vmem:[#allocation15 + $0x798] sm:$0xff]
    %v3028 = vld [vmem:[#allocation15 + $0x7a0] sm:$0xff]
    %v3029 = vld [vmem:[#allocation15 + $0x7a8] sm:$0xff]
    %v3030 = vld [vmem:[#allocation15 + $0x7b0] sm:$0xff]
    %v3031 = vld [vmem:[#allocation15 + $0x7b8] sm:$0xff]
    %v3032 = vld [vmem:[#allocation15 + $0x7c0] sm:$0xff]
    %v3033 = vld [vmem:[#allocation15 + $0x7c8] sm:$0xff]
    %v3034 = vld [vmem:[#allocation15 + $0x7d0] sm:$0xff]
    %v3035 = vld [vmem:[#allocation15 + $0x7d8] sm:$0xff]
    %v3036 = vld [vmem:[#allocation15 + $0x7e0] sm:$0xff]
    %v3037 = vld [vmem:[#allocation15 + $0x7e8] sm:$0xff]
    %v3038 = vld [vmem:[#allocation15 + $0x7f0] sm:$0xff]
    %v3039 = vld [vmem:[#allocation15 + $0x7f8] sm:$0xff]
    %v3040 = vld [vmem:[%s14] sm:$0xf]
    %v3042 = vperm.slane %v3040, 0
    %v3043 = vperm.slane %v3040, 1
    %v3044 = vperm.slane %v3040, 2
    %v3045 = vperm.slane %v3040, 3
    %v3306 = vunpack.c.l.b16 %v2784
    %v3307 = vunpack.c.h.b16 %v2784
    %v3308 = vunpack.c.l.b16 %v2785
    %v3309 = vunpack.c.h.b16 %v2785
    %v3310 = vunpack.c.l.b16 %v2786
    %v3311 = vunpack.c.h.b16 %v2786
    %v3312 = vunpack.c.l.b16 %v2787
    %v3313 = vunpack.c.h.b16 %v2787
    %v3314 = vunpack.c.l.b16 %v2788
    %v3315 = vunpack.c.h.b16 %v2788
    %v3316 = vunpack.c.l.b16 %v2789
    %v3317 = vunpack.c.h.b16 %v2789
    %v3318 = vunpack.c.l.b16 %v2790
    %v3319 = vunpack.c.h.b16 %v2790
    %v3320 = vunpack.c.l.b16 %v2791
    %v3321 = vunpack.c.h.b16 %v2791
    %v3322 = vunpack.c.l.b16 %v2792
    %v3323 = vunpack.c.h.b16 %v2792
    %v3324 = vunpack.c.l.b16 %v2793
    %v3325 = vunpack.c.h.b16 %v2793
    %v3326 = vunpack.c.l.b16 %v2794
    %v3327 = vunpack.c.h.b16 %v2794
    %v3328 = vunpack.c.l.b16 %v2795
    %v3329 = vunpack.c.h.b16 %v2795
    %v3330 = vunpack.c.l.b16 %v2796
    %v3331 = vunpack.c.h.b16 %v2796
    %v3332 = vunpack.c.l.b16 %v2797
    %v3333 = vunpack.c.h.b16 %v2797
    %v3334 = vunpack.c.l.b16 %v2798
    %v3335 = vunpack.c.h.b16 %v2798
    %v3336 = vunpack.c.l.b16 %v2799
    %v3337 = vunpack.c.h.b16 %v2799
    %v3338 = vunpack.c.l.b16 %v2800
    %v3339 = vunpack.c.h.b16 %v2800
    %v3340 = vunpack.c.l.b16 %v2801
    %v3341 = vunpack.c.h.b16 %v2801
    %v3342 = vunpack.c.l.b16 %v2802
    %v3343 = vunpack.c.h.b16 %v2802
    %v3344 = vunpack.c.l.b16 %v2803
    %v3345 = vunpack.c.h.b16 %v2803
    %v3346 = vunpack.c.l.b16 %v2804
    %v3347 = vunpack.c.h.b16 %v2804
    %v3348 = vunpack.c.l.b16 %v2805
    %v3349 = vunpack.c.h.b16 %v2805
    %v3350 = vunpack.c.l.b16 %v2806
    %v3351 = vunpack.c.h.b16 %v2806
    %v3352 = vunpack.c.l.b16 %v2807
    %v3353 = vunpack.c.h.b16 %v2807
    %v3354 = vunpack.c.l.b16 %v2808
    %v3355 = vunpack.c.h.b16 %v2808
    %v3356 = vunpack.c.l.b16 %v2809
    %v3357 = vunpack.c.h.b16 %v2809
    %v3358 = vunpack.c.l.b16 %v2810
    %v3359 = vunpack.c.h.b16 %v2810
    %v3360 = vunpack.c.l.b16 %v2811
    %v3361 = vunpack.c.h.b16 %v2811
    %v3362 = vunpack.c.l.b16 %v2812
    %v3363 = vunpack.c.h.b16 %v2812
    %v3364 = vunpack.c.l.b16 %v2813
    %v3365 = vunpack.c.h.b16 %v2813
    %v3366 = vunpack.c.l.b16 %v2814
    %v3367 = vunpack.c.h.b16 %v2814
    %v3368 = vunpack.c.l.b16 %v2815
    %v3369 = vunpack.c.h.b16 %v2815
    %v3370 = vunpack.c.l.b16 %v2816
    %v3371 = vunpack.c.h.b16 %v2816
    %v3372 = vunpack.c.l.b16 %v2817
    %v3373 = vunpack.c.h.b16 %v2817
    %v3374 = vunpack.c.l.b16 %v2818
    %v3375 = vunpack.c.h.b16 %v2818
    %v3376 = vunpack.c.l.b16 %v2819
    %v3377 = vunpack.c.h.b16 %v2819
    %v3378 = vunpack.c.l.b16 %v2820
    %v3379 = vunpack.c.h.b16 %v2820
    %v3380 = vunpack.c.l.b16 %v2821
    %v3381 = vunpack.c.h.b16 %v2821
    %v3382 = vunpack.c.l.b16 %v2822
    %v3383 = vunpack.c.h.b16 %v2822
    %v3384 = vunpack.c.l.b16 %v2823
    %v3385 = vunpack.c.h.b16 %v2823
    %v3386 = vunpack.c.l.b16 %v2824
    %v3387 = vunpack.c.h.b16 %v2824
    %v3388 = vunpack.c.l.b16 %v2825
    %v3389 = vunpack.c.h.b16 %v2825
    %v3390 = vunpack.c.l.b16 %v2826
    %v3391 = vunpack.c.h.b16 %v2826
    %v3392 = vunpack.c.l.b16 %v2827
    %v3393 = vunpack.c.h.b16 %v2827
    %v3394 = vunpack.c.l.b16 %v2828
    %v3395 = vunpack.c.h.b16 %v2828
    %v3396 = vunpack.c.l.b16 %v2829
    %v3397 = vunpack.c.h.b16 %v2829
    %v3398 = vunpack.c.l.b16 %v2830
    %v3399 = vunpack.c.h.b16 %v2830
    %v3400 = vunpack.c.l.b16 %v2831
    %v3401 = vunpack.c.h.b16 %v2831
    %v3402 = vunpack.c.l.b16 %v2832
    %v3403 = vunpack.c.h.b16 %v2832
    %v3404 = vunpack.c.l.b16 %v2833
    %v3405 = vunpack.c.h.b16 %v2833
    %v3406 = vunpack.c.l.b16 %v2834
    %v3407 = vunpack.c.h.b16 %v2834
    %v3408 = vunpack.c.l.b16 %v2835
    %v3409 = vunpack.c.h.b16 %v2835
    %v3410 = vunpack.c.l.b16 %v2836
    %v3411 = vunpack.c.h.b16 %v2836
    %v3412 = vunpack.c.l.b16 %v2837
    %v3413 = vunpack.c.h.b16 %v2837
    %v3414 = vunpack.c.l.b16 %v2838
    %v3415 = vunpack.c.h.b16 %v2838
    %v3416 = vunpack.c.l.b16 %v2839
    %v3417 = vunpack.c.h.b16 %v2839
    %v3418 = vunpack.c.l.b16 %v2840
    %v3419 = vunpack.c.h.b16 %v2840
    %v3420 = vunpack.c.l.b16 %v2841
    %v3421 = vunpack.c.h.b16 %v2841
    %v3422 = vunpack.c.l.b16 %v2842
    %v3423 = vunpack.c.h.b16 %v2842
    %v3424 = vunpack.c.l.b16 %v2843
    %v3425 = vunpack.c.h.b16 %v2843
    %v3426 = vunpack.c.l.b16 %v2844
    %v3427 = vunpack.c.h.b16 %v2844
    %v3428 = vunpack.c.l.b16 %v2845
    %v3429 = vunpack.c.h.b16 %v2845
    %v3430 = vunpack.c.l.b16 %v2846
    %v3431 = vunpack.c.h.b16 %v2846
    %v3432 = vunpack.c.l.b16 %v2847
    %v3433 = vunpack.c.h.b16 %v2847
    %v3434 = vunpack.c.l.b16 %v2848
    %v3435 = vunpack.c.h.b16 %v2848
    %v3436 = vunpack.c.l.b16 %v2849
    %v3437 = vunpack.c.h.b16 %v2849
    %v3438 = vunpack.c.l.b16 %v2850
    %v3439 = vunpack.c.h.b16 %v2850
    %v3440 = vunpack.c.l.b16 %v2851
    %v3441 = vunpack.c.h.b16 %v2851
    %v3442 = vunpack.c.l.b16 %v2852
    %v3443 = vunpack.c.h.b16 %v2852
    %v3444 = vunpack.c.l.b16 %v2853
    %v3445 = vunpack.c.h.b16 %v2853
    %v3446 = vunpack.c.l.b16 %v2854
    %v3447 = vunpack.c.h.b16 %v2854
    %v3448 = vunpack.c.l.b16 %v2855
    %v3449 = vunpack.c.h.b16 %v2855
    %v3450 = vunpack.c.l.b16 %v2856
    %v3451 = vunpack.c.h.b16 %v2856
    %v3452 = vunpack.c.l.b16 %v2857
    %v3453 = vunpack.c.h.b16 %v2857
    %v3454 = vunpack.c.l.b16 %v2858
    %v3455 = vunpack.c.h.b16 %v2858
    %v3456 = vunpack.c.l.b16 %v2859
    %v3457 = vunpack.c.h.b16 %v2859
    %v3458 = vunpack.c.l.b16 %v2860
    %v3459 = vunpack.c.h.b16 %v2860
    %v3460 = vunpack.c.l.b16 %v2861
    %v3461 = vunpack.c.h.b16 %v2861
    %v3462 = vunpack.c.l.b16 %v2862
    %v3463 = vunpack.c.h.b16 %v2862
    %v3464 = vunpack.c.l.b16 %v2863
    %v3465 = vunpack.c.h.b16 %v2863
    %v3466 = vunpack.c.l.b16 %v2864
    %v3467 = vunpack.c.h.b16 %v2864
    %v3468 = vunpack.c.l.b16 %v2865
    %v3469 = vunpack.c.h.b16 %v2865
    %v3470 = vunpack.c.l.b16 %v2866
    %v3471 = vunpack.c.h.b16 %v2866
    %v3472 = vunpack.c.l.b16 %v2867
    %v3473 = vunpack.c.h.b16 %v2867
    %v3474 = vunpack.c.l.b16 %v2868
    %v3475 = vunpack.c.h.b16 %v2868
    %v3476 = vunpack.c.l.b16 %v2869
    %v3477 = vunpack.c.h.b16 %v2869
    %v3478 = vunpack.c.l.b16 %v2870
    %v3479 = vunpack.c.h.b16 %v2870
    %v3480 = vunpack.c.l.b16 %v2871
    %v3481 = vunpack.c.h.b16 %v2871
    %v3482 = vunpack.c.l.b16 %v2872
    %v3483 = vunpack.c.h.b16 %v2872
    %v3484 = vunpack.c.l.b16 %v2873
    %v3485 = vunpack.c.h.b16 %v2873
    %v3486 = vunpack.c.l.b16 %v2874
    %v3487 = vunpack.c.h.b16 %v2874
    %v3488 = vunpack.c.l.b16 %v2875
    %v3489 = vunpack.c.h.b16 %v2875
    %v3490 = vunpack.c.l.b16 %v2876
    %v3491 = vunpack.c.h.b16 %v2876
    %v3492 = vunpack.c.l.b16 %v2877
    %v3493 = vunpack.c.h.b16 %v2877
    %v3494 = vunpack.c.l.b16 %v2878
    %v3495 = vunpack.c.h.b16 %v2878
    %v3496 = vunpack.c.l.b16 %v2879
    %v3497 = vunpack.c.h.b16 %v2879
    %v3498 = vunpack.c.l.b16 %v2880
    %v3499 = vunpack.c.h.b16 %v2880
    %v3500 = vunpack.c.l.b16 %v2881
    %v3501 = vunpack.c.h.b16 %v2881
    %v3502 = vunpack.c.l.b16 %v2882
    %v3503 = vunpack.c.h.b16 %v2882
    %v3504 = vunpack.c.l.b16 %v2883
    %v3505 = vunpack.c.h.b16 %v2883
    %v3506 = vunpack.c.l.b16 %v2884
    %v3507 = vunpack.c.h.b16 %v2884
    %v3508 = vunpack.c.l.b16 %v2885
    %v3509 = vunpack.c.h.b16 %v2885
    %v3510 = vunpack.c.l.b16 %v2886
    %v3511 = vunpack.c.h.b16 %v2886
    %v3512 = vunpack.c.l.b16 %v2887
    %v3513 = vunpack.c.h.b16 %v2887
    %v3514 = vunpack.c.l.b16 %v2888
    %v3515 = vunpack.c.h.b16 %v2888
    %v3516 = vunpack.c.l.b16 %v2889
    %v3517 = vunpack.c.h.b16 %v2889
    %v3518 = vunpack.c.l.b16 %v2890
    %v3519 = vunpack.c.h.b16 %v2890
    %v3520 = vunpack.c.l.b16 %v2891
    %v3521 = vunpack.c.h.b16 %v2891
    %v3522 = vunpack.c.l.b16 %v2892
    %v3523 = vunpack.c.h.b16 %v2892
    %v3524 = vunpack.c.l.b16 %v2893
    %v3525 = vunpack.c.h.b16 %v2893
    %v3526 = vunpack.c.l.b16 %v2894
    %v3527 = vunpack.c.h.b16 %v2894
    %v3528 = vunpack.c.l.b16 %v2895
    %v3529 = vunpack.c.h.b16 %v2895
    %v3530 = vunpack.c.l.b16 %v2896
    %v3531 = vunpack.c.h.b16 %v2896
    %v3532 = vunpack.c.l.b16 %v2897
    %v3533 = vunpack.c.h.b16 %v2897
    %v3534 = vunpack.c.l.b16 %v2898
    %v3535 = vunpack.c.h.b16 %v2898
    %v3536 = vunpack.c.l.b16 %v2899
    %v3537 = vunpack.c.h.b16 %v2899
    %v3538 = vunpack.c.l.b16 %v2900
    %v3539 = vunpack.c.h.b16 %v2900
    %v3540 = vunpack.c.l.b16 %v2901
    %v3541 = vunpack.c.h.b16 %v2901
    %v3542 = vunpack.c.l.b16 %v2902
    %v3543 = vunpack.c.h.b16 %v2902
    %v3544 = vunpack.c.l.b16 %v2903
    %v3545 = vunpack.c.h.b16 %v2903
    %v3546 = vunpack.c.l.b16 %v2904
    %v3547 = vunpack.c.h.b16 %v2904
    %v3548 = vunpack.c.l.b16 %v2905
    %v3549 = vunpack.c.h.b16 %v2905
    %v3550 = vunpack.c.l.b16 %v2906
    %v3551 = vunpack.c.h.b16 %v2906
    %v3552 = vunpack.c.l.b16 %v2907
    %v3553 = vunpack.c.h.b16 %v2907
    %v3554 = vunpack.c.l.b16 %v2908
    %v3555 = vunpack.c.h.b16 %v2908
    %v3556 = vunpack.c.l.b16 %v2909
    %v3557 = vunpack.c.h.b16 %v2909
    %v3558 = vunpack.c.l.b16 %v2910
    %v3559 = vunpack.c.h.b16 %v2910
    %v3560 = vunpack.c.l.b16 %v2911
    %v3561 = vunpack.c.h.b16 %v2911
    %v3562 = vunpack.c.l.b16 %v2912
    %v3563 = vunpack.c.h.b16 %v2912
    %v3564 = vunpack.c.l.b16 %v2913
    %v3565 = vunpack.c.h.b16 %v2913
    %v3566 = vunpack.c.l.b16 %v2914
    %v3567 = vunpack.c.h.b16 %v2914
    %v3568 = vunpack.c.l.b16 %v2915
    %v3569 = vunpack.c.h.b16 %v2915
    %v3570 = vunpack.c.l.b16 %v2916
    %v3571 = vunpack.c.h.b16 %v2916
    %v3572 = vunpack.c.l.b16 %v2917
    %v3573 = vunpack.c.h.b16 %v2917
    %v3574 = vunpack.c.l.b16 %v2918
    %v3575 = vunpack.c.h.b16 %v2918
    %v3576 = vunpack.c.l.b16 %v2919
    %v3577 = vunpack.c.h.b16 %v2919
    %v3578 = vunpack.c.l.b16 %v2920
    %v3579 = vunpack.c.h.b16 %v2920
    %v3580 = vunpack.c.l.b16 %v2921
    %v3581 = vunpack.c.h.b16 %v2921
    %v3582 = vunpack.c.l.b16 %v2922
    %v3583 = vunpack.c.h.b16 %v2922
    %v3584 = vunpack.c.l.b16 %v2923
    %v3585 = vunpack.c.h.b16 %v2923
    %v3586 = vunpack.c.l.b16 %v2924
    %v3587 = vunpack.c.h.b16 %v2924
    %v3588 = vunpack.c.l.b16 %v2925
    %v3589 = vunpack.c.h.b16 %v2925
    %v3590 = vunpack.c.l.b16 %v2926
    %v3591 = vunpack.c.h.b16 %v2926
    %v3592 = vunpack.c.l.b16 %v2927
    %v3593 = vunpack.c.h.b16 %v2927
    %v3594 = vunpack.c.l.b16 %v2928
    %v3595 = vunpack.c.h.b16 %v2928
    %v3596 = vunpack.c.l.b16 %v2929
    %v3597 = vunpack.c.h.b16 %v2929
    %v3598 = vunpack.c.l.b16 %v2930
    %v3599 = vunpack.c.h.b16 %v2930
    %v3600 = vunpack.c.l.b16 %v2931
    %v3601 = vunpack.c.h.b16 %v2931
    %v3602 = vunpack.c.l.b16 %v2932
    %v3603 = vunpack.c.h.b16 %v2932
    %v3604 = vunpack.c.l.b16 %v2933
    %v3605 = vunpack.c.h.b16 %v2933
    %v3606 = vunpack.c.l.b16 %v2934
    %v3607 = vunpack.c.h.b16 %v2934
    %v3608 = vunpack.c.l.b16 %v2935
    %v3609 = vunpack.c.h.b16 %v2935
    %v3610 = vunpack.c.l.b16 %v2936
    %v3611 = vunpack.c.h.b16 %v2936
    %v3612 = vunpack.c.l.b16 %v2937
    %v3613 = vunpack.c.h.b16 %v2937
    %v3614 = vunpack.c.l.b16 %v2938
    %v3615 = vunpack.c.h.b16 %v2938
    %v3616 = vunpack.c.l.b16 %v2939
    %v3617 = vunpack.c.h.b16 %v2939
    %v3618 = vunpack.c.l.b16 %v2940
    %v3619 = vunpack.c.h.b16 %v2940
    %v3620 = vunpack.c.l.b16 %v2941
    %v3621 = vunpack.c.h.b16 %v2941
    %v3622 = vunpack.c.l.b16 %v2942
    %v3623 = vunpack.c.h.b16 %v2942
    %v3624 = vunpack.c.l.b16 %v2943
    %v3625 = vunpack.c.h.b16 %v2943
    %v3626 = vunpack.c.l.b16 %v2944
    %v3627 = vunpack.c.h.b16 %v2944
    %v3628 = vunpack.c.l.b16 %v2945
    %v3629 = vunpack.c.h.b16 %v2945
    %v3630 = vunpack.c.l.b16 %v2946
    %v3631 = vunpack.c.h.b16 %v2946
    %v3632 = vunpack.c.l.b16 %v2947
    %v3633 = vunpack.c.h.b16 %v2947
    %v3634 = vunpack.c.l.b16 %v2948
    %v3635 = vunpack.c.h.b16 %v2948
    %v3636 = vunpack.c.l.b16 %v2949
    %v3637 = vunpack.c.h.b16 %v2949
    %v3638 = vunpack.c.l.b16 %v2950
    %v3639 = vunpack.c.h.b16 %v2950
    %v3640 = vunpack.c.l.b16 %v2951
    %v3641 = vunpack.c.h.b16 %v2951
    %v3642 = vunpack.c.l.b16 %v2952
    %v3643 = vunpack.c.h.b16 %v2952
    %v3644 = vunpack.c.l.b16 %v2953
    %v3645 = vunpack.c.h.b16 %v2953
    %v3646 = vunpack.c.l.b16 %v2954
    %v3647 = vunpack.c.h.b16 %v2954
    %v3648 = vunpack.c.l.b16 %v2955
    %v3649 = vunpack.c.h.b16 %v2955
    %v3650 = vunpack.c.l.b16 %v2956
    %v3651 = vunpack.c.h.b16 %v2956
    %v3652 = vunpack.c.l.b16 %v2957
    %v3653 = vunpack.c.h.b16 %v2957
    %v3654 = vunpack.c.l.b16 %v2958
    %v3655 = vunpack.c.h.b16 %v2958
    %v3656 = vunpack.c.l.b16 %v2959
    %v3657 = vunpack.c.h.b16 %v2959
    %v3658 = vunpack.c.l.b16 %v2960
    %v3659 = vunpack.c.h.b16 %v2960
    %v3660 = vunpack.c.l.b16 %v2961
    %v3661 = vunpack.c.h.b16 %v2961
    %v3662 = vunpack.c.l.b16 %v2962
    %v3663 = vunpack.c.h.b16 %v2962
    %v3664 = vunpack.c.l.b16 %v2963
    %v3665 = vunpack.c.h.b16 %v2963
    %v3666 = vunpack.c.l.b16 %v2964
    %v3667 = vunpack.c.h.b16 %v2964
    %v3668 = vunpack.c.l.b16 %v2965
    %v3669 = vunpack.c.h.b16 %v2965
    %v3670 = vunpack.c.l.b16 %v2966
    %v3671 = vunpack.c.h.b16 %v2966
    %v3672 = vunpack.c.l.b16 %v2967
    %v3673 = vunpack.c.h.b16 %v2967
    %v3674 = vunpack.c.l.b16 %v2968
    %v3675 = vunpack.c.h.b16 %v2968
    %v3676 = vunpack.c.l.b16 %v2969
    %v3677 = vunpack.c.h.b16 %v2969
    %v3678 = vunpack.c.l.b16 %v2970
    %v3679 = vunpack.c.h.b16 %v2970
    %v3680 = vunpack.c.l.b16 %v2971
    %v3681 = vunpack.c.h.b16 %v2971
    %v3682 = vunpack.c.l.b16 %v2972
    %v3683 = vunpack.c.h.b16 %v2972
    %v3684 = vunpack.c.l.b16 %v2973
    %v3685 = vunpack.c.h.b16 %v2973
    %v3686 = vunpack.c.l.b16 %v2974
    %v3687 = vunpack.c.h.b16 %v2974
    %v3688 = vunpack.c.l.b16 %v2975
    %v3689 = vunpack.c.h.b16 %v2975
    %v3690 = vunpack.c.l.b16 %v2976
    %v3691 = vunpack.c.h.b16 %v2976
    %v3692 = vunpack.c.l.b16 %v2977
    %v3693 = vunpack.c.h.b16 %v2977
    %v3694 = vunpack.c.l.b16 %v2978
    %v3695 = vunpack.c.h.b16 %v2978
    %v3696 = vunpack.c.l.b16 %v2979
    %v3697 = vunpack.c.h.b16 %v2979
    %v3698 = vunpack.c.l.b16 %v2980
    %v3699 = vunpack.c.h.b16 %v2980
    %v3700 = vunpack.c.l.b16 %v2981
    %v3701 = vunpack.c.h.b16 %v2981
    %v3702 = vunpack.c.l.b16 %v2982
    %v3703 = vunpack.c.h.b16 %v2982
    %v3704 = vunpack.c.l.b16 %v2983
    %v3705 = vunpack.c.h.b16 %v2983
    %v3706 = vunpack.c.l.b16 %v2984
    %v3707 = vunpack.c.h.b16 %v2984
    %v3708 = vunpack.c.l.b16 %v2985
    %v3709 = vunpack.c.h.b16 %v2985
    %v3710 = vunpack.c.l.b16 %v2986
    %v3711 = vunpack.c.h.b16 %v2986
    %v3712 = vunpack.c.l.b16 %v2987
    %v3713 = vunpack.c.h.b16 %v2987
    %v3714 = vunpack.c.l.b16 %v2988
    %v3715 = vunpack.c.h.b16 %v2988
    %v3716 = vunpack.c.l.b16 %v2989
    %v3717 = vunpack.c.h.b16 %v2989
    %v3718 = vunpack.c.l.b16 %v2990
    %v3719 = vunpack.c.h.b16 %v2990
    %v3720 = vunpack.c.l.b16 %v2991
    %v3721 = vunpack.c.h.b16 %v2991
    %v3722 = vunpack.c.l.b16 %v2992
    %v3723 = vunpack.c.h.b16 %v2992
    %v3724 = vunpack.c.l.b16 %v2993
    %v3725 = vunpack.c.h.b16 %v2993
    %v3726 = vunpack.c.l.b16 %v2994
    %v3727 = vunpack.c.h.b16 %v2994
    %v3728 = vunpack.c.l.b16 %v2995
    %v3729 = vunpack.c.h.b16 %v2995
    %v3730 = vunpack.c.l.b16 %v2996
    %v3731 = vunpack.c.h.b16 %v2996
    %v3732 = vunpack.c.l.b16 %v2997
    %v3733 = vunpack.c.h.b16 %v2997
    %v3734 = vunpack.c.l.b16 %v2998
    %v3735 = vunpack.c.h.b16 %v2998
    %v3736 = vunpack.c.l.b16 %v2999
    %v3737 = vunpack.c.h.b16 %v2999
    %v3738 = vunpack.c.l.b16 %v3000
    %v3739 = vunpack.c.h.b16 %v3000
    %v3740 = vunpack.c.l.b16 %v3001
    %v3741 = vunpack.c.h.b16 %v3001
    %v3742 = vunpack.c.l.b16 %v3002
    %v3743 = vunpack.c.h.b16 %v3002
    %v3744 = vunpack.c.l.b16 %v3003
    %v3745 = vunpack.c.h.b16 %v3003
    %v3746 = vunpack.c.l.b16 %v3004
    %v3747 = vunpack.c.h.b16 %v3004
    %v3748 = vunpack.c.l.b16 %v3005
    %v3749 = vunpack.c.h.b16 %v3005
    %v3750 = vunpack.c.l.b16 %v3006
    %v3751 = vunpack.c.h.b16 %v3006
    %v3752 = vunpack.c.l.b16 %v3007
    %v3753 = vunpack.c.h.b16 %v3007
    %v3754 = vunpack.c.l.b16 %v3008
    %v3755 = vunpack.c.h.b16 %v3008
    %v3756 = vunpack.c.l.b16 %v3009
    %v3757 = vunpack.c.h.b16 %v3009
    %v3758 = vunpack.c.l.b16 %v3010
    %v3759 = vunpack.c.h.b16 %v3010
    %v3760 = vunpack.c.l.b16 %v3011
    %v3761 = vunpack.c.h.b16 %v3011
    %v3762 = vunpack.c.l.b16 %v3012
    %v3763 = vunpack.c.h.b16 %v3012
    %v3764 = vunpack.c.l.b16 %v3013
    %v3765 = vunpack.c.h.b16 %v3013
    %v3766 = vunpack.c.l.b16 %v3014
    %v3767 = vunpack.c.h.b16 %v3014
    %v3768 = vunpack.c.l.b16 %v3015
    %v3769 = vunpack.c.h.b16 %v3015
    %v3770 = vunpack.c.l.b16 %v3016
    %v3771 = vunpack.c.h.b16 %v3016
    %v3772 = vunpack.c.l.b16 %v3017
    %v3773 = vunpack.c.h.b16 %v3017
    %v3774 = vunpack.c.l.b16 %v3018
    %v3775 = vunpack.c.h.b16 %v3018
    %v3776 = vunpack.c.l.b16 %v3019
    %v3777 = vunpack.c.h.b16 %v3019
    %v3778 = vunpack.c.l.b16 %v3020
    %v3779 = vunpack.c.h.b16 %v3020
    %v3780 = vunpack.c.l.b16 %v3021
    %v3781 = vunpack.c.h.b16 %v3021
    %v3782 = vunpack.c.l.b16 %v3022
    %v3783 = vunpack.c.h.b16 %v3022
    %v3784 = vunpack.c.l.b16 %v3023
    %v3785 = vunpack.c.h.b16 %v3023
    %v3786 = vunpack.c.l.b16 %v3024
    %v3787 = vunpack.c.h.b16 %v3024
    %v3788 = vunpack.c.l.b16 %v3025
    %v3789 = vunpack.c.h.b16 %v3025
    %v3790 = vunpack.c.l.b16 %v3026
    %v3791 = vunpack.c.h.b16 %v3026
    %v3792 = vunpack.c.l.b16 %v3027
    %v3793 = vunpack.c.h.b16 %v3027
    %v3794 = vunpack.c.l.b16 %v3028
    %v3795 = vunpack.c.h.b16 %v3028
    %v3796 = vunpack.c.l.b16 %v3029
    %v3797 = vunpack.c.h.b16 %v3029
    %v3798 = vunpack.c.l.b16 %v3030
    %v3799 = vunpack.c.h.b16 %v3030
    %v3800 = vunpack.c.l.b16 %v3031
    %v3801 = vunpack.c.h.b16 %v3031
    %v3802 = vunpack.c.l.b16 %v3032
    %v3803 = vunpack.c.h.b16 %v3032
    %v3804 = vunpack.c.l.b16 %v3033
    %v3805 = vunpack.c.h.b16 %v3033
    %v3806 = vunpack.c.l.b16 %v3034
    %v3807 = vunpack.c.h.b16 %v3034
    %v3808 = vunpack.c.l.b16 %v3035
    %v3809 = vunpack.c.h.b16 %v3035
    %v3810 = vunpack.c.l.b16 %v3036
    %v3811 = vunpack.c.h.b16 %v3036
    %v3812 = vunpack.c.l.b16 %v3037
    %v3813 = vunpack.c.h.b16 %v3037
    %v3814 = vunpack.c.l.b16 %v3038
    %v3815 = vunpack.c.h.b16 %v3038
    %v3816 = vunpack.c.l.b16 %v3039
    %v3817 = vunpack.c.h.b16 %v3039
    %v3818 = vpack.c.b16 %v3310, %v3306
    %v3819 = vpack.c.b16 %v3311, %v3307
    %v3820 = vpack.c.b16 %v3312, %v3308
    %v3821 = vpack.c.b16 %v3313, %v3309
    %v3822 = vpack.c.b16 %v3318, %v3314
    %v3823 = vpack.c.b16 %v3319, %v3315
    %v3824 = vpack.c.b16 %v3320, %v3316
    %v3825 = vpack.c.b16 %v3321, %v3317
    %v3826 = vpack.c.b16 %v3326, %v3322
    %v3827 = vpack.c.b16 %v3327, %v3323
    %v3828 = vpack.c.b16 %v3328, %v3324
    %v3829 = vpack.c.b16 %v3329, %v3325
    %v3830 = vpack.c.b16 %v3334, %v3330
    %v3831 = vpack.c.b16 %v3335, %v3331
    %v3832 = vpack.c.b16 %v3336, %v3332
    %v3833 = vpack.c.b16 %v3337, %v3333
    %v3834 = vpack.c.b16 %v3342, %v3338
    %v3835 = vpack.c.b16 %v3343, %v3339
    %v3836 = vpack.c.b16 %v3344, %v3340
    %v3837 = vpack.c.b16 %v3345, %v3341
    %v3838 = vpack.c.b16 %v3350, %v3346
    %v3839 = vpack.c.b16 %v3351, %v3347
    %v3840 = vpack.c.b16 %v3352, %v3348
    %v3841 = vpack.c.b16 %v3353, %v3349
    %v3842 = vpack.c.b16 %v3358, %v3354
    %v3843 = vpack.c.b16 %v3359, %v3355
    %v3844 = vpack.c.b16 %v3360, %v3356
    %v3845 = vpack.c.b16 %v3361, %v3357
    %v3846 = vpack.c.b16 %v3366, %v3362
    %v3847 = vpack.c.b16 %v3367, %v3363
    %v3848 = vpack.c.b16 %v3368, %v3364
    %v3849 = vpack.c.b16 %v3369, %v3365
    %v3850 = vpack.c.b16 %v3374, %v3370
    %v3851 = vpack.c.b16 %v3375, %v3371
    %v3852 = vpack.c.b16 %v3376, %v3372
    %v3853 = vpack.c.b16 %v3377, %v3373
    %v3854 = vpack.c.b16 %v3382, %v3378
    %v3855 = vpack.c.b16 %v3383, %v3379
    %v3856 = vpack.c.b16 %v3384, %v3380
    %v3857 = vpack.c.b16 %v3385, %v3381
    %v3858 = vpack.c.b16 %v3390, %v3386
    %v3859 = vpack.c.b16 %v3391, %v3387
    %v3860 = vpack.c.b16 %v3392, %v3388
    %v3861 = vpack.c.b16 %v3393, %v3389
    %v3862 = vpack.c.b16 %v3398, %v3394
    %v3863 = vpack.c.b16 %v3399, %v3395
    %v3864 = vpack.c.b16 %v3400, %v3396
    %v3865 = vpack.c.b16 %v3401, %v3397
    %v3866 = vpack.c.b16 %v3406, %v3402
    %v3867 = vpack.c.b16 %v3407, %v3403
    %v3868 = vpack.c.b16 %v3408, %v3404
    %v3869 = vpack.c.b16 %v3409, %v3405
    %v3870 = vpack.c.b16 %v3414, %v3410
    %v3871 = vpack.c.b16 %v3415, %v3411
    %v3872 = vpack.c.b16 %v3416, %v3412
    %v3873 = vpack.c.b16 %v3417, %v3413
    %v3874 = vpack.c.b16 %v3422, %v3418
    %v3875 = vpack.c.b16 %v3423, %v3419
    %v3876 = vpack.c.b16 %v3424, %v3420
    %v3877 = vpack.c.b16 %v3425, %v3421
    %v3878 = vpack.c.b16 %v3430, %v3426
    %v3879 = vpack.c.b16 %v3431, %v3427
    %v3880 = vpack.c.b16 %v3432, %v3428
    %v3881 = vpack.c.b16 %v3433, %v3429
    %v3882 = vpack.c.b16 %v3438, %v3434
    %v3883 = vpack.c.b16 %v3439, %v3435
    %v3884 = vpack.c.b16 %v3440, %v3436
    %v3885 = vpack.c.b16 %v3441, %v3437
    %v3886 = vpack.c.b16 %v3446, %v3442
    %v3887 = vpack.c.b16 %v3447, %v3443
    %v3888 = vpack.c.b16 %v3448, %v3444
    %v3889 = vpack.c.b16 %v3449, %v3445
    %v3890 = vpack.c.b16 %v3454, %v3450
    %v3891 = vpack.c.b16 %v3455, %v3451
    %v3892 = vpack.c.b16 %v3456, %v3452
    %v3893 = vpack.c.b16 %v3457, %v3453
    %v3894 = vpack.c.b16 %v3462, %v3458
    %v3895 = vpack.c.b16 %v3463, %v3459
    %v3896 = vpack.c.b16 %v3464, %v3460
    %v3897 = vpack.c.b16 %v3465, %v3461
    %v3898 = vpack.c.b16 %v3470, %v3466
    %v3899 = vpack.c.b16 %v3471, %v3467
    %v3900 = vpack.c.b16 %v3472, %v3468
    %v3901 = vpack.c.b16 %v3473, %v3469
    %v3902 = vpack.c.b16 %v3478, %v3474
    %v3903 = vpack.c.b16 %v3479, %v3475
    %v3904 = vpack.c.b16 %v3480, %v3476
    %v3905 = vpack.c.b16 %v3481, %v3477
    %v3906 = vpack.c.b16 %v3486, %v3482
    %v3907 = vpack.c.b16 %v3487, %v3483
    %v3908 = vpack.c.b16 %v3488, %v3484
    %v3909 = vpack.c.b16 %v3489, %v3485
    %v3910 = vpack.c.b16 %v3494, %v3490
    %v3911 = vpack.c.b16 %v3495, %v3491
    %v3912 = vpack.c.b16 %v3496, %v3492
    %v3913 = vpack.c.b16 %v3497, %v3493
    %v3914 = vpack.c.b16 %v3502, %v3498
    %v3915 = vpack.c.b16 %v3503, %v3499
    %v3916 = vpack.c.b16 %v3504, %v3500
    %v3917 = vpack.c.b16 %v3505, %v3501
    %v3918 = vpack.c.b16 %v3510, %v3506
    %v3919 = vpack.c.b16 %v3511, %v3507
    %v3920 = vpack.c.b16 %v3512, %v3508
    %v3921 = vpack.c.b16 %v3513, %v3509
    %v3922 = vpack.c.b16 %v3518, %v3514
    %v3923 = vpack.c.b16 %v3519, %v3515
    %v3924 = vpack.c.b16 %v3520, %v3516
    %v3925 = vpack.c.b16 %v3521, %v3517
    %v3926 = vpack.c.b16 %v3526, %v3522
    %v3927 = vpack.c.b16 %v3527, %v3523
    %v3928 = vpack.c.b16 %v3528, %v3524
    %v3929 = vpack.c.b16 %v3529, %v3525
    %v3930 = vpack.c.b16 %v3534, %v3530
    %v3931 = vpack.c.b16 %v3535, %v3531
    %v3932 = vpack.c.b16 %v3536, %v3532
    %v3933 = vpack.c.b16 %v3537, %v3533
    %v3934 = vpack.c.b16 %v3542, %v3538
    %v3935 = vpack.c.b16 %v3543, %v3539
    %v3936 = vpack.c.b16 %v3544, %v3540
    %v3937 = vpack.c.b16 %v3545, %v3541
    %v3938 = vpack.c.b16 %v3550, %v3546
    %v3939 = vpack.c.b16 %v3551, %v3547
    %v3940 = vpack.c.b16 %v3552, %v3548
    %v3941 = vpack.c.b16 %v3553, %v3549
    %v3942 = vpack.c.b16 %v3558, %v3554
    %v3943 = vpack.c.b16 %v3559, %v3555
    %v3944 = vpack.c.b16 %v3560, %v3556
    %v3945 = vpack.c.b16 %v3561, %v3557
    %v3946 = vpack.c.b16 %v3566, %v3562
    %v3947 = vpack.c.b16 %v3567, %v3563
    %v3948 = vpack.c.b16 %v3568, %v3564
    %v3949 = vpack.c.b16 %v3569, %v3565
    %v3950 = vpack.c.b16 %v3574, %v3570
    %v3951 = vpack.c.b16 %v3575, %v3571
    %v3952 = vpack.c.b16 %v3576, %v3572
    %v3953 = vpack.c.b16 %v3577, %v3573
    %v3954 = vpack.c.b16 %v3582, %v3578
    %v3955 = vpack.c.b16 %v3583, %v3579
    %v3956 = vpack.c.b16 %v3584, %v3580
    %v3957 = vpack.c.b16 %v3585, %v3581
    %v3958 = vpack.c.b16 %v3590, %v3586
    %v3959 = vpack.c.b16 %v3591, %v3587
    %v3960 = vpack.c.b16 %v3592, %v3588
    %v3961 = vpack.c.b16 %v3593, %v3589
    %v3962 = vpack.c.b16 %v3598, %v3594
    %v3963 = vpack.c.b16 %v3599, %v3595
    %v3964 = vpack.c.b16 %v3600, %v3596
    %v3965 = vpack.c.b16 %v3601, %v3597
    %v3966 = vpack.c.b16 %v3606, %v3602
    %v3967 = vpack.c.b16 %v3607, %v3603
    %v3968 = vpack.c.b16 %v3608, %v3604
    %v3969 = vpack.c.b16 %v3609, %v3605
    %v3970 = vpack.c.b16 %v3614, %v3610
    %v3971 = vpack.c.b16 %v3615, %v3611
    %v3972 = vpack.c.b16 %v3616, %v3612
    %v3973 = vpack.c.b16 %v3617, %v3613
    %v3974 = vpack.c.b16 %v3622, %v3618
    %v3975 = vpack.c.b16 %v3623, %v3619
    %v3976 = vpack.c.b16 %v3624, %v3620
    %v3977 = vpack.c.b16 %v3625, %v3621
    %v3978 = vpack.c.b16 %v3630, %v3626
    %v3979 = vpack.c.b16 %v3631, %v3627
    %v3980 = vpack.c.b16 %v3632, %v3628
    %v3981 = vpack.c.b16 %v3633, %v3629
    %v3982 = vpack.c.b16 %v3638, %v3634
    %v3983 = vpack.c.b16 %v3639, %v3635
    %v3984 = vpack.c.b16 %v3640, %v3636
    %v3985 = vpack.c.b16 %v3641, %v3637
    %v3986 = vpack.c.b16 %v3646, %v3642
    %v3987 = vpack.c.b16 %v3647, %v3643
    %v3988 = vpack.c.b16 %v3648, %v3644
    %v3989 = vpack.c.b16 %v3649, %v3645
    %v3990 = vpack.c.b16 %v3654, %v3650
    %v3991 = vpack.c.b16 %v3655, %v3651
    %v3992 = vpack.c.b16 %v3656, %v3652
    %v3993 = vpack.c.b16 %v3657, %v3653
    %v3994 = vpack.c.b16 %v3662, %v3658
    %v3995 = vpack.c.b16 %v3663, %v3659
    %v3996 = vpack.c.b16 %v3664, %v3660
    %v3997 = vpack.c.b16 %v3665, %v3661
    %v3998 = vpack.c.b16 %v3670, %v3666
    %v3999 = vpack.c.b16 %v3671, %v3667
    %v4000 = vpack.c.b16 %v3672, %v3668
    %v4001 = vpack.c.b16 %v3673, %v3669
    %v4002 = vpack.c.b16 %v3678, %v3674
    %v4003 = vpack.c.b16 %v3679, %v3675
    %v4004 = vpack.c.b16 %v3680, %v3676
    %v4005 = vpack.c.b16 %v3681, %v3677
    %v4006 = vpack.c.b16 %v3686, %v3682
    %v4007 = vpack.c.b16 %v3687, %v3683
    %v4008 = vpack.c.b16 %v3688, %v3684
    %v4009 = vpack.c.b16 %v3689, %v3685
    %v4010 = vpack.c.b16 %v3694, %v3690
    %v4011 = vpack.c.b16 %v3695, %v3691
    %v4012 = vpack.c.b16 %v3696, %v3692
    %v4013 = vpack.c.b16 %v3697, %v3693
    %v4014 = vpack.c.b16 %v3702, %v3698
    %v4015 = vpack.c.b16 %v3703, %v3699
    %v4016 = vpack.c.b16 %v3704, %v3700
    %v4017 = vpack.c.b16 %v3705, %v3701
    %v4018 = vpack.c.b16 %v3710, %v3706
    %v4019 = vpack.c.b16 %v3711, %v3707
    %v4020 = vpack.c.b16 %v3712, %v3708
    %v4021 = vpack.c.b16 %v3713, %v3709
    %v4022 = vpack.c.b16 %v3718, %v3714
    %v4023 = vpack.c.b16 %v3719, %v3715
    %v4024 = vpack.c.b16 %v3720, %v3716
    %v4025 = vpack.c.b16 %v3721, %v3717
    %v4026 = vpack.c.b16 %v3726, %v3722
    %v4027 = vpack.c.b16 %v3727, %v3723
    %v4028 = vpack.c.b16 %v3728, %v3724
    %v4029 = vpack.c.b16 %v3729, %v3725
    %v4030 = vpack.c.b16 %v3734, %v3730
    %v4031 = vpack.c.b16 %v3735, %v3731
    %v4032 = vpack.c.b16 %v3736, %v3732
    %v4033 = vpack.c.b16 %v3737, %v3733
    %v4034 = vpack.c.b16 %v3742, %v3738
    %v4035 = vpack.c.b16 %v3743, %v3739
    %v4036 = vpack.c.b16 %v3744, %v3740
    %v4037 = vpack.c.b16 %v3745, %v3741
    %v4038 = vpack.c.b16 %v3750, %v3746
    %v4039 = vpack.c.b16 %v3751, %v3747
    %v4040 = vpack.c.b16 %v3752, %v3748
    %v4041 = vpack.c.b16 %v3753, %v3749
    %v4042 = vpack.c.b16 %v3758, %v3754
    %v4043 = vpack.c.b16 %v3759, %v3755
    %v4044 = vpack.c.b16 %v3760, %v3756
    %v4045 = vpack.c.b16 %v3761, %v3757
    %v4046 = vpack.c.b16 %v3766, %v3762
    %v4047 = vpack.c.b16 %v3767, %v3763
    %v4048 = vpack.c.b16 %v3768, %v3764
    %v4049 = vpack.c.b16 %v3769, %v3765
    %v4050 = vpack.c.b16 %v3774, %v3770
    %v4051 = vpack.c.b16 %v3775, %v3771
    %v4052 = vpack.c.b16 %v3776, %v3772
    %v4053 = vpack.c.b16 %v3777, %v3773
    %v4054 = vpack.c.b16 %v3782, %v3778
    %v4055 = vpack.c.b16 %v3783, %v3779
    %v4056 = vpack.c.b16 %v3784, %v3780
    %v4057 = vpack.c.b16 %v3785, %v3781
    %v4058 = vpack.c.b16 %v3790, %v3786
    %v4059 = vpack.c.b16 %v3791, %v3787
    %v4060 = vpack.c.b16 %v3792, %v3788
    %v4061 = vpack.c.b16 %v3793, %v3789
    %v4062 = vpack.c.b16 %v3798, %v3794
    %v4063 = vpack.c.b16 %v3799, %v3795
    %v4064 = vpack.c.b16 %v3800, %v3796
    %v4065 = vpack.c.b16 %v3801, %v3797
    %v4066 = vpack.c.b16 %v3806, %v3802
    %v4067 = vpack.c.b16 %v3807, %v3803
    %v4068 = vpack.c.b16 %v3808, %v3804
    %v4069 = vpack.c.b16 %v3809, %v3805
    %v4070 = vpack.c.b16 %v3814, %v3810
    %v4071 = vpack.c.b16 %v3815, %v3811
    %v4072 = vpack.c.b16 %v3816, %v3812
    %v4073 = vpack.c.b16 %v3817, %v3813
    %4330 = vmatpush.bf16.msra.mxu0 %v3846
    %4331 = vmatpush.bf16.msra.mxu0 %v3842
    %4332 = vmatpush.bf16.msra.mxu0 %v3838
    %4333 = vmatpush.bf16.msra.mxu0 %v3834
    %4334 = vmatpush.bf16.msra.mxu0 %v3830
    %4335 = vmatpush.bf16.msra.mxu0 %v3826
    %4336 = vmatpush.bf16.msra.mxu0 %v3822
    %4337 = vmatpush.bf16.msra.mxu0 %v3818
    %4338 = vmatmul.bf16.gmra.mxu0 %v2776
    %v4339 = vpop.f32.mrf.mxu0
    %v4340 = vadd.f32 %v3042, %v4339
    %v4341 = vpop.f32.mrf.mxu0
    %4342 = vdwg.mxu0
    %4343 = vmatpush.bf16.msra.mxu0 %v3878
    %4344 = vmatpush.bf16.msra.mxu0 %v3874
    %4345 = vmatpush.bf16.msra.mxu0 %v3870
    %4346 = vmatpush.bf16.msra.mxu0 %v3866
    %4347 = vmatpush.bf16.msra.mxu0 %v3862
    %4348 = vmatpush.bf16.msra.mxu0 %v3858
    %4349 = vmatpush.bf16.msra.mxu0 %v3854
    %4350 = vmatpush.bf16.msra.mxu0 %v3850
    %4351 = vmatmul.bf16.gmra.mxu0 %v2777
    %v4352 = vpop.f32.mrf.mxu0
    %v4353 = vadd.f32 %v4340, %v4352
    %v4354 = vpop.f32.mrf.mxu0
    %4355 = vdwg.mxu0
    %4356 = vmatpush.bf16.msra.mxu0 %v3910
    %4357 = vmatpush.bf16.msra.mxu0 %v3906
    %4358 = vmatpush.bf16.msra.mxu0 %v3902
    %4359 = vmatpush.bf16.msra.mxu0 %v3898
    %4360 = vmatpush.bf16.msra.mxu0 %v3894
    %4361 = vmatpush.bf16.msra.mxu0 %v3890
    %4362 = vmatpush.bf16.msra.mxu0 %v3886
    %4363 = vmatpush.bf16.msra.mxu0 %v3882
    %4364 = vmatmul.bf16.gmra.mxu0 %v2778
    %v4365 = vpop.f32.mrf.mxu0
    %v4366 = vadd.f32 %v4353, %v4365
    %v4367 = vpop.f32.mrf.mxu0
    %4368 = vdwg.mxu0
    %4369 = vmatpush.bf16.msra.mxu0 %v3942
    %4370 = vmatpush.bf16.msra.mxu0 %v3938
    %4371 = vmatpush.bf16.msra.mxu0 %v3934
    %4372 = vmatpush.bf16.msra.mxu0 %v3930
    %4373 = vmatpush.bf16.msra.mxu0 %v3926
    %4374 = vmatpush.bf16.msra.mxu0 %v3922
    %4375 = vmatpush.bf16.msra.mxu0 %v3918
    %4376 = vmatpush.bf16.msra.mxu0 %v3914
    %4377 = vmatmul.bf16.gmra.mxu0 %v2779
    %v4378 = vpop.f32.mrf.mxu0
    %v4379 = vadd.f32 %v4366, %v4378
    %v4380 = vpop.f32.mrf.mxu0
    %4381 = vdwg.mxu0
    %4382 = vmatpush.bf16.msra.mxu0 %v3974
    %4383 = vmatpush.bf16.msra.mxu0 %v3970
    %4384 = vmatpush.bf16.msra.mxu0 %v3966
    %4385 = vmatpush.bf16.msra.mxu0 %v3962
    %4386 = vmatpush.bf16.msra.mxu0 %v3958
    %4387 = vmatpush.bf16.msra.mxu0 %v3954
    %4388 = vmatpush.bf16.msra.mxu0 %v3950
    %4389 = vmatpush.bf16.msra.mxu0 %v3946
    %4390 = vmatmul.bf16.gmra.mxu0 %v2780
    %v4391 = vpop.f32.mrf.mxu0
    %v4392 = vadd.f32 %v4379, %v4391
    %v4393 = vpop.f32.mrf.mxu0
    %4394 = vdwg.mxu0
    %4395 = vmatpush.bf16.msra.mxu0 %v4006
    %4396 = vmatpush.bf16.msra.mxu0 %v4002
    %4397 = vmatpush.bf16.msra.mxu0 %v3998
    %4398 = vmatpush.bf16.msra.mxu0 %v3994
    %4399 = vmatpush.bf16.msra.mxu0 %v3990
    %4400 = vmatpush.bf16.msra.mxu0 %v3986
    %4401 = vmatpush.bf16.msra.mxu0 %v3982
    %4402 = vmatpush.bf16.msra.mxu0 %v3978
    %4403 = vmatmul.bf16.gmra.mxu0 %v2781
    %v4404 = vpop.f32.mrf.mxu0
    %v4405 = vadd.f32 %v4392, %v4404
    %v4406 = vpop.f32.mrf.mxu0
    %4407 = vdwg.mxu0
    %4408 = vmatpush.bf16.msra.mxu0 %v4038
    %4409 = vmatpush.bf16.msra.mxu0 %v4034
    %4410 = vmatpush.bf16.msra.mxu0 %v4030
    %4411 = vmatpush.bf16.msra.mxu0 %v4026
    %4412 = vmatpush.bf16.msra.mxu0 %v4022
    %4413 = vmatpush.bf16.msra.mxu0 %v4018
    %4414 = vmatpush.bf16.msra.mxu0 %v4014
    %4415 = vmatpush.bf16.msra.mxu0 %v4010
    %4416 = vmatmul.bf16.gmra.mxu0 %v2782
    %v4417 = vpop.f32.mrf.mxu0
    %v4418 = vadd.f32 %v4405, %v4417
    %v4419 = vpop.f32.mrf.mxu0
    %4420 = vdwg.mxu0
    %4421 = vmatpush.bf16.msra.mxu0 %v4070
    %4422 = vmatpush.bf16.msra.mxu0 %v4066
    %4423 = vmatpush.bf16.msra.mxu0 %v4062
    %4424 = vmatpush.bf16.msra.mxu0 %v4058
    %4425 = vmatpush.bf16.msra.mxu0 %v4054
    %4426 = vmatpush.bf16.msra.mxu0 %v4050
    %4427 = vmatpush.bf16.msra.mxu0 %v4046
    %4428 = vmatpush.bf16.msra.mxu0 %v4042
    %4429 = vmatmul.bf16.gmra.mxu0 %v2783
    %v4430 = vpop.f32.mrf.mxu0
    %v4431 = vadd.f32 %v4418, %v4430
    %v4432 = vpop.f32.mrf.mxu0
    %4433 = vdwg.mxu0
    %4434 = vmatpush.bf16.msra.mxu0 %v3847
    %4435 = vmatpush.bf16.msra.mxu0 %v3843
    %4436 = vmatpush.bf16.msra.mxu0 %v3839
    %4437 = vmatpush.bf16.msra.mxu0 %v3835
    %4438 = vmatpush.bf16.msra.mxu0 %v3831
    %4439 = vmatpush.bf16.msra.mxu0 %v3827
    %4440 = vmatpush.bf16.msra.mxu0 %v3823
    %4441 = vmatpush.bf16.msra.mxu0 %v3819
    %4442 = vmatmul.bf16.gmra.mxu0 %v2776
    %v4443 = vpop.f32.mrf.mxu0
    %v4444 = vadd.f32 %v3043, %v4443
    %v4445 = vpop.f32.mrf.mxu0
    %4446 = vdwg.mxu0
    %4447 = vmatpush.bf16.msra.mxu0 %v3879
    %4448 = vmatpush.bf16.msra.mxu0 %v3875
    %4449 = vmatpush.bf16.msra.mxu0 %v3871
    %4450 = vmatpush.bf16.msra.mxu0 %v3867
    %4451 = vmatpush.bf16.msra.mxu0 %v3863
    %4452 = vmatpush.bf16.msra.mxu0 %v3859
    %4453 = vmatpush.bf16.msra.mxu0 %v3855
    %4454 = vmatpush.bf16.msra.mxu0 %v3851
    %4455 = vmatmul.bf16.gmra.mxu0 %v2777
    %v4456 = vpop.f32.mrf.mxu0
    %v4457 = vadd.f32 %v4444, %v4456
    %v4458 = vpop.f32.mrf.mxu0
    %4459 = vdwg.mxu0
    %4460 = vmatpush.bf16.msra.mxu0 %v3911
    %4461 = vmatpush.bf16.msra.mxu0 %v3907
    %4462 = vmatpush.bf16.msra.mxu0 %v3903
    %4463 = vmatpush.bf16.msra.mxu0 %v3899
    %4464 = vmatpush.bf16.msra.mxu0 %v3895
    %4465 = vmatpush.bf16.msra.mxu0 %v3891
    %4466 = vmatpush.bf16.msra.mxu0 %v3887
    %4467 = vmatpush.bf16.msra.mxu0 %v3883
    %4468 = vmatmul.bf16.gmra.mxu0 %v2778
    %v4469 = vpop.f32.mrf.mxu0
    %v4470 = vadd.f32 %v4457, %v4469
    %v4471 = vpop.f32.mrf.mxu0
    %4472 = vdwg.mxu0
    %4473 = vmatpush.bf16.msra.mxu0 %v3943
    %4474 = vmatpush.bf16.msra.mxu0 %v3939
    %4475 = vmatpush.bf16.msra.mxu0 %v3935
    %4476 = vmatpush.bf16.msra.mxu0 %v3931
    %4477 = vmatpush.bf16.msra.mxu0 %v3927
    %4478 = vmatpush.bf16.msra.mxu0 %v3923
    %4479 = vmatpush.bf16.msra.mxu0 %v3919
    %4480 = vmatpush.bf16.msra.mxu0 %v3915
    %4481 = vmatmul.bf16.gmra.mxu0 %v2779
    %v4482 = vpop.f32.mrf.mxu0
    %v4483 = vadd.f32 %v4470, %v4482
    %v4484 = vpop.f32.mrf.mxu0
    %4485 = vdwg.mxu0
    %4486 = vmatpush.bf16.msra.mxu0 %v3975
    %4487 = vmatpush.bf16.msra.mxu0 %v3971
    %4488 = vmatpush.bf16.msra.mxu0 %v3967
    %4489 = vmatpush.bf16.msra.mxu0 %v3963
    %4490 = vmatpush.bf16.msra.mxu0 %v3959
    %4491 = vmatpush.bf16.msra.mxu0 %v3955
    %4492 = vmatpush.bf16.msra.mxu0 %v3951
    %4493 = vmatpush.bf16.msra.mxu0 %v3947
    %4494 = vmatmul.bf16.gmra.mxu0 %v2780
    %v4495 = vpop.f32.mrf.mxu0
    %v4496 = vadd.f32 %v4483, %v4495
    %v4497 = vpop.f32.mrf.mxu0
    %4498 = vdwg.mxu0
    %4499 = vmatpush.bf16.msra.mxu0 %v4007
    %4500 = vmatpush.bf16.msra.mxu0 %v4003
    %4501 = vmatpush.bf16.msra.mxu0 %v3999
    %4502 = vmatpush.bf16.msra.mxu0 %v3995
    %4503 = vmatpush.bf16.msra.mxu0 %v3991
    %4504 = vmatpush.bf16.msra.mxu0 %v3987
    %4505 = vmatpush.bf16.msra.mxu0 %v3983
    %4506 = vmatpush.bf16.msra.mxu0 %v3979
    %4507 = vmatmul.bf16.gmra.mxu0 %v2781
    %v4508 = vpop.f32.mrf.mxu0
    %v4509 = vadd.f32 %v4496, %v4508
    %v4510 = vpop.f32.mrf.mxu0
    %4511 = vdwg.mxu0
    %4512 = vmatpush.bf16.msra.mxu0 %v4039
    %4513 = vmatpush.bf16.msra.mxu0 %v4035
    %4514 = vmatpush.bf16.msra.mxu0 %v4031
    %4515 = vmatpush.bf16.msra.mxu0 %v4027
    %4516 = vmatpush.bf16.msra.mxu0 %v4023
    %4517 = vmatpush.bf16.msra.mxu0 %v4019
    %4518 = vmatpush.bf16.msra.mxu0 %v4015
    %4519 = vmatpush.bf16.msra.mxu0 %v4011
    %4520 = vmatmul.bf16.gmra.mxu0 %v2782
    %v4521 = vpop.f32.mrf.mxu0
    %v4522 = vadd.f32 %v4509, %v4521
    %v4523 = vpop.f32.mrf.mxu0
    %4524 = vdwg.mxu0
    %4525 = vmatpush.bf16.msra.mxu0 %v4071
    %4526 = vmatpush.bf16.msra.mxu0 %v4067
    %4527 = vmatpush.bf16.msra.mxu0 %v4063
    %4528 = vmatpush.bf16.msra.mxu0 %v4059
    %4529 = vmatpush.bf16.msra.mxu0 %v4055
    %4530 = vmatpush.bf16.msra.mxu0 %v4051
    %4531 = vmatpush.bf16.msra.mxu0 %v4047
    %4532 = vmatpush.bf16.msra.mxu0 %v4043
    %4533 = vmatmul.bf16.gmra.mxu0 %v2783
    %v4534 = vpop.f32.mrf.mxu0
    %v4535 = vadd.f32 %v4522, %v4534
    %v4536 = vpop.f32.mrf.mxu0
    %4537 = vdwg.mxu0
    %4538 = vmatpush.bf16.msra.mxu0 %v3848
    %4539 = vmatpush.bf16.msra.mxu0 %v3844
    %4540 = vmatpush.bf16.msra.mxu0 %v3840
    %4541 = vmatpush.bf16.msra.mxu0 %v3836
    %4542 = vmatpush.bf16.msra.mxu0 %v3832
    %4543 = vmatpush.bf16.msra.mxu0 %v3828
    %4544 = vmatpush.bf16.msra.mxu0 %v3824
    %4545 = vmatpush.bf16.msra.mxu0 %v3820
    %4546 = vmatmul.bf16.gmra.mxu0 %v2776
    %v4547 = vpop.f32.mrf.mxu0
    %v4548 = vadd.f32 %v3044, %v4547
    %v4549 = vpop.f32.mrf.mxu0
    %4550 = vdwg.mxu0
    %4551 = vmatpush.bf16.msra.mxu0 %v3880
    %4552 = vmatpush.bf16.msra.mxu0 %v3876
    %4553 = vmatpush.bf16.msra.mxu0 %v3872
    %4554 = vmatpush.bf16.msra.mxu0 %v3868
    %4555 = vmatpush.bf16.msra.mxu0 %v3864
    %4556 = vmatpush.bf16.msra.mxu0 %v3860
    %4557 = vmatpush.bf16.msra.mxu0 %v3856
    %4558 = vmatpush.bf16.msra.mxu0 %v3852
    %4559 = vmatmul.bf16.gmra.mxu0 %v2777
    %v4560 = vpop.f32.mrf.mxu0
    %v4561 = vadd.f32 %v4548, %v4560
    %v4562 = vpop.f32.mrf.mxu0
    %4563 = vdwg.mxu0
    %4564 = vmatpush.bf16.msra.mxu0 %v3912
    %4565 = vmatpush.bf16.msra.mxu0 %v3908
    %4566 = vmatpush.bf16.msra.mxu0 %v3904
    %4567 = vmatpush.bf16.msra.mxu0 %v3900
    %4568 = vmatpush.bf16.msra.mxu0 %v3896
    %4569 = vmatpush.bf16.msra.mxu0 %v3892
    %4570 = vmatpush.bf16.msra.mxu0 %v3888
    %4571 = vmatpush.bf16.msra.mxu0 %v3884
    %4572 = vmatmul.bf16.gmra.mxu0 %v2778
    %v4573 = vpop.f32.mrf.mxu0
    %v4574 = vadd.f32 %v4561, %v4573
    %v4575 = vpop.f32.mrf.mxu0
    %4576 = vdwg.mxu0
    %4577 = vmatpush.bf16.msra.mxu0 %v3944
    %4578 = vmatpush.bf16.msra.mxu0 %v3940
    %4579 = vmatpush.bf16.msra.mxu0 %v3936
    %4580 = vmatpush.bf16.msra.mxu0 %v3932
    %4581 = vmatpush.bf16.msra.mxu0 %v3928
    %4582 = vmatpush.bf16.msra.mxu0 %v3924
    %4583 = vmatpush.bf16.msra.mxu0 %v3920
    %4584 = vmatpush.bf16.msra.mxu0 %v3916
    %4585 = vmatmul.bf16.gmra.mxu0 %v2779
    %v4586 = vpop.f32.mrf.mxu0
    %v4587 = vadd.f32 %v4574, %v4586
    %v4588 = vpop.f32.mrf.mxu0
    %4589 = vdwg.mxu0
    %4590 = vmatpush.bf16.msra.mxu0 %v3976
    %4591 = vmatpush.bf16.msra.mxu0 %v3972
    %4592 = vmatpush.bf16.msra.mxu0 %v3968
    %4593 = vmatpush.bf16.msra.mxu0 %v3964
    %4594 = vmatpush.bf16.msra.mxu0 %v3960
    %4595 = vmatpush.bf16.msra.mxu0 %v3956
    %4596 = vmatpush.bf16.msra.mxu0 %v3952
    %4597 = vmatpush.bf16.msra.mxu0 %v3948
    %4598 = vmatmul.bf16.gmra.mxu0 %v2780
    %v4599 = vpop.f32.mrf.mxu0
    %v4600 = vadd.f32 %v4587, %v4599
    %v4601 = vpop.f32.mrf.mxu0
    %4602 = vdwg.mxu0
    %4603 = vmatpush.bf16.msra.mxu0 %v4008
    %4604 = vmatpush.bf16.msra.mxu0 %v4004
    %4605 = vmatpush.bf16.msra.mxu0 %v4000
    %4606 = vmatpush.bf16.msra.mxu0 %v3996
    %4607 = vmatpush.bf16.msra.mxu0 %v3992
    %4608 = vmatpush.bf16.msra.mxu0 %v3988
    %4609 = vmatpush.bf16.msra.mxu0 %v3984
    %4610 = vmatpush.bf16.msra.mxu0 %v3980
    %4611 = vmatmul.bf16.gmra.mxu0 %v2781
    %v4612 = vpop.f32.mrf.mxu0
    %v4613 = vadd.f32 %v4600, %v4612
    %v4614 = vpop.f32.mrf.mxu0
    %4615 = vdwg.mxu0
    %4616 = vmatpush.bf16.msra.mxu0 %v4040
    %4617 = vmatpush.bf16.msra.mxu0 %v4036
    %4618 = vmatpush.bf16.msra.mxu0 %v4032
    %4619 = vmatpush.bf16.msra.mxu0 %v4028
    %4620 = vmatpush.bf16.msra.mxu0 %v4024
    %4621 = vmatpush.bf16.msra.mxu0 %v4020
    %4622 = vmatpush.bf16.msra.mxu0 %v4016
    %4623 = vmatpush.bf16.msra.mxu0 %v4012
    %4624 = vmatmul.bf16.gmra.mxu0 %v2782
    %v4625 = vpop.f32.mrf.mxu0
    %v4626 = vadd.f32 %v4613, %v4625
    %v4627 = vpop.f32.mrf.mxu0
    %4628 = vdwg.mxu0
    %4629 = vmatpush.bf16.msra.mxu0 %v4072
    %4630 = vmatpush.bf16.msra.mxu0 %v4068
    %4631 = vmatpush.bf16.msra.mxu0 %v4064
    %4632 = vmatpush.bf16.msra.mxu0 %v4060
    %4633 = vmatpush.bf16.msra.mxu0 %v4056
    %4634 = vmatpush.bf16.msra.mxu0 %v4052
    %4635 = vmatpush.bf16.msra.mxu0 %v4048
    %4636 = vmatpush.bf16.msra.mxu0 %v4044
    %4637 = vmatmul.bf16.gmra.mxu0 %v2783
    %v4638 = vpop.f32.mrf.mxu0
    %v4639 = vadd.f32 %v4626, %v4638
    %v4640 = vpop.f32.mrf.mxu0
    %4641 = vdwg.mxu0
    %4642 = vmatpush.bf16.msra.mxu0 %v3849
    %4643 = vmatpush.bf16.msra.mxu0 %v3845
    %4644 = vmatpush.bf16.msra.mxu0 %v3841
    %4645 = vmatpush.bf16.msra.mxu0 %v3837
    %4646 = vmatpush.bf16.msra.mxu0 %v3833
    %4647 = vmatpush.bf16.msra.mxu0 %v3829
    %4648 = vmatpush.bf16.msra.mxu0 %v3825
    %4649 = vmatpush.bf16.msra.mxu0 %v3821
    %4650 = vmatmul.bf16.gmra.mxu0 %v2776
    %v4651 = vpop.f32.mrf.mxu0
    %v4652 = vadd.f32 %v3045, %v4651
    %v4653 = vpop.f32.mrf.mxu0
    %4654 = vdwg.mxu0
    %4655 = vmatpush.bf16.msra.mxu0 %v3881
    %4656 = vmatpush.bf16.msra.mxu0 %v3877
    %4657 = vmatpush.bf16.msra.mxu0 %v3873
    %4658 = vmatpush.bf16.msra.mxu0 %v3869
    %4659 = vmatpush.bf16.msra.mxu0 %v3865
    %4660 = vmatpush.bf16.msra.mxu0 %v3861
    %4661 = vmatpush.bf16.msra.mxu0 %v3857
    %4662 = vmatpush.bf16.msra.mxu0 %v3853
    %4663 = vmatmul.bf16.gmra.mxu0 %v2777
    %v4664 = vpop.f32.mrf.mxu0
    %v4665 = vadd.f32 %v4652, %v4664
    %v4666 = vpop.f32.mrf.mxu0
    %4667 = vdwg.mxu0
    %4668 = vmatpush.bf16.msra.mxu0 %v3913
    %4669 = vmatpush.bf16.msra.mxu0 %v3909
    %4670 = vmatpush.bf16.msra.mxu0 %v3905
    %4671 = vmatpush.bf16.msra.mxu0 %v3901
    %4672 = vmatpush.bf16.msra.mxu0 %v3897
    %4673 = vmatpush.bf16.msra.mxu0 %v3893
    %4674 = vmatpush.bf16.msra.mxu0 %v3889
    %4675 = vmatpush.bf16.msra.mxu0 %v3885
    %4676 = vmatmul.bf16.gmra.mxu0 %v2778
    %v4677 = vpop.f32.mrf.mxu0
    %v4678 = vadd.f32 %v4665, %v4677
    %v4679 = vpop.f32.mrf.mxu0
    %4680 = vdwg.mxu0
    %4681 = vmatpush.bf16.msra.mxu0 %v3945
    %4682 = vmatpush.bf16.msra.mxu0 %v3941
    %4683 = vmatpush.bf16.msra.mxu0 %v3937
    %4684 = vmatpush.bf16.msra.mxu0 %v3933
    %4685 = vmatpush.bf16.msra.mxu0 %v3929
    %4686 = vmatpush.bf16.msra.mxu0 %v3925
    %4687 = vmatpush.bf16.msra.mxu0 %v3921
    %4688 = vmatpush.bf16.msra.mxu0 %v3917
    %4689 = vmatmul.bf16.gmra.mxu0 %v2779
    %v4690 = vpop.f32.mrf.mxu0
    %v4691 = vadd.f32 %v4678, %v4690
    %v4692 = vpop.f32.mrf.mxu0
    %4693 = vdwg.mxu0
    %4694 = vmatpush.bf16.msra.mxu0 %v3977
    %4695 = vmatpush.bf16.msra.mxu0 %v3973
    %4696 = vmatpush.bf16.msra.mxu0 %v3969
    %4697 = vmatpush.bf16.msra.mxu0 %v3965
    %4698 = vmatpush.bf16.msra.mxu0 %v3961
    %4699 = vmatpush.bf16.msra.mxu0 %v3957
    %4700 = vmatpush.bf16.msra.mxu0 %v3953
    %4701 = vmatpush.bf16.msra.mxu0 %v3949
    %4702 = vmatmul.bf16.gmra.mxu0 %v2780
    %v4703 = vpop.f32.mrf.mxu0
    %v4704 = vadd.f32 %v4691, %v4703
    %v4705 = vpop.f32.mrf.mxu0
    %4706 = vdwg.mxu0
    %4707 = vmatpush.bf16.msra.mxu0 %v4009
    %4708 = vmatpush.bf16.msra.mxu0 %v4005
    %4709 = vmatpush.bf16.msra.mxu0 %v4001
    %4710 = vmatpush.bf16.msra.mxu0 %v3997
    %4711 = vmatpush.bf16.msra.mxu0 %v3993
    %4712 = vmatpush.bf16.msra.mxu0 %v3989
    %4713 = vmatpush.bf16.msra.mxu0 %v3985
    %4714 = vmatpush.bf16.msra.mxu0 %v3981
    %4715 = vmatmul.bf16.gmra.mxu0 %v2781
    %v4716 = vpop.f32.mrf.mxu0
    %v4717 = vadd.f32 %v4704, %v4716
    %v4718 = vpop.f32.mrf.mxu0
    %4719 = vdwg.mxu0
    %4720 = vmatpush.bf16.msra.mxu0 %v4041
    %4721 = vmatpush.bf16.msra.mxu0 %v4037
    %4722 = vmatpush.bf16.msra.mxu0 %v4033
    %4723 = vmatpush.bf16.msra.mxu0 %v4029
    %4724 = vmatpush.bf16.msra.mxu0 %v4025
    %4725 = vmatpush.bf16.msra.mxu0 %v4021
    %4726 = vmatpush.bf16.msra.mxu0 %v4017
    %4727 = vmatpush.bf16.msra.mxu0 %v4013
    %4728 = vmatmul.bf16.gmra.mxu0 %v2782
    %v4729 = vpop.f32.mrf.mxu0
    %v4730 = vadd.f32 %v4717, %v4729
    %v4731 = vpop.f32.mrf.mxu0
    %4732 = vdwg.mxu0
    %4733 = vmatpush.bf16.msra.mxu0 %v4073
    %4734 = vmatpush.bf16.msra.mxu0 %v4069
    %4735 = vmatpush.bf16.msra.mxu0 %v4065
    %4736 = vmatpush.bf16.msra.mxu0 %v4061
    %4737 = vmatpush.bf16.msra.mxu0 %v4057
    %4738 = vmatpush.bf16.msra.mxu0 %v4053
    %4739 = vmatpush.bf16.msra.mxu0 %v4049
    %4740 = vmatpush.bf16.msra.mxu0 %v4045
    %4741 = vmatmul.bf16.gmra.mxu0 %v2783
    %v4742 = vpop.f32.mrf.mxu0
    %v4743 = vadd.f32 %v4730, %v4742
    %v4744 = vpop.f32.mrf.mxu0
    %4745 = vdwg.mxu0
    %v4746 = vmax.f32 %v4431, 0.0
    %v4747 = vmax.f32 %v4535, 0.0
    %v4748 = vmax.f32 %v4639, 0.0
    %v4749 = vmax.f32 %v4743, 0.0
    %v4750 = vpack.c.bf16 %v4746, %v4746
    %v4751 = vpack.c.bf16 %v4747, %v4747
    %v4752 = vpack.c.bf16 %v4748, %v4748
    %v4753 = vpack.c.bf16 %v4749, %v4749
    %v4754 = vld [vmem:[%s15] sm:$0xff]
    %v4755 = vld [vmem:[%s15 + $0x8] sm:$0xff]
    %v4756 = vld [vmem:[%s15 + $0x10] sm:$0xff]
    %v4757 = vld [vmem:[%s15 + $0x18] sm:$0xff]
    %v4758 = vld [vmem:[%s15 + $0x20] sm:$0xff]
    %v4759 = vld [vmem:[%s15 + $0x28] sm:$0xff]
    %v4760 = vld [vmem:[%s15 + $0x30] sm:$0xff]
    %v4761 = vld [vmem:[%s15 + $0x38] sm:$0xff]
    %v4762 = vld [vmem:[%s15 + $0x40] sm:$0xff]
    %v4763 = vld [vmem:[%s15 + $0x48] sm:$0xff]
    %v4764 = vld [vmem:[%s15 + $0x50] sm:$0xff]
    %v4765 = vld [vmem:[%s15 + $0x58] sm:$0xff]
    %v4766 = vld [vmem:[%s15 + $0x60] sm:$0xff]
    %v4767 = vld [vmem:[%s15 + $0x68] sm:$0xff]
    %v4768 = vld [vmem:[%s15 + $0x70] sm:$0xff]
    %v4769 = vld [vmem:[%s15 + $0x78] sm:$0xff]
    %v4770 = vld [vmem:[%s15 + $0x80] sm:$0xff]
    %v4771 = vld [vmem:[%s15 + $0x88] sm:$0xff]
    %v4772 = vld [vmem:[%s15 + $0x90] sm:$0xff]
    %v4773 = vld [vmem:[%s15 + $0x98] sm:$0xff]
    %v4774 = vld [vmem:[%s15 + $0xa0] sm:$0xff]
    %v4775 = vld [vmem:[%s15 + $0xa8] sm:$0xff]
    %v4776 = vld [vmem:[%s15 + $0xb0] sm:$0xff]
    %v4777 = vld [vmem:[%s15 + $0xb8] sm:$0xff]
    %v4778 = vld [vmem:[%s15 + $0xc0] sm:$0xff]
    %v4779 = vld [vmem:[%s15 + $0xc8] sm:$0xff]
    %v4780 = vld [vmem:[%s15 + $0xd0] sm:$0xff]
    %v4781 = vld [vmem:[%s15 + $0xd8] sm:$0xff]
    %v4782 = vld [vmem:[%s15 + $0xe0] sm:$0xff]
    %v4783 = vld [vmem:[%s15 + $0xe8] sm:$0xff]
    %v4784 = vld [vmem:[%s15 + $0xf0] sm:$0xff]
    %v4785 = vld [vmem:[%s15 + $0xf8] sm:$0xff]
    %v4786 = vld [vmem:[%s15 + $0x100] sm:$0xff]
    %v4787 = vld [vmem:[%s15 + $0x108] sm:$0xff]
    %v4788 = vld [vmem:[%s15 + $0x110] sm:$0xff]
    %v4789 = vld [vmem:[%s15 + $0x118] sm:$0xff]
    %v4790 = vld [vmem:[%s15 + $0x120] sm:$0xff]
    %v4791 = vld [vmem:[%s15 + $0x128] sm:$0xff]
    %v4792 = vld [vmem:[%s15 + $0x130] sm:$0xff]
    %v4793 = vld [vmem:[%s15 + $0x138] sm:$0xff]
    %v4794 = vld [vmem:[%s15 + $0x140] sm:$0xff]
    %v4795 = vld [vmem:[%s15 + $0x148] sm:$0xff]
    %v4796 = vld [vmem:[%s15 + $0x150] sm:$0xff]
    %v4797 = vld [vmem:[%s15 + $0x158] sm:$0xff]
    %v4798 = vld [vmem:[%s15 + $0x160] sm:$0xff]
    %v4799 = vld [vmem:[%s15 + $0x168] sm:$0xff]
    %v4800 = vld [vmem:[%s15 + $0x170] sm:$0xff]
    %v4801 = vld [vmem:[%s15 + $0x178] sm:$0xff]
    %v4802 = vld [vmem:[%s15 + $0x180] sm:$0xff]
    %v4803 = vld [vmem:[%s15 + $0x188] sm:$0xff]
    %v4804 = vld [vmem:[%s15 + $0x190] sm:$0xff]
    %v4805 = vld [vmem:[%s15 + $0x198] sm:$0xff]
    %v4806 = vld [vmem:[%s15 + $0x1a0] sm:$0xff]
    %v4807 = vld [vmem:[%s15 + $0x1a8] sm:$0xff]
    %v4808 = vld [vmem:[%s15 + $0x1b0] sm:$0xff]
    %v4809 = vld [vmem:[%s15 + $0x1b8] sm:$0xff]
    %v4810 = vld [vmem:[%s15 + $0x1c0] sm:$0xff]
    %v4811 = vld [vmem:[%s15 + $0x1c8] sm:$0xff]
    %v4812 = vld [vmem:[%s15 + $0x1d0] sm:$0xff]
    %v4813 = vld [vmem:[%s15 + $0x1d8] sm:$0xff]
    %v4814 = vld [vmem:[%s15 + $0x1e0] sm:$0xff]
    %v4815 = vld [vmem:[%s15 + $0x1e8] sm:$0xff]
    %v4816 = vld [vmem:[%s15 + $0x1f0] sm:$0xff]
    %v4817 = vld [vmem:[%s15 + $0x1f8] sm:$0xff]
    %v4818 = vld [vmem:[#allocation17] sm:$0x3]
    %v4820 = vperm.slane %v4818, 0
    %v4821 = vperm.slane %v4818, 1
    %v4888 = vunpack.c.l.b16 %v4754
    %v4889 = vunpack.c.h.b16 %v4754
    %v4890 = vunpack.c.l.b16 %v4755
    %v4891 = vunpack.c.h.b16 %v4755
    %v4892 = vunpack.c.l.b16 %v4756
    %v4893 = vunpack.c.h.b16 %v4756
    %v4894 = vunpack.c.l.b16 %v4757
    %v4895 = vunpack.c.h.b16 %v4757
    %v4896 = vunpack.c.l.b16 %v4758
    %v4897 = vunpack.c.h.b16 %v4758
    %v4898 = vunpack.c.l.b16 %v4759
    %v4899 = vunpack.c.h.b16 %v4759
    %v4900 = vunpack.c.l.b16 %v4760
    %v4901 = vunpack.c.h.b16 %v4760
    %v4902 = vunpack.c.l.b16 %v4761
    %v4903 = vunpack.c.h.b16 %v4761
    %v4904 = vunpack.c.l.b16 %v4762
    %v4905 = vunpack.c.h.b16 %v4762
    %v4906 = vunpack.c.l.b16 %v4763
    %v4907 = vunpack.c.h.b16 %v4763
    %v4908 = vunpack.c.l.b16 %v4764
    %v4909 = vunpack.c.h.b16 %v4764
    %v4910 = vunpack.c.l.b16 %v4765
    %v4911 = vunpack.c.h.b16 %v4765
    %v4912 = vunpack.c.l.b16 %v4766
    %v4913 = vunpack.c.h.b16 %v4766
    %v4914 = vunpack.c.l.b16 %v4767
    %v4915 = vunpack.c.h.b16 %v4767
    %v4916 = vunpack.c.l.b16 %v4768
    %v4917 = vunpack.c.h.b16 %v4768
    %v4918 = vunpack.c.l.b16 %v4769
    %v4919 = vunpack.c.h.b16 %v4769
    %v4920 = vunpack.c.l.b16 %v4770
    %v4921 = vunpack.c.h.b16 %v4770
    %v4922 = vunpack.c.l.b16 %v4771
    %v4923 = vunpack.c.h.b16 %v4771
    %v4924 = vunpack.c.l.b16 %v4772
    %v4925 = vunpack.c.h.b16 %v4772
    %v4926 = vunpack.c.l.b16 %v4773
    %v4927 = vunpack.c.h.b16 %v4773
    %v4928 = vunpack.c.l.b16 %v4774
    %v4929 = vunpack.c.h.b16 %v4774
    %v4930 = vunpack.c.l.b16 %v4775
    %v4931 = vunpack.c.h.b16 %v4775
    %v4932 = vunpack.c.l.b16 %v4776
    %v4933 = vunpack.c.h.b16 %v4776
    %v4934 = vunpack.c.l.b16 %v4777
    %v4935 = vunpack.c.h.b16 %v4777
    %v4936 = vunpack.c.l.b16 %v4778
    %v4937 = vunpack.c.h.b16 %v4778
    %v4938 = vunpack.c.l.b16 %v4779
    %v4939 = vunpack.c.h.b16 %v4779
    %v4940 = vunpack.c.l.b16 %v4780
    %v4941 = vunpack.c.h.b16 %v4780
    %v4942 = vunpack.c.l.b16 %v4781
    %v4943 = vunpack.c.h.b16 %v4781
    %v4944 = vunpack.c.l.b16 %v4782
    %v4945 = vunpack.c.h.b16 %v4782
    %v4946 = vunpack.c.l.b16 %v4783
    %v4947 = vunpack.c.h.b16 %v4783
    %v4948 = vunpack.c.l.b16 %v4784
    %v4949 = vunpack.c.h.b16 %v4784
    %v4950 = vunpack.c.l.b16 %v4785
    %v4951 = vunpack.c.h.b16 %v4785
    %v4952 = vunpack.c.l.b16 %v4786
    %v4953 = vunpack.c.h.b16 %v4786
    %v4954 = vunpack.c.l.b16 %v4787
    %v4955 = vunpack.c.h.b16 %v4787
    %v4956 = vunpack.c.l.b16 %v4788
    %v4957 = vunpack.c.h.b16 %v4788
    %v4958 = vunpack.c.l.b16 %v4789
    %v4959 = vunpack.c.h.b16 %v4789
    %v4960 = vunpack.c.l.b16 %v4790
    %v4961 = vunpack.c.h.b16 %v4790
    %v4962 = vunpack.c.l.b16 %v4791
    %v4963 = vunpack.c.h.b16 %v4791
    %v4964 = vunpack.c.l.b16 %v4792
    %v4965 = vunpack.c.h.b16 %v4792
    %v4966 = vunpack.c.l.b16 %v4793
    %v4967 = vunpack.c.h.b16 %v4793
    %v4968 = vunpack.c.l.b16 %v4794
    %v4969 = vunpack.c.h.b16 %v4794
    %v4970 = vunpack.c.l.b16 %v4795
    %v4971 = vunpack.c.h.b16 %v4795
    %v4972 = vunpack.c.l.b16 %v4796
    %v4973 = vunpack.c.h.b16 %v4796
    %v4974 = vunpack.c.l.b16 %v4797
    %v4975 = vunpack.c.h.b16 %v4797
    %v4976 = vunpack.c.l.b16 %v4798
    %v4977 = vunpack.c.h.b16 %v4798
    %v4978 = vunpack.c.l.b16 %v4799
    %v4979 = vunpack.c.h.b16 %v4799
    %v4980 = vunpack.c.l.b16 %v4800
    %v4981 = vunpack.c.h.b16 %v4800
    %v4982 = vunpack.c.l.b16 %v4801
    %v4983 = vunpack.c.h.b16 %v4801
    %v4984 = vunpack.c.l.b16 %v4802
    %v4985 = vunpack.c.h.b16 %v4802
    %v4986 = vunpack.c.l.b16 %v4803
    %v4987 = vunpack.c.h.b16 %v4803
    %v4988 = vunpack.c.l.b16 %v4804
    %v4989 = vunpack.c.h.b16 %v4804
    %v4990 = vunpack.c.l.b16 %v4805
    %v4991 = vunpack.c.h.b16 %v4805
    %v4992 = vunpack.c.l.b16 %v4806
    %v4993 = vunpack.c.h.b16 %v4806
    %v4994 = vunpack.c.l.b16 %v4807
    %v4995 = vunpack.c.h.b16 %v4807
    %v4996 = vunpack.c.l.b16 %v4808
    %v4997 = vunpack.c.h.b16 %v4808
    %v4998 = vunpack.c.l.b16 %v4809
    %v4999 = vunpack.c.h.b16 %v4809
    %v5000 = vunpack.c.l.b16 %v4810
    %v5001 = vunpack.c.h.b16 %v4810
    %v5002 = vunpack.c.l.b16 %v4811
    %v5003 = vunpack.c.h.b16 %v4811
    %v5004 = vunpack.c.l.b16 %v4812
    %v5005 = vunpack.c.h.b16 %v4812
    %v5006 = vunpack.c.l.b16 %v4813
    %v5007 = vunpack.c.h.b16 %v4813
    %v5008 = vunpack.c.l.b16 %v4814
    %v5009 = vunpack.c.h.b16 %v4814
    %v5010 = vunpack.c.l.b16 %v4815
    %v5011 = vunpack.c.h.b16 %v4815
    %v5012 = vunpack.c.l.b16 %v4816
    %v5013 = vunpack.c.h.b16 %v4816
    %v5014 = vunpack.c.l.b16 %v4817
    %v5015 = vunpack.c.h.b16 %v4817
    %v5016 = vpack.c.b16 %v4890, %v4888
    %v5017 = vpack.c.b16 %v4891, %v4889
    %v5018 = vpack.c.b16 %v4894, %v4892
    %v5019 = vpack.c.b16 %v4895, %v4893
    %v5020 = vpack.c.b16 %v4898, %v4896
    %v5021 = vpack.c.b16 %v4899, %v4897
    %v5022 = vpack.c.b16 %v4902, %v4900
    %v5023 = vpack.c.b16 %v4903, %v4901
    %v5024 = vpack.c.b16 %v4906, %v4904
    %v5025 = vpack.c.b16 %v4907, %v4905
    %v5026 = vpack.c.b16 %v4910, %v4908
    %v5027 = vpack.c.b16 %v4911, %v4909
    %v5028 = vpack.c.b16 %v4914, %v4912
    %v5029 = vpack.c.b16 %v4915, %v4913
    %v5030 = vpack.c.b16 %v4918, %v4916
    %v5031 = vpack.c.b16 %v4919, %v4917
    %v5032 = vpack.c.b16 %v4922, %v4920
    %v5033 = vpack.c.b16 %v4923, %v4921
    %v5034 = vpack.c.b16 %v4926, %v4924
    %v5035 = vpack.c.b16 %v4927, %v4925
    %v5036 = vpack.c.b16 %v4930, %v4928
    %v5037 = vpack.c.b16 %v4931, %v4929
    %v5038 = vpack.c.b16 %v4934, %v4932
    %v5039 = vpack.c.b16 %v4935, %v4933
    %v5040 = vpack.c.b16 %v4938, %v4936
    %v5041 = vpack.c.b16 %v4939, %v4937
    %v5042 = vpack.c.b16 %v4942, %v4940
    %v5043 = vpack.c.b16 %v4943, %v4941
    %v5044 = vpack.c.b16 %v4946, %v4944
    %v5045 = vpack.c.b16 %v4947, %v4945
    %v5046 = vpack.c.b16 %v4950, %v4948
    %v5047 = vpack.c.b16 %v4951, %v4949
    %v5048 = vpack.c.b16 %v4954, %v4952
    %v5049 = vpack.c.b16 %v4955, %v4953
    %v5050 = vpack.c.b16 %v4958, %v4956
    %v5051 = vpack.c.b16 %v4959, %v4957
    %v5052 = vpack.c.b16 %v4962, %v4960
    %v5053 = vpack.c.b16 %v4963, %v4961
    %v5054 = vpack.c.b16 %v4966, %v4964
    %v5055 = vpack.c.b16 %v4967, %v4965
    %v5056 = vpack.c.b16 %v4970, %v4968
    %v5057 = vpack.c.b16 %v4971, %v4969
    %v5058 = vpack.c.b16 %v4974, %v4972
    %v5059 = vpack.c.b16 %v4975, %v4973
    %v5060 = vpack.c.b16 %v4978, %v4976
    %v5061 = vpack.c.b16 %v4979, %v4977
    %v5062 = vpack.c.b16 %v4982, %v4980
    %v5063 = vpack.c.b16 %v4983, %v4981
    %v5064 = vpack.c.b16 %v4986, %v4984
    %v5065 = vpack.c.b16 %v4987, %v4985
    %v5066 = vpack.c.b16 %v4990, %v4988
    %v5067 = vpack.c.b16 %v4991, %v4989
    %v5068 = vpack.c.b16 %v4994, %v4992
    %v5069 = vpack.c.b16 %v4995, %v4993
    %v5070 = vpack.c.b16 %v4998, %v4996
    %v5071 = vpack.c.b16 %v4999, %v4997
    %v5072 = vpack.c.b16 %v5002, %v5000
    %v5073 = vpack.c.b16 %v5003, %v5001
    %v5074 = vpack.c.b16 %v5006, %v5004
    %v5075 = vpack.c.b16 %v5007, %v5005
    %v5076 = vpack.c.b16 %v5010, %v5008
    %v5077 = vpack.c.b16 %v5011, %v5009
    %v5078 = vpack.c.b16 %v5014, %v5012
    %v5079 = vpack.c.b16 %v5015, %v5013
    %5144 = vmatpush.bf16.msra.mxu0 %v5030
    %5145 = vmatpush.bf16.msra.mxu0 %v5028
    %5146 = vmatpush.bf16.msra.mxu0 %v5026
    %5147 = vmatpush.bf16.msra.mxu0 %v5024
    %5148 = vmatpush.bf16.msra.mxu0 %v5022
    %5149 = vmatpush.bf16.msra.mxu0 %v5020
    %5150 = vmatpush.bf16.msra.mxu0 %v5018
    %5151 = vmatpush.bf16.msra.mxu0 %v5016
    %5152 = vmatmul.bf16.gmra.mxu0 %v4750
    %v5153 = vpop.f32.mrf.mxu0
    %v5154 = vadd.f32 %v4820, %v5153
    %v5155 = vpop.f32.mrf.mxu0
    %5156 = vdwg.mxu0
    %5157 = vmatpush.bf16.msra.mxu0 %v5046
    %5158 = vmatpush.bf16.msra.mxu0 %v5044
    %5159 = vmatpush.bf16.msra.mxu0 %v5042
    %5160 = vmatpush.bf16.msra.mxu0 %v5040
    %5161 = vmatpush.bf16.msra.mxu0 %v5038
    %5162 = vmatpush.bf16.msra.mxu0 %v5036
    %5163 = vmatpush.bf16.msra.mxu0 %v5034
    %5164 = vmatpush.bf16.msra.mxu0 %v5032
    %5165 = vmatmul.bf16.gmra.mxu0 %v4751
    %v5166 = vpop.f32.mrf.mxu0
    %v5167 = vadd.f32 %v5154, %v5166
    %v5168 = vpop.f32.mrf.mxu0
    %5169 = vdwg.mxu0
    %5170 = vmatpush.bf16.msra.mxu0 %v5062
    %5171 = vmatpush.bf16.msra.mxu0 %v5060
    %5172 = vmatpush.bf16.msra.mxu0 %v5058
    %5173 = vmatpush.bf16.msra.mxu0 %v5056
    %5174 = vmatpush.bf16.msra.mxu0 %v5054
    %5175 = vmatpush.bf16.msra.mxu0 %v5052
    %5176 = vmatpush.bf16.msra.mxu0 %v5050
    %5177 = vmatpush.bf16.msra.mxu0 %v5048
    %5178 = vmatmul.bf16.gmra.mxu0 %v4752
    %v5179 = vpop.f32.mrf.mxu0
    %v5180 = vadd.f32 %v5167, %v5179
    %v5181 = vpop.f32.mrf.mxu0
    %5182 = vdwg.mxu0
    %5183 = vmatpush.bf16.msra.mxu0 %v5078
    %5184 = vmatpush.bf16.msra.mxu0 %v5076
    %5185 = vmatpush.bf16.msra.mxu0 %v5074
    %5186 = vmatpush.bf16.msra.mxu0 %v5072
    %5187 = vmatpush.bf16.msra.mxu0 %v5070
    %5188 = vmatpush.bf16.msra.mxu0 %v5068
    %5189 = vmatpush.bf16.msra.mxu0 %v5066
    %5190 = vmatpush.bf16.msra.mxu0 %v5064
    %5191 = vmatmul.bf16.gmra.mxu0 %v4753
    %v5192 = vpop.f32.mrf.mxu0
    %v5193 = vadd.f32 %v5180, %v5192
    %v5194 = vpop.f32.mrf.mxu0
    %5195 = vdwg.mxu0
    %5196 = vmatpush.bf16.msra.mxu0 %v5031
    %5197 = vmatpush.bf16.msra.mxu0 %v5029
    %5198 = vmatpush.bf16.msra.mxu0 %v5027
    %5199 = vmatpush.bf16.msra.mxu0 %v5025
    %5200 = vmatpush.bf16.msra.mxu0 %v5023
    %5201 = vmatpush.bf16.msra.mxu0 %v5021
    %5202 = vmatpush.bf16.msra.mxu0 %v5019
    %5203 = vmatpush.bf16.msra.mxu0 %v5017
    %5204 = vmatmul.bf16.gmra.mxu0 %v4750
    %v5205 = vpop.f32.mrf.mxu0
    %v5206 = vadd.f32 %v4821, %v5205
    %v5207 = vpop.f32.mrf.mxu0
    %5208 = vdwg.mxu0
    %5209 = vmatpush.bf16.msra.mxu0 %v5047
    %5210 = vmatpush.bf16.msra.mxu0 %v5045
    %5211 = vmatpush.bf16.msra.mxu0 %v5043
    %5212 = vmatpush.bf16.msra.mxu0 %v5041
    %5213 = vmatpush.bf16.msra.mxu0 %v5039
    %5214 = vmatpush.bf16.msra.mxu0 %v5037
    %5215 = vmatpush.bf16.msra.mxu0 %v5035
    %5216 = vmatpush.bf16.msra.mxu0 %v5033
    %5217 = vmatmul.bf16.gmra.mxu0 %v4751
    %v5218 = vpop.f32.mrf.mxu0
    %v5219 = vadd.f32 %v5206, %v5218
    %v5220 = vpop.f32.mrf.mxu0
    %5221 = vdwg.mxu0
    %5222 = vmatpush.bf16.msra.mxu0 %v5063
    %5223 = vmatpush.bf16.msra.mxu0 %v5061
    %5224 = vmatpush.bf16.msra.mxu0 %v5059
    %5225 = vmatpush.bf16.msra.mxu0 %v5057
    %5226 = vmatpush.bf16.msra.mxu0 %v5055
    %5227 = vmatpush.bf16.msra.mxu0 %v5053
    %5228 = vmatpush.bf16.msra.mxu0 %v5051
    %5229 = vmatpush.bf16.msra.mxu0 %v5049
    %5230 = vmatmul.bf16.gmra.mxu0 %v4752
    %v5231 = vpop.f32.mrf.mxu0
    %v5232 = vadd.f32 %v5219, %v5231
    %v5233 = vpop.f32.mrf.mxu0
    %5234 = vdwg.mxu0
    %5235 = vmatpush.bf16.msra.mxu0 %v5079
    %5236 = vmatpush.bf16.msra.mxu0 %v5077
    %5237 = vmatpush.bf16.msra.mxu0 %v5075
    %5238 = vmatpush.bf16.msra.mxu0 %v5073
    %5239 = vmatpush.bf16.msra.mxu0 %v5071
    %5240 = vmatpush.bf16.msra.mxu0 %v5069
    %5241 = vmatpush.bf16.msra.mxu0 %v5067
    %5242 = vmatpush.bf16.msra.mxu0 %v5065
    %5243 = vmatmul.bf16.gmra.mxu0 %v4753
    %v5244 = vpop.f32.mrf.mxu0
    %v5245 = vadd.f32 %v5232, %v5244
    %v5246 = vpop.f32.mrf.mxu0
    %5247 = vdwg.mxu0
    %5248 = vst [vmem:[%s17] sm:$0xff] %v5193
    %5249 = vst [vmem:[%s17 + $0x8] sm:$0xff] %v5245
    %v5250 = vld [vmem:[%s2] sm:$0xff]
    %v5251 = vld [vmem:[%s2 + $0x8] sm:$0xff]
    %v5252 = vld [vmem:[%s2 + $0x10] sm:$0xff]
    %v5253 = vld [vmem:[%s2 + $0x18] sm:$0xff]
    %v5254 = vld [vmem:[%s2 + $0x20] sm:$0xff]
    %v5255 = vld [vmem:[%s2 + $0x28] sm:$0xff]
    %v5256 = vld [vmem:[%s3] sm:$0xff]
    %v5257 = vld [vmem:[%s3 + $0x8] sm:$0xff]
    %v5258 = vmul.f32 %v5250, %v5250
    %v5259 = vmul.f32 %v5251, %v5251
    %v5260 = vmul.f32 %v5252, %v5252
    %v5261 = vmul.f32 %v5253, %v5253
    %v5262 = vmul.f32 %v5254, %v5254
    %v5263 = vmul.f32 %v5255, %v5255
    %v5264 = vadd.f32 %v5258, %v5259
    %v5265 = vadd.f32 %v5264, %v5260
    %v5266 = vadd.f32 %v5265, %v5261
    %v5267 = vadd.f32 %v5266, %v5262
    %v5268 = vadd.f32 %v5267, %v5263
    %5269 = vadd.xlane.f32.xlu0 %v5268
    %v5270 = vpop.xlane.xlu0 %5269
    %v5271 = vmax.f32 %v5270, 1e-24
    %v5272 = vrsqrt.pop %v5271
    %v5273 = vmul.f32 %v5272, %v5271
    %v5274 = vmul.f32 %v5273, %v5272
    %v5275 = vmul.f32 0.5, %v5274
    %v5276 = vsub.f32 1.5, %v5275
    %v5277 = vmul.f32 %v5272, %v5276
    %vm5278 = vweird.f32 %v5271
    %vm5279 = vweird.f32 %v5272
    %vm5280 = vmor %vm5278, %vm5279
    %v5281 = vsel %vm5280, %v5272, %v5277
    %v5282 = vmul.f32 %v5250, %v5281
    %v5283 = vmul.f32 %v5251, %v5281
    %v5284 = vmul.f32 %v5252, %v5281
    %v5285 = vmul.f32 %v5253, %v5281
    %v5286 = vmul.f32 %v5254, %v5281
    %v5287 = vmul.f32 %v5255, %v5281
    %v5288 = vmul.f32 %v5256, %v5256
    %v5289 = vmul.f32 %v5257, %v5257
    %v5290 = vsel %vm198, %v5289, 0.0
    %v5291 = vadd.f32 %v5288, %v5290
    %5292 = vadd.xlane.f32.xlu0 %v5291
    %v5293 = vpop.xlane.xlu0 %5292
    %v5294 = vmax.f32 %v5293, 1e-24
    %v5295 = vrsqrt.pop %v5294
    %v5296 = vmul.f32 %v5295, %v5294
    %v5297 = vmul.f32 %v5296, %v5295
    %v5298 = vmul.f32 0.5, %v5297
    %v5299 = vsub.f32 1.5, %v5298
    %v5300 = vmul.f32 %v5295, %v5299
    %vm5301 = vweird.f32 %v5294
    %vm5302 = vweird.f32 %v5295
    %vm5303 = vmor %vm5301, %vm5302
    %v5304 = vsel %vm5303, %v5295, %v5300
    %v5305 = vmul.f32 %v5256, %v5304
    %v5306 = vmul.f32 %v5257, %v5304
    %5307 = vst [vmem:[#allocation2] sm:$0xff] %v5305
    %5308 = vst.msk [vmem:[#allocation2 + $0x8] sm:$0xff] %vm198, %v5306
    %v5309 = vpack.c.bf16 %v5282, %v5282
    %v5310 = vpack.c.bf16 %v5283, %v5283
    %v5311 = vpack.c.bf16 %v5284, %v5284
    %v5312 = vpack.c.bf16 %v5285, %v5285
    %v5313 = vpack.c.bf16 %v5286, %v5286
    %v5314 = vpack.c.bf16 %v5287, %v5287
    %v5315 = vld [vmem:[%s4] sm:$0xff]
    %v5316 = vld [vmem:[%s4 + $0x8] sm:$0xff]
    %v5317 = vld [vmem:[%s4 + $0x10] sm:$0xff]
    %v5318 = vld [vmem:[%s4 + $0x18] sm:$0xff]
    %v5319 = vld [vmem:[%s4 + $0x20] sm:$0xff]
    %v5320 = vld [vmem:[%s4 + $0x28] sm:$0xff]
    %v5321 = vld [vmem:[%s4 + $0x30] sm:$0xff]
    %v5322 = vld [vmem:[%s4 + $0x38] sm:$0xff]
    %v5323 = vld [vmem:[%s4 + $0x40] sm:$0xff]
    %v5324 = vld [vmem:[%s4 + $0x48] sm:$0xff]
    %v5325 = vld [vmem:[%s4 + $0x50] sm:$0xff]
    %v5326 = vld [vmem:[%s4 + $0x58] sm:$0xff]
    %v5327 = vld [vmem:[%s4 + $0x60] sm:$0xff]
    %v5328 = vld [vmem:[%s4 + $0x68] sm:$0xff]
    %v5329 = vld [vmem:[%s4 + $0x70] sm:$0xff]
    %v5330 = vld [vmem:[%s4 + $0x78] sm:$0xff]
    %v5331 = vld [vmem:[%s4 + $0x80] sm:$0xff]
    %v5332 = vld [vmem:[%s4 + $0x88] sm:$0xff]
    %v5333 = vld [vmem:[%s4 + $0x90] sm:$0xff]
    %v5334 = vld [vmem:[%s4 + $0x98] sm:$0xff]
    %v5335 = vld [vmem:[%s4 + $0xa0] sm:$0xff]
    %v5336 = vld [vmem:[%s4 + $0xa8] sm:$0xff]
    %v5337 = vld [vmem:[%s4 + $0xb0] sm:$0xff]
    %v5338 = vld [vmem:[%s4 + $0xb8] sm:$0xff]
    %v5339 = vld [vmem:[%s4 + $0xc0] sm:$0xff]
    %v5340 = vld [vmem:[%s4 + $0xc8] sm:$0xff]
    %v5341 = vld [vmem:[%s4 + $0xd0] sm:$0xff]
    %v5342 = vld [vmem:[%s4 + $0xd8] sm:$0xff]
    %v5343 = vld [vmem:[%s4 + $0xe0] sm:$0xff]
    %v5344 = vld [vmem:[%s4 + $0xe8] sm:$0xff]
    %v5345 = vld [vmem:[%s4 + $0xf0] sm:$0xff]
    %v5346 = vld [vmem:[%s4 + $0xf8] sm:$0xff]
    %v5347 = vld [vmem:[%s4 + $0x100] sm:$0xff]
    %v5348 = vld [vmem:[%s4 + $0x108] sm:$0xff]
    %v5349 = vld [vmem:[%s4 + $0x110] sm:$0xff]
    %v5350 = vld [vmem:[%s4 + $0x118] sm:$0xff]
    %v5351 = vld [vmem:[%s4 + $0x120] sm:$0xff]
    %v5352 = vld [vmem:[%s4 + $0x128] sm:$0xff]
    %v5353 = vld [vmem:[%s4 + $0x130] sm:$0xff]
    %v5354 = vld [vmem:[%s4 + $0x138] sm:$0xff]
    %v5355 = vld [vmem:[%s4 + $0x140] sm:$0xff]
    %v5356 = vld [vmem:[%s4 + $0x148] sm:$0xff]
    %v5357 = vld [vmem:[%s4 + $0x150] sm:$0xff]
    %v5358 = vld [vmem:[%s4 + $0x158] sm:$0xff]
    %v5359 = vld [vmem:[%s4 + $0x160] sm:$0xff]
    %v5360 = vld [vmem:[%s4 + $0x168] sm:$0xff]
    %v5361 = vld [vmem:[%s4 + $0x170] sm:$0xff]
    %v5362 = vld [vmem:[%s4 + $0x178] sm:$0xff]
    %v5363 = vld [vmem:[%s4 + $0x180] sm:$0xff]
    %v5364 = vld [vmem:[%s4 + $0x188] sm:$0xff]
    %v5365 = vld [vmem:[%s4 + $0x190] sm:$0xff]
    %v5366 = vld [vmem:[%s4 + $0x198] sm:$0xff]
    %v5367 = vld [vmem:[%s4 + $0x1a0] sm:$0xff]
    %v5368 = vld [vmem:[%s4 + $0x1a8] sm:$0xff]
    %v5369 = vld [vmem:[%s4 + $0x1b0] sm:$0xff]
    %v5370 = vld [vmem:[%s4 + $0x1b8] sm:$0xff]
    %v5371 = vld [vmem:[%s4 + $0x1c0] sm:$0xff]
    %v5372 = vld [vmem:[%s4 + $0x1c8] sm:$0xff]
    %v5373 = vld [vmem:[%s4 + $0x1d0] sm:$0xff]
    %v5374 = vld [vmem:[%s4 + $0x1d8] sm:$0xff]
    %v5375 = vld [vmem:[%s4 + $0x1e0] sm:$0xff]
    %v5376 = vld [vmem:[%s4 + $0x1e8] sm:$0xff]
    %v5377 = vld [vmem:[%s4 + $0x1f0] sm:$0xff]
    %v5378 = vld [vmem:[%s4 + $0x1f8] sm:$0xff]
    %v5379 = vld [vmem:[%s4 + $0x200] sm:$0xff]
    %v5380 = vld [vmem:[%s4 + $0x208] sm:$0xff]
    %v5381 = vld [vmem:[%s4 + $0x210] sm:$0xff]
    %v5382 = vld [vmem:[%s4 + $0x218] sm:$0xff]
    %v5383 = vld [vmem:[%s4 + $0x220] sm:$0xff]
    %v5384 = vld [vmem:[%s4 + $0x228] sm:$0xff]
    %v5385 = vld [vmem:[%s4 + $0x230] sm:$0xff]
    %v5386 = vld [vmem:[%s4 + $0x238] sm:$0xff]
    %v5387 = vld [vmem:[%s4 + $0x240] sm:$0xff]
    %v5388 = vld [vmem:[%s4 + $0x248] sm:$0xff]
    %v5389 = vld [vmem:[%s4 + $0x250] sm:$0xff]
    %v5390 = vld [vmem:[%s4 + $0x258] sm:$0xff]
    %v5391 = vld [vmem:[%s4 + $0x260] sm:$0xff]
    %v5392 = vld [vmem:[%s4 + $0x268] sm:$0xff]
    %v5393 = vld [vmem:[%s4 + $0x270] sm:$0xff]
    %v5394 = vld [vmem:[%s4 + $0x278] sm:$0xff]
    %v5395 = vld [vmem:[%s4 + $0x280] sm:$0xff]
    %v5396 = vld [vmem:[%s4 + $0x288] sm:$0xff]
    %v5397 = vld [vmem:[%s4 + $0x290] sm:$0xff]
    %v5398 = vld [vmem:[%s4 + $0x298] sm:$0xff]
    %v5399 = vld [vmem:[%s4 + $0x2a0] sm:$0xff]
    %v5400 = vld [vmem:[%s4 + $0x2a8] sm:$0xff]
    %v5401 = vld [vmem:[%s4 + $0x2b0] sm:$0xff]
    %v5402 = vld [vmem:[%s4 + $0x2b8] sm:$0xff]
    %v5403 = vld [vmem:[%s4 + $0x2c0] sm:$0xff]
    %v5404 = vld [vmem:[%s4 + $0x2c8] sm:$0xff]
    %v5405 = vld [vmem:[%s4 + $0x2d0] sm:$0xff]
    %v5406 = vld [vmem:[%s4 + $0x2d8] sm:$0xff]
    %v5407 = vld [vmem:[%s4 + $0x2e0] sm:$0xff]
    %v5408 = vld [vmem:[%s4 + $0x2e8] sm:$0xff]
    %v5409 = vld [vmem:[%s4 + $0x2f0] sm:$0xff]
    %v5410 = vld [vmem:[%s4 + $0x2f8] sm:$0xff]
    %v5411 = vld [vmem:[#allocation7] sm:$0x3]
    %v5413 = vperm.slane %v5411, 0
    %v5414 = vperm.slane %v5411, 1
    %v5513 = vunpack.c.l.b16 %v5315
    %v5514 = vunpack.c.h.b16 %v5315
    %v5515 = vunpack.c.l.b16 %v5316
    %v5516 = vunpack.c.h.b16 %v5316
    %v5517 = vunpack.c.l.b16 %v5317
    %v5518 = vunpack.c.h.b16 %v5317
    %v5519 = vunpack.c.l.b16 %v5318
    %v5520 = vunpack.c.h.b16 %v5318
    %v5521 = vunpack.c.l.b16 %v5319
    %v5522 = vunpack.c.h.b16 %v5319
    %v5523 = vunpack.c.l.b16 %v5320
    %v5524 = vunpack.c.h.b16 %v5320
    %v5525 = vunpack.c.l.b16 %v5321
    %v5526 = vunpack.c.h.b16 %v5321
    %v5527 = vunpack.c.l.b16 %v5322
    %v5528 = vunpack.c.h.b16 %v5322
    %v5529 = vunpack.c.l.b16 %v5323
    %v5530 = vunpack.c.h.b16 %v5323
    %v5531 = vunpack.c.l.b16 %v5324
    %v5532 = vunpack.c.h.b16 %v5324
    %v5533 = vunpack.c.l.b16 %v5325
    %v5534 = vunpack.c.h.b16 %v5325
    %v5535 = vunpack.c.l.b16 %v5326
    %v5536 = vunpack.c.h.b16 %v5326
    %v5537 = vunpack.c.l.b16 %v5327
    %v5538 = vunpack.c.h.b16 %v5327
    %v5539 = vunpack.c.l.b16 %v5328
    %v5540 = vunpack.c.h.b16 %v5328
    %v5541 = vunpack.c.l.b16 %v5329
    %v5542 = vunpack.c.h.b16 %v5329
    %v5543 = vunpack.c.l.b16 %v5330
    %v5544 = vunpack.c.h.b16 %v5330
    %v5545 = vunpack.c.l.b16 %v5331
    %v5546 = vunpack.c.h.b16 %v5331
    %v5547 = vunpack.c.l.b16 %v5332
    %v5548 = vunpack.c.h.b16 %v5332
    %v5549 = vunpack.c.l.b16 %v5333
    %v5550 = vunpack.c.h.b16 %v5333
    %v5551 = vunpack.c.l.b16 %v5334
    %v5552 = vunpack.c.h.b16 %v5334
    %v5553 = vunpack.c.l.b16 %v5335
    %v5554 = vunpack.c.h.b16 %v5335
    %v5555 = vunpack.c.l.b16 %v5336
    %v5556 = vunpack.c.h.b16 %v5336
    %v5557 = vunpack.c.l.b16 %v5337
    %v5558 = vunpack.c.h.b16 %v5337
    %v5559 = vunpack.c.l.b16 %v5338
    %v5560 = vunpack.c.h.b16 %v5338
    %v5561 = vunpack.c.l.b16 %v5339
    %v5562 = vunpack.c.h.b16 %v5339
    %v5563 = vunpack.c.l.b16 %v5340
    %v5564 = vunpack.c.h.b16 %v5340
    %v5565 = vunpack.c.l.b16 %v5341
    %v5566 = vunpack.c.h.b16 %v5341
    %v5567 = vunpack.c.l.b16 %v5342
    %v5568 = vunpack.c.h.b16 %v5342
    %v5569 = vunpack.c.l.b16 %v5343
    %v5570 = vunpack.c.h.b16 %v5343
    %v5571 = vunpack.c.l.b16 %v5344
    %v5572 = vunpack.c.h.b16 %v5344
    %v5573 = vunpack.c.l.b16 %v5345
    %v5574 = vunpack.c.h.b16 %v5345
    %v5575 = vunpack.c.l.b16 %v5346
    %v5576 = vunpack.c.h.b16 %v5346
    %v5577 = vunpack.c.l.b16 %v5347
    %v5578 = vunpack.c.h.b16 %v5347
    %v5579 = vunpack.c.l.b16 %v5348
    %v5580 = vunpack.c.h.b16 %v5348
    %v5581 = vunpack.c.l.b16 %v5349
    %v5582 = vunpack.c.h.b16 %v5349
    %v5583 = vunpack.c.l.b16 %v5350
    %v5584 = vunpack.c.h.b16 %v5350
    %v5585 = vunpack.c.l.b16 %v5351
    %v5586 = vunpack.c.h.b16 %v5351
    %v5587 = vunpack.c.l.b16 %v5352
    %v5588 = vunpack.c.h.b16 %v5352
    %v5589 = vunpack.c.l.b16 %v5353
    %v5590 = vunpack.c.h.b16 %v5353
    %v5591 = vunpack.c.l.b16 %v5354
    %v5592 = vunpack.c.h.b16 %v5354
    %v5593 = vunpack.c.l.b16 %v5355
    %v5594 = vunpack.c.h.b16 %v5355
    %v5595 = vunpack.c.l.b16 %v5356
    %v5596 = vunpack.c.h.b16 %v5356
    %v5597 = vunpack.c.l.b16 %v5357
    %v5598 = vunpack.c.h.b16 %v5357
    %v5599 = vunpack.c.l.b16 %v5358
    %v5600 = vunpack.c.h.b16 %v5358
    %v5601 = vunpack.c.l.b16 %v5359
    %v5602 = vunpack.c.h.b16 %v5359
    %v5603 = vunpack.c.l.b16 %v5360
    %v5604 = vunpack.c.h.b16 %v5360
    %v5605 = vunpack.c.l.b16 %v5361
    %v5606 = vunpack.c.h.b16 %v5361
    %v5607 = vunpack.c.l.b16 %v5362
    %v5608 = vunpack.c.h.b16 %v5362
    %v5609 = vunpack.c.l.b16 %v5363
    %v5610 = vunpack.c.h.b16 %v5363
    %v5611 = vunpack.c.l.b16 %v5364
    %v5612 = vunpack.c.h.b16 %v5364
    %v5613 = vunpack.c.l.b16 %v5365
    %v5614 = vunpack.c.h.b16 %v5365
    %v5615 = vunpack.c.l.b16 %v5366
    %v5616 = vunpack.c.h.b16 %v5366
    %v5617 = vunpack.c.l.b16 %v5367
    %v5618 = vunpack.c.h.b16 %v5367
    %v5619 = vunpack.c.l.b16 %v5368
    %v5620 = vunpack.c.h.b16 %v5368
    %v5621 = vunpack.c.l.b16 %v5369
    %v5622 = vunpack.c.h.b16 %v5369
    %v5623 = vunpack.c.l.b16 %v5370
    %v5624 = vunpack.c.h.b16 %v5370
    %v5625 = vunpack.c.l.b16 %v5371
    %v5626 = vunpack.c.h.b16 %v5371
    %v5627 = vunpack.c.l.b16 %v5372
    %v5628 = vunpack.c.h.b16 %v5372
    %v5629 = vunpack.c.l.b16 %v5373
    %v5630 = vunpack.c.h.b16 %v5373
    %v5631 = vunpack.c.l.b16 %v5374
    %v5632 = vunpack.c.h.b16 %v5374
    %v5633 = vunpack.c.l.b16 %v5375
    %v5634 = vunpack.c.h.b16 %v5375
    %v5635 = vunpack.c.l.b16 %v5376
    %v5636 = vunpack.c.h.b16 %v5376
    %v5637 = vunpack.c.l.b16 %v5377
    %v5638 = vunpack.c.h.b16 %v5377
    %v5639 = vunpack.c.l.b16 %v5378
    %v5640 = vunpack.c.h.b16 %v5378
    %v5641 = vunpack.c.l.b16 %v5379
    %v5642 = vunpack.c.h.b16 %v5379
    %v5643 = vunpack.c.l.b16 %v5380
    %v5644 = vunpack.c.h.b16 %v5380
    %v5645 = vunpack.c.l.b16 %v5381
    %v5646 = vunpack.c.h.b16 %v5381
    %v5647 = vunpack.c.l.b16 %v5382
    %v5648 = vunpack.c.h.b16 %v5382
    %v5649 = vunpack.c.l.b16 %v5383
    %v5650 = vunpack.c.h.b16 %v5383
    %v5651 = vunpack.c.l.b16 %v5384
    %v5652 = vunpack.c.h.b16 %v5384
    %v5653 = vunpack.c.l.b16 %v5385
    %v5654 = vunpack.c.h.b16 %v5385
    %v5655 = vunpack.c.l.b16 %v5386
    %v5656 = vunpack.c.h.b16 %v5386
    %v5657 = vunpack.c.l.b16 %v5387
    %v5658 = vunpack.c.h.b16 %v5387
    %v5659 = vunpack.c.l.b16 %v5388
    %v5660 = vunpack.c.h.b16 %v5388
    %v5661 = vunpack.c.l.b16 %v5389
    %v5662 = vunpack.c.h.b16 %v5389
    %v5663 = vunpack.c.l.b16 %v5390
    %v5664 = vunpack.c.h.b16 %v5390
    %v5665 = vunpack.c.l.b16 %v5391
    %v5666 = vunpack.c.h.b16 %v5391
    %v5667 = vunpack.c.l.b16 %v5392
    %v5668 = vunpack.c.h.b16 %v5392
    %v5669 = vunpack.c.l.b16 %v5393
    %v5670 = vunpack.c.h.b16 %v5393
    %v5671 = vunpack.c.l.b16 %v5394
    %v5672 = vunpack.c.h.b16 %v5394
    %v5673 = vunpack.c.l.b16 %v5395
    %v5674 = vunpack.c.h.b16 %v5395
    %v5675 = vunpack.c.l.b16 %v5396
    %v5676 = vunpack.c.h.b16 %v5396
    %v5677 = vunpack.c.l.b16 %v5397
    %v5678 = vunpack.c.h.b16 %v5397
    %v5679 = vunpack.c.l.b16 %v5398
    %v5680 = vunpack.c.h.b16 %v5398
    %v5681 = vunpack.c.l.b16 %v5399
    %v5682 = vunpack.c.h.b16 %v5399
    %v5683 = vunpack.c.l.b16 %v5400
    %v5684 = vunpack.c.h.b16 %v5400
    %v5685 = vunpack.c.l.b16 %v5401
    %v5686 = vunpack.c.h.b16 %v5401
    %v5687 = vunpack.c.l.b16 %v5402
    %v5688 = vunpack.c.h.b16 %v5402
    %v5689 = vunpack.c.l.b16 %v5403
    %v5690 = vunpack.c.h.b16 %v5403
    %v5691 = vunpack.c.l.b16 %v5404
    %v5692 = vunpack.c.h.b16 %v5404
    %v5693 = vunpack.c.l.b16 %v5405
    %v5694 = vunpack.c.h.b16 %v5405
    %v5695 = vunpack.c.l.b16 %v5406
    %v5696 = vunpack.c.h.b16 %v5406
    %v5697 = vunpack.c.l.b16 %v5407
    %v5698 = vunpack.c.h.b16 %v5407
    %v5699 = vunpack.c.l.b16 %v5408
    %v5700 = vunpack.c.h.b16 %v5408
    %v5701 = vunpack.c.l.b16 %v5409
    %v5702 = vunpack.c.h.b16 %v5409
    %v5703 = vunpack.c.l.b16 %v5410
    %v5704 = vunpack.c.h.b16 %v5410
    %v5705 = vpack.c.b16 %v5515, %v5513
    %v5706 = vpack.c.b16 %v5516, %v5514
    %v5707 = vpack.c.b16 %v5519, %v5517
    %v5708 = vpack.c.b16 %v5520, %v5518
    %v5709 = vpack.c.b16 %v5523, %v5521
    %v5710 = vpack.c.b16 %v5524, %v5522
    %v5711 = vpack.c.b16 %v5527, %v5525
    %v5712 = vpack.c.b16 %v5528, %v5526
    %v5713 = vpack.c.b16 %v5531, %v5529
    %v5714 = vpack.c.b16 %v5532, %v5530
    %v5715 = vpack.c.b16 %v5535, %v5533
    %v5716 = vpack.c.b16 %v5536, %v5534
    %v5717 = vpack.c.b16 %v5539, %v5537
    %v5718 = vpack.c.b16 %v5540, %v5538
    %v5719 = vpack.c.b16 %v5543, %v5541
    %v5720 = vpack.c.b16 %v5544, %v5542
    %v5721 = vpack.c.b16 %v5547, %v5545
    %v5722 = vpack.c.b16 %v5548, %v5546
    %v5723 = vpack.c.b16 %v5551, %v5549
    %v5724 = vpack.c.b16 %v5552, %v5550
    %v5725 = vpack.c.b16 %v5555, %v5553
    %v5726 = vpack.c.b16 %v5556, %v5554
    %v5727 = vpack.c.b16 %v5559, %v5557
    %v5728 = vpack.c.b16 %v5560, %v5558
    %v5729 = vpack.c.b16 %v5563, %v5561
    %v5730 = vpack.c.b16 %v5564, %v5562
    %v5731 = vpack.c.b16 %v5567, %v5565
    %v5732 = vpack.c.b16 %v5568, %v5566
    %v5733 = vpack.c.b16 %v5571, %v5569
    %v5734 = vpack.c.b16 %v5572, %v5570
    %v5735 = vpack.c.b16 %v5575, %v5573
    %v5736 = vpack.c.b16 %v5576, %v5574
    %v5737 = vpack.c.b16 %v5579, %v5577
    %v5738 = vpack.c.b16 %v5580, %v5578
    %v5739 = vpack.c.b16 %v5583, %v5581
    %v5740 = vpack.c.b16 %v5584, %v5582
    %v5741 = vpack.c.b16 %v5587, %v5585
    %v5742 = vpack.c.b16 %v5588, %v5586
    %v5743 = vpack.c.b16 %v5591, %v5589
    %v5744 = vpack.c.b16 %v5592, %v5590
    %v5745 = vpack.c.b16 %v5595, %v5593
    %v5746 = vpack.c.b16 %v5596, %v5594
    %v5747 = vpack.c.b16 %v5599, %v5597
    %v5748 = vpack.c.b16 %v5600, %v5598
    %v5749 = vpack.c.b16 %v5603, %v5601
    %v5750 = vpack.c.b16 %v5604, %v5602
    %v5751 = vpack.c.b16 %v5607, %v5605
    %v5752 = vpack.c.b16 %v5608, %v5606
    %v5753 = vpack.c.b16 %v5611, %v5609
    %v5754 = vpack.c.b16 %v5612, %v5610
    %v5755 = vpack.c.b16 %v5615, %v5613
    %v5756 = vpack.c.b16 %v5616, %v5614
    %v5757 = vpack.c.b16 %v5619, %v5617
    %v5758 = vpack.c.b16 %v5620, %v5618
    %v5759 = vpack.c.b16 %v5623, %v5621
    %v5760 = vpack.c.b16 %v5624, %v5622
    %v5761 = vpack.c.b16 %v5627, %v5625
    %v5762 = vpack.c.b16 %v5628, %v5626
    %v5763 = vpack.c.b16 %v5631, %v5629
    %v5764 = vpack.c.b16 %v5632, %v5630
    %v5765 = vpack.c.b16 %v5635, %v5633
    %v5766 = vpack.c.b16 %v5636, %v5634
    %v5767 = vpack.c.b16 %v5639, %v5637
    %v5768 = vpack.c.b16 %v5640, %v5638
    %v5769 = vpack.c.b16 %v5643, %v5641
    %v5770 = vpack.c.b16 %v5644, %v5642
    %v5771 = vpack.c.b16 %v5647, %v5645
    %v5772 = vpack.c.b16 %v5648, %v5646
    %v5773 = vpack.c.b16 %v5651, %v5649
    %v5774 = vpack.c.b16 %v5652, %v5650
    %v5775 = vpack.c.b16 %v5655, %v5653
    %v5776 = vpack.c.b16 %v5656, %v5654
    %v5777 = vpack.c.b16 %v5659, %v5657
    %v5778 = vpack.c.b16 %v5660, %v5658
    %v5779 = vpack.c.b16 %v5663, %v5661
    %v5780 = vpack.c.b16 %v5664, %v5662
    %v5781 = vpack.c.b16 %v5667, %v5665
    %v5782 = vpack.c.b16 %v5668, %v5666
    %v5783 = vpack.c.b16 %v5671, %v5669
    %v5784 = vpack.c.b16 %v5672, %v5670
    %v5785 = vpack.c.b16 %v5675, %v5673
    %v5786 = vpack.c.b16 %v5676, %v5674
    %v5787 = vpack.c.b16 %v5679, %v5677
    %v5788 = vpack.c.b16 %v5680, %v5678
    %v5789 = vpack.c.b16 %v5683, %v5681
    %v5790 = vpack.c.b16 %v5684, %v5682
    %v5791 = vpack.c.b16 %v5687, %v5685
    %v5792 = vpack.c.b16 %v5688, %v5686
    %v5793 = vpack.c.b16 %v5691, %v5689
    %v5794 = vpack.c.b16 %v5692, %v5690
    %v5795 = vpack.c.b16 %v5695, %v5693
    %v5796 = vpack.c.b16 %v5696, %v5694
    %v5797 = vpack.c.b16 %v5699, %v5697
    %v5798 = vpack.c.b16 %v5700, %v5698
    %v5799 = vpack.c.b16 %v5703, %v5701
    %v5800 = vpack.c.b16 %v5704, %v5702
    %5897 = vmatpush.bf16.msra.mxu0 %v5719
    %5898 = vmatpush.bf16.msra.mxu0 %v5717
    %5899 = vmatpush.bf16.msra.mxu0 %v5715
    %5900 = vmatpush.bf16.msra.mxu0 %v5713
    %5901 = vmatpush.bf16.msra.mxu0 %v5711
    %5902 = vmatpush.bf16.msra.mxu0 %v5709
    %5903 = vmatpush.bf16.msra.mxu0 %v5707
    %5904 = vmatpush.bf16.msra.mxu0 %v5705
    %5905 = vmatmul.bf16.gmra.mxu0 %v5309
    %v5906 = vpop.f32.mrf.mxu0
    %v5907 = vadd.f32 %v5413, %v5906
    %v5908 = vpop.f32.mrf.mxu0
    %5909 = vdwg.mxu0
    %5910 = vmatpush.bf16.msra.mxu0 %v5735
    %5911 = vmatpush.bf16.msra.mxu0 %v5733
    %5912 = vmatpush.bf16.msra.mxu0 %v5731
    %5913 = vmatpush.bf16.msra.mxu0 %v5729
    %5914 = vmatpush.bf16.msra.mxu0 %v5727
    %5915 = vmatpush.bf16.msra.mxu0 %v5725
    %5916 = vmatpush.bf16.msra.mxu0 %v5723
    %5917 = vmatpush.bf16.msra.mxu0 %v5721
    %5918 = vmatmul.bf16.gmra.mxu0 %v5310
    %v5919 = vpop.f32.mrf.mxu0
    %v5920 = vadd.f32 %v5907, %v5919
    %v5921 = vpop.f32.mrf.mxu0
    %5922 = vdwg.mxu0
    %5923 = vmatpush.bf16.msra.mxu0 %v5751
    %5924 = vmatpush.bf16.msra.mxu0 %v5749
    %5925 = vmatpush.bf16.msra.mxu0 %v5747
    %5926 = vmatpush.bf16.msra.mxu0 %v5745
    %5927 = vmatpush.bf16.msra.mxu0 %v5743
    %5928 = vmatpush.bf16.msra.mxu0 %v5741
    %5929 = vmatpush.bf16.msra.mxu0 %v5739
    %5930 = vmatpush.bf16.msra.mxu0 %v5737
    %5931 = vmatmul.bf16.gmra.mxu0 %v5311
    %v5932 = vpop.f32.mrf.mxu0
    %v5933 = vadd.f32 %v5920, %v5932
    %v5934 = vpop.f32.mrf.mxu0
    %5935 = vdwg.mxu0
    %5936 = vmatpush.bf16.msra.mxu0 %v5767
    %5937 = vmatpush.bf16.msra.mxu0 %v5765
    %5938 = vmatpush.bf16.msra.mxu0 %v5763
    %5939 = vmatpush.bf16.msra.mxu0 %v5761
    %5940 = vmatpush.bf16.msra.mxu0 %v5759
    %5941 = vmatpush.bf16.msra.mxu0 %v5757
    %5942 = vmatpush.bf16.msra.mxu0 %v5755
    %5943 = vmatpush.bf16.msra.mxu0 %v5753
    %5944 = vmatmul.bf16.gmra.mxu0 %v5312
    %v5945 = vpop.f32.mrf.mxu0
    %v5946 = vadd.f32 %v5933, %v5945
    %v5947 = vpop.f32.mrf.mxu0
    %5948 = vdwg.mxu0
    %5949 = vmatpush.bf16.msra.mxu0 %v5783
    %5950 = vmatpush.bf16.msra.mxu0 %v5781
    %5951 = vmatpush.bf16.msra.mxu0 %v5779
    %5952 = vmatpush.bf16.msra.mxu0 %v5777
    %5953 = vmatpush.bf16.msra.mxu0 %v5775
    %5954 = vmatpush.bf16.msra.mxu0 %v5773
    %5955 = vmatpush.bf16.msra.mxu0 %v5771
    %5956 = vmatpush.bf16.msra.mxu0 %v5769
    %5957 = vmatmul.bf16.gmra.mxu0 %v5313
    %v5958 = vpop.f32.mrf.mxu0
    %v5959 = vadd.f32 %v5946, %v5958
    %v5960 = vpop.f32.mrf.mxu0
    %5961 = vdwg.mxu0
    %5962 = vmatpush.bf16.msra.mxu0 %v5799
    %5963 = vmatpush.bf16.msra.mxu0 %v5797
    %5964 = vmatpush.bf16.msra.mxu0 %v5795
    %5965 = vmatpush.bf16.msra.mxu0 %v5793
    %5966 = vmatpush.bf16.msra.mxu0 %v5791
    %5967 = vmatpush.bf16.msra.mxu0 %v5789
    %5968 = vmatpush.bf16.msra.mxu0 %v5787
    %5969 = vmatpush.bf16.msra.mxu0 %v5785
    %5970 = vmatmul.bf16.gmra.mxu0 %v5314
    %v5971 = vpop.f32.mrf.mxu0
    %v5972 = vadd.f32 %v5959, %v5971
    %v5973 = vpop.f32.mrf.mxu0
    %5974 = vdwg.mxu0
    %5975 = vmatpush.bf16.msra.mxu0 %v5720
    %5976 = vmatpush.bf16.msra.mxu0 %v5718
    %5977 = vmatpush.bf16.msra.mxu0 %v5716
    %5978 = vmatpush.bf16.msra.mxu0 %v5714
    %5979 = vmatpush.bf16.msra.mxu0 %v5712
    %5980 = vmatpush.bf16.msra.mxu0 %v5710
    %5981 = vmatpush.bf16.msra.mxu0 %v5708
    %5982 = vmatpush.bf16.msra.mxu0 %v5706
    %5983 = vmatmul.bf16.gmra.mxu0 %v5309
    %v5984 = vpop.f32.mrf.mxu0
    %v5985 = vadd.f32 %v5414, %v5984
    %v5986 = vpop.f32.mrf.mxu0
    %5987 = vdwg.mxu0
    %5988 = vmatpush.bf16.msra.mxu0 %v5736
    %5989 = vmatpush.bf16.msra.mxu0 %v5734
    %5990 = vmatpush.bf16.msra.mxu0 %v5732
    %5991 = vmatpush.bf16.msra.mxu0 %v5730
    %5992 = vmatpush.bf16.msra.mxu0 %v5728
    %5993 = vmatpush.bf16.msra.mxu0 %v5726
    %5994 = vmatpush.bf16.msra.mxu0 %v5724
    %5995 = vmatpush.bf16.msra.mxu0 %v5722
    %5996 = vmatmul.bf16.gmra.mxu0 %v5310
    %v5997 = vpop.f32.mrf.mxu0
    %v5998 = vadd.f32 %v5985, %v5997
    %v5999 = vpop.f32.mrf.mxu0
    %6000 = vdwg.mxu0
    %6001 = vmatpush.bf16.msra.mxu0 %v5752
    %6002 = vmatpush.bf16.msra.mxu0 %v5750
    %6003 = vmatpush.bf16.msra.mxu0 %v5748
    %6004 = vmatpush.bf16.msra.mxu0 %v5746
    %6005 = vmatpush.bf16.msra.mxu0 %v5744
    %6006 = vmatpush.bf16.msra.mxu0 %v5742
    %6007 = vmatpush.bf16.msra.mxu0 %v5740
    %6008 = vmatpush.bf16.msra.mxu0 %v5738
    %6009 = vmatmul.bf16.gmra.mxu0 %v5311
    %v6010 = vpop.f32.mrf.mxu0
    %v6011 = vadd.f32 %v5998, %v6010
    %v6012 = vpop.f32.mrf.mxu0
    %6013 = vdwg.mxu0
    %6014 = vmatpush.bf16.msra.mxu0 %v5768
    %6015 = vmatpush.bf16.msra.mxu0 %v5766
    %6016 = vmatpush.bf16.msra.mxu0 %v5764
    %6017 = vmatpush.bf16.msra.mxu0 %v5762
    %6018 = vmatpush.bf16.msra.mxu0 %v5760
    %6019 = vmatpush.bf16.msra.mxu0 %v5758
    %6020 = vmatpush.bf16.msra.mxu0 %v5756
    %6021 = vmatpush.bf16.msra.mxu0 %v5754
    %6022 = vmatmul.bf16.gmra.mxu0 %v5312
    %v6023 = vpop.f32.mrf.mxu0
    %v6024 = vadd.f32 %v6011, %v6023
    %v6025 = vpop.f32.mrf.mxu0
    %6026 = vdwg.mxu0
    %6027 = vmatpush.bf16.msra.mxu0 %v5784
    %6028 = vmatpush.bf16.msra.mxu0 %v5782
    %6029 = vmatpush.bf16.msra.mxu0 %v5780
    %6030 = vmatpush.bf16.msra.mxu0 %v5778
    %6031 = vmatpush.bf16.msra.mxu0 %v5776
    %6032 = vmatpush.bf16.msra.mxu0 %v5774
    %6033 = vmatpush.bf16.msra.mxu0 %v5772
    %6034 = vmatpush.bf16.msra.mxu0 %v5770
    %6035 = vmatmul.bf16.gmra.mxu0 %v5313
    %v6036 = vpop.f32.mrf.mxu0
    %v6037 = vadd.f32 %v6024, %v6036
    %v6038 = vpop.f32.mrf.mxu0
    %6039 = vdwg.mxu0
    %6040 = vmatpush.bf16.msra.mxu0 %v5800
    %6041 = vmatpush.bf16.msra.mxu0 %v5798
    %6042 = vmatpush.bf16.msra.mxu0 %v5796
    %6043 = vmatpush.bf16.msra.mxu0 %v5794
    %6044 = vmatpush.bf16.msra.mxu0 %v5792
    %6045 = vmatpush.bf16.msra.mxu0 %v5790
    %6046 = vmatpush.bf16.msra.mxu0 %v5788
    %6047 = vmatpush.bf16.msra.mxu0 %v5786
    %6048 = vmatmul.bf16.gmra.mxu0 %v5314
    %v6049 = vpop.f32.mrf.mxu0
    %v6050 = vadd.f32 %v6037, %v6049
    %v6051 = vpop.f32.mrf.mxu0
    %6052 = vdwg.mxu0
    %6053 = vst [vmem:[#allocation3] sm:$0xff] %v5972
    %6054 = vst.msk [vmem:[#allocation3 + $0x8] sm:$0xff] %vm198, %v6050
    %v6055 = vld [vmem:[#allocation2] sm:$0xff]
    %v6056 = vld [vmem:[#allocation2 + $0x8] sm:$0xff]
    %v6057 = vpack.c.bf16 %v6055, %v6055
    %v6058 = vpack.c.bf16 %v6056, %v6056
    %v6059 = vld [vmem:[%s6] sm:$0xff]
    %v6060 = vld [vmem:[%s6 + $0x8] sm:$0xff]
    %v6061 = vld [vmem:[%s6 + $0x10] sm:$0xff]
    %v6062 = vld [vmem:[%s6 + $0x18] sm:$0xff]
    %v6063 = vld [vmem:[%s6 + $0x20] sm:$0xff]
    %v6064 = vld [vmem:[%s6 + $0x28] sm:$0xff]
    %v6065 = vld [vmem:[%s6 + $0x30] sm:$0xff]
    %v6066 = vld [vmem:[%s6 + $0x38] sm:$0xff]
    %v6067 = vld [vmem:[%s6 + $0x40] sm:$0xff]
    %v6068 = vld [vmem:[%s6 + $0x48] sm:$0xff]
    %v6069 = vld [vmem:[%s6 + $0x50] sm:$0xff]
    %v6070 = vld [vmem:[%s6 + $0x58] sm:$0xff]
    %v6071 = vld [vmem:[%s6 + $0x60] sm:$0xff]
    %v6072 = vld [vmem:[%s6 + $0x68] sm:$0xff]
    %v6073 = vld [vmem:[%s6 + $0x70] sm:$0xff]
    %v6074 = vld [vmem:[%s6 + $0x78] sm:$0xff]
    %v6075 = vld [vmem:[%s6 + $0x80] sm:$0xff]
    %v6076 = vld [vmem:[%s6 + $0x88] sm:$0xff]
    %v6077 = vld [vmem:[%s6 + $0x90] sm:$0xff]
    %v6078 = vld [vmem:[%s6 + $0x98] sm:$0xff]
    %v6079 = vld [vmem:[%s6 + $0xa0] sm:$0xff]
    %v6080 = vld [vmem:[%s6 + $0xa8] sm:$0xff]
    %v6081 = vld [vmem:[%s6 + $0xb0] sm:$0xff]
    %v6082 = vld [vmem:[%s6 + $0xb8] sm:$0xff]
    %v6083 = vld [vmem:[#allocation9] sm:$0x3]
    %v6085 = vperm.slane %v6083, 0
    %v6086 = vperm.slane %v6083, 1
    %v6113 = vunpack.c.l.b16 %v6059
    %v6114 = vunpack.c.h.b16 %v6059
    %v6115 = vunpack.c.l.b16 %v6060
    %v6116 = vunpack.c.h.b16 %v6060
    %v6117 = vunpack.c.l.b16 %v6061
    %v6118 = vunpack.c.h.b16 %v6061
    %v6119 = vunpack.c.l.b16 %v6062
    %v6120 = vunpack.c.h.b16 %v6062
    %v6121 = vunpack.c.l.b16 %v6063
    %v6122 = vunpack.c.h.b16 %v6063
    %v6123 = vunpack.c.l.b16 %v6064
    %v6124 = vunpack.c.h.b16 %v6064
    %v6125 = vunpack.c.l.b16 %v6065
    %v6126 = vunpack.c.h.b16 %v6065
    %v6127 = vunpack.c.l.b16 %v6066
    %v6128 = vunpack.c.h.b16 %v6066
    %v6129 = vunpack.c.l.b16 %v6067
    %v6130 = vunpack.c.h.b16 %v6067
    %v6131 = vunpack.c.l.b16 %v6068
    %v6132 = vunpack.c.h.b16 %v6068
    %v6133 = vunpack.c.l.b16 %v6069
    %v6134 = vunpack.c.h.b16 %v6069
    %v6135 = vunpack.c.l.b16 %v6070
    %v6136 = vunpack.c.h.b16 %v6070
    %v6137 = vunpack.c.l.b16 %v6071
    %v6138 = vunpack.c.h.b16 %v6071
    %v6139 = vunpack.c.l.b16 %v6072
    %v6140 = vunpack.c.h.b16 %v6072
    %v6141 = vunpack.c.l.b16 %v6073
    %v6142 = vunpack.c.h.b16 %v6073
    %v6143 = vunpack.c.l.b16 %v6074
    %v6144 = vunpack.c.h.b16 %v6074
    %v6145 = vunpack.c.l.b16 %v6075
    %v6146 = vunpack.c.h.b16 %v6075
    %v6147 = vunpack.c.l.b16 %v6076
    %v6148 = vunpack.c.h.b16 %v6076
    %v6149 = vunpack.c.l.b16 %v6077
    %v6150 = vunpack.c.h.b16 %v6077
    %v6151 = vunpack.c.l.b16 %v6078
    %v6152 = vunpack.c.h.b16 %v6078
    %v6153 = vunpack.c.l.b16 %v6079
    %v6154 = vunpack.c.h.b16 %v6079
    %v6155 = vunpack.c.l.b16 %v6080
    %v6156 = vunpack.c.h.b16 %v6080
    %v6157 = vunpack.c.l.b16 %v6081
    %v6158 = vunpack.c.h.b16 %v6081
    %v6159 = vunpack.c.l.b16 %v6082
    %v6160 = vunpack.c.h.b16 %v6082
    %v6161 = vpack.c.b16 %v6115, %v6113
    %v6162 = vpack.c.b16 %v6116, %v6114
    %v6163 = vpack.c.b16 %v6119, %v6117
    %v6164 = vpack.c.b16 %v6120, %v6118
    %v6165 = vpack.c.b16 %v6123, %v6121
    %v6166 = vpack.c.b16 %v6124, %v6122
    %v6167 = vpack.c.b16 %v6127, %v6125
    %v6168 = vpack.c.b16 %v6128, %v6126
    %v6169 = vpack.c.b16 %v6131, %v6129
    %v6170 = vpack.c.b16 %v6132, %v6130
    %v6171 = vpack.c.b16 %v6135, %v6133
    %v6172 = vpack.c.b16 %v6136, %v6134
    %v6173 = vpack.c.b16 %v6139, %v6137
    %v6174 = vpack.c.b16 %v6140, %v6138
    %v6175 = vpack.c.b16 %v6143, %v6141
    %v6176 = vpack.c.b16 %v6144, %v6142
    %v6177 = vpack.c.b16 %v6147, %v6145
    %v6178 = vpack.c.b16 %v6148, %v6146
    %v6179 = vpack.c.b16 %v6151, %v6149
    %v6180 = vpack.c.b16 %v6152, %v6150
    %v6181 = vpack.c.b16 %v6155, %v6153
    %v6182 = vpack.c.b16 %v6156, %v6154
    %v6183 = vpack.c.b16 %v6159, %v6157
    %v6184 = vpack.c.b16 %v6160, %v6158
    %v6210 = vsel %vm198, %v6058, 0
    %6212 = vmatpush.bf16.msra.mxu0 %v6175
    %6213 = vmatpush.bf16.msra.mxu0 %v6173
    %6214 = vmatpush.bf16.msra.mxu0 %v6171
    %6215 = vmatpush.bf16.msra.mxu0 %v6169
    %6216 = vmatpush.bf16.msra.mxu0 %v6167
    %6217 = vmatpush.bf16.msra.mxu0 %v6165
    %6218 = vmatpush.bf16.msra.mxu0 %v6163
    %6219 = vmatpush.bf16.msra.mxu0 %v6161
    %6220 = vmatmul.bf16.gmra.mxu0 %v6057
    %v6221 = vpop.f32.mrf.mxu0
    %v6222 = vadd.f32 %v6085, %v6221
    %v6223 = vpop.f32.mrf.mxu0
    %6224 = vdwg.mxu0
    %6225 = vmatpush.bf16.msra.mxu0 0
    %6226 = vmatpush.bf16.msra.mxu0 0
    %6227 = vmatpush.bf16.msra.mxu0 0
    %6228 = vmatpush.bf16.msra.mxu0 0
    %6229 = vmatpush.bf16.msra.mxu0 %v6183
    %6230 = vmatpush.bf16.msra.mxu0 %v6181
    %6231 = vmatpush.bf16.msra.mxu0 %v6179
    %6232 = vmatpush.bf16.msra.mxu0 %v6177
    %6233 = vmatmul.bf16.gmra.mxu0 %v6210
    %v6234 = vpop.f32.mrf.mxu0
    %v6235 = vadd.f32 %v6222, %v6234
    %v6236 = vpop.f32.mrf.mxu0
    %6237 = vdwg.mxu0
    %6238 = vmatpush.bf16.msra.mxu0 %v6176
    %6239 = vmatpush.bf16.msra.mxu0 %v6174
    %6240 = vmatpush.bf16.msra.mxu0 %v6172
    %6241 = vmatpush.bf16.msra.mxu0 %v6170
    %6242 = vmatpush.bf16.msra.mxu0 %v6168
    %6243 = vmatpush.bf16.msra.mxu0 %v6166
    %6244 = vmatpush.bf16.msra.mxu0 %v6164
    %6245 = vmatpush.bf16.msra.mxu0 %v6162
    %6246 = vmatmul.bf16.gmra.mxu0 %v6057
    %v6247 = vpop.f32.mrf.mxu0
    %v6248 = vadd.f32 %v6086, %v6247
    %v6249 = vpop.f32.mrf.mxu0
    %6250 = vdwg.mxu0
    %6251 = vmatpush.bf16.msra.mxu0 0
    %6252 = vmatpush.bf16.msra.mxu0 0
    %6253 = vmatpush.bf16.msra.mxu0 0
    %6254 = vmatpush.bf16.msra.mxu0 0
    %6255 = vmatpush.bf16.msra.mxu0 %v6184
    %6256 = vmatpush.bf16.msra.mxu0 %v6182
    %6257 = vmatpush.bf16.msra.mxu0 %v6180
    %6258 = vmatpush.bf16.msra.mxu0 %v6178
    %6259 = vmatmul.bf16.gmra.mxu0 %v6210
    %v6260 = vpop.f32.mrf.mxu0
    %v6261 = vadd.f32 %v6248, %v6260
    %v6262 = vpop.f32.mrf.mxu0
    %6263 = vdwg.mxu0
    %6264 = vst [vmem:[#allocation4] sm:$0xff] %v6235
    %6265 = vst.msk [vmem:[#allocation4 + $0x8] sm:$0xff] %vm198, %v6261
    %v6266 = vld [vmem:[#allocation3] sm:$0xff]
    %v6267 = vld [vmem:[#allocation3 + $0x8] sm:$0xff]
    %v6268 = vpack.c.bf16 %v6266, %v6266
    %v6269 = vpack.c.bf16 %v6267, %v6267
    %v6270 = vld [vmem:[#allocation11] sm:$0xff]
    %v6271 = vld [vmem:[#allocation11 + $0x8] sm:$0xf]
    %v6272 = vld [vmem:[#allocation11 + $0xc] sm:$0xff]
    %v6273 = vld [vmem:[#allocation11 + $0x14] sm:$0xf]
    %v6274 = vld [vmem:[#allocation11 + $0x18] sm:$0xff]
    %v6275 = vld [vmem:[#allocation11 + $0x20] sm:$0xf]
    %v6276 = vld [vmem:[#allocation11 + $0x24] sm:$0xff]
    %v6277 = vld [vmem:[#allocation11 + $0x2c] sm:$0xf]
    %v6278 = vld [vmem:[#allocation11 + $0x30] sm:$0xff]
    %v6279 = vld [vmem:[#allocation11 + $0x38] sm:$0xf]
    %v6280 = vld [vmem:[#allocation11 + $0x3c] sm:$0xff]
    %v6281 = vld [vmem:[#allocation11 + $0x44] sm:$0xf]
    %v6282 = vld [vmem:[#allocation11 + $0x48] sm:$0xff]
    %v6283 = vld [vmem:[#allocation11 + $0x50] sm:$0xf]
    %v6284 = vld [vmem:[#allocation11 + $0x54] sm:$0xff]
    %v6285 = vld [vmem:[#allocation11 + $0x5c] sm:$0xf]
    %v6286 = vld [vmem:[#allocation11 + $0x60] sm:$0xff]
    %v6287 = vld [vmem:[#allocation11 + $0x68] sm:$0xf]
    %v6288 = vld [vmem:[#allocation11 + $0x6c] sm:$0xff]
    %v6289 = vld [vmem:[#allocation11 + $0x74] sm:$0xf]
    %v6290 = vld [vmem:[#allocation11 + $0x78] sm:$0xff]
    %v6291 = vld [vmem:[#allocation11 + $0x80] sm:$0xf]
    %v6292 = vld [vmem:[#allocation11 + $0x84] sm:$0xff]
    %v6293 = vld [vmem:[#allocation11 + $0x8c] sm:$0xf]
    %v6294 = vld [vmem:[#allocation11 + $0x90] sm:$0xff]
    %v6295 = vld [vmem:[#allocation11 + $0x98] sm:$0xf]
    %v6296 = vld [vmem:[#allocation11 + $0x9c] sm:$0xff]
    %v6297 = vld [vmem:[#allocation11 + $0xa4] sm:$0xf]
    %v6298 = vld [vmem:[#allocation11 + $0xa8] sm:$0xff]
    %v6299 = vld [vmem:[#allocation11 + $0xb0] sm:$0xf]
    %v6300 = vld [vmem:[#allocation11 + $0xb4] sm:$0xff]
    %v6301 = vld [vmem:[#allocation11 + $0xbc] sm:$0xf]
    %v6302 = vld [vmem:[#allocation11 + $0xc0] sm:$0xff]
    %v6303 = vld [vmem:[#allocation11 + $0xc8] sm:$0xf]
    %v6304 = vld [vmem:[#allocation11 + $0xcc] sm:$0xff]
    %v6305 = vld [vmem:[#allocation11 + $0xd4] sm:$0xf]
    %v6306 = vld [vmem:[#allocation11 + $0xd8] sm:$0xff]
    %v6307 = vld [vmem:[#allocation11 + $0xe0] sm:$0xf]
    %v6308 = vld [vmem:[#allocation11 + $0xe4] sm:$0xff]
    %v6309 = vld [vmem:[#allocation11 + $0xec] sm:$0xf]
    %v6310 = vld [vmem:[#allocation11 + $0xf0] sm:$0xff]
    %v6311 = vld [vmem:[#allocation11 + $0xf8] sm:$0xf]
    %v6312 = vld [vmem:[#allocation11 + $0xfc] sm:$0xff]
    %v6313 = vld [vmem:[#allocation11 + $0x104] sm:$0xf]
    %v6314 = vld [vmem:[#allocation11 + $0x108] sm:$0xff]
    %v6315 = vld [vmem:[#allocation11 + $0x110] sm:$0xf]
    %v6316 = vld [vmem:[#allocation11 + $0x114] sm:$0xff]
    %v6317 = vld [vmem:[#allocation11 + $0x11c] sm:$0xf]
    %v6318 = vld [vmem:[#allocation12] sm:$0x7]
    %v6320 = vperm.slane %v6318, 0
    %v6321 = vperm.slane %v6318, 1
    %v6322 = vperm.slane %v6318, 2
    %v6374 = vunpack.c.l.b16 %v6270
    %v6375 = vunpack.c.h.b16 %v6270
    %v6376 = vunpack.c.l.b16 %v6271
    %v6377 = vunpack.c.l.b16 %v6272
    %v6378 = vunpack.c.h.b16 %v6272
    %v6379 = vunpack.c.l.b16 %v6273
    %v6380 = vunpack.c.l.b16 %v6274
    %v6381 = vunpack.c.h.b16 %v6274
    %v6382 = vunpack.c.l.b16 %v6275
    %v6383 = vunpack.c.l.b16 %v6276
    %v6384 = vunpack.c.h.b16 %v6276
    %v6385 = vunpack.c.l.b16 %v6277
    %v6386 = vunpack.c.l.b16 %v6278
    %v6387 = vunpack.c.h.b16 %v6278
    %v6388 = vunpack.c.l.b16 %v6279
    %v6389 = vunpack.c.l.b16 %v6280
    %v6390 = vunpack.c.h.b16 %v6280
    %v6391 = vunpack.c.l.b16 %v6281
    %v6392 = vunpack.c.l.b16 %v6282
    %v6393 = vunpack.c.h.b16 %v6282
    %v6394 = vunpack.c.l.b16 %v6283
    %v6395 = vunpack.c.l.b16 %v6284
    %v6396 = vunpack.c.h.b16 %v6284
    %v6397 = vunpack.c.l.b16 %v6285
    %v6398 = vunpack.c.l.b16 %v6286
    %v6399 = vunpack.c.h.b16 %v6286
    %v6400 = vunpack.c.l.b16 %v6287
    %v6401 = vunpack.c.l.b16 %v6288
    %v6402 = vunpack.c.h.b16 %v6288
    %v6403 = vunpack.c.l.b16 %v6289
    %v6404 = vunpack.c.l.b16 %v6290
    %v6405 = vunpack.c.h.b16 %v6290
    %v6406 = vunpack.c.l.b16 %v6291
    %v6407 = vunpack.c.l.b16 %v6292
    %v6408 = vunpack.c.h.b16 %v6292
    %v6409 = vunpack.c.l.b16 %v6293
    %v6410 = vunpack.c.l.b16 %v6294
    %v6411 = vunpack.c.h.b16 %v6294
    %v6412 = vunpack.c.l.b16 %v6295
    %v6413 = vunpack.c.l.b16 %v6296
    %v6414 = vunpack.c.h.b16 %v6296
    %v6415 = vunpack.c.l.b16 %v6297
    %v6416 = vunpack.c.l.b16 %v6298
    %v6417 = vunpack.c.h.b16 %v6298
    %v6418 = vunpack.c.l.b16 %v6299
    %v6419 = vunpack.c.l.b16 %v6300
    %v6420 = vunpack.c.h.b16 %v6300
    %v6421 = vunpack.c.l.b16 %v6301
    %v6422 = vunpack.c.l.b16 %v6302
    %v6423 = vunpack.c.h.b16 %v6302
    %v6424 = vunpack.c.l.b16 %v6303
    %v6425 = vunpack.c.l.b16 %v6304
    %v6426 = vunpack.c.h.b16 %v6304
    %v6427 = vunpack.c.l.b16 %v6305
    %v6428 = vunpack.c.l.b16 %v6306
    %v6429 = vunpack.c.h.b16 %v6306
    %v6430 = vunpack.c.l.b16 %v6307
    %v6431 = vunpack.c.l.b16 %v6308
    %v6432 = vunpack.c.h.b16 %v6308
    %v6433 = vunpack.c.l.b16 %v6309
    %v6434 = vunpack.c.l.b16 %v6310
    %v6435 = vunpack.c.h.b16 %v6310
    %v6436 = vunpack.c.l.b16 %v6311
    %v6437 = vunpack.c.l.b16 %v6312
    %v6438 = vunpack.c.h.b16 %v6312
    %v6439 = vunpack.c.l.b16 %v6313
    %v6440 = vunpack.c.l.b16 %v6314
    %v6441 = vunpack.c.h.b16 %v6314
    %v6442 = vunpack.c.l.b16 %v6315
    %v6443 = vunpack.c.l.b16 %v6316
    %v6444 = vunpack.c.h.b16 %v6316
    %v6445 = vunpack.c.l.b16 %v6317
    %v6446 = vpack.c.b16 %v6377, %v6374
    %v6447 = vpack.c.b16 %v6378, %v6375
    %v6448 = vpack.c.b16 %v6379, %v6376
    %v6449 = vpack.c.b16 %v6383, %v6380
    %v6450 = vpack.c.b16 %v6384, %v6381
    %v6451 = vpack.c.b16 %v6385, %v6382
    %v6452 = vpack.c.b16 %v6389, %v6386
    %v6453 = vpack.c.b16 %v6390, %v6387
    %v6454 = vpack.c.b16 %v6391, %v6388
    %v6455 = vpack.c.b16 %v6395, %v6392
    %v6456 = vpack.c.b16 %v6396, %v6393
    %v6457 = vpack.c.b16 %v6397, %v6394
    %v6458 = vpack.c.b16 %v6401, %v6398
    %v6459 = vpack.c.b16 %v6402, %v6399
    %v6460 = vpack.c.b16 %v6403, %v6400
    %v6461 = vpack.c.b16 %v6407, %v6404
    %v6462 = vpack.c.b16 %v6408, %v6405
    %v6463 = vpack.c.b16 %v6409, %v6406
    %v6464 = vpack.c.b16 %v6413, %v6410
    %v6465 = vpack.c.b16 %v6414, %v6411
    %v6466 = vpack.c.b16 %v6415, %v6412
    %v6467 = vpack.c.b16 %v6419, %v6416
    %v6468 = vpack.c.b16 %v6420, %v6417
    %v6469 = vpack.c.b16 %v6421, %v6418
    %v6470 = vpack.c.b16 %v6425, %v6422
    %v6471 = vpack.c.b16 %v6426, %v6423
    %v6472 = vpack.c.b16 %v6427, %v6424
    %v6473 = vpack.c.b16 %v6431, %v6428
    %v6474 = vpack.c.b16 %v6432, %v6429
    %v6475 = vpack.c.b16 %v6433, %v6430
    %v6476 = vpack.c.b16 %v6437, %v6434
    %v6477 = vpack.c.b16 %v6438, %v6435
    %v6478 = vpack.c.b16 %v6439, %v6436
    %v6479 = vpack.c.b16 %v6443, %v6440
    %v6480 = vpack.c.b16 %v6444, %v6441
    %v6481 = vpack.c.b16 %v6445, %v6442
    %v6519 = vsel %vm198, %v6269, 0
    %6521 = vmatpush.bf16.msra.mxu0 %v6467
    %6522 = vmatpush.bf16.msra.mxu0 %v6464
    %6523 = vmatpush.bf16.msra.mxu0 %v6461
    %6524 = vmatpush.bf16.msra.mxu0 %v6458
    %6525 = vmatpush.bf16.msra.mxu0 %v6455
    %6526 = vmatpush.bf16.msra.mxu0 %v6452
    %6527 = vmatpush.bf16.msra.mxu0 %v6449
    %6528 = vmatpush.bf16.msra.mxu0 %v6446
    %6529 = vmatmul.bf16.gmra.mxu0 %v6268
    %v6530 = vpop.f32.mrf.mxu0
    %v6531 = vadd.f32 %v6320, %v6530
    %v6532 = vpop.f32.mrf.mxu0
    %6533 = vdwg.mxu0
    %6534 = vmatpush.bf16.msra.mxu0 0
    %6535 = vmatpush.bf16.msra.mxu0 0
    %6536 = vmatpush.bf16.msra.mxu0 0
    %6537 = vmatpush.bf16.msra.mxu0 0
    %6538 = vmatpush.bf16.msra.mxu0 %v6479
    %6539 = vmatpush.bf16.msra.mxu0 %v6476
    %6540 = vmatpush.bf16.msra.mxu0 %v6473
    %6541 = vmatpush.bf16.msra.mxu0 %v6470
    %6542 = vmatmul.bf16.gmra.mxu0 %v6519
    %v6543 = vpop.f32.mrf.mxu0
    %v6544 = vadd.f32 %v6531, %v6543
    %v6545 = vpop.f32.mrf.mxu0
    %6546 = vdwg.mxu0
    %6547 = vmatpush.bf16.msra.mxu0 %v6468
    %6548 = vmatpush.bf16.msra.mxu0 %v6465
    %6549 = vmatpush.bf16.msra.mxu0 %v6462
    %6550 = vmatpush.bf16.msra.mxu0 %v6459
    %6551 = vmatpush.bf16.msra.mxu0 %v6456
    %6552 = vmatpush.bf16.msra.mxu0 %v6453
    %6553 = vmatpush.bf16.msra.mxu0 %v6450
    %6554 = vmatpush.bf16.msra.mxu0 %v6447
    %6555 = vmatmul.bf16.gmra.mxu0 %v6268
    %v6556 = vpop.f32.mrf.mxu0
    %v6557 = vadd.f32 %v6321, %v6556
    %v6558 = vpop.f32.mrf.mxu0
    %6559 = vdwg.mxu0
    %6560 = vmatpush.bf16.msra.mxu0 0
    %6561 = vmatpush.bf16.msra.mxu0 0
    %6562 = vmatpush.bf16.msra.mxu0 0
    %6563 = vmatpush.bf16.msra.mxu0 0
    %6564 = vmatpush.bf16.msra.mxu0 %v6480
    %6565 = vmatpush.bf16.msra.mxu0 %v6477
    %6566 = vmatpush.bf16.msra.mxu0 %v6474
    %6567 = vmatpush.bf16.msra.mxu0 %v6471
    %6568 = vmatmul.bf16.gmra.mxu0 %v6519
    %v6569 = vpop.f32.mrf.mxu0
    %v6570 = vadd.f32 %v6557, %v6569
    %v6571 = vpop.f32.mrf.mxu0
    %6572 = vdwg.mxu0
    %6573 = vmatpush.bf16.msra.mxu0 %v6469
    %6574 = vmatpush.bf16.msra.mxu0 %v6466
    %6575 = vmatpush.bf16.msra.mxu0 %v6463
    %6576 = vmatpush.bf16.msra.mxu0 %v6460
    %6577 = vmatpush.bf16.msra.mxu0 %v6457
    %6578 = vmatpush.bf16.msra.mxu0 %v6454
    %6579 = vmatpush.bf16.msra.mxu0 %v6451
    %6580 = vmatpush.bf16.msra.mxu0 %v6448
    %6581 = vmatmul.bf16.gmra.mxu0 %v6268
    %v6582 = vpop.f32.mrf.mxu0
    %v6583 = vadd.f32 %v6322, %v6582
    %v6584 = vpop.f32.mrf.mxu0
    %6585 = vdwg.mxu0
    %6586 = vmatpush.bf16.msra.mxu0 0
    %6587 = vmatpush.bf16.msra.mxu0 0
    %6588 = vmatpush.bf16.msra.mxu0 0
    %6589 = vmatpush.bf16.msra.mxu0 0
    %6590 = vmatpush.bf16.msra.mxu0 %v6481
    %6591 = vmatpush.bf16.msra.mxu0 %v6478
    %6592 = vmatpush.bf16.msra.mxu0 %v6475
    %6593 = vmatpush.bf16.msra.mxu0 %v6472
    %6594 = vmatmul.bf16.gmra.mxu0 %v6519
    %v6595 = vpop.f32.mrf.mxu0
    %v6596 = vadd.f32 %v6583, %v6595
    %v6597 = vpop.f32.mrf.mxu0
    %6598 = vdwg.mxu0
    %6599 = vst [vmem:[#allocation5] sm:$0xff] %v6544
    %6600 = vst [vmem:[#allocation5 + $0x8] sm:$0xff] %v6570
    %6601 = vst [vmem:[#allocation5 + $0x10] sm:$0xff] %v6596
    %v6602 = vld [vmem:[#allocation14] sm:$0x1]
    %v6603 = vld [vmem:[#allocation4] sm:$0xff]
    %v6604 = vld [vmem:[#allocation5] sm:$0xff]
    %v6605 = vmul.f32 %v6603, %v6604
    %v6606 = vsel %vm1515, %v6605, 0.0
    %6607 = vadd.xlane.f32.xlu0 %v6606
    %v6608 = vpop.xlane.xlu0 %6607
    %v6609 = vmul.f32 %v6608, 0.14433756
    %6611 = vrot.lane.b32.xlu0 %v6604, 80
    %v6612 = vpop.permute.xlu0 %6611
    %v6614 = vmul.f32 %v6603, %v6612
    %v6615 = vsel %vm1515, %v6614, 0.0
    %6616 = vadd.xlane.f32.xlu0 %v6615
    %v6617 = vpop.xlane.xlu0 %6616
    %v6618 = vmul.f32 %v6617, 0.14433756
    %v6619 = vld [vmem:[#allocation5 + $0x8] sm:$0xff]
    %6621 = vrot.lane.b32.xlu0 %v6604, 32
    %v6622 = vpop.permute.xlu0 %6621
    %6623 = vrot.lane.b32.xlu0 %v6619, 32
    %v6624 = vpop.permute.xlu0 %6623
    %v6625 = vsel %vm1535, %v6622, %v6624
    %v6627 = vmul.f32 %v6603, %v6625
    %v6628 = vsel %vm1515, %v6627, 0.0
    %6629 = vadd.xlane.f32.xlu0 %v6628
    %v6630 = vpop.xlane.xlu0 %6629
    %v6631 = vmul.f32 %v6630, 0.14433756
    %6632 = vrot.lane.b32.xlu0 %v6619, 112
    %v6633 = vpop.permute.xlu0 %6632
    %v6635 = vmul.f32 %v6603, %v6633
    %v6636 = vsel %vm1515, %v6635, 0.0
    %6637 = vadd.xlane.f32.xlu0 %v6636
    %v6638 = vpop.xlane.xlu0 %6637
    %v6639 = vmul.f32 %v6638, 0.14433756
    %v6640 = vmax.f32 %v6609, %v6618
    %v6641 = vmax.f32 %v6631, %v6639
    %v6642 = vmax.f32 %v6640, %v6641
    %v6643 = vsub.f32 %v6609, %v6642
    %v6644 = vmul.f32 %v6643, 1.442695
    %v6645 = vpow.pop %v6644
    %v6646 = vsub.f32 %v6618, %v6642
    %v6647 = vmul.f32 %v6646, 1.442695
    %v6648 = vpow.pop %v6647
    %v6649 = vsub.f32 %v6631, %v6642
    %v6650 = vmul.f32 %v6649, 1.442695
    %v6651 = vpow.pop %v6650
    %v6652 = vsub.f32 %v6639, %v6642
    %v6653 = vmul.f32 %v6652, 1.442695
    %v6654 = vpow.pop %v6653
    %v6655 = vadd.f32 %v6645, %v6648
    %v6656 = vadd.f32 %v6655, %v6651
    %v6657 = vadd.f32 %v6656, %v6654
    %v6658 = vrcp.pop %v6657
    %v6659 = vmul.f32 %v6645, %v6658
    %v6660 = vmul.f32 %v6659, %v6619
    %v6661 = vmul.f32 %v6648, %v6658
    %v6662 = vld [vmem:[#allocation5 + $0x8] sm:$0xff]
    %v6663 = vld [vmem:[#allocation5 + $0x10] sm:$0xff]
    %v6664 = vmul.f32 %v6661, %v6662
    %v6665 = vmul.f32 %v6661, %v6663
    %6668 = vrot.lane.b32.xlu0 %v6664, 80
    %v6669 = vpop.permute.xlu0 %6668
    %6670 = vrot.lane.b32.xlu0 %v6665, 80
    %v6671 = vpop.permute.xlu0 %6670
    %v6672 = vsel %vm1583, %v6669, %v6671
    %v6674 = vadd.f32 %v6660, %v6672
    %v6675 = vmul.f32 %v6651, %v6658
    %v6676 = vmul.f32 %v6675, %v6663
    %6678 = vrot.lane.b32.xlu0 %v6676, 32
    %v6679 = vpop.permute.xlu0 %6678
    %v6681 = vadd.f32 %v6674, %v6679
    %v6682 = vmul.f32 %v6654, %v6658
    %v6683 = vmul.f32 %v6682, %v6663
    %6685 = vrot.lane.b32.xlu0 %v6683, 112
    %v6686 = vpop.permute.xlu0 %6685
    %v6688 = vadd.f32 %v6681, %v6686
    %v6690 = vperm.slane %v6602, 0
    %6691 = vrot.lane.b32.xlu0 %v6690, 64
    %v6692 = vpop.permute.xlu0 %6691
    %v6694 = vadd.f32 %v6688, %v6692
    %6696 = vrot.lane.b32.xlu0 %v6694, 64
    %v6697 = vpop.permute.xlu0 %6696
    %6699 = vst.msk [vmem:[#allocation6] sm:$0xff] %vm1515, %v6697
    %v6700 = vld [vmem:[#allocation4] sm:$0xff]
    %v6701 = vld [vmem:[#allocation5] sm:$0xff]
    %6703 = vrot.lane.b32.xlu0 %v6701, 48
    %v6704 = vpop.permute.xlu0 %6703
    %v6706 = vmul.f32 %v6700, %v6704
    %6708 = vrot.lane.b32.xlu0 %v6706, 80
    %v6709 = vpop.permute.xlu0 %6708
    %v6711 = vsel %vm1515, %v6709, 0.0
    %6712 = vadd.xlane.f32.xlu0 %v6711
    %v6713 = vpop.xlane.xlu0 %6712
    %v6714 = vmul.f32 %v6713, 0.14433756
    %v6715 = vmul.f32 %v6700, %v6701
    %6717 = vrot.lane.b32.xlu0 %v6715, 80
    %v6718 = vpop.permute.xlu0 %6717
    %v6720 = vsel %vm1515, %v6718, 0.0
    %6721 = vadd.xlane.f32.xlu0 %v6720
    %v6722 = vpop.xlane.xlu0 %6721
    %v6723 = vmul.f32 %v6722, 0.14433756
    %v6724 = vld [vmem:[#allocation5 + $0x8] sm:$0xff]
    %6726 = vrot.lane.b32.xlu0 %v6701, 80
    %v6727 = vpop.permute.xlu0 %6726
    %6728 = vrot.lane.b32.xlu0 %v6724, 80
    %v6729 = vpop.permute.xlu0 %6728
    %v6730 = vsel %vm1583, %v6727, %v6729
    %v6732 = vmul.f32 %v6700, %v6730
    %6734 = vrot.lane.b32.xlu0 %v6732, 80
    %v6735 = vpop.permute.xlu0 %6734
    %v6737 = vsel %vm1515, %v6735, 0.0
    %6738 = vadd.xlane.f32.xlu0 %v6737
    %v6739 = vpop.xlane.xlu0 %6738
    %v6740 = vmul.f32 %v6739, 0.14433756
    %6741 = vrot.lane.b32.xlu0 %v6724, 32
    %v6742 = vpop.permute.xlu0 %6741
    %v6744 = vmul.f32 %v6700, %v6742
    %6746 = vrot.lane.b32.xlu0 %v6744, 80
    %v6747 = vpop.permute.xlu0 %6746
    %v6749 = vsel %vm1515, %v6747, 0.0
    %6750 = vadd.xlane.f32.xlu0 %v6749
    %v6751 = vpop.xlane.xlu0 %6750
    %v6752 = vmul.f32 %v6751, 0.14433756
    %v6753 = vmax.f32 %v6714, %v6723
    %v6754 = vmax.f32 %v6740, %v6752
    %v6755 = vmax.f32 %v6753, %v6754
    %v6756 = vsub.f32 %v6714, %v6755
    %v6757 = vmul.f32 %v6756, 1.442695
    %v6758 = vpow.pop %v6757
    %v6759 = vsub.f32 %v6723, %v6755
    %v6760 = vmul.f32 %v6759, 1.442695
    %v6761 = vpow.pop %v6760
    %v6762 = vsub.f32 %v6740, %v6755
    %v6763 = vmul.f32 %v6762, 1.442695
    %v6764 = vpow.pop %v6763
    %v6765 = vsub.f32 %v6752, %v6755
    %v6766 = vmul.f32 %v6765, 1.442695
    %v6767 = vpow.pop %v6766
    %v6768 = vadd.f32 %v6758, %v6761
    %v6769 = vadd.f32 %v6768, %v6764
    %v6770 = vadd.f32 %v6769, %v6767
    %v6771 = vrcp.pop %v6770
    %v6772 = vmul.f32 %v6758, %v6771
    %v6773 = vmul.f32 %v6772, %v6724
    %v6774 = vmul.f32 %v6761, %v6771
    %v6775 = vld [vmem:[#allocation5 + $0x8] sm:$0xff]
    %v6776 = vld [vmem:[#allocation5 + $0x10] sm:$0xff]
    %v6777 = vmul.f32 %v6774, %v6775
    %v6778 = vmul.f32 %v6774, %v6776
    %6781 = vrot.lane.b32.xlu0 %v6777, 80
    %v6782 = vpop.permute.xlu0 %6781
    %6783 = vrot.lane.b32.xlu0 %v6778, 80
    %v6784 = vpop.permute.xlu0 %6783
    %v6785 = vsel %vm1583, %v6782, %v6784
    %v6787 = vadd.f32 %v6773, %v6785
    %v6788 = vmul.f32 %v6764, %v6771
    %v6789 = vmul.f32 %v6788, %v6776
    %6791 = vrot.lane.b32.xlu0 %v6789, 32
    %v6792 = vpop.permute.xlu0 %6791
    %v6794 = vadd.f32 %v6787, %v6792
    %v6795 = vmul.f32 %v6767, %v6771
    %v6796 = vmul.f32 %v6795, %v6776
    %6798 = vrot.lane.b32.xlu0 %v6796, 112
    %v6799 = vpop.permute.xlu0 %6798
    %v6801 = vadd.f32 %v6794, %v6799
    %v6802 = vadd.f32 %v6801, %v6692
    %6804 = vrot.lane.b32.xlu0 %v6802, 112
    %v6805 = vpop.permute.xlu0 %6804
    %6807 = vst.msk [vmem:[#allocation6] sm:$0xff] %vm1719, %v6805
    %v6808 = vld [vmem:[#allocation4] sm:$0xff]
    %v6809 = vld [vmem:[#allocation4 + $0x8] sm:$0xff]
    %v6810 = vld [vmem:[#allocation5] sm:$0xff]
    %6812 = vrot.lane.b32.xlu0 %v6810, 96
    %v6813 = vpop.permute.xlu0 %6812
    %v6815 = vmul.f32 %v6808, %v6813
    %v6816 = vmul.f32 %v6809, %v6813
    %6819 = vrot.lane.b32.xlu0 %v6815, 32
    %v6820 = vpop.permute.xlu0 %6819
    %6821 = vrot.lane.b32.xlu0 %v6816, 32
    %v6822 = vpop.permute.xlu0 %6821
    %v6823 = vsel %vm1535, %v6820, %v6822
    %v6825 = vsel %vm1515, %v6823, 0.0
    %6826 = vadd.xlane.f32.xlu0 %v6825
    %v6827 = vpop.xlane.xlu0 %6826
    %v6828 = vmul.f32 %v6827, 0.14433756
    %6829 = vrot.lane.b32.xlu0 %v6810, 48
    %v6830 = vpop.permute.xlu0 %6829
    %v6832 = vmul.f32 %v6808, %v6830
    %v6833 = vmul.f32 %v6809, %v6830
    %6836 = vrot.lane.b32.xlu0 %v6832, 32
    %v6837 = vpop.permute.xlu0 %6836
    %6838 = vrot.lane.b32.xlu0 %v6833, 32
    %v6839 = vpop.permute.xlu0 %6838
    %v6840 = vsel %vm1535, %v6837, %v6839
    %v6842 = vsel %vm1515, %v6840, 0.0
    %6843 = vadd.xlane.f32.xlu0 %v6842
    %v6844 = vpop.xlane.xlu0 %6843
    %v6845 = vmul.f32 %v6844, 0.14433756
    %v6846 = vld [vmem:[#allocation5 + $0x8] sm:$0xff]
    %v6847 = vmul.f32 %v6808, %v6810
    %v6848 = vmul.f32 %v6809, %v6846
    %6851 = vrot.lane.b32.xlu0 %v6847, 32
    %v6852 = vpop.permute.xlu0 %6851
    %6853 = vrot.lane.b32.xlu0 %v6848, 32
    %v6854 = vpop.permute.xlu0 %6853
    %v6855 = vsel %vm1535, %v6852, %v6854
    %v6857 = vsel %vm1515, %v6855, 0.0
    %6858 = vadd.xlane.f32.xlu0 %v6857
    %v6859 = vpop.xlane.xlu0 %6858
    %v6860 = vmul.f32 %v6859, 0.14433756
    %6862 = vrot.lane.b32.xlu0 %v6846, 80
    %v6863 = vpop.permute.xlu0 %6862
    %v6865 = vmul.f32 %v6808, %v6863
    %v6866 = vmul.f32 %v6809, %v6863
    %6869 = vrot.lane.b32.xlu0 %v6865, 32
    %v6870 = vpop.permute.xlu0 %6869
    %6871 = vrot.lane.b32.xlu0 %v6866, 32
    %v6872 = vpop.permute.xlu0 %6871
    %v6873 = vsel %vm1535, %v6870, %v6872
    %v6875 = vsel %vm1515, %v6873, 0.0
    %6876 = vadd.xlane.f32.xlu0 %v6875
    %v6877 = vpop.xlane.xlu0 %6876
    %v6878 = vmul.f32 %v6877, 0.14433756
    %v6879 = vmax.f32 %v6828, %v6845
    %v6880 = vmax.f32 %v6860, %v6878
    %v6881 = vmax.f32 %v6879, %v6880
    %v6882 = vsub.f32 %v6828, %v6881
    %v6883 = vmul.f32 %v6882, 1.442695
    %v6884 = vpow.pop %v6883
    %v6885 = vsub.f32 %v6845, %v6881
    %v6886 = vmul.f32 %v6885, 1.442695
    %v6887 = vpow.pop %v6886
    %v6888 = vsub.f32 %v6860, %v6881
    %v6889 = vmul.f32 %v6888, 1.442695
    %v6890 = vpow.pop %v6889
    %v6891 = vsub.f32 %v6878, %v6881
    %v6892 = vmul.f32 %v6891, 1.442695
    %v6893 = vpow.pop %v6892
    %v6894 = vadd.f32 %v6884, %v6887
    %v6895 = vadd.f32 %v6894, %v6890
    %v6896 = vadd.f32 %v6895, %v6893
    %v6897 = vrcp.pop %v6896
    %v6898 = vmul.f32 %v6884, %v6897
    %v6899 = vmul.f32 %v6898, %v6846
    %v6900 = vmul.f32 %v6887, %v6897
    %v6901 = vld [vmem:[#allocation5 + $0x8] sm:$0xff]
    %v6902 = vld [vmem:[#allocation5 + $0x10] sm:$0xff]
    %v6903 = vmul.f32 %v6900, %v6901
    %v6904 = vmul.f32 %v6900, %v6902
    %6907 = vrot.lane.b32.xlu0 %v6903, 80
    %v6908 = vpop.permute.xlu0 %6907
    %6909 = vrot.lane.b32.xlu0 %v6904, 80
    %v6910 = vpop.permute.xlu0 %6909
    %v6911 = vsel %vm1583, %v6908, %v6910
    %v6913 = vadd.f32 %v6899, %v6911
    %v6914 = vmul.f32 %v6890, %v6897
    %v6915 = vmul.f32 %v6914, %v6902
    %6917 = vrot.lane.b32.xlu0 %v6915, 32
    %v6918 = vpop.permute.xlu0 %6917
    %v6920 = vadd.f32 %v6913, %v6918
    %v6921 = vmul.f32 %v6893, %v6897
    %v6922 = vmul.f32 %v6921, %v6902
    %6924 = vrot.lane.b32.xlu0 %v6922, 112
    %v6925 = vpop.permute.xlu0 %6924
    %v6927 = vadd.f32 %v6920, %v6925
    %v6928 = vadd.f32 %v6927, %v6692
    %6930 = vrot.lane.b32.xlu0 %v6928, 32
    %v6931 = vpop.permute.xlu0 %6930
    %6933 = vst.msk [vmem:[#allocation6] sm:$0xff] %vm1846, %v6931
    %6934 = vst.msk [vmem:[#allocation6 + $0x8] sm:$0xff] %vm1848, %v6931
    %v6935 = vld [vmem:[#allocation4 + $0x8] sm:$0xff]
    %v6936 = vld [vmem:[#allocation5] sm:$0xff]
    %6938 = vrot.lane.b32.xlu0 %v6936, 16
    %v6939 = vpop.permute.xlu0 %6938
    %v6941 = vmul.f32 %v6935, %v6939
    %6943 = vrot.lane.b32.xlu0 %v6941, 112
    %v6944 = vpop.permute.xlu0 %6943
    %v6946 = vsel %vm1515, %v6944, 0.0
    %6947 = vadd.xlane.f32.xlu0 %v6946
    %v6948 = vpop.xlane.xlu0 %6947
    %v6949 = vmul.f32 %v6948, 0.14433756
    %6950 = vrot.lane.b32.xlu0 %v6936, 96
    %v6951 = vpop.permute.xlu0 %6950
    %v6953 = vmul.f32 %v6935, %v6951
    %6955 = vrot.lane.b32.xlu0 %v6953, 112
    %v6956 = vpop.permute.xlu0 %6955
    %v6958 = vsel %vm1515, %v6956, 0.0
    %6959 = vadd.xlane.f32.xlu0 %v6958
    %v6960 = vpop.xlane.xlu0 %6959
    %v6961 = vmul.f32 %v6960, 0.14433756
    %v6962 = vld [vmem:[#allocation5 + $0x8] sm:$0xff]
    %6964 = vrot.lane.b32.xlu0 %v6936, 48
    %v6965 = vpop.permute.xlu0 %6964
    %6966 = vrot.lane.b32.xlu0 %v6962, 48
    %v6967 = vpop.permute.xlu0 %6966
    %v6968 = vsel %vm1515, %v6965, %v6967
    %v6970 = vmul.f32 %v6935, %v6968
    %6972 = vrot.lane.b32.xlu0 %v6970, 112
    %v6973 = vpop.permute.xlu0 %6972
    %v6975 = vsel %vm1515, %v6973, 0.0
    %6976 = vadd.xlane.f32.xlu0 %v6975
    %v6977 = vpop.xlane.xlu0 %6976
    %v6978 = vmul.f32 %v6977, 0.14433756
    %v6979 = vmul.f32 %v6935, %v6962
    %6981 = vrot.lane.b32.xlu0 %v6979, 112
    %v6982 = vpop.permute.xlu0 %6981
    %v6984 = vsel %vm1515, %v6982, 0.0
    %6985 = vadd.xlane.f32.xlu0 %v6984
    %v6986 = vpop.xlane.xlu0 %6985
    %v6987 = vmul.f32 %v6986, 0.14433756
    %v6988 = vmax.f32 %v6949, %v6961
    %v6989 = vmax.f32 %v6978, %v6987
    %v6990 = vmax.f32 %v6988, %v6989
    %v6991 = vsub.f32 %v6949, %v6990
    %v6992 = vmul.f32 %v6991, 1.442695
    %v6993 = vpow.pop %v6992
    %v6994 = vsub.f32 %v6961, %v6990
    %v6995 = vmul.f32 %v6994, 1.442695
    %v6996 = vpow.pop %v6995
    %v6997 = vsub.f32 %v6978, %v6990
    %v6998 = vmul.f32 %v6997, 1.442695
    %v6999 = vpow.pop %v6998
    %v7000 = vsub.f32 %v6987, %v6990
    %v7001 = vmul.f32 %v7000, 1.442695
    %v7002 = vpow.pop %v7001
    %v7003 = vadd.f32 %v6993, %v6996
    %v7004 = vadd.f32 %v7003, %v6999
    %v7005 = vadd.f32 %v7004, %v7002
    %v7006 = vrcp.pop %v7005
    %v7007 = vmul.f32 %v6993, %v7006
    %v7008 = vmul.f32 %v7007, %v6962
    %v7009 = vmul.f32 %v6996, %v7006
    %v7010 = vld [vmem:[#allocation5 + $0x8] sm:$0xff]
    %v7011 = vld [vmem:[#allocation5 + $0x10] sm:$0xff]
    %v7012 = vmul.f32 %v7009, %v7010
    %v7013 = vmul.f32 %v7009, %v7011
    %7016 = vrot.lane.b32.xlu0 %v7012, 80
    %v7017 = vpop.permute.xlu0 %7016
    %7018 = vrot.lane.b32.xlu0 %v7013, 80
    %v7019 = vpop.permute.xlu0 %7018
    %v7020 = vsel %vm1583, %v7017, %v7019
    %v7022 = vadd.f32 %v7008, %v7020
    %v7023 = vmul.f32 %v6999, %v7006
    %v7024 = vmul.f32 %v7023, %v7011
    %7026 = vrot.lane.b32.xlu0 %v7024, 32
    %v7027 = vpop.permute.xlu0 %7026
    %v7029 = vadd.f32 %v7022, %v7027
    %v7030 = vmul.f32 %v7002, %v7006
    %v7031 = vmul.f32 %v7030, %v7011
    %7033 = vrot.lane.b32.xlu0 %v7031, 112
    %v7034 = vpop.permute.xlu0 %7033
    %v7036 = vadd.f32 %v7029, %v7034
    %v7037 = vadd.f32 %v7036, %v6692
    %7039 = vrot.lane.b32.xlu0 %v7037, 80
    %v7040 = vpop.permute.xlu0 %7039
    %7042 = vst.msk [vmem:[#allocation6 + $0x8] sm:$0xff] %vm1957, %v7040
    %v7043 = vld [vmem:[#allocation6] sm:$0xff]
    %v7044 = vld [vmem:[#allocation6 + $0x8] sm:$0xff]
    %v7045 = vpack.c.bf16 %v7043, %v7043
    %v7046 = vpack.c.bf16 %v7044, %v7044
    %v7047 = vld [vmem:[%s11] sm:$0xff]
    %v7048 = vld [vmem:[%s11 + $0x8] sm:$0xff]
    %v7049 = vld [vmem:[%s11 + $0x10] sm:$0xff]
    %v7050 = vld [vmem:[%s11 + $0x18] sm:$0xff]
    %v7051 = vld [vmem:[%s11 + $0x20] sm:$0xff]
    %v7052 = vld [vmem:[%s11 + $0x28] sm:$0xff]
    %v7053 = vld [vmem:[%s11 + $0x30] sm:$0xff]
    %v7054 = vld [vmem:[%s11 + $0x38] sm:$0xff]
    %v7055 = vld [vmem:[%s11 + $0x40] sm:$0xff]
    %v7056 = vld [vmem:[%s11 + $0x48] sm:$0xff]
    %v7057 = vld [vmem:[%s11 + $0x50] sm:$0xff]
    %v7058 = vld [vmem:[%s11 + $0x58] sm:$0xff]
    %v7059 = vld [vmem:[%s11 + $0x60] sm:$0xff]
    %v7060 = vld [vmem:[%s11 + $0x68] sm:$0xff]
    %v7061 = vld [vmem:[%s11 + $0x70] sm:$0xff]
    %v7062 = vld [vmem:[%s11 + $0x78] sm:$0xff]
    %v7063 = vld [vmem:[%s11 + $0x80] sm:$0xff]
    %v7064 = vld [vmem:[%s11 + $0x88] sm:$0xff]
    %v7065 = vld [vmem:[%s11 + $0x90] sm:$0xff]
    %v7066 = vld [vmem:[%s11 + $0x98] sm:$0xff]
    %v7067 = vld [vmem:[%s11 + $0xa0] sm:$0xff]
    %v7068 = vld [vmem:[%s11 + $0xa8] sm:$0xff]
    %v7069 = vld [vmem:[%s11 + $0xb0] sm:$0xff]
    %v7070 = vld [vmem:[%s11 + $0xb8] sm:$0xff]
    %v7071 = vld [vmem:[%s11 + $0xc0] sm:$0xff]
    %v7072 = vld [vmem:[%s11 + $0xc8] sm:$0xff]
    %v7073 = vld [vmem:[%s11 + $0xd0] sm:$0xff]
    %v7074 = vld [vmem:[%s11 + $0xd8] sm:$0xff]
    %v7075 = vld [vmem:[%s11 + $0xe0] sm:$0xff]
    %v7076 = vld [vmem:[%s11 + $0xe8] sm:$0xff]
    %v7077 = vld [vmem:[%s11 + $0xf0] sm:$0xff]
    %v7078 = vld [vmem:[%s11 + $0xf8] sm:$0xff]
    %v7079 = vld [vmem:[%s11 + $0x100] sm:$0xff]
    %v7080 = vld [vmem:[%s11 + $0x108] sm:$0xff]
    %v7081 = vld [vmem:[%s11 + $0x110] sm:$0xff]
    %v7082 = vld [vmem:[%s11 + $0x118] sm:$0xff]
    %v7083 = vld [vmem:[%s11 + $0x120] sm:$0xff]
    %v7084 = vld [vmem:[%s11 + $0x128] sm:$0xff]
    %v7085 = vld [vmem:[%s11 + $0x130] sm:$0xff]
    %v7086 = vld [vmem:[%s11 + $0x138] sm:$0xff]
    %v7087 = vld [vmem:[%s11 + $0x140] sm:$0xff]
    %v7088 = vld [vmem:[%s11 + $0x148] sm:$0xff]
    %v7089 = vld [vmem:[%s11 + $0x150] sm:$0xff]
    %v7090 = vld [vmem:[%s11 + $0x158] sm:$0xff]
    %v7091 = vld [vmem:[%s11 + $0x160] sm:$0xff]
    %v7092 = vld [vmem:[%s11 + $0x168] sm:$0xff]
    %v7093 = vld [vmem:[%s11 + $0x170] sm:$0xff]
    %v7094 = vld [vmem:[%s11 + $0x178] sm:$0xff]
    %v7095 = vld [vmem:[%s11 + $0x180] sm:$0xff]
    %v7096 = vld [vmem:[%s11 + $0x188] sm:$0xff]
    %v7097 = vld [vmem:[%s11 + $0x190] sm:$0xff]
    %v7098 = vld [vmem:[%s11 + $0x198] sm:$0xff]
    %v7099 = vld [vmem:[%s11 + $0x1a0] sm:$0xff]
    %v7100 = vld [vmem:[%s11 + $0x1a8] sm:$0xff]
    %v7101 = vld [vmem:[%s11 + $0x1b0] sm:$0xff]
    %v7102 = vld [vmem:[%s11 + $0x1b8] sm:$0xff]
    %v7103 = vld [vmem:[%s11 + $0x1c0] sm:$0xff]
    %v7104 = vld [vmem:[%s11 + $0x1c8] sm:$0xff]
    %v7105 = vld [vmem:[%s11 + $0x1d0] sm:$0xff]
    %v7106 = vld [vmem:[%s11 + $0x1d8] sm:$0xff]
    %v7107 = vld [vmem:[%s11 + $0x1e0] sm:$0xff]
    %v7108 = vld [vmem:[%s11 + $0x1e8] sm:$0xff]
    %v7109 = vld [vmem:[%s11 + $0x1f0] sm:$0xff]
    %v7110 = vld [vmem:[%s11 + $0x1f8] sm:$0xff]
    %v7111 = vld [vmem:[%s11 + $0x200] sm:$0xff]
    %v7112 = vld [vmem:[%s11 + $0x208] sm:$0xff]
    %v7113 = vld [vmem:[%s11 + $0x210] sm:$0xff]
    %v7114 = vld [vmem:[%s11 + $0x218] sm:$0xff]
    %v7115 = vld [vmem:[%s11 + $0x220] sm:$0xff]
    %v7116 = vld [vmem:[%s11 + $0x228] sm:$0xff]
    %v7117 = vld [vmem:[%s11 + $0x230] sm:$0xff]
    %v7118 = vld [vmem:[%s11 + $0x238] sm:$0xff]
    %v7119 = vld [vmem:[%s11 + $0x240] sm:$0xff]
    %v7120 = vld [vmem:[%s11 + $0x248] sm:$0xff]
    %v7121 = vld [vmem:[%s11 + $0x250] sm:$0xff]
    %v7122 = vld [vmem:[%s11 + $0x258] sm:$0xff]
    %v7123 = vld [vmem:[%s11 + $0x260] sm:$0xff]
    %v7124 = vld [vmem:[%s11 + $0x268] sm:$0xff]
    %v7125 = vld [vmem:[%s11 + $0x270] sm:$0xff]
    %v7126 = vld [vmem:[%s11 + $0x278] sm:$0xff]
    %v7127 = vld [vmem:[%s11 + $0x280] sm:$0xff]
    %v7128 = vld [vmem:[%s11 + $0x288] sm:$0xff]
    %v7129 = vld [vmem:[%s11 + $0x290] sm:$0xff]
    %v7130 = vld [vmem:[%s11 + $0x298] sm:$0xff]
    %v7131 = vld [vmem:[%s11 + $0x2a0] sm:$0xff]
    %v7132 = vld [vmem:[%s11 + $0x2a8] sm:$0xff]
    %v7133 = vld [vmem:[%s11 + $0x2b0] sm:$0xff]
    %v7134 = vld [vmem:[%s11 + $0x2b8] sm:$0xff]
    %v7135 = vld [vmem:[%s11 + $0x2c0] sm:$0xff]
    %v7136 = vld [vmem:[%s11 + $0x2c8] sm:$0xff]
    %v7137 = vld [vmem:[%s11 + $0x2d0] sm:$0xff]
    %v7138 = vld [vmem:[%s11 + $0x2d8] sm:$0xff]
    %v7139 = vld [vmem:[%s11 + $0x2e0] sm:$0xff]
    %v7140 = vld [vmem:[%s11 + $0x2e8] sm:$0xff]
    %v7141 = vld [vmem:[%s11 + $0x2f0] sm:$0xff]
    %v7142 = vld [vmem:[%s11 + $0x2f8] sm:$0xff]
    %v7143 = vld [vmem:[%s12] sm:$0xff]
    %v7145 = vperm.slane %v7143, 0
    %v7146 = vperm.slane %v7143, 1
    %v7147 = vperm.slane %v7143, 2
    %v7148 = vperm.slane %v7143, 3
    %v7149 = vperm.slane %v7143, 4
    %v7150 = vperm.slane %v7143, 5
    %v7151 = vperm.slane %v7143, 6
    %v7152 = vperm.slane %v7143, 7
    %v7257 = vunpack.c.l.b16 %v7047
    %v7258 = vunpack.c.h.b16 %v7047
    %v7259 = vunpack.c.l.b16 %v7048
    %v7260 = vunpack.c.h.b16 %v7048
    %v7261 = vunpack.c.l.b16 %v7049
    %v7262 = vunpack.c.h.b16 %v7049
    %v7263 = vunpack.c.l.b16 %v7050
    %v7264 = vunpack.c.h.b16 %v7050
    %v7265 = vunpack.c.l.b16 %v7051
    %v7266 = vunpack.c.h.b16 %v7051
    %v7267 = vunpack.c.l.b16 %v7052
    %v7268 = vunpack.c.h.b16 %v7052
    %v7269 = vunpack.c.l.b16 %v7053
    %v7270 = vunpack.c.h.b16 %v7053
    %v7271 = vunpack.c.l.b16 %v7054
    %v7272 = vunpack.c.h.b16 %v7054
    %v7273 = vunpack.c.l.b16 %v7055
    %v7274 = vunpack.c.h.b16 %v7055
    %v7275 = vunpack.c.l.b16 %v7056
    %v7276 = vunpack.c.h.b16 %v7056
    %v7277 = vunpack.c.l.b16 %v7057
    %v7278 = vunpack.c.h.b16 %v7057
    %v7279 = vunpack.c.l.b16 %v7058
    %v7280 = vunpack.c.h.b16 %v7058
    %v7281 = vunpack.c.l.b16 %v7059
    %v7282 = vunpack.c.h.b16 %v7059
    %v7283 = vunpack.c.l.b16 %v7060
    %v7284 = vunpack.c.h.b16 %v7060
    %v7285 = vunpack.c.l.b16 %v7061
    %v7286 = vunpack.c.h.b16 %v7061
    %v7287 = vunpack.c.l.b16 %v7062
    %v7288 = vunpack.c.h.b16 %v7062
    %v7289 = vunpack.c.l.b16 %v7063
    %v7290 = vunpack.c.h.b16 %v7063
    %v7291 = vunpack.c.l.b16 %v7064
    %v7292 = vunpack.c.h.b16 %v7064
    %v7293 = vunpack.c.l.b16 %v7065
    %v7294 = vunpack.c.h.b16 %v7065
    %v7295 = vunpack.c.l.b16 %v7066
    %v7296 = vunpack.c.h.b16 %v7066
    %v7297 = vunpack.c.l.b16 %v7067
    %v7298 = vunpack.c.h.b16 %v7067
    %v7299 = vunpack.c.l.b16 %v7068
    %v7300 = vunpack.c.h.b16 %v7068
    %v7301 = vunpack.c.l.b16 %v7069
    %v7302 = vunpack.c.h.b16 %v7069
    %v7303 = vunpack.c.l.b16 %v7070
    %v7304 = vunpack.c.h.b16 %v7070
    %v7305 = vunpack.c.l.b16 %v7071
    %v7306 = vunpack.c.h.b16 %v7071
    %v7307 = vunpack.c.l.b16 %v7072
    %v7308 = vunpack.c.h.b16 %v7072
    %v7309 = vunpack.c.l.b16 %v7073
    %v7310 = vunpack.c.h.b16 %v7073
    %v7311 = vunpack.c.l.b16 %v7074
    %v7312 = vunpack.c.h.b16 %v7074
    %v7313 = vunpack.c.l.b16 %v7075
    %v7314 = vunpack.c.h.b16 %v7075
    %v7315 = vunpack.c.l.b16 %v7076
    %v7316 = vunpack.c.h.b16 %v7076
    %v7317 = vunpack.c.l.b16 %v7077
    %v7318 = vunpack.c.h.b16 %v7077
    %v7319 = vunpack.c.l.b16 %v7078
    %v7320 = vunpack.c.h.b16 %v7078
    %v7321 = vunpack.c.l.b16 %v7079
    %v7322 = vunpack.c.h.b16 %v7079
    %v7323 = vunpack.c.l.b16 %v7080
    %v7324 = vunpack.c.h.b16 %v7080
    %v7325 = vunpack.c.l.b16 %v7081
    %v7326 = vunpack.c.h.b16 %v7081
    %v7327 = vunpack.c.l.b16 %v7082
    %v7328 = vunpack.c.h.b16 %v7082
    %v7329 = vunpack.c.l.b16 %v7083
    %v7330 = vunpack.c.h.b16 %v7083
    %v7331 = vunpack.c.l.b16 %v7084
    %v7332 = vunpack.c.h.b16 %v7084
    %v7333 = vunpack.c.l.b16 %v7085
    %v7334 = vunpack.c.h.b16 %v7085
    %v7335 = vunpack.c.l.b16 %v7086
    %v7336 = vunpack.c.h.b16 %v7086
    %v7337 = vunpack.c.l.b16 %v7087
    %v7338 = vunpack.c.h.b16 %v7087
    %v7339 = vunpack.c.l.b16 %v7088
    %v7340 = vunpack.c.h.b16 %v7088
    %v7341 = vunpack.c.l.b16 %v7089
    %v7342 = vunpack.c.h.b16 %v7089
    %v7343 = vunpack.c.l.b16 %v7090
    %v7344 = vunpack.c.h.b16 %v7090
    %v7345 = vunpack.c.l.b16 %v7091
    %v7346 = vunpack.c.h.b16 %v7091
    %v7347 = vunpack.c.l.b16 %v7092
    %v7348 = vunpack.c.h.b16 %v7092
    %v7349 = vunpack.c.l.b16 %v7093
    %v7350 = vunpack.c.h.b16 %v7093
    %v7351 = vunpack.c.l.b16 %v7094
    %v7352 = vunpack.c.h.b16 %v7094
    %v7353 = vunpack.c.l.b16 %v7095
    %v7354 = vunpack.c.h.b16 %v7095
    %v7355 = vunpack.c.l.b16 %v7096
    %v7356 = vunpack.c.h.b16 %v7096
    %v7357 = vunpack.c.l.b16 %v7097
    %v7358 = vunpack.c.h.b16 %v7097
    %v7359 = vunpack.c.l.b16 %v7098
    %v7360 = vunpack.c.h.b16 %v7098
    %v7361 = vunpack.c.l.b16 %v7099
    %v7362 = vunpack.c.h.b16 %v7099
    %v7363 = vunpack.c.l.b16 %v7100
    %v7364 = vunpack.c.h.b16 %v7100
    %v7365 = vunpack.c.l.b16 %v7101
    %v7366 = vunpack.c.h.b16 %v7101
    %v7367 = vunpack.c.l.b16 %v7102
    %v7368 = vunpack.c.h.b16 %v7102
    %v7369 = vunpack.c.l.b16 %v7103
    %v7370 = vunpack.c.h.b16 %v7103
    %v7371 = vunpack.c.l.b16 %v7104
    %v7372 = vunpack.c.h.b16 %v7104
    %v7373 = vunpack.c.l.b16 %v7105
    %v7374 = vunpack.c.h.b16 %v7105
    %v7375 = vunpack.c.l.b16 %v7106
    %v7376 = vunpack.c.h.b16 %v7106
    %v7377 = vunpack.c.l.b16 %v7107
    %v7378 = vunpack.c.h.b16 %v7107
    %v7379 = vunpack.c.l.b16 %v7108
    %v7380 = vunpack.c.h.b16 %v7108
    %v7381 = vunpack.c.l.b16 %v7109
    %v7382 = vunpack.c.h.b16 %v7109
    %v7383 = vunpack.c.l.b16 %v7110
    %v7384 = vunpack.c.h.b16 %v7110
    %v7385 = vunpack.c.l.b16 %v7111
    %v7386 = vunpack.c.h.b16 %v7111
    %v7387 = vunpack.c.l.b16 %v7112
    %v7388 = vunpack.c.h.b16 %v7112
    %v7389 = vunpack.c.l.b16 %v7113
    %v7390 = vunpack.c.h.b16 %v7113
    %v7391 = vunpack.c.l.b16 %v7114
    %v7392 = vunpack.c.h.b16 %v7114
    %v7393 = vunpack.c.l.b16 %v7115
    %v7394 = vunpack.c.h.b16 %v7115
    %v7395 = vunpack.c.l.b16 %v7116
    %v7396 = vunpack.c.h.b16 %v7116
    %v7397 = vunpack.c.l.b16 %v7117
    %v7398 = vunpack.c.h.b16 %v7117
    %v7399 = vunpack.c.l.b16 %v7118
    %v7400 = vunpack.c.h.b16 %v7118
    %v7401 = vunpack.c.l.b16 %v7119
    %v7402 = vunpack.c.h.b16 %v7119
    %v7403 = vunpack.c.l.b16 %v7120
    %v7404 = vunpack.c.h.b16 %v7120
    %v7405 = vunpack.c.l.b16 %v7121
    %v7406 = vunpack.c.h.b16 %v7121
    %v7407 = vunpack.c.l.b16 %v7122
    %v7408 = vunpack.c.h.b16 %v7122
    %v7409 = vunpack.c.l.b16 %v7123
    %v7410 = vunpack.c.h.b16 %v7123
    %v7411 = vunpack.c.l.b16 %v7124
    %v7412 = vunpack.c.h.b16 %v7124
    %v7413 = vunpack.c.l.b16 %v7125
    %v7414 = vunpack.c.h.b16 %v7125
    %v7415 = vunpack.c.l.b16 %v7126
    %v7416 = vunpack.c.h.b16 %v7126
    %v7417 = vunpack.c.l.b16 %v7127
    %v7418 = vunpack.c.h.b16 %v7127
    %v7419 = vunpack.c.l.b16 %v7128
    %v7420 = vunpack.c.h.b16 %v7128
    %v7421 = vunpack.c.l.b16 %v7129
    %v7422 = vunpack.c.h.b16 %v7129
    %v7423 = vunpack.c.l.b16 %v7130
    %v7424 = vunpack.c.h.b16 %v7130
    %v7425 = vunpack.c.l.b16 %v7131
    %v7426 = vunpack.c.h.b16 %v7131
    %v7427 = vunpack.c.l.b16 %v7132
    %v7428 = vunpack.c.h.b16 %v7132
    %v7429 = vunpack.c.l.b16 %v7133
    %v7430 = vunpack.c.h.b16 %v7133
    %v7431 = vunpack.c.l.b16 %v7134
    %v7432 = vunpack.c.h.b16 %v7134
    %v7433 = vunpack.c.l.b16 %v7135
    %v7434 = vunpack.c.h.b16 %v7135
    %v7435 = vunpack.c.l.b16 %v7136
    %v7436 = vunpack.c.h.b16 %v7136
    %v7437 = vunpack.c.l.b16 %v7137
    %v7438 = vunpack.c.h.b16 %v7137
    %v7439 = vunpack.c.l.b16 %v7138
    %v7440 = vunpack.c.h.b16 %v7138
    %v7441 = vunpack.c.l.b16 %v7139
    %v7442 = vunpack.c.h.b16 %v7139
    %v7443 = vunpack.c.l.b16 %v7140
    %v7444 = vunpack.c.h.b16 %v7140
    %v7445 = vunpack.c.l.b16 %v7141
    %v7446 = vunpack.c.h.b16 %v7141
    %v7447 = vunpack.c.l.b16 %v7142
    %v7448 = vunpack.c.h.b16 %v7142
    %v7449 = vpack.c.b16 %v7265, %v7257
    %v7450 = vpack.c.b16 %v7266, %v7258
    %v7451 = vpack.c.b16 %v7267, %v7259
    %v7452 = vpack.c.b16 %v7268, %v7260
    %v7453 = vpack.c.b16 %v7269, %v7261
    %v7454 = vpack.c.b16 %v7270, %v7262
    %v7455 = vpack.c.b16 %v7271, %v7263
    %v7456 = vpack.c.b16 %v7272, %v7264
    %v7457 = vpack.c.b16 %v7281, %v7273
    %v7458 = vpack.c.b16 %v7282, %v7274
    %v7459 = vpack.c.b16 %v7283, %v7275
    %v7460 = vpack.c.b16 %v7284, %v7276
    %v7461 = vpack.c.b16 %v7285, %v7277
    %v7462 = vpack.c.b16 %v7286, %v7278
    %v7463 = vpack.c.b16 %v7287, %v7279
    %v7464 = vpack.c.b16 %v7288, %v7280
    %v7465 = vpack.c.b16 %v7297, %v7289
    %v7466 = vpack.c.b16 %v7298, %v7290
    %v7467 = vpack.c.b16 %v7299, %v7291
    %v7468 = vpack.c.b16 %v7300, %v7292
    %v7469 = vpack.c.b16 %v7301, %v7293
    %v7470 = vpack.c.b16 %v7302, %v7294
    %v7471 = vpack.c.b16 %v7303, %v7295
    %v7472 = vpack.c.b16 %v7304, %v7296
    %v7473 = vpack.c.b16 %v7313, %v7305
    %v7474 = vpack.c.b16 %v7314, %v7306
    %v7475 = vpack.c.b16 %v7315, %v7307
    %v7476 = vpack.c.b16 %v7316, %v7308
    %v7477 = vpack.c.b16 %v7317, %v7309
    %v7478 = vpack.c.b16 %v7318, %v7310
    %v7479 = vpack.c.b16 %v7319, %v7311
    %v7480 = vpack.c.b16 %v7320, %v7312
    %v7481 = vpack.c.b16 %v7329, %v7321
    %v7482 = vpack.c.b16 %v7330, %v7322
    %v7483 = vpack.c.b16 %v7331, %v7323
    %v7484 = vpack.c.b16 %v7332, %v7324
    %v7485 = vpack.c.b16 %v7333, %v7325
    %v7486 = vpack.c.b16 %v7334, %v7326
    %v7487 = vpack.c.b16 %v7335, %v7327
    %v7488 = vpack.c.b16 %v7336, %v7328
    %v7489 = vpack.c.b16 %v7345, %v7337
    %v7490 = vpack.c.b16 %v7346, %v7338
    %v7491 = vpack.c.b16 %v7347, %v7339
    %v7492 = vpack.c.b16 %v7348, %v7340
    %v7493 = vpack.c.b16 %v7349, %v7341
    %v7494 = vpack.c.b16 %v7350, %v7342
    %v7495 = vpack.c.b16 %v7351, %v7343
    %v7496 = vpack.c.b16 %v7352, %v7344
    %v7497 = vpack.c.b16 %v7361, %v7353
    %v7498 = vpack.c.b16 %v7362, %v7354
    %v7499 = vpack.c.b16 %v7363, %v7355
    %v7500 = vpack.c.b16 %v7364, %v7356
    %v7501 = vpack.c.b16 %v7365, %v7357
    %v7502 = vpack.c.b16 %v7366, %v7358
    %v7503 = vpack.c.b16 %v7367, %v7359
    %v7504 = vpack.c.b16 %v7368, %v7360
    %v7505 = vpack.c.b16 %v7377, %v7369
    %v7506 = vpack.c.b16 %v7378, %v7370
    %v7507 = vpack.c.b16 %v7379, %v7371
    %v7508 = vpack.c.b16 %v7380, %v7372
    %v7509 = vpack.c.b16 %v7381, %v7373
    %v7510 = vpack.c.b16 %v7382, %v7374
    %v7511 = vpack.c.b16 %v7383, %v7375
    %v7512 = vpack.c.b16 %v7384, %v7376
    %v7513 = vpack.c.b16 %v7393, %v7385
    %v7514 = vpack.c.b16 %v7394, %v7386
    %v7515 = vpack.c.b16 %v7395, %v7387
    %v7516 = vpack.c.b16 %v7396, %v7388
    %v7517 = vpack.c.b16 %v7397, %v7389
    %v7518 = vpack.c.b16 %v7398, %v7390
    %v7519 = vpack.c.b16 %v7399, %v7391
    %v7520 = vpack.c.b16 %v7400, %v7392
    %v7521 = vpack.c.b16 %v7409, %v7401
    %v7522 = vpack.c.b16 %v7410, %v7402
    %v7523 = vpack.c.b16 %v7411, %v7403
    %v7524 = vpack.c.b16 %v7412, %v7404
    %v7525 = vpack.c.b16 %v7413, %v7405
    %v7526 = vpack.c.b16 %v7414, %v7406
    %v7527 = vpack.c.b16 %v7415, %v7407
    %v7528 = vpack.c.b16 %v7416, %v7408
    %v7529 = vpack.c.b16 %v7425, %v7417
    %v7530 = vpack.c.b16 %v7426, %v7418
    %v7531 = vpack.c.b16 %v7427, %v7419
    %v7532 = vpack.c.b16 %v7428, %v7420
    %v7533 = vpack.c.b16 %v7429, %v7421
    %v7534 = vpack.c.b16 %v7430, %v7422
    %v7535 = vpack.c.b16 %v7431, %v7423
    %v7536 = vpack.c.b16 %v7432, %v7424
    %v7537 = vpack.c.b16 %v7441, %v7433
    %v7538 = vpack.c.b16 %v7442, %v7434
    %v7539 = vpack.c.b16 %v7443, %v7435
    %v7540 = vpack.c.b16 %v7444, %v7436
    %v7541 = vpack.c.b16 %v7445, %v7437
    %v7542 = vpack.c.b16 %v7446, %v7438
    %v7543 = vpack.c.b16 %v7447, %v7439
    %v7544 = vpack.c.b16 %v7448, %v7440
    %v7642 = vsel %vm198, %v7046, 0
    %7644 = vmatpush.bf16.msra.mxu0 %v7505
    %7645 = vmatpush.bf16.msra.mxu0 %v7497
    %7646 = vmatpush.bf16.msra.mxu0 %v7489
    %7647 = vmatpush.bf16.msra.mxu0 %v7481
    %7648 = vmatpush.bf16.msra.mxu0 %v7473
    %7649 = vmatpush.bf16.msra.mxu0 %v7465
    %7650 = vmatpush.bf16.msra.mxu0 %v7457
    %7651 = vmatpush.bf16.msra.mxu0 %v7449
    %7652 = vmatmul.bf16.gmra.mxu0 %v7045
    %v7653 = vpop.f32.mrf.mxu0
    %v7654 = vadd.f32 %v7145, %v7653
    %v7655 = vpop.f32.mrf.mxu0
    %7656 = vdwg.mxu0
    %7657 = vmatpush.bf16.msra.mxu0 0
    %7658 = vmatpush.bf16.msra.mxu0 0
    %7659 = vmatpush.bf16.msra.mxu0 0
    %7660 = vmatpush.bf16.msra.mxu0 0
    %7661 = vmatpush.bf16.msra.mxu0 %v7537
    %7662 = vmatpush.bf16.msra.mxu0 %v7529
    %7663 = vmatpush.bf16.msra.mxu0 %v7521
    %7664 = vmatpush.bf16.msra.mxu0 %v7513
    %7665 = vmatmul.bf16.gmra.mxu0 %v7642
    %v7666 = vpop.f32.mrf.mxu0
    %v7667 = vadd.f32 %v7654, %v7666
    %v7668 = vpop.f32.mrf.mxu0
    %7669 = vdwg.mxu0
    %7670 = vmatpush.bf16.msra.mxu0 %v7506
    %7671 = vmatpush.bf16.msra.mxu0 %v7498
    %7672 = vmatpush.bf16.msra.mxu0 %v7490
    %7673 = vmatpush.bf16.msra.mxu0 %v7482
    %7674 = vmatpush.bf16.msra.mxu0 %v7474
    %7675 = vmatpush.bf16.msra.mxu0 %v7466
    %7676 = vmatpush.bf16.msra.mxu0 %v7458
    %7677 = vmatpush.bf16.msra.mxu0 %v7450
    %7678 = vmatmul.bf16.gmra.mxu0 %v7045
    %v7679 = vpop.f32.mrf.mxu0
    %v7680 = vadd.f32 %v7146, %v7679
    %v7681 = vpop.f32.mrf.mxu0
    %7682 = vdwg.mxu0
    %7683 = vmatpush.bf16.msra.mxu0 0
    %7684 = vmatpush.bf16.msra.mxu0 0
    %7685 = vmatpush.bf16.msra.mxu0 0
    %7686 = vmatpush.bf16.msra.mxu0 0
    %7687 = vmatpush.bf16.msra.mxu0 %v7538
    %7688 = vmatpush.bf16.msra.mxu0 %v7530
    %7689 = vmatpush.bf16.msra.mxu0 %v7522
    %7690 = vmatpush.bf16.msra.mxu0 %v7514
    %7691 = vmatmul.bf16.gmra.mxu0 %v7642
    %v7692 = vpop.f32.mrf.mxu0
    %v7693 = vadd.f32 %v7680, %v7692
    %v7694 = vpop.f32.mrf.mxu0
    %7695 = vdwg.mxu0
    %7696 = vmatpush.bf16.msra.mxu0 %v7507
    %7697 = vmatpush.bf16.msra.mxu0 %v7499
    %7698 = vmatpush.bf16.msra.mxu0 %v7491
    %7699 = vmatpush.bf16.msra.mxu0 %v7483
    %7700 = vmatpush.bf16.msra.mxu0 %v7475
    %7701 = vmatpush.bf16.msra.mxu0 %v7467
    %7702 = vmatpush.bf16.msra.mxu0 %v7459
    %7703 = vmatpush.bf16.msra.mxu0 %v7451
    %7704 = vmatmul.bf16.gmra.mxu0 %v7045
    %v7705 = vpop.f32.mrf.mxu0
    %v7706 = vadd.f32 %v7147, %v7705
    %v7707 = vpop.f32.mrf.mxu0
    %7708 = vdwg.mxu0
    %7709 = vmatpush.bf16.msra.mxu0 0
    %7710 = vmatpush.bf16.msra.mxu0 0
    %7711 = vmatpush.bf16.msra.mxu0 0
    %7712 = vmatpush.bf16.msra.mxu0 0
    %7713 = vmatpush.bf16.msra.mxu0 %v7539
    %7714 = vmatpush.bf16.msra.mxu0 %v7531
    %7715 = vmatpush.bf16.msra.mxu0 %v7523
    %7716 = vmatpush.bf16.msra.mxu0 %v7515
    %7717 = vmatmul.bf16.gmra.mxu0 %v7642
    %v7718 = vpop.f32.mrf.mxu0
    %v7719 = vadd.f32 %v7706, %v7718
    %v7720 = vpop.f32.mrf.mxu0
    %7721 = vdwg.mxu0
    %7722 = vmatpush.bf16.msra.mxu0 %v7508
    %7723 = vmatpush.bf16.msra.mxu0 %v7500
    %7724 = vmatpush.bf16.msra.mxu0 %v7492
    %7725 = vmatpush.bf16.msra.mxu0 %v7484
    %7726 = vmatpush.bf16.msra.mxu0 %v7476
    %7727 = vmatpush.bf16.msra.mxu0 %v7468
    %7728 = vmatpush.bf16.msra.mxu0 %v7460
    %7729 = vmatpush.bf16.msra.mxu0 %v7452
    %7730 = vmatmul.bf16.gmra.mxu0 %v7045
    %v7731 = vpop.f32.mrf.mxu0
    %v7732 = vadd.f32 %v7148, %v7731
    %v7733 = vpop.f32.mrf.mxu0
    %7734 = vdwg.mxu0
    %7735 = vmatpush.bf16.msra.mxu0 0
    %7736 = vmatpush.bf16.msra.mxu0 0
    %7737 = vmatpush.bf16.msra.mxu0 0
    %7738 = vmatpush.bf16.msra.mxu0 0
    %7739 = vmatpush.bf16.msra.mxu0 %v7540
    %7740 = vmatpush.bf16.msra.mxu0 %v7532
    %7741 = vmatpush.bf16.msra.mxu0 %v7524
    %7742 = vmatpush.bf16.msra.mxu0 %v7516
    %7743 = vmatmul.bf16.gmra.mxu0 %v7642
    %v7744 = vpop.f32.mrf.mxu0
    %v7745 = vadd.f32 %v7732, %v7744
    %v7746 = vpop.f32.mrf.mxu0
    %7747 = vdwg.mxu0
    %7748 = vmatpush.bf16.msra.mxu0 %v7509
    %7749 = vmatpush.bf16.msra.mxu0 %v7501
    %7750 = vmatpush.bf16.msra.mxu0 %v7493
    %7751 = vmatpush.bf16.msra.mxu0 %v7485
    %7752 = vmatpush.bf16.msra.mxu0 %v7477
    %7753 = vmatpush.bf16.msra.mxu0 %v7469
    %7754 = vmatpush.bf16.msra.mxu0 %v7461
    %7755 = vmatpush.bf16.msra.mxu0 %v7453
    %7756 = vmatmul.bf16.gmra.mxu0 %v7045
    %v7757 = vpop.f32.mrf.mxu0
    %v7758 = vadd.f32 %v7149, %v7757
    %v7759 = vpop.f32.mrf.mxu0
    %7760 = vdwg.mxu0
    %7761 = vmatpush.bf16.msra.mxu0 0
    %7762 = vmatpush.bf16.msra.mxu0 0
    %7763 = vmatpush.bf16.msra.mxu0 0
    %7764 = vmatpush.bf16.msra.mxu0 0
    %7765 = vmatpush.bf16.msra.mxu0 %v7541
    %7766 = vmatpush.bf16.msra.mxu0 %v7533
    %7767 = vmatpush.bf16.msra.mxu0 %v7525
    %7768 = vmatpush.bf16.msra.mxu0 %v7517
    %7769 = vmatmul.bf16.gmra.mxu0 %v7642
    %v7770 = vpop.f32.mrf.mxu0
    %v7771 = vadd.f32 %v7758, %v7770
    %v7772 = vpop.f32.mrf.mxu0
    %7773 = vdwg.mxu0
    %7774 = vmatpush.bf16.msra.mxu0 %v7510
    %7775 = vmatpush.bf16.msra.mxu0 %v7502
    %7776 = vmatpush.bf16.msra.mxu0 %v7494
    %7777 = vmatpush.bf16.msra.mxu0 %v7486
    %7778 = vmatpush.bf16.msra.mxu0 %v7478
    %7779 = vmatpush.bf16.msra.mxu0 %v7470
    %7780 = vmatpush.bf16.msra.mxu0 %v7462
    %7781 = vmatpush.bf16.msra.mxu0 %v7454
    %7782 = vmatmul.bf16.gmra.mxu0 %v7045
    %v7783 = vpop.f32.mrf.mxu0
    %v7784 = vadd.f32 %v7150, %v7783
    %v7785 = vpop.f32.mrf.mxu0
    %7786 = vdwg.mxu0
    %7787 = vmatpush.bf16.msra.mxu0 0
    %7788 = vmatpush.bf16.msra.mxu0 0
    %7789 = vmatpush.bf16.msra.mxu0 0
    %7790 = vmatpush.bf16.msra.mxu0 0
    %7791 = vmatpush.bf16.msra.mxu0 %v7542
    %7792 = vmatpush.bf16.msra.mxu0 %v7534
    %7793 = vmatpush.bf16.msra.mxu0 %v7526
    %7794 = vmatpush.bf16.msra.mxu0 %v7518
    %7795 = vmatmul.bf16.gmra.mxu0 %v7642
    %v7796 = vpop.f32.mrf.mxu0
    %v7797 = vadd.f32 %v7784, %v7796
    %v7798 = vpop.f32.mrf.mxu0
    %7799 = vdwg.mxu0
    %7800 = vmatpush.bf16.msra.mxu0 %v7511
    %7801 = vmatpush.bf16.msra.mxu0 %v7503
    %7802 = vmatpush.bf16.msra.mxu0 %v7495
    %7803 = vmatpush.bf16.msra.mxu0 %v7487
    %7804 = vmatpush.bf16.msra.mxu0 %v7479
    %7805 = vmatpush.bf16.msra.mxu0 %v7471
    %7806 = vmatpush.bf16.msra.mxu0 %v7463
    %7807 = vmatpush.bf16.msra.mxu0 %v7455
    %7808 = vmatmul.bf16.gmra.mxu0 %v7045
    %v7809 = vpop.f32.mrf.mxu0
    %v7810 = vadd.f32 %v7151, %v7809
    %v7811 = vpop.f32.mrf.mxu0
    %7812 = vdwg.mxu0
    %7813 = vmatpush.bf16.msra.mxu0 0
    %7814 = vmatpush.bf16.msra.mxu0 0
    %7815 = vmatpush.bf16.msra.mxu0 0
    %7816 = vmatpush.bf16.msra.mxu0 0
    %7817 = vmatpush.bf16.msra.mxu0 %v7543
    %7818 = vmatpush.bf16.msra.mxu0 %v7535
    %7819 = vmatpush.bf16.msra.mxu0 %v7527
    %7820 = vmatpush.bf16.msra.mxu0 %v7519
    %7821 = vmatmul.bf16.gmra.mxu0 %v7642
    %v7822 = vpop.f32.mrf.mxu0
    %v7823 = vadd.f32 %v7810, %v7822
    %v7824 = vpop.f32.mrf.mxu0
    %7825 = vdwg.mxu0
    %7826 = vmatpush.bf16.msra.mxu0 %v7512
    %7827 = vmatpush.bf16.msra.mxu0 %v7504
    %7828 = vmatpush.bf16.msra.mxu0 %v7496
    %7829 = vmatpush.bf16.msra.mxu0 %v7488
    %7830 = vmatpush.bf16.msra.mxu0 %v7480
    %7831 = vmatpush.bf16.msra.mxu0 %v7472
    %7832 = vmatpush.bf16.msra.mxu0 %v7464
    %7833 = vmatpush.bf16.msra.mxu0 %v7456
    %7834 = vmatmul.bf16.gmra.mxu0 %v7045
    %v7835 = vpop.f32.mrf.mxu0
    %v7836 = vadd.f32 %v7152, %v7835
    %v7837 = vpop.f32.mrf.mxu0
    %7838 = vdwg.mxu0
    %7839 = vmatpush.bf16.msra.mxu0 0
    %7840 = vmatpush.bf16.msra.mxu0 0
    %7841 = vmatpush.bf16.msra.mxu0 0
    %7842 = vmatpush.bf16.msra.mxu0 0
    %7843 = vmatpush.bf16.msra.mxu0 %v7544
    %7844 = vmatpush.bf16.msra.mxu0 %v7536
    %7845 = vmatpush.bf16.msra.mxu0 %v7528
    %7846 = vmatpush.bf16.msra.mxu0 %v7520
    %7847 = vmatmul.bf16.gmra.mxu0 %v7642
    %v7848 = vpop.f32.mrf.mxu0
    %v7849 = vadd.f32 %v7836, %v7848
    %v7850 = vpop.f32.mrf.mxu0
    %7851 = vdwg.mxu0
    %v7852 = vmax.f32 %v7667, 0.0
    %v7853 = vmax.f32 %v7693, 0.0
    %v7854 = vmax.f32 %v7719, 0.0
    %v7855 = vmax.f32 %v7745, 0.0
    %v7856 = vmax.f32 %v7771, 0.0
    %v7857 = vmax.f32 %v7797, 0.0
    %v7858 = vmax.f32 %v7823, 0.0
    %v7859 = vmax.f32 %v7849, 0.0
    %v7860 = vpack.c.bf16 %v7852, %v7852
    %v7861 = vpack.c.bf16 %v7853, %v7853
    %v7862 = vpack.c.bf16 %v7854, %v7854
    %v7863 = vpack.c.bf16 %v7855, %v7855
    %v7864 = vpack.c.bf16 %v7856, %v7856
    %v7865 = vpack.c.bf16 %v7857, %v7857
    %v7866 = vpack.c.bf16 %v7858, %v7858
    %v7867 = vpack.c.bf16 %v7859, %v7859
    %v7868 = vld [vmem:[#allocation15] sm:$0xff]
    %v7869 = vld [vmem:[#allocation15 + $0x8] sm:$0xff]
    %v7870 = vld [vmem:[#allocation15 + $0x10] sm:$0xff]
    %v7871 = vld [vmem:[#allocation15 + $0x18] sm:$0xff]
    %v7872 = vld [vmem:[#allocation15 + $0x20] sm:$0xff]
    %v7873 = vld [vmem:[#allocation15 + $0x28] sm:$0xff]
    %v7874 = vld [vmem:[#allocation15 + $0x30] sm:$0xff]
    %v7875 = vld [vmem:[#allocation15 + $0x38] sm:$0xff]
    %v7876 = vld [vmem:[#allocation15 + $0x40] sm:$0xff]
    %v7877 = vld [vmem:[#allocation15 + $0x48] sm:$0xff]
    %v7878 = vld [vmem:[#allocation15 + $0x50] sm:$0xff]
    %v7879 = vld [vmem:[#allocation15 + $0x58] sm:$0xff]
    %v7880 = vld [vmem:[#allocation15 + $0x60] sm:$0xff]
    %v7881 = vld [vmem:[#allocation15 + $0x68] sm:$0xff]
    %v7882 = vld [vmem:[#allocation15 + $0x70] sm:$0xff]
    %v7883 = vld [vmem:[#allocation15 + $0x78] sm:$0xff]
    %v7884 = vld [vmem:[#allocation15 + $0x80] sm:$0xff]
    %v7885 = vld [vmem:[#allocation15 + $0x88] sm:$0xff]
    %v7886 = vld [vmem:[#allocation15 + $0x90] sm:$0xff]
    %v7887 = vld [vmem:[#allocation15 + $0x98] sm:$0xff]
    %v7888 = vld [vmem:[#allocation15 + $0xa0] sm:$0xff]
    %v7889 = vld [vmem:[#allocation15 + $0xa8] sm:$0xff]
    %v7890 = vld [vmem:[#allocation15 + $0xb0] sm:$0xff]
    %v7891 = vld [vmem:[#allocation15 + $0xb8] sm:$0xff]
    %v7892 = vld [vmem:[#allocation15 + $0xc0] sm:$0xff]
    %v7893 = vld [vmem:[#allocation15 + $0xc8] sm:$0xff]
    %v7894 = vld [vmem:[#allocation15 + $0xd0] sm:$0xff]
    %v7895 = vld [vmem:[#allocation15 + $0xd8] sm:$0xff]
    %v7896 = vld [vmem:[#allocation15 + $0xe0] sm:$0xff]
    %v7897 = vld [vmem:[#allocation15 + $0xe8] sm:$0xff]
    %v7898 = vld [vmem:[#allocation15 + $0xf0] sm:$0xff]
    %v7899 = vld [vmem:[#allocation15 + $0xf8] sm:$0xff]
    %v7900 = vld [vmem:[#allocation15 + $0x100] sm:$0xff]
    %v7901 = vld [vmem:[#allocation15 + $0x108] sm:$0xff]
    %v7902 = vld [vmem:[#allocation15 + $0x110] sm:$0xff]
    %v7903 = vld [vmem:[#allocation15 + $0x118] sm:$0xff]
    %v7904 = vld [vmem:[#allocation15 + $0x120] sm:$0xff]
    %v7905 = vld [vmem:[#allocation15 + $0x128] sm:$0xff]
    %v7906 = vld [vmem:[#allocation15 + $0x130] sm:$0xff]
    %v7907 = vld [vmem:[#allocation15 + $0x138] sm:$0xff]
    %v7908 = vld [vmem:[#allocation15 + $0x140] sm:$0xff]
    %v7909 = vld [vmem:[#allocation15 + $0x148] sm:$0xff]
    %v7910 = vld [vmem:[#allocation15 + $0x150] sm:$0xff]
    %v7911 = vld [vmem:[#allocation15 + $0x158] sm:$0xff]
    %v7912 = vld [vmem:[#allocation15 + $0x160] sm:$0xff]
    %v7913 = vld [vmem:[#allocation15 + $0x168] sm:$0xff]
    %v7914 = vld [vmem:[#allocation15 + $0x170] sm:$0xff]
    %v7915 = vld [vmem:[#allocation15 + $0x178] sm:$0xff]
    %v7916 = vld [vmem:[#allocation15 + $0x180] sm:$0xff]
    %v7917 = vld [vmem:[#allocation15 + $0x188] sm:$0xff]
    %v7918 = vld [vmem:[#allocation15 + $0x190] sm:$0xff]
    %v7919 = vld [vmem:[#allocation15 + $0x198] sm:$0xff]
    %v7920 = vld [vmem:[#allocation15 + $0x1a0] sm:$0xff]
    %v7921 = vld [vmem:[#allocation15 + $0x1a8] sm:$0xff]
    %v7922 = vld [vmem:[#allocation15 + $0x1b0] sm:$0xff]
    %v7923 = vld [vmem:[#allocation15 + $0x1b8] sm:$0xff]
    %v7924 = vld [vmem:[#allocation15 + $0x1c0] sm:$0xff]
    %v7925 = vld [vmem:[#allocation15 + $0x1c8] sm:$0xff]
    %v7926 = vld [vmem:[#allocation15 + $0x1d0] sm:$0xff]
    %v7927 = vld [vmem:[#allocation15 + $0x1d8] sm:$0xff]
    %v7928 = vld [vmem:[#allocation15 + $0x1e0] sm:$0xff]
    %v7929 = vld [vmem:[#allocation15 + $0x1e8] sm:$0xff]
    %v7930 = vld [vmem:[#allocation15 + $0x1f0] sm:$0xff]
    %v7931 = vld [vmem:[#allocation15 + $0x1f8] sm:$0xff]
    %v7932 = vld [vmem:[#allocation15 + $0x200] sm:$0xff]
    %v7933 = vld [vmem:[#allocation15 + $0x208] sm:$0xff]
    %v7934 = vld [vmem:[#allocation15 + $0x210] sm:$0xff]
    %v7935 = vld [vmem:[#allocation15 + $0x218] sm:$0xff]
    %v7936 = vld [vmem:[#allocation15 + $0x220] sm:$0xff]
    %v7937 = vld [vmem:[#allocation15 + $0x228] sm:$0xff]
    %v7938 = vld [vmem:[#allocation15 + $0x230] sm:$0xff]
    %v7939 = vld [vmem:[#allocation15 + $0x238] sm:$0xff]
    %v7940 = vld [vmem:[#allocation15 + $0x240] sm:$0xff]
    %v7941 = vld [vmem:[#allocation15 + $0x248] sm:$0xff]
    %v7942 = vld [vmem:[#allocation15 + $0x250] sm:$0xff]
    %v7943 = vld [vmem:[#allocation15 + $0x258] sm:$0xff]
    %v7944 = vld [vmem:[#allocation15 + $0x260] sm:$0xff]
    %v7945 = vld [vmem:[#allocation15 + $0x268] sm:$0xff]
    %v7946 = vld [vmem:[#allocation15 + $0x270] sm:$0xff]
    %v7947 = vld [vmem:[#allocation15 + $0x278] sm:$0xff]
    %v7948 = vld [vmem:[#allocation15 + $0x280] sm:$0xff]
    %v7949 = vld [vmem:[#allocation15 + $0x288] sm:$0xff]
    %v7950 = vld [vmem:[#allocation15 + $0x290] sm:$0xff]
    %v7951 = vld [vmem:[#allocation15 + $0x298] sm:$0xff]
    %v7952 = vld [vmem:[#allocation15 + $0x2a0] sm:$0xff]
    %v7953 = vld [vmem:[#allocation15 + $0x2a8] sm:$0xff]
    %v7954 = vld [vmem:[#allocation15 + $0x2b0] sm:$0xff]
    %v7955 = vld [vmem:[#allocation15 + $0x2b8] sm:$0xff]
    %v7956 = vld [vmem:[#allocation15 + $0x2c0] sm:$0xff]
    %v7957 = vld [vmem:[#allocation15 + $0x2c8] sm:$0xff]
    %v7958 = vld [vmem:[#allocation15 + $0x2d0] sm:$0xff]
    %v7959 = vld [vmem:[#allocation15 + $0x2d8] sm:$0xff]
    %v7960 = vld [vmem:[#allocation15 + $0x2e0] sm:$0xff]
    %v7961 = vld [vmem:[#allocation15 + $0x2e8] sm:$0xff]
    %v7962 = vld [vmem:[#allocation15 + $0x2f0] sm:$0xff]
    %v7963 = vld [vmem:[#allocation15 + $0x2f8] sm:$0xff]
    %v7964 = vld [vmem:[#allocation15 + $0x300] sm:$0xff]
    %v7965 = vld [vmem:[#allocation15 + $0x308] sm:$0xff]
    %v7966 = vld [vmem:[#allocation15 + $0x310] sm:$0xff]
    %v7967 = vld [vmem:[#allocation15 + $0x318] sm:$0xff]
    %v7968 = vld [vmem:[#allocation15 + $0x320] sm:$0xff]
    %v7969 = vld [vmem:[#allocation15 + $0x328] sm:$0xff]
    %v7970 = vld [vmem:[#allocation15 + $0x330] sm:$0xff]
    %v7971 = vld [vmem:[#allocation15 + $0x338] sm:$0xff]
    %v7972 = vld [vmem:[#allocation15 + $0x340] sm:$0xff]
    %v7973 = vld [vmem:[#allocation15 + $0x348] sm:$0xff]
    %v7974 = vld [vmem:[#allocation15 + $0x350] sm:$0xff]
    %v7975 = vld [vmem:[#allocation15 + $0x358] sm:$0xff]
    %v7976 = vld [vmem:[#allocation15 + $0x360] sm:$0xff]
    %v7977 = vld [vmem:[#allocation15 + $0x368] sm:$0xff]
    %v7978 = vld [vmem:[#allocation15 + $0x370] sm:$0xff]
    %v7979 = vld [vmem:[#allocation15 + $0x378] sm:$0xff]
    %v7980 = vld [vmem:[#allocation15 + $0x380] sm:$0xff]
    %v7981 = vld [vmem:[#allocation15 + $0x388] sm:$0xff]
    %v7982 = vld [vmem:[#allocation15 + $0x390] sm:$0xff]
    %v7983 = vld [vmem:[#allocation15 + $0x398] sm:$0xff]
    %v7984 = vld [vmem:[#allocation15 + $0x3a0] sm:$0xff]
    %v7985 = vld [vmem:[#allocation15 + $0x3a8] sm:$0xff]
    %v7986 = vld [vmem:[#allocation15 + $0x3b0] sm:$0xff]
    %v7987 = vld [vmem:[#allocation15 + $0x3b8] sm:$0xff]
    %v7988 = vld [vmem:[#allocation15 + $0x3c0] sm:$0xff]
    %v7989 = vld [vmem:[#allocation15 + $0x3c8] sm:$0xff]
    %v7990 = vld [vmem:[#allocation15 + $0x3d0] sm:$0xff]
    %v7991 = vld [vmem:[#allocation15 + $0x3d8] sm:$0xff]
    %v7992 = vld [vmem:[#allocation15 + $0x3e0] sm:$0xff]
    %v7993 = vld [vmem:[#allocation15 + $0x3e8] sm:$0xff]
    %v7994 = vld [vmem:[#allocation15 + $0x3f0] sm:$0xff]
    %v7995 = vld [vmem:[#allocation15 + $0x3f8] sm:$0xff]
    %v7996 = vld [vmem:[#allocation15 + $0x400] sm:$0xff]
    %v7997 = vld [vmem:[#allocation15 + $0x408] sm:$0xff]
    %v7998 = vld [vmem:[#allocation15 + $0x410] sm:$0xff]
    %v7999 = vld [vmem:[#allocation15 + $0x418] sm:$0xff]
    %v8000 = vld [vmem:[#allocation15 + $0x420] sm:$0xff]
    %v8001 = vld [vmem:[#allocation15 + $0x428] sm:$0xff]
    %v8002 = vld [vmem:[#allocation15 + $0x430] sm:$0xff]
    %v8003 = vld [vmem:[#allocation15 + $0x438] sm:$0xff]
    %v8004 = vld [vmem:[#allocation15 + $0x440] sm:$0xff]
    %v8005 = vld [vmem:[#allocation15 + $0x448] sm:$0xff]
    %v8006 = vld [vmem:[#allocation15 + $0x450] sm:$0xff]
    %v8007 = vld [vmem:[#allocation15 + $0x458] sm:$0xff]
    %v8008 = vld [vmem:[#allocation15 + $0x460] sm:$0xff]
    %v8009 = vld [vmem:[#allocation15 + $0x468] sm:$0xff]
    %v8010 = vld [vmem:[#allocation15 + $0x470] sm:$0xff]
    %v8011 = vld [vmem:[#allocation15 + $0x478] sm:$0xff]
    %v8012 = vld [vmem:[#allocation15 + $0x480] sm:$0xff]
    %v8013 = vld [vmem:[#allocation15 + $0x488] sm:$0xff]
    %v8014 = vld [vmem:[#allocation15 + $0x490] sm:$0xff]
    %v8015 = vld [vmem:[#allocation15 + $0x498] sm:$0xff]
    %v8016 = vld [vmem:[#allocation15 + $0x4a0] sm:$0xff]
    %v8017 = vld [vmem:[#allocation15 + $0x4a8] sm:$0xff]
    %v8018 = vld [vmem:[#allocation15 + $0x4b0] sm:$0xff]
    %v8019 = vld [vmem:[#allocation15 + $0x4b8] sm:$0xff]
    %v8020 = vld [vmem:[#allocation15 + $0x4c0] sm:$0xff]
    %v8021 = vld [vmem:[#allocation15 + $0x4c8] sm:$0xff]
    %v8022 = vld [vmem:[#allocation15 + $0x4d0] sm:$0xff]
    %v8023 = vld [vmem:[#allocation15 + $0x4d8] sm:$0xff]
    %v8024 = vld [vmem:[#allocation15 + $0x4e0] sm:$0xff]
    %v8025 = vld [vmem:[#allocation15 + $0x4e8] sm:$0xff]
    %v8026 = vld [vmem:[#allocation15 + $0x4f0] sm:$0xff]
    %v8027 = vld [vmem:[#allocation15 + $0x4f8] sm:$0xff]
    %v8028 = vld [vmem:[#allocation15 + $0x500] sm:$0xff]
    %v8029 = vld [vmem:[#allocation15 + $0x508] sm:$0xff]
    %v8030 = vld [vmem:[#allocation15 + $0x510] sm:$0xff]
    %v8031 = vld [vmem:[#allocation15 + $0x518] sm:$0xff]
    %v8032 = vld [vmem:[#allocation15 + $0x520] sm:$0xff]
    %v8033 = vld [vmem:[#allocation15 + $0x528] sm:$0xff]
    %v8034 = vld [vmem:[#allocation15 + $0x530] sm:$0xff]
    %v8035 = vld [vmem:[#allocation15 + $0x538] sm:$0xff]
    %v8036 = vld [vmem:[#allocation15 + $0x540] sm:$0xff]
    %v8037 = vld [vmem:[#allocation15 + $0x548] sm:$0xff]
    %v8038 = vld [vmem:[#allocation15 + $0x550] sm:$0xff]
    %v8039 = vld [vmem:[#allocation15 + $0x558] sm:$0xff]
    %v8040 = vld [vmem:[#allocation15 + $0x560] sm:$0xff]
    %v8041 = vld [vmem:[#allocation15 + $0x568] sm:$0xff]
    %v8042 = vld [vmem:[#allocation15 + $0x570] sm:$0xff]
    %v8043 = vld [vmem:[#allocation15 + $0x578] sm:$0xff]
    %v8044 = vld [vmem:[#allocation15 + $0x580] sm:$0xff]
    %v8045 = vld [vmem:[#allocation15 + $0x588] sm:$0xff]
    %v8046 = vld [vmem:[#allocation15 + $0x590] sm:$0xff]
    %v8047 = vld [vmem:[#allocation15 + $0x598] sm:$0xff]
    %v8048 = vld [vmem:[#allocation15 + $0x5a0] sm:$0xff]
    %v8049 = vld [vmem:[#allocation15 + $0x5a8] sm:$0xff]
    %v8050 = vld [vmem:[#allocation15 + $0x5b0] sm:$0xff]
    %v8051 = vld [vmem:[#allocation15 + $0x5b8] sm:$0xff]
    %v8052 = vld [vmem:[#allocation15 + $0x5c0] sm:$0xff]
    %v8053 = vld [vmem:[#allocation15 + $0x5c8] sm:$0xff]
    %v8054 = vld [vmem:[#allocation15 + $0x5d0] sm:$0xff]
    %v8055 = vld [vmem:[#allocation15 + $0x5d8] sm:$0xff]
    %v8056 = vld [vmem:[#allocation15 + $0x5e0] sm:$0xff]
    %v8057 = vld [vmem:[#allocation15 + $0x5e8] sm:$0xff]
    %v8058 = vld [vmem:[#allocation15 + $0x5f0] sm:$0xff]
    %v8059 = vld [vmem:[#allocation15 + $0x5f8] sm:$0xff]
    %v8060 = vld [vmem:[#allocation15 + $0x600] sm:$0xff]
    %v8061 = vld [vmem:[#allocation15 + $0x608] sm:$0xff]
    %v8062 = vld [vmem:[#allocation15 + $0x610] sm:$0xff]
    %v8063 = vld [vmem:[#allocation15 + $0x618] sm:$0xff]
    %v8064 = vld [vmem:[#allocation15 + $0x620] sm:$0xff]
    %v8065 = vld [vmem:[#allocation15 + $0x628] sm:$0xff]
    %v8066 = vld [vmem:[#allocation15 + $0x630] sm:$0xff]
    %v8067 = vld [vmem:[#allocation15 + $0x638] sm:$0xff]
    %v8068 = vld [vmem:[#allocation15 + $0x640] sm:$0xff]
    %v8069 = vld [vmem:[#allocation15 + $0x648] sm:$0xff]
    %v8070 = vld [vmem:[#allocation15 + $0x650] sm:$0xff]
    %v8071 = vld [vmem:[#allocation15 + $0x658] sm:$0xff]
    %v8072 = vld [vmem:[#allocation15 + $0x660] sm:$0xff]
    %v8073 = vld [vmem:[#allocation15 + $0x668] sm:$0xff]
    %v8074 = vld [vmem:[#allocation15 + $0x670] sm:$0xff]
    %v8075 = vld [vmem:[#allocation15 + $0x678] sm:$0xff]
    %v8076 = vld [vmem:[#allocation15 + $0x680] sm:$0xff]
    %v8077 = vld [vmem:[#allocation15 + $0x688] sm:$0xff]
    %v8078 = vld [vmem:[#allocation15 + $0x690] sm:$0xff]
    %v8079 = vld [vmem:[#allocation15 + $0x698] sm:$0xff]
    %v8080 = vld [vmem:[#allocation15 + $0x6a0] sm:$0xff]
    %v8081 = vld [vmem:[#allocation15 + $0x6a8] sm:$0xff]
    %v8082 = vld [vmem:[#allocation15 + $0x6b0] sm:$0xff]
    %v8083 = vld [vmem:[#allocation15 + $0x6b8] sm:$0xff]
    %v8084 = vld [vmem:[#allocation15 + $0x6c0] sm:$0xff]
    %v8085 = vld [vmem:[#allocation15 + $0x6c8] sm:$0xff]
    %v8086 = vld [vmem:[#allocation15 + $0x6d0] sm:$0xff]
    %v8087 = vld [vmem:[#allocation15 + $0x6d8] sm:$0xff]
    %v8088 = vld [vmem:[#allocation15 + $0x6e0] sm:$0xff]
    %v8089 = vld [vmem:[#allocation15 + $0x6e8] sm:$0xff]
    %v8090 = vld [vmem:[#allocation15 + $0x6f0] sm:$0xff]
    %v8091 = vld [vmem:[#allocation15 + $0x6f8] sm:$0xff]
    %v8092 = vld [vmem:[#allocation15 + $0x700] sm:$0xff]
    %v8093 = vld [vmem:[#allocation15 + $0x708] sm:$0xff]
    %v8094 = vld [vmem:[#allocation15 + $0x710] sm:$0xff]
    %v8095 = vld [vmem:[#allocation15 + $0x718] sm:$0xff]
    %v8096 = vld [vmem:[#allocation15 + $0x720] sm:$0xff]
    %v8097 = vld [vmem:[#allocation15 + $0x728] sm:$0xff]
    %v8098 = vld [vmem:[#allocation15 + $0x730] sm:$0xff]
    %v8099 = vld [vmem:[#allocation15 + $0x738] sm:$0xff]
    %v8100 = vld [vmem:[#allocation15 + $0x740] sm:$0xff]
    %v8101 = vld [vmem:[#allocation15 + $0x748] sm:$0xff]
    %v8102 = vld [vmem:[#allocation15 + $0x750] sm:$0xff]
    %v8103 = vld [vmem:[#allocation15 + $0x758] sm:$0xff]
    %v8104 = vld [vmem:[#allocation15 + $0x760] sm:$0xff]
    %v8105 = vld [vmem:[#allocation15 + $0x768] sm:$0xff]
    %v8106 = vld [vmem:[#allocation15 + $0x770] sm:$0xff]
    %v8107 = vld [vmem:[#allocation15 + $0x778] sm:$0xff]
    %v8108 = vld [vmem:[#allocation15 + $0x780] sm:$0xff]
    %v8109 = vld [vmem:[#allocation15 + $0x788] sm:$0xff]
    %v8110 = vld [vmem:[#allocation15 + $0x790] sm:$0xff]
    %v8111 = vld [vmem:[#allocation15 + $0x798] sm:$0xff]
    %v8112 = vld [vmem:[#allocation15 + $0x7a0] sm:$0xff]
    %v8113 = vld [vmem:[#allocation15 + $0x7a8] sm:$0xff]
    %v8114 = vld [vmem:[#allocation15 + $0x7b0] sm:$0xff]
    %v8115 = vld [vmem:[#allocation15 + $0x7b8] sm:$0xff]
    %v8116 = vld [vmem:[#allocation15 + $0x7c0] sm:$0xff]
    %v8117 = vld [vmem:[#allocation15 + $0x7c8] sm:$0xff]
    %v8118 = vld [vmem:[#allocation15 + $0x7d0] sm:$0xff]
    %v8119 = vld [vmem:[#allocation15 + $0x7d8] sm:$0xff]
    %v8120 = vld [vmem:[#allocation15 + $0x7e0] sm:$0xff]
    %v8121 = vld [vmem:[#allocation15 + $0x7e8] sm:$0xff]
    %v8122 = vld [vmem:[#allocation15 + $0x7f0] sm:$0xff]
    %v8123 = vld [vmem:[#allocation15 + $0x7f8] sm:$0xff]
    %v8124 = vld [vmem:[%s14] sm:$0xf]
    %v8126 = vperm.slane %v8124, 0
    %v8127 = vperm.slane %v8124, 1
    %v8128 = vperm.slane %v8124, 2
    %v8129 = vperm.slane %v8124, 3
    %v8390 = vunpack.c.l.b16 %v7868
    %v8391 = vunpack.c.h.b16 %v7868
    %v8392 = vunpack.c.l.b16 %v7869
    %v8393 = vunpack.c.h.b16 %v7869
    %v8394 = vunpack.c.l.b16 %v7870
    %v8395 = vunpack.c.h.b16 %v7870
    %v8396 = vunpack.c.l.b16 %v7871
    %v8397 = vunpack.c.h.b16 %v7871
    %v8398 = vunpack.c.l.b16 %v7872
    %v8399 = vunpack.c.h.b16 %v7872
    %v8400 = vunpack.c.l.b16 %v7873
    %v8401 = vunpack.c.h.b16 %v7873
    %v8402 = vunpack.c.l.b16 %v7874
    %v8403 = vunpack.c.h.b16 %v7874
    %v8404 = vunpack.c.l.b16 %v7875
    %v8405 = vunpack.c.h.b16 %v7875
    %v8406 = vunpack.c.l.b16 %v7876
    %v8407 = vunpack.c.h.b16 %v7876
    %v8408 = vunpack.c.l.b16 %v7877
    %v8409 = vunpack.c.h.b16 %v7877
    %v8410 = vunpack.c.l.b16 %v7878
    %v8411 = vunpack.c.h.b16 %v7878
    %v8412 = vunpack.c.l.b16 %v7879
    %v8413 = vunpack.c.h.b16 %v7879
    %v8414 = vunpack.c.l.b16 %v7880
    %v8415 = vunpack.c.h.b16 %v7880
    %v8416 = vunpack.c.l.b16 %v7881
    %v8417 = vunpack.c.h.b16 %v7881
    %v8418 = vunpack.c.l.b16 %v7882
    %v8419 = vunpack.c.h.b16 %v7882
    %v8420 = vunpack.c.l.b16 %v7883
    %v8421 = vunpack.c.h.b16 %v7883
    %v8422 = vunpack.c.l.b16 %v7884
    %v8423 = vunpack.c.h.b16 %v7884
    %v8424 = vunpack.c.l.b16 %v7885
    %v8425 = vunpack.c.h.b16 %v7885
    %v8426 = vunpack.c.l.b16 %v7886
    %v8427 = vunpack.c.h.b16 %v7886
    %v8428 = vunpack.c.l.b16 %v7887
    %v8429 = vunpack.c.h.b16 %v7887
    %v8430 = vunpack.c.l.b16 %v7888
    %v8431 = vunpack.c.h.b16 %v7888
    %v8432 = vunpack.c.l.b16 %v7889
    %v8433 = vunpack.c.h.b16 %v7889
    %v8434 = vunpack.c.l.b16 %v7890
    %v8435 = vunpack.c.h.b16 %v7890
    %v8436 = vunpack.c.l.b16 %v7891
    %v8437 = vunpack.c.h.b16 %v7891
    %v8438 = vunpack.c.l.b16 %v7892
    %v8439 = vunpack.c.h.b16 %v7892
    %v8440 = vunpack.c.l.b16 %v7893
    %v8441 = vunpack.c.h.b16 %v7893
    %v8442 = vunpack.c.l.b16 %v7894
    %v8443 = vunpack.c.h.b16 %v7894
    %v8444 = vunpack.c.l.b16 %v7895
    %v8445 = vunpack.c.h.b16 %v7895
    %v8446 = vunpack.c.l.b16 %v7896
    %v8447 = vunpack.c.h.b16 %v7896
    %v8448 = vunpack.c.l.b16 %v7897
    %v8449 = vunpack.c.h.b16 %v7897
    %v8450 = vunpack.c.l.b16 %v7898
    %v8451 = vunpack.c.h.b16 %v7898
    %v8452 = vunpack.c.l.b16 %v7899
    %v8453 = vunpack.c.h.b16 %v7899
    %v8454 = vunpack.c.l.b16 %v7900
    %v8455 = vunpack.c.h.b16 %v7900
    %v8456 = vunpack.c.l.b16 %v7901
    %v8457 = vunpack.c.h.b16 %v7901
    %v8458 = vunpack.c.l.b16 %v7902
    %v8459 = vunpack.c.h.b16 %v7902
    %v8460 = vunpack.c.l.b16 %v7903
    %v8461 = vunpack.c.h.b16 %v7903
    %v8462 = vunpack.c.l.b16 %v7904
    %v8463 = vunpack.c.h.b16 %v7904
    %v8464 = vunpack.c.l.b16 %v7905
    %v8465 = vunpack.c.h.b16 %v7905
    %v8466 = vunpack.c.l.b16 %v7906
    %v8467 = vunpack.c.h.b16 %v7906
    %v8468 = vunpack.c.l.b16 %v7907
    %v8469 = vunpack.c.h.b16 %v7907
    %v8470 = vunpack.c.l.b16 %v7908
    %v8471 = vunpack.c.h.b16 %v7908
    %v8472 = vunpack.c.l.b16 %v7909
    %v8473 = vunpack.c.h.b16 %v7909
    %v8474 = vunpack.c.l.b16 %v7910
    %v8475 = vunpack.c.h.b16 %v7910
    %v8476 = vunpack.c.l.b16 %v7911
    %v8477 = vunpack.c.h.b16 %v7911
    %v8478 = vunpack.c.l.b16 %v7912
    %v8479 = vunpack.c.h.b16 %v7912
    %v8480 = vunpack.c.l.b16 %v7913
    %v8481 = vunpack.c.h.b16 %v7913
    %v8482 = vunpack.c.l.b16 %v7914
    %v8483 = vunpack.c.h.b16 %v7914
    %v8484 = vunpack.c.l.b16 %v7915
    %v8485 = vunpack.c.h.b16 %v7915
    %v8486 = vunpack.c.l.b16 %v7916
    %v8487 = vunpack.c.h.b16 %v7916
    %v8488 = vunpack.c.l.b16 %v7917
    %v8489 = vunpack.c.h.b16 %v7917
    %v8490 = vunpack.c.l.b16 %v7918
    %v8491 = vunpack.c.h.b16 %v7918
    %v8492 = vunpack.c.l.b16 %v7919
    %v8493 = vunpack.c.h.b16 %v7919
    %v8494 = vunpack.c.l.b16 %v7920
    %v8495 = vunpack.c.h.b16 %v7920
    %v8496 = vunpack.c.l.b16 %v7921
    %v8497 = vunpack.c.h.b16 %v7921
    %v8498 = vunpack.c.l.b16 %v7922
    %v8499 = vunpack.c.h.b16 %v7922
    %v8500 = vunpack.c.l.b16 %v7923
    %v8501 = vunpack.c.h.b16 %v7923
    %v8502 = vunpack.c.l.b16 %v7924
    %v8503 = vunpack.c.h.b16 %v7924
    %v8504 = vunpack.c.l.b16 %v7925
    %v8505 = vunpack.c.h.b16 %v7925
    %v8506 = vunpack.c.l.b16 %v7926
    %v8507 = vunpack.c.h.b16 %v7926
    %v8508 = vunpack.c.l.b16 %v7927
    %v8509 = vunpack.c.h.b16 %v7927
    %v8510 = vunpack.c.l.b16 %v7928
    %v8511 = vunpack.c.h.b16 %v7928
    %v8512 = vunpack.c.l.b16 %v7929
    %v8513 = vunpack.c.h.b16 %v7929
    %v8514 = vunpack.c.l.b16 %v7930
    %v8515 = vunpack.c.h.b16 %v7930
    %v8516 = vunpack.c.l.b16 %v7931
    %v8517 = vunpack.c.h.b16 %v7931
    %v8518 = vunpack.c.l.b16 %v7932
    %v8519 = vunpack.c.h.b16 %v7932
    %v8520 = vunpack.c.l.b16 %v7933
    %v8521 = vunpack.c.h.b16 %v7933
    %v8522 = vunpack.c.l.b16 %v7934
    %v8523 = vunpack.c.h.b16 %v7934
    %v8524 = vunpack.c.l.b16 %v7935
    %v8525 = vunpack.c.h.b16 %v7935
    %v8526 = vunpack.c.l.b16 %v7936
    %v8527 = vunpack.c.h.b16 %v7936
    %v8528 = vunpack.c.l.b16 %v7937
    %v8529 = vunpack.c.h.b16 %v7937
    %v8530 = vunpack.c.l.b16 %v7938
    %v8531 = vunpack.c.h.b16 %v7938
    %v8532 = vunpack.c.l.b16 %v7939
    %v8533 = vunpack.c.h.b16 %v7939
    %v8534 = vunpack.c.l.b16 %v7940
    %v8535 = vunpack.c.h.b16 %v7940
    %v8536 = vunpack.c.l.b16 %v7941
    %v8537 = vunpack.c.h.b16 %v7941
    %v8538 = vunpack.c.l.b16 %v7942
    %v8539 = vunpack.c.h.b16 %v7942
    %v8540 = vunpack.c.l.b16 %v7943
    %v8541 = vunpack.c.h.b16 %v7943
    %v8542 = vunpack.c.l.b16 %v7944
    %v8543 = vunpack.c.h.b16 %v7944
    %v8544 = vunpack.c.l.b16 %v7945
    %v8545 = vunpack.c.h.b16 %v7945
    %v8546 = vunpack.c.l.b16 %v7946
    %v8547 = vunpack.c.h.b16 %v7946
    %v8548 = vunpack.c.l.b16 %v7947
    %v8549 = vunpack.c.h.b16 %v7947
    %v8550 = vunpack.c.l.b16 %v7948
    %v8551 = vunpack.c.h.b16 %v7948
    %v8552 = vunpack.c.l.b16 %v7949
    %v8553 = vunpack.c.h.b16 %v7949
    %v8554 = vunpack.c.l.b16 %v7950
    %v8555 = vunpack.c.h.b16 %v7950
    %v8556 = vunpack.c.l.b16 %v7951
    %v8557 = vunpack.c.h.b16 %v7951
    %v8558 = vunpack.c.l.b16 %v7952
    %v8559 = vunpack.c.h.b16 %v7952
    %v8560 = vunpack.c.l.b16 %v7953
    %v8561 = vunpack.c.h.b16 %v7953
    %v8562 = vunpack.c.l.b16 %v7954
    %v8563 = vunpack.c.h.b16 %v7954
    %v8564 = vunpack.c.l.b16 %v7955
    %v8565 = vunpack.c.h.b16 %v7955
    %v8566 = vunpack.c.l.b16 %v7956
    %v8567 = vunpack.c.h.b16 %v7956
    %v8568 = vunpack.c.l.b16 %v7957
    %v8569 = vunpack.c.h.b16 %v7957
    %v8570 = vunpack.c.l.b16 %v7958
    %v8571 = vunpack.c.h.b16 %v7958
    %v8572 = vunpack.c.l.b16 %v7959
    %v8573 = vunpack.c.h.b16 %v7959
    %v8574 = vunpack.c.l.b16 %v7960
    %v8575 = vunpack.c.h.b16 %v7960
    %v8576 = vunpack.c.l.b16 %v7961
    %v8577 = vunpack.c.h.b16 %v7961
    %v8578 = vunpack.c.l.b16 %v7962
    %v8579 = vunpack.c.h.b16 %v7962
    %v8580 = vunpack.c.l.b16 %v7963
    %v8581 = vunpack.c.h.b16 %v7963
    %v8582 = vunpack.c.l.b16 %v7964
    %v8583 = vunpack.c.h.b16 %v7964
    %v8584 = vunpack.c.l.b16 %v7965
    %v8585 = vunpack.c.h.b16 %v7965
    %v8586 = vunpack.c.l.b16 %v7966
    %v8587 = vunpack.c.h.b16 %v7966
    %v8588 = vunpack.c.l.b16 %v7967
    %v8589 = vunpack.c.h.b16 %v7967
    %v8590 = vunpack.c.l.b16 %v7968
    %v8591 = vunpack.c.h.b16 %v7968
    %v8592 = vunpack.c.l.b16 %v7969
    %v8593 = vunpack.c.h.b16 %v7969
    %v8594 = vunpack.c.l.b16 %v7970
    %v8595 = vunpack.c.h.b16 %v7970
    %v8596 = vunpack.c.l.b16 %v7971
    %v8597 = vunpack.c.h.b16 %v7971
    %v8598 = vunpack.c.l.b16 %v7972
    %v8599 = vunpack.c.h.b16 %v7972
    %v8600 = vunpack.c.l.b16 %v7973
    %v8601 = vunpack.c.h.b16 %v7973
    %v8602 = vunpack.c.l.b16 %v7974
    %v8603 = vunpack.c.h.b16 %v7974
    %v8604 = vunpack.c.l.b16 %v7975
    %v8605 = vunpack.c.h.b16 %v7975
    %v8606 = vunpack.c.l.b16 %v7976
    %v8607 = vunpack.c.h.b16 %v7976
    %v8608 = vunpack.c.l.b16 %v7977
    %v8609 = vunpack.c.h.b16 %v7977
    %v8610 = vunpack.c.l.b16 %v7978
    %v8611 = vunpack.c.h.b16 %v7978
    %v8612 = vunpack.c.l.b16 %v7979
    %v8613 = vunpack.c.h.b16 %v7979
    %v8614 = vunpack.c.l.b16 %v7980
    %v8615 = vunpack.c.h.b16 %v7980
    %v8616 = vunpack.c.l.b16 %v7981
    %v8617 = vunpack.c.h.b16 %v7981
    %v8618 = vunpack.c.l.b16 %v7982
    %v8619 = vunpack.c.h.b16 %v7982
    %v8620 = vunpack.c.l.b16 %v7983
    %v8621 = vunpack.c.h.b16 %v7983
    %v8622 = vunpack.c.l.b16 %v7984
    %v8623 = vunpack.c.h.b16 %v7984
    %v8624 = vunpack.c.l.b16 %v7985
    %v8625 = vunpack.c.h.b16 %v7985
    %v8626 = vunpack.c.l.b16 %v7986
    %v8627 = vunpack.c.h.b16 %v7986
    %v8628 = vunpack.c.l.b16 %v7987
    %v8629 = vunpack.c.h.b16 %v7987
    %v8630 = vunpack.c.l.b16 %v7988
    %v8631 = vunpack.c.h.b16 %v7988
    %v8632 = vunpack.c.l.b16 %v7989
    %v8633 = vunpack.c.h.b16 %v7989
    %v8634 = vunpack.c.l.b16 %v7990
    %v8635 = vunpack.c.h.b16 %v7990
    %v8636 = vunpack.c.l.b16 %v7991
    %v8637 = vunpack.c.h.b16 %v7991
    %v8638 = vunpack.c.l.b16 %v7992
    %v8639 = vunpack.c.h.b16 %v7992
    %v8640 = vunpack.c.l.b16 %v7993
    %v8641 = vunpack.c.h.b16 %v7993
    %v8642 = vunpack.c.l.b16 %v7994
    %v8643 = vunpack.c.h.b16 %v7994
    %v8644 = vunpack.c.l.b16 %v7995
    %v8645 = vunpack.c.h.b16 %v7995
    %v8646 = vunpack.c.l.b16 %v7996
    %v8647 = vunpack.c.h.b16 %v7996
    %v8648 = vunpack.c.l.b16 %v7997
    %v8649 = vunpack.c.h.b16 %v7997
    %v8650 = vunpack.c.l.b16 %v7998
    %v8651 = vunpack.c.h.b16 %v7998
    %v8652 = vunpack.c.l.b16 %v7999
    %v8653 = vunpack.c.h.b16 %v7999
    %v8654 = vunpack.c.l.b16 %v8000
    %v8655 = vunpack.c.h.b16 %v8000
    %v8656 = vunpack.c.l.b16 %v8001
    %v8657 = vunpack.c.h.b16 %v8001
    %v8658 = vunpack.c.l.b16 %v8002
    %v8659 = vunpack.c.h.b16 %v8002
    %v8660 = vunpack.c.l.b16 %v8003
    %v8661 = vunpack.c.h.b16 %v8003
    %v8662 = vunpack.c.l.b16 %v8004
    %v8663 = vunpack.c.h.b16 %v8004
    %v8664 = vunpack.c.l.b16 %v8005
    %v8665 = vunpack.c.h.b16 %v8005
    %v8666 = vunpack.c.l.b16 %v8006
    %v8667 = vunpack.c.h.b16 %v8006
    %v8668 = vunpack.c.l.b16 %v8007
    %v8669 = vunpack.c.h.b16 %v8007
    %v8670 = vunpack.c.l.b16 %v8008
    %v8671 = vunpack.c.h.b16 %v8008
    %v8672 = vunpack.c.l.b16 %v8009
    %v8673 = vunpack.c.h.b16 %v8009
    %v8674 = vunpack.c.l.b16 %v8010
    %v8675 = vunpack.c.h.b16 %v8010
    %v8676 = vunpack.c.l.b16 %v8011
    %v8677 = vunpack.c.h.b16 %v8011
    %v8678 = vunpack.c.l.b16 %v8012
    %v8679 = vunpack.c.h.b16 %v8012
    %v8680 = vunpack.c.l.b16 %v8013
    %v8681 = vunpack.c.h.b16 %v8013
    %v8682 = vunpack.c.l.b16 %v8014
    %v8683 = vunpack.c.h.b16 %v8014
    %v8684 = vunpack.c.l.b16 %v8015
    %v8685 = vunpack.c.h.b16 %v8015
    %v8686 = vunpack.c.l.b16 %v8016
    %v8687 = vunpack.c.h.b16 %v8016
    %v8688 = vunpack.c.l.b16 %v8017
    %v8689 = vunpack.c.h.b16 %v8017
    %v8690 = vunpack.c.l.b16 %v8018
    %v8691 = vunpack.c.h.b16 %v8018
    %v8692 = vunpack.c.l.b16 %v8019
    %v8693 = vunpack.c.h.b16 %v8019
    %v8694 = vunpack.c.l.b16 %v8020
    %v8695 = vunpack.c.h.b16 %v8020
    %v8696 = vunpack.c.l.b16 %v8021
    %v8697 = vunpack.c.h.b16 %v8021
    %v8698 = vunpack.c.l.b16 %v8022
    %v8699 = vunpack.c.h.b16 %v8022
    %v8700 = vunpack.c.l.b16 %v8023
    %v8701 = vunpack.c.h.b16 %v8023
    %v8702 = vunpack.c.l.b16 %v8024
    %v8703 = vunpack.c.h.b16 %v8024
    %v8704 = vunpack.c.l.b16 %v8025
    %v8705 = vunpack.c.h.b16 %v8025
    %v8706 = vunpack.c.l.b16 %v8026
    %v8707 = vunpack.c.h.b16 %v8026
    %v8708 = vunpack.c.l.b16 %v8027
    %v8709 = vunpack.c.h.b16 %v8027
    %v8710 = vunpack.c.l.b16 %v8028
    %v8711 = vunpack.c.h.b16 %v8028
    %v8712 = vunpack.c.l.b16 %v8029
    %v8713 = vunpack.c.h.b16 %v8029
    %v8714 = vunpack.c.l.b16 %v8030
    %v8715 = vunpack.c.h.b16 %v8030
    %v8716 = vunpack.c.l.b16 %v8031
    %v8717 = vunpack.c.h.b16 %v8031
    %v8718 = vunpack.c.l.b16 %v8032
    %v8719 = vunpack.c.h.b16 %v8032
    %v8720 = vunpack.c.l.b16 %v8033
    %v8721 = vunpack.c.h.b16 %v8033
    %v8722 = vunpack.c.l.b16 %v8034
    %v8723 = vunpack.c.h.b16 %v8034
    %v8724 = vunpack.c.l.b16 %v8035
    %v8725 = vunpack.c.h.b16 %v8035
    %v8726 = vunpack.c.l.b16 %v8036
    %v8727 = vunpack.c.h.b16 %v8036
    %v8728 = vunpack.c.l.b16 %v8037
    %v8729 = vunpack.c.h.b16 %v8037
    %v8730 = vunpack.c.l.b16 %v8038
    %v8731 = vunpack.c.h.b16 %v8038
    %v8732 = vunpack.c.l.b16 %v8039
    %v8733 = vunpack.c.h.b16 %v8039
    %v8734 = vunpack.c.l.b16 %v8040
    %v8735 = vunpack.c.h.b16 %v8040
    %v8736 = vunpack.c.l.b16 %v8041
    %v8737 = vunpack.c.h.b16 %v8041
    %v8738 = vunpack.c.l.b16 %v8042
    %v8739 = vunpack.c.h.b16 %v8042
    %v8740 = vunpack.c.l.b16 %v8043
    %v8741 = vunpack.c.h.b16 %v8043
    %v8742 = vunpack.c.l.b16 %v8044
    %v8743 = vunpack.c.h.b16 %v8044
    %v8744 = vunpack.c.l.b16 %v8045
    %v8745 = vunpack.c.h.b16 %v8045
    %v8746 = vunpack.c.l.b16 %v8046
    %v8747 = vunpack.c.h.b16 %v8046
    %v8748 = vunpack.c.l.b16 %v8047
    %v8749 = vunpack.c.h.b16 %v8047
    %v8750 = vunpack.c.l.b16 %v8048
    %v8751 = vunpack.c.h.b16 %v8048
    %v8752 = vunpack.c.l.b16 %v8049
    %v8753 = vunpack.c.h.b16 %v8049
    %v8754 = vunpack.c.l.b16 %v8050
    %v8755 = vunpack.c.h.b16 %v8050
    %v8756 = vunpack.c.l.b16 %v8051
    %v8757 = vunpack.c.h.b16 %v8051
    %v8758 = vunpack.c.l.b16 %v8052
    %v8759 = vunpack.c.h.b16 %v8052
    %v8760 = vunpack.c.l.b16 %v8053
    %v8761 = vunpack.c.h.b16 %v8053
    %v8762 = vunpack.c.l.b16 %v8054
    %v8763 = vunpack.c.h.b16 %v8054
    %v8764 = vunpack.c.l.b16 %v8055
    %v8765 = vunpack.c.h.b16 %v8055
    %v8766 = vunpack.c.l.b16 %v8056
    %v8767 = vunpack.c.h.b16 %v8056
    %v8768 = vunpack.c.l.b16 %v8057
    %v8769 = vunpack.c.h.b16 %v8057
    %v8770 = vunpack.c.l.b16 %v8058
    %v8771 = vunpack.c.h.b16 %v8058
    %v8772 = vunpack.c.l.b16 %v8059
    %v8773 = vunpack.c.h.b16 %v8059
    %v8774 = vunpack.c.l.b16 %v8060
    %v8775 = vunpack.c.h.b16 %v8060
    %v8776 = vunpack.c.l.b16 %v8061
    %v8777 = vunpack.c.h.b16 %v8061
    %v8778 = vunpack.c.l.b16 %v8062
    %v8779 = vunpack.c.h.b16 %v8062
    %v8780 = vunpack.c.l.b16 %v8063
    %v8781 = vunpack.c.h.b16 %v8063
    %v8782 = vunpack.c.l.b16 %v8064
    %v8783 = vunpack.c.h.b16 %v8064
    %v8784 = vunpack.c.l.b16 %v8065
    %v8785 = vunpack.c.h.b16 %v8065
    %v8786 = vunpack.c.l.b16 %v8066
    %v8787 = vunpack.c.h.b16 %v8066
    %v8788 = vunpack.c.l.b16 %v8067
    %v8789 = vunpack.c.h.b16 %v8067
    %v8790 = vunpack.c.l.b16 %v8068
    %v8791 = vunpack.c.h.b16 %v8068
    %v8792 = vunpack.c.l.b16 %v8069
    %v8793 = vunpack.c.h.b16 %v8069
    %v8794 = vunpack.c.l.b16 %v8070
    %v8795 = vunpack.c.h.b16 %v8070
    %v8796 = vunpack.c.l.b16 %v8071
    %v8797 = vunpack.c.h.b16 %v8071
    %v8798 = vunpack.c.l.b16 %v8072
    %v8799 = vunpack.c.h.b16 %v8072
    %v8800 = vunpack.c.l.b16 %v8073
    %v8801 = vunpack.c.h.b16 %v8073
    %v8802 = vunpack.c.l.b16 %v8074
    %v8803 = vunpack.c.h.b16 %v8074
    %v8804 = vunpack.c.l.b16 %v8075
    %v8805 = vunpack.c.h.b16 %v8075
    %v8806 = vunpack.c.l.b16 %v8076
    %v8807 = vunpack.c.h.b16 %v8076
    %v8808 = vunpack.c.l.b16 %v8077
    %v8809 = vunpack.c.h.b16 %v8077
    %v8810 = vunpack.c.l.b16 %v8078
    %v8811 = vunpack.c.h.b16 %v8078
    %v8812 = vunpack.c.l.b16 %v8079
    %v8813 = vunpack.c.h.b16 %v8079
    %v8814 = vunpack.c.l.b16 %v8080
    %v8815 = vunpack.c.h.b16 %v8080
    %v8816 = vunpack.c.l.b16 %v8081
    %v8817 = vunpack.c.h.b16 %v8081
    %v8818 = vunpack.c.l.b16 %v8082
    %v8819 = vunpack.c.h.b16 %v8082
    %v8820 = vunpack.c.l.b16 %v8083
    %v8821 = vunpack.c.h.b16 %v8083
    %v8822 = vunpack.c.l.b16 %v8084
    %v8823 = vunpack.c.h.b16 %v8084
    %v8824 = vunpack.c.l.b16 %v8085
    %v8825 = vunpack.c.h.b16 %v8085
    %v8826 = vunpack.c.l.b16 %v8086
    %v8827 = vunpack.c.h.b16 %v8086
    %v8828 = vunpack.c.l.b16 %v8087
    %v8829 = vunpack.c.h.b16 %v8087
    %v8830 = vunpack.c.l.b16 %v8088
    %v8831 = vunpack.c.h.b16 %v8088
    %v8832 = vunpack.c.l.b16 %v8089
    %v8833 = vunpack.c.h.b16 %v8089
    %v8834 = vunpack.c.l.b16 %v8090
    %v8835 = vunpack.c.h.b16 %v8090
    %v8836 = vunpack.c.l.b16 %v8091
    %v8837 = vunpack.c.h.b16 %v8091
    %v8838 = vunpack.c.l.b16 %v8092
    %v8839 = vunpack.c.h.b16 %v8092
    %v8840 = vunpack.c.l.b16 %v8093
    %v8841 = vunpack.c.h.b16 %v8093
    %v8842 = vunpack.c.l.b16 %v8094
    %v8843 = vunpack.c.h.b16 %v8094
    %v8844 = vunpack.c.l.b16 %v8095
    %v8845 = vunpack.c.h.b16 %v8095
    %v8846 = vunpack.c.l.b16 %v8096
    %v8847 = vunpack.c.h.b16 %v8096
    %v8848 = vunpack.c.l.b16 %v8097
    %v8849 = vunpack.c.h.b16 %v8097
    %v8850 = vunpack.c.l.b16 %v8098
    %v8851 = vunpack.c.h.b16 %v8098
    %v8852 = vunpack.c.l.b16 %v8099
    %v8853 = vunpack.c.h.b16 %v8099
    %v8854 = vunpack.c.l.b16 %v8100
    %v8855 = vunpack.c.h.b16 %v8100
    %v8856 = vunpack.c.l.b16 %v8101
    %v8857 = vunpack.c.h.b16 %v8101
    %v8858 = vunpack.c.l.b16 %v8102
    %v8859 = vunpack.c.h.b16 %v8102
    %v8860 = vunpack.c.l.b16 %v8103
    %v8861 = vunpack.c.h.b16 %v8103
    %v8862 = vunpack.c.l.b16 %v8104
    %v8863 = vunpack.c.h.b16 %v8104
    %v8864 = vunpack.c.l.b16 %v8105
    %v8865 = vunpack.c.h.b16 %v8105
    %v8866 = vunpack.c.l.b16 %v8106
    %v8867 = vunpack.c.h.b16 %v8106
    %v8868 = vunpack.c.l.b16 %v8107
    %v8869 = vunpack.c.h.b16 %v8107
    %v8870 = vunpack.c.l.b16 %v8108
    %v8871 = vunpack.c.h.b16 %v8108
    %v8872 = vunpack.c.l.b16 %v8109
    %v8873 = vunpack.c.h.b16 %v8109
    %v8874 = vunpack.c.l.b16 %v8110
    %v8875 = vunpack.c.h.b16 %v8110
    %v8876 = vunpack.c.l.b16 %v8111
    %v8877 = vunpack.c.h.b16 %v8111
    %v8878 = vunpack.c.l.b16 %v8112
    %v8879 = vunpack.c.h.b16 %v8112
    %v8880 = vunpack.c.l.b16 %v8113
    %v8881 = vunpack.c.h.b16 %v8113
    %v8882 = vunpack.c.l.b16 %v8114
    %v8883 = vunpack.c.h.b16 %v8114
    %v8884 = vunpack.c.l.b16 %v8115
    %v8885 = vunpack.c.h.b16 %v8115
    %v8886 = vunpack.c.l.b16 %v8116
    %v8887 = vunpack.c.h.b16 %v8116
    %v8888 = vunpack.c.l.b16 %v8117
    %v8889 = vunpack.c.h.b16 %v8117
    %v8890 = vunpack.c.l.b16 %v8118
    %v8891 = vunpack.c.h.b16 %v8118
    %v8892 = vunpack.c.l.b16 %v8119
    %v8893 = vunpack.c.h.b16 %v8119
    %v8894 = vunpack.c.l.b16 %v8120
    %v8895 = vunpack.c.h.b16 %v8120
    %v8896 = vunpack.c.l.b16 %v8121
    %v8897 = vunpack.c.h.b16 %v8121
    %v8898 = vunpack.c.l.b16 %v8122
    %v8899 = vunpack.c.h.b16 %v8122
    %v8900 = vunpack.c.l.b16 %v8123
    %v8901 = vunpack.c.h.b16 %v8123
    %v8902 = vpack.c.b16 %v8394, %v8390
    %v8903 = vpack.c.b16 %v8395, %v8391
    %v8904 = vpack.c.b16 %v8396, %v8392
    %v8905 = vpack.c.b16 %v8397, %v8393
    %v8906 = vpack.c.b16 %v8402, %v8398
    %v8907 = vpack.c.b16 %v8403, %v8399
    %v8908 = vpack.c.b16 %v8404, %v8400
    %v8909 = vpack.c.b16 %v8405, %v8401
    %v8910 = vpack.c.b16 %v8410, %v8406
    %v8911 = vpack.c.b16 %v8411, %v8407
    %v8912 = vpack.c.b16 %v8412, %v8408
    %v8913 = vpack.c.b16 %v8413, %v8409
    %v8914 = vpack.c.b16 %v8418, %v8414
    %v8915 = vpack.c.b16 %v8419, %v8415
    %v8916 = vpack.c.b16 %v8420, %v8416
    %v8917 = vpack.c.b16 %v8421, %v8417
    %v8918 = vpack.c.b16 %v8426, %v8422
    %v8919 = vpack.c.b16 %v8427, %v8423
    %v8920 = vpack.c.b16 %v8428, %v8424
    %v8921 = vpack.c.b16 %v8429, %v8425
    %v8922 = vpack.c.b16 %v8434, %v8430
    %v8923 = vpack.c.b16 %v8435, %v8431
    %v8924 = vpack.c.b16 %v8436, %v8432
    %v8925 = vpack.c.b16 %v8437, %v8433
    %v8926 = vpack.c.b16 %v8442, %v8438
    %v8927 = vpack.c.b16 %v8443, %v8439
    %v8928 = vpack.c.b16 %v8444, %v8440
    %v8929 = vpack.c.b16 %v8445, %v8441
    %v8930 = vpack.c.b16 %v8450, %v8446
    %v8931 = vpack.c.b16 %v8451, %v8447
    %v8932 = vpack.c.b16 %v8452, %v8448
    %v8933 = vpack.c.b16 %v8453, %v8449
    %v8934 = vpack.c.b16 %v8458, %v8454
    %v8935 = vpack.c.b16 %v8459, %v8455
    %v8936 = vpack.c.b16 %v8460, %v8456
    %v8937 = vpack.c.b16 %v8461, %v8457
    %v8938 = vpack.c.b16 %v8466, %v8462
    %v8939 = vpack.c.b16 %v8467, %v8463
    %v8940 = vpack.c.b16 %v8468, %v8464
    %v8941 = vpack.c.b16 %v8469, %v8465
    %v8942 = vpack.c.b16 %v8474, %v8470
    %v8943 = vpack.c.b16 %v8475, %v8471
    %v8944 = vpack.c.b16 %v8476, %v8472
    %v8945 = vpack.c.b16 %v8477, %v8473
    %v8946 = vpack.c.b16 %v8482, %v8478
    %v8947 = vpack.c.b16 %v8483, %v8479
    %v8948 = vpack.c.b16 %v8484, %v8480
    %v8949 = vpack.c.b16 %v8485, %v8481
    %v8950 = vpack.c.b16 %v8490, %v8486
    %v8951 = vpack.c.b16 %v8491, %v8487
    %v8952 = vpack.c.b16 %v8492, %v8488
    %v8953 = vpack.c.b16 %v8493, %v8489
    %v8954 = vpack.c.b16 %v8498, %v8494
    %v8955 = vpack.c.b16 %v8499, %v8495
    %v8956 = vpack.c.b16 %v8500, %v8496
    %v8957 = vpack.c.b16 %v8501, %v8497
    %v8958 = vpack.c.b16 %v8506, %v8502
    %v8959 = vpack.c.b16 %v8507, %v8503
    %v8960 = vpack.c.b16 %v8508, %v8504
    %v8961 = vpack.c.b16 %v8509, %v8505
    %v8962 = vpack.c.b16 %v8514, %v8510
    %v8963 = vpack.c.b16 %v8515, %v8511
    %v8964 = vpack.c.b16 %v8516, %v8512
    %v8965 = vpack.c.b16 %v8517, %v8513
    %v8966 = vpack.c.b16 %v8522, %v8518
    %v8967 = vpack.c.b16 %v8523, %v8519
    %v8968 = vpack.c.b16 %v8524, %v8520
    %v8969 = vpack.c.b16 %v8525, %v8521
    %v8970 = vpack.c.b16 %v8530, %v8526
    %v8971 = vpack.c.b16 %v8531, %v8527
    %v8972 = vpack.c.b16 %v8532, %v8528
    %v8973 = vpack.c.b16 %v8533, %v8529
    %v8974 = vpack.c.b16 %v8538, %v8534
    %v8975 = vpack.c.b16 %v8539, %v8535
    %v8976 = vpack.c.b16 %v8540, %v8536
    %v8977 = vpack.c.b16 %v8541, %v8537
    %v8978 = vpack.c.b16 %v8546, %v8542
    %v8979 = vpack.c.b16 %v8547, %v8543
    %v8980 = vpack.c.b16 %v8548, %v8544
    %v8981 = vpack.c.b16 %v8549, %v8545
    %v8982 = vpack.c.b16 %v8554, %v8550
    %v8983 = vpack.c.b16 %v8555, %v8551
    %v8984 = vpack.c.b16 %v8556, %v8552
    %v8985 = vpack.c.b16 %v8557, %v8553
    %v8986 = vpack.c.b16 %v8562, %v8558
    %v8987 = vpack.c.b16 %v8563, %v8559
    %v8988 = vpack.c.b16 %v8564, %v8560
    %v8989 = vpack.c.b16 %v8565, %v8561
    %v8990 = vpack.c.b16 %v8570, %v8566
    %v8991 = vpack.c.b16 %v8571, %v8567
    %v8992 = vpack.c.b16 %v8572, %v8568
    %v8993 = vpack.c.b16 %v8573, %v8569
    %v8994 = vpack.c.b16 %v8578, %v8574
    %v8995 = vpack.c.b16 %v8579, %v8575
    %v8996 = vpack.c.b16 %v8580, %v8576
    %v8997 = vpack.c.b16 %v8581, %v8577
    %v8998 = vpack.c.b16 %v8586, %v8582
    %v8999 = vpack.c.b16 %v8587, %v8583
    %v9000 = vpack.c.b16 %v8588, %v8584
    %v9001 = vpack.c.b16 %v8589, %v8585
    %v9002 = vpack.c.b16 %v8594, %v8590
    %v9003 = vpack.c.b16 %v8595, %v8591
    %v9004 = vpack.c.b16 %v8596, %v8592
    %v9005 = vpack.c.b16 %v8597, %v8593
    %v9006 = vpack.c.b16 %v8602, %v8598
    %v9007 = vpack.c.b16 %v8603, %v8599
    %v9008 = vpack.c.b16 %v8604, %v8600
    %v9009 = vpack.c.b16 %v8605, %v8601
    %v9010 = vpack.c.b16 %v8610, %v8606
    %v9011 = vpack.c.b16 %v8611, %v8607
    %v9012 = vpack.c.b16 %v8612, %v8608
    %v9013 = vpack.c.b16 %v8613, %v8609
    %v9014 = vpack.c.b16 %v8618, %v8614
    %v9015 = vpack.c.b16 %v8619, %v8615
    %v9016 = vpack.c.b16 %v8620, %v8616
    %v9017 = vpack.c.b16 %v8621, %v8617
    %v9018 = vpack.c.b16 %v8626, %v8622
    %v9019 = vpack.c.b16 %v8627, %v8623
    %v9020 = vpack.c.b16 %v8628, %v8624
    %v9021 = vpack.c.b16 %v8629, %v8625
    %v9022 = vpack.c.b16 %v8634, %v8630
    %v9023 = vpack.c.b16 %v8635, %v8631
    %v9024 = vpack.c.b16 %v8636, %v8632
    %v9025 = vpack.c.b16 %v8637, %v8633
    %v9026 = vpack.c.b16 %v8642, %v8638
    %v9027 = vpack.c.b16 %v8643, %v8639
    %v9028 = vpack.c.b16 %v8644, %v8640
    %v9029 = vpack.c.b16 %v8645, %v8641
    %v9030 = vpack.c.b16 %v8650, %v8646
    %v9031 = vpack.c.b16 %v8651, %v8647
    %v9032 = vpack.c.b16 %v8652, %v8648
    %v9033 = vpack.c.b16 %v8653, %v8649
    %v9034 = vpack.c.b16 %v8658, %v8654
    %v9035 = vpack.c.b16 %v8659, %v8655
    %v9036 = vpack.c.b16 %v8660, %v8656
    %v9037 = vpack.c.b16 %v8661, %v8657
    %v9038 = vpack.c.b16 %v8666, %v8662
    %v9039 = vpack.c.b16 %v8667, %v8663
    %v9040 = vpack.c.b16 %v8668, %v8664
    %v9041 = vpack.c.b16 %v8669, %v8665
    %v9042 = vpack.c.b16 %v8674, %v8670
    %v9043 = vpack.c.b16 %v8675, %v8671
    %v9044 = vpack.c.b16 %v8676, %v8672
    %v9045 = vpack.c.b16 %v8677, %v8673
    %v9046 = vpack.c.b16 %v8682, %v8678
    %v9047 = vpack.c.b16 %v8683, %v8679
    %v9048 = vpack.c.b16 %v8684, %v8680
    %v9049 = vpack.c.b16 %v8685, %v8681
    %v9050 = vpack.c.b16 %v8690, %v8686
    %v9051 = vpack.c.b16 %v8691, %v8687
    %v9052 = vpack.c.b16 %v8692, %v8688
    %v9053 = vpack.c.b16 %v8693, %v8689
    %v9054 = vpack.c.b16 %v8698, %v8694
    %v9055 = vpack.c.b16 %v8699, %v8695
    %v9056 = vpack.c.b16 %v8700, %v8696
    %v9057 = vpack.c.b16 %v8701, %v8697
    %v9058 = vpack.c.b16 %v8706, %v8702
    %v9059 = vpack.c.b16 %v8707, %v8703
    %v9060 = vpack.c.b16 %v8708, %v8704
    %v9061 = vpack.c.b16 %v8709, %v8705
    %v9062 = vpack.c.b16 %v8714, %v8710
    %v9063 = vpack.c.b16 %v8715, %v8711
    %v9064 = vpack.c.b16 %v8716, %v8712
    %v9065 = vpack.c.b16 %v8717, %v8713
    %v9066 = vpack.c.b16 %v8722, %v8718
    %v9067 = vpack.c.b16 %v8723, %v8719
    %v9068 = vpack.c.b16 %v8724, %v8720
    %v9069 = vpack.c.b16 %v8725, %v8721
    %v9070 = vpack.c.b16 %v8730, %v8726
    %v9071 = vpack.c.b16 %v8731, %v8727
    %v9072 = vpack.c.b16 %v8732, %v8728
    %v9073 = vpack.c.b16 %v8733, %v8729
    %v9074 = vpack.c.b16 %v8738, %v8734
    %v9075 = vpack.c.b16 %v8739, %v8735
    %v9076 = vpack.c.b16 %v8740, %v8736
    %v9077 = vpack.c.b16 %v8741, %v8737
    %v9078 = vpack.c.b16 %v8746, %v8742
    %v9079 = vpack.c.b16 %v8747, %v8743
    %v9080 = vpack.c.b16 %v8748, %v8744
    %v9081 = vpack.c.b16 %v8749, %v8745
    %v9082 = vpack.c.b16 %v8754, %v8750
    %v9083 = vpack.c.b16 %v8755, %v8751
    %v9084 = vpack.c.b16 %v8756, %v8752
    %v9085 = vpack.c.b16 %v8757, %v8753
    %v9086 = vpack.c.b16 %v8762, %v8758
    %v9087 = vpack.c.b16 %v8763, %v8759
    %v9088 = vpack.c.b16 %v8764, %v8760
    %v9089 = vpack.c.b16 %v8765, %v8761
    %v9090 = vpack.c.b16 %v8770, %v8766
    %v9091 = vpack.c.b16 %v8771, %v8767
    %v9092 = vpack.c.b16 %v8772, %v8768
    %v9093 = vpack.c.b16 %v8773, %v8769
    %v9094 = vpack.c.b16 %v8778, %v8774
    %v9095 = vpack.c.b16 %v8779, %v8775
    %v9096 = vpack.c.b16 %v8780, %v8776
    %v9097 = vpack.c.b16 %v8781, %v8777
    %v9098 = vpack.c.b16 %v8786, %v8782
    %v9099 = vpack.c.b16 %v8787, %v8783
    %v9100 = vpack.c.b16 %v8788, %v8784
    %v9101 = vpack.c.b16 %v8789, %v8785
    %v9102 = vpack.c.b16 %v8794, %v8790
    %v9103 = vpack.c.b16 %v8795, %v8791
    %v9104 = vpack.c.b16 %v8796, %v8792
    %v9105 = vpack.c.b16 %v8797, %v8793
    %v9106 = vpack.c.b16 %v8802, %v8798
    %v9107 = vpack.c.b16 %v8803, %v8799
    %v9108 = vpack.c.b16 %v8804, %v8800
    %v9109 = vpack.c.b16 %v8805, %v8801
    %v9110 = vpack.c.b16 %v8810, %v8806
    %v9111 = vpack.c.b16 %v8811, %v8807
    %v9112 = vpack.c.b16 %v8812, %v8808
    %v9113 = vpack.c.b16 %v8813, %v8809
    %v9114 = vpack.c.b16 %v8818, %v8814
    %v9115 = vpack.c.b16 %v8819, %v8815
    %v9116 = vpack.c.b16 %v8820, %v8816
    %v9117 = vpack.c.b16 %v8821, %v8817
    %v9118 = vpack.c.b16 %v8826, %v8822
    %v9119 = vpack.c.b16 %v8827, %v8823
    %v9120 = vpack.c.b16 %v8828, %v8824
    %v9121 = vpack.c.b16 %v8829, %v8825
    %v9122 = vpack.c.b16 %v8834, %v8830
    %v9123 = vpack.c.b16 %v8835, %v8831
    %v9124 = vpack.c.b16 %v8836, %v8832
    %v9125 = vpack.c.b16 %v8837, %v8833
    %v9126 = vpack.c.b16 %v8842, %v8838
    %v9127 = vpack.c.b16 %v8843, %v8839
    %v9128 = vpack.c.b16 %v8844, %v8840
    %v9129 = vpack.c.b16 %v8845, %v8841
    %v9130 = vpack.c.b16 %v8850, %v8846
    %v9131 = vpack.c.b16 %v8851, %v8847
    %v9132 = vpack.c.b16 %v8852, %v8848
    %v9133 = vpack.c.b16 %v8853, %v8849
    %v9134 = vpack.c.b16 %v8858, %v8854
    %v9135 = vpack.c.b16 %v8859, %v8855
    %v9136 = vpack.c.b16 %v8860, %v8856
    %v9137 = vpack.c.b16 %v8861, %v8857
    %v9138 = vpack.c.b16 %v8866, %v8862
    %v9139 = vpack.c.b16 %v8867, %v8863
    %v9140 = vpack.c.b16 %v8868, %v8864
    %v9141 = vpack.c.b16 %v8869, %v8865
    %v9142 = vpack.c.b16 %v8874, %v8870
    %v9143 = vpack.c.b16 %v8875, %v8871
    %v9144 = vpack.c.b16 %v8876, %v8872
    %v9145 = vpack.c.b16 %v8877, %v8873
    %v9146 = vpack.c.b16 %v8882, %v8878
    %v9147 = vpack.c.b16 %v8883, %v8879
    %v9148 = vpack.c.b16 %v8884, %v8880
    %v9149 = vpack.c.b16 %v8885, %v8881
    %v9150 = vpack.c.b16 %v8890, %v8886
    %v9151 = vpack.c.b16 %v8891, %v8887
    %v9152 = vpack.c.b16 %v8892, %v8888
    %v9153 = vpack.c.b16 %v8893, %v8889
    %v9154 = vpack.c.b16 %v8898, %v8894
    %v9155 = vpack.c.b16 %v8899, %v8895
    %v9156 = vpack.c.b16 %v8900, %v8896
    %v9157 = vpack.c.b16 %v8901, %v8897
    %9414 = vmatpush.bf16.msra.mxu0 %v8930
    %9415 = vmatpush.bf16.msra.mxu0 %v8926
    %9416 = vmatpush.bf16.msra.mxu0 %v8922
    %9417 = vmatpush.bf16.msra.mxu0 %v8918
    %9418 = vmatpush.bf16.msra.mxu0 %v8914
    %9419 = vmatpush.bf16.msra.mxu0 %v8910
    %9420 = vmatpush.bf16.msra.mxu0 %v8906
    %9421 = vmatpush.bf16.msra.mxu0 %v8902
    %9422 = vmatmul.bf16.gmra.mxu0 %v7860
    %v9423 = vpop.f32.mrf.mxu0
    %v9424 = vadd.f32 %v8126, %v9423
    %v9425 = vpop.f32.mrf.mxu0
    %9426 = vdwg.mxu0
    %9427 = vmatpush.bf16.msra.mxu0 %v8962
    %9428 = vmatpush.bf16.msra.mxu0 %v8958
    %9429 = vmatpush.bf16.msra.mxu0 %v8954
    %9430 = vmatpush.bf16.msra.mxu0 %v8950
    %9431 = vmatpush.bf16.msra.mxu0 %v8946
    %9432 = vmatpush.bf16.msra.mxu0 %v8942
    %9433 = vmatpush.bf16.msra.mxu0 %v8938
    %9434 = vmatpush.bf16.msra.mxu0 %v8934
    %9435 = vmatmul.bf16.gmra.mxu0 %v7861
    %v9436 = vpop.f32.mrf.mxu0
    %v9437 = vadd.f32 %v9424, %v9436
    %v9438 = vpop.f32.mrf.mxu0
    %9439 = vdwg.mxu0
    %9440 = vmatpush.bf16.msra.mxu0 %v8994
    %9441 = vmatpush.bf16.msra.mxu0 %v8990
    %9442 = vmatpush.bf16.msra.mxu0 %v8986
    %9443 = vmatpush.bf16.msra.mxu0 %v8982
    %9444 = vmatpush.bf16.msra.mxu0 %v8978
    %9445 = vmatpush.bf16.msra.mxu0 %v8974
    %9446 = vmatpush.bf16.msra.mxu0 %v8970
    %9447 = vmatpush.bf16.msra.mxu0 %v8966
    %9448 = vmatmul.bf16.gmra.mxu0 %v7862
    %v9449 = vpop.f32.mrf.mxu0
    %v9450 = vadd.f32 %v9437, %v9449
    %v9451 = vpop.f32.mrf.mxu0
    %9452 = vdwg.mxu0
    %9453 = vmatpush.bf16.msra.mxu0 %v9026
    %9454 = vmatpush.bf16.msra.mxu0 %v9022
    %9455 = vmatpush.bf16.msra.mxu0 %v9018
    %9456 = vmatpush.bf16.msra.mxu0 %v9014
    %9457 = vmatpush.bf16.msra.mxu0 %v9010
    %9458 = vmatpush.bf16.msra.mxu0 %v9006
    %9459 = vmatpush.bf16.msra.mxu0 %v9002
    %9460 = vmatpush.bf16.msra.mxu0 %v8998
    %9461 = vmatmul.bf16.gmra.mxu0 %v7863
    %v9462 = vpop.f32.mrf.mxu0
    %v9463 = vadd.f32 %v9450, %v9462
    %v9464 = vpop.f32.mrf.mxu0
    %9465 = vdwg.mxu0
    %9466 = vmatpush.bf16.msra.mxu0 %v9058
    %9467 = vmatpush.bf16.msra.mxu0 %v9054
    %9468 = vmatpush.bf16.msra.mxu0 %v9050
    %9469 = vmatpush.bf16.msra.mxu0 %v9046
    %9470 = vmatpush.bf16.msra.mxu0 %v9042
    %9471 = vmatpush.bf16.msra.mxu0 %v9038
    %9472 = vmatpush.bf16.msra.mxu0 %v9034
    %9473 = vmatpush.bf16.msra.mxu0 %v9030
    %9474 = vmatmul.bf16.gmra.mxu0 %v7864
    %v9475 = vpop.f32.mrf.mxu0
    %v9476 = vadd.f32 %v9463, %v9475
    %v9477 = vpop.f32.mrf.mxu0
    %9478 = vdwg.mxu0
    %9479 = vmatpush.bf16.msra.mxu0 %v9090
    %9480 = vmatpush.bf16.msra.mxu0 %v9086
    %9481 = vmatpush.bf16.msra.mxu0 %v9082
    %9482 = vmatpush.bf16.msra.mxu0 %v9078
    %9483 = vmatpush.bf16.msra.mxu0 %v9074
    %9484 = vmatpush.bf16.msra.mxu0 %v9070
    %9485 = vmatpush.bf16.msra.mxu0 %v9066
    %9486 = vmatpush.bf16.msra.mxu0 %v9062
    %9487 = vmatmul.bf16.gmra.mxu0 %v7865
    %v9488 = vpop.f32.mrf.mxu0
    %v9489 = vadd.f32 %v9476, %v9488
    %v9490 = vpop.f32.mrf.mxu0
    %9491 = vdwg.mxu0
    %9492 = vmatpush.bf16.msra.mxu0 %v9122
    %9493 = vmatpush.bf16.msra.mxu0 %v9118
    %9494 = vmatpush.bf16.msra.mxu0 %v9114
    %9495 = vmatpush.bf16.msra.mxu0 %v9110
    %9496 = vmatpush.bf16.msra.mxu0 %v9106
    %9497 = vmatpush.bf16.msra.mxu0 %v9102
    %9498 = vmatpush.bf16.msra.mxu0 %v9098
    %9499 = vmatpush.bf16.msra.mxu0 %v9094
    %9500 = vmatmul.bf16.gmra.mxu0 %v7866
    %v9501 = vpop.f32.mrf.mxu0
    %v9502 = vadd.f32 %v9489, %v9501
    %v9503 = vpop.f32.mrf.mxu0
    %9504 = vdwg.mxu0
    %9505 = vmatpush.bf16.msra.mxu0 %v9154
    %9506 = vmatpush.bf16.msra.mxu0 %v9150
    %9507 = vmatpush.bf16.msra.mxu0 %v9146
    %9508 = vmatpush.bf16.msra.mxu0 %v9142
    %9509 = vmatpush.bf16.msra.mxu0 %v9138
    %9510 = vmatpush.bf16.msra.mxu0 %v9134
    %9511 = vmatpush.bf16.msra.mxu0 %v9130
    %9512 = vmatpush.bf16.msra.mxu0 %v9126
    %9513 = vmatmul.bf16.gmra.mxu0 %v7867
    %v9514 = vpop.f32.mrf.mxu0
    %v9515 = vadd.f32 %v9502, %v9514
    %v9516 = vpop.f32.mrf.mxu0
    %9517 = vdwg.mxu0
    %9518 = vmatpush.bf16.msra.mxu0 %v8931
    %9519 = vmatpush.bf16.msra.mxu0 %v8927
    %9520 = vmatpush.bf16.msra.mxu0 %v8923
    %9521 = vmatpush.bf16.msra.mxu0 %v8919
    %9522 = vmatpush.bf16.msra.mxu0 %v8915
    %9523 = vmatpush.bf16.msra.mxu0 %v8911
    %9524 = vmatpush.bf16.msra.mxu0 %v8907
    %9525 = vmatpush.bf16.msra.mxu0 %v8903
    %9526 = vmatmul.bf16.gmra.mxu0 %v7860
    %v9527 = vpop.f32.mrf.mxu0
    %v9528 = vadd.f32 %v8127, %v9527
    %v9529 = vpop.f32.mrf.mxu0
    %9530 = vdwg.mxu0
    %9531 = vmatpush.bf16.msra.mxu0 %v8963
    %9532 = vmatpush.bf16.msra.mxu0 %v8959
    %9533 = vmatpush.bf16.msra.mxu0 %v8955
    %9534 = vmatpush.bf16.msra.mxu0 %v8951
    %9535 = vmatpush.bf16.msra.mxu0 %v8947
    %9536 = vmatpush.bf16.msra.mxu0 %v8943
    %9537 = vmatpush.bf16.msra.mxu0 %v8939
    %9538 = vmatpush.bf16.msra.mxu0 %v8935
    %9539 = vmatmul.bf16.gmra.mxu0 %v7861
    %v9540 = vpop.f32.mrf.mxu0
    %v9541 = vadd.f32 %v9528, %v9540
    %v9542 = vpop.f32.mrf.mxu0
    %9543 = vdwg.mxu0
    %9544 = vmatpush.bf16.msra.mxu0 %v8995
    %9545 = vmatpush.bf16.msra.mxu0 %v8991
    %9546 = vmatpush.bf16.msra.mxu0 %v8987
    %9547 = vmatpush.bf16.msra.mxu0 %v8983
    %9548 = vmatpush.bf16.msra.mxu0 %v8979
    %9549 = vmatpush.bf16.msra.mxu0 %v8975
    %9550 = vmatpush.bf16.msra.mxu0 %v8971
    %9551 = vmatpush.bf16.msra.mxu0 %v8967
    %9552 = vmatmul.bf16.gmra.mxu0 %v7862
    %v9553 = vpop.f32.mrf.mxu0
    %v9554 = vadd.f32 %v9541, %v9553
    %v9555 = vpop.f32.mrf.mxu0
    %9556 = vdwg.mxu0
    %9557 = vmatpush.bf16.msra.mxu0 %v9027
    %9558 = vmatpush.bf16.msra.mxu0 %v9023
    %9559 = vmatpush.bf16.msra.mxu0 %v9019
    %9560 = vmatpush.bf16.msra.mxu0 %v9015
    %9561 = vmatpush.bf16.msra.mxu0 %v9011
    %9562 = vmatpush.bf16.msra.mxu0 %v9007
    %9563 = vmatpush.bf16.msra.mxu0 %v9003
    %9564 = vmatpush.bf16.msra.mxu0 %v8999
    %9565 = vmatmul.bf16.gmra.mxu0 %v7863
    %v9566 = vpop.f32.mrf.mxu0
    %v9567 = vadd.f32 %v9554, %v9566
    %v9568 = vpop.f32.mrf.mxu0
    %9569 = vdwg.mxu0
    %9570 = vmatpush.bf16.msra.mxu0 %v9059
    %9571 = vmatpush.bf16.msra.mxu0 %v9055
    %9572 = vmatpush.bf16.msra.mxu0 %v9051
    %9573 = vmatpush.bf16.msra.mxu0 %v9047
    %9574 = vmatpush.bf16.msra.mxu0 %v9043
    %9575 = vmatpush.bf16.msra.mxu0 %v9039
    %9576 = vmatpush.bf16.msra.mxu0 %v9035
    %9577 = vmatpush.bf16.msra.mxu0 %v9031
    %9578 = vmatmul.bf16.gmra.mxu0 %v7864
    %v9579 = vpop.f32.mrf.mxu0
    %v9580 = vadd.f32 %v9567, %v9579
    %v9581 = vpop.f32.mrf.mxu0
    %9582 = vdwg.mxu0
    %9583 = vmatpush.bf16.msra.mxu0 %v9091
    %9584 = vmatpush.bf16.msra.mxu0 %v9087
    %9585 = vmatpush.bf16.msra.mxu0 %v9083
    %9586 = vmatpush.bf16.msra.mxu0 %v9079
    %9587 = vmatpush.bf16.msra.mxu0 %v9075
    %9588 = vmatpush.bf16.msra.mxu0 %v9071
    %9589 = vmatpush.bf16.msra.mxu0 %v9067
    %9590 = vmatpush.bf16.msra.mxu0 %v9063
    %9591 = vmatmul.bf16.gmra.mxu0 %v7865
    %v9592 = vpop.f32.mrf.mxu0
    %v9593 = vadd.f32 %v9580, %v9592
    %v9594 = vpop.f32.mrf.mxu0
    %9595 = vdwg.mxu0
    %9596 = vmatpush.bf16.msra.mxu0 %v9123
    %9597 = vmatpush.bf16.msra.mxu0 %v9119
    %9598 = vmatpush.bf16.msra.mxu0 %v9115
    %9599 = vmatpush.bf16.msra.mxu0 %v9111
    %9600 = vmatpush.bf16.msra.mxu0 %v9107
    %9601 = vmatpush.bf16.msra.mxu0 %v9103
    %9602 = vmatpush.bf16.msra.mxu0 %v9099
    %9603 = vmatpush.bf16.msra.mxu0 %v9095
    %9604 = vmatmul.bf16.gmra.mxu0 %v7866
    %v9605 = vpop.f32.mrf.mxu0
    %v9606 = vadd.f32 %v9593, %v9605
    %v9607 = vpop.f32.mrf.mxu0
    %9608 = vdwg.mxu0
    %9609 = vmatpush.bf16.msra.mxu0 %v9155
    %9610 = vmatpush.bf16.msra.mxu0 %v9151
    %9611 = vmatpush.bf16.msra.mxu0 %v9147
    %9612 = vmatpush.bf16.msra.mxu0 %v9143
    %9613 = vmatpush.bf16.msra.mxu0 %v9139
    %9614 = vmatpush.bf16.msra.mxu0 %v9135
    %9615 = vmatpush.bf16.msra.mxu0 %v9131
    %9616 = vmatpush.bf16.msra.mxu0 %v9127
    %9617 = vmatmul.bf16.gmra.mxu0 %v7867
    %v9618 = vpop.f32.mrf.mxu0
    %v9619 = vadd.f32 %v9606, %v9618
    %v9620 = vpop.f32.mrf.mxu0
    %9621 = vdwg.mxu0
    %9622 = vmatpush.bf16.msra.mxu0 %v8932
    %9623 = vmatpush.bf16.msra.mxu0 %v8928
    %9624 = vmatpush.bf16.msra.mxu0 %v8924
    %9625 = vmatpush.bf16.msra.mxu0 %v8920
    %9626 = vmatpush.bf16.msra.mxu0 %v8916
    %9627 = vmatpush.bf16.msra.mxu0 %v8912
    %9628 = vmatpush.bf16.msra.mxu0 %v8908
    %9629 = vmatpush.bf16.msra.mxu0 %v8904
    %9630 = vmatmul.bf16.gmra.mxu0 %v7860
    %v9631 = vpop.f32.mrf.mxu0
    %v9632 = vadd.f32 %v8128, %v9631
    %v9633 = vpop.f32.mrf.mxu0
    %9634 = vdwg.mxu0
    %9635 = vmatpush.bf16.msra.mxu0 %v8964
    %9636 = vmatpush.bf16.msra.mxu0 %v8960
    %9637 = vmatpush.bf16.msra.mxu0 %v8956
    %9638 = vmatpush.bf16.msra.mxu0 %v8952
    %9639 = vmatpush.bf16.msra.mxu0 %v8948
    %9640 = vmatpush.bf16.msra.mxu0 %v8944
    %9641 = vmatpush.bf16.msra.mxu0 %v8940
    %9642 = vmatpush.bf16.msra.mxu0 %v8936
    %9643 = vmatmul.bf16.gmra.mxu0 %v7861
    %v9644 = vpop.f32.mrf.mxu0
    %v9645 = vadd.f32 %v9632, %v9644
    %v9646 = vpop.f32.mrf.mxu0
    %9647 = vdwg.mxu0
    %9648 = vmatpush.bf16.msra.mxu0 %v8996
    %9649 = vmatpush.bf16.msra.mxu0 %v8992
    %9650 = vmatpush.bf16.msra.mxu0 %v8988
    %9651 = vmatpush.bf16.msra.mxu0 %v8984
    %9652 = vmatpush.bf16.msra.mxu0 %v8980
    %9653 = vmatpush.bf16.msra.mxu0 %v8976
    %9654 = vmatpush.bf16.msra.mxu0 %v8972
    %9655 = vmatpush.bf16.msra.mxu0 %v8968
    %9656 = vmatmul.bf16.gmra.mxu0 %v7862
    %v9657 = vpop.f32.mrf.mxu0
    %v9658 = vadd.f32 %v9645, %v9657
    %v9659 = vpop.f32.mrf.mxu0
    %9660 = vdwg.mxu0
    %9661 = vmatpush.bf16.msra.mxu0 %v9028
    %9662 = vmatpush.bf16.msra.mxu0 %v9024
    %9663 = vmatpush.bf16.msra.mxu0 %v9020
    %9664 = vmatpush.bf16.msra.mxu0 %v9016
    %9665 = vmatpush.bf16.msra.mxu0 %v9012
    %9666 = vmatpush.bf16.msra.mxu0 %v9008
    %9667 = vmatpush.bf16.msra.mxu0 %v9004
    %9668 = vmatpush.bf16.msra.mxu0 %v9000
    %9669 = vmatmul.bf16.gmra.mxu0 %v7863
    %v9670 = vpop.f32.mrf.mxu0
    %v9671 = vadd.f32 %v9658, %v9670
    %v9672 = vpop.f32.mrf.mxu0
    %9673 = vdwg.mxu0
    %9674 = vmatpush.bf16.msra.mxu0 %v9060
    %9675 = vmatpush.bf16.msra.mxu0 %v9056
    %9676 = vmatpush.bf16.msra.mxu0 %v9052
    %9677 = vmatpush.bf16.msra.mxu0 %v9048
    %9678 = vmatpush.bf16.msra.mxu0 %v9044
    %9679 = vmatpush.bf16.msra.mxu0 %v9040
    %9680 = vmatpush.bf16.msra.mxu0 %v9036
    %9681 = vmatpush.bf16.msra.mxu0 %v9032
    %9682 = vmatmul.bf16.gmra.mxu0 %v7864
    %v9683 = vpop.f32.mrf.mxu0
    %v9684 = vadd.f32 %v9671, %v9683
    %v9685 = vpop.f32.mrf.mxu0
    %9686 = vdwg.mxu0
    %9687 = vmatpush.bf16.msra.mxu0 %v9092
    %9688 = vmatpush.bf16.msra.mxu0 %v9088
    %9689 = vmatpush.bf16.msra.mxu0 %v9084
    %9690 = vmatpush.bf16.msra.mxu0 %v9080
    %9691 = vmatpush.bf16.msra.mxu0 %v9076
    %9692 = vmatpush.bf16.msra.mxu0 %v9072
    %9693 = vmatpush.bf16.msra.mxu0 %v9068
    %9694 = vmatpush.bf16.msra.mxu0 %v9064
    %9695 = vmatmul.bf16.gmra.mxu0 %v7865
    %v9696 = vpop.f32.mrf.mxu0
    %v9697 = vadd.f32 %v9684, %v9696
    %v9698 = vpop.f32.mrf.mxu0
    %9699 = vdwg.mxu0
    %9700 = vmatpush.bf16.msra.mxu0 %v9124
    %9701 = vmatpush.bf16.msra.mxu0 %v9120
    %9702 = vmatpush.bf16.msra.mxu0 %v9116
    %9703 = vmatpush.bf16.msra.mxu0 %v9112
    %9704 = vmatpush.bf16.msra.mxu0 %v9108
    %9705 = vmatpush.bf16.msra.mxu0 %v9104
    %9706 = vmatpush.bf16.msra.mxu0 %v9100
    %9707 = vmatpush.bf16.msra.mxu0 %v9096
    %9708 = vmatmul.bf16.gmra.mxu0 %v7866
    %v9709 = vpop.f32.mrf.mxu0
    %v9710 = vadd.f32 %v9697, %v9709
    %v9711 = vpop.f32.mrf.mxu0
    %9712 = vdwg.mxu0
    %9713 = vmatpush.bf16.msra.mxu0 %v9156
    %9714 = vmatpush.bf16.msra.mxu0 %v9152
    %9715 = vmatpush.bf16.msra.mxu0 %v9148
    %9716 = vmatpush.bf16.msra.mxu0 %v9144
    %9717 = vmatpush.bf16.msra.mxu0 %v9140
    %9718 = vmatpush.bf16.msra.mxu0 %v9136
    %9719 = vmatpush.bf16.msra.mxu0 %v9132
    %9720 = vmatpush.bf16.msra.mxu0 %v9128
    %9721 = vmatmul.bf16.gmra.mxu0 %v7867
    %v9722 = vpop.f32.mrf.mxu0
    %v9723 = vadd.f32 %v9710, %v9722
    %v9724 = vpop.f32.mrf.mxu0
    %9725 = vdwg.mxu0
    %9726 = vmatpush.bf16.msra.mxu0 %v8933
    %9727 = vmatpush.bf16.msra.mxu0 %v8929
    %9728 = vmatpush.bf16.msra.mxu0 %v8925
    %9729 = vmatpush.bf16.msra.mxu0 %v8921
    %9730 = vmatpush.bf16.msra.mxu0 %v8917
    %9731 = vmatpush.bf16.msra.mxu0 %v8913
    %9732 = vmatpush.bf16.msra.mxu0 %v8909
    %9733 = vmatpush.bf16.msra.mxu0 %v8905
    %9734 = vmatmul.bf16.gmra.mxu0 %v7860
    %v9735 = vpop.f32.mrf.mxu0
    %v9736 = vadd.f32 %v8129, %v9735
    %v9737 = vpop.f32.mrf.mxu0
    %9738 = vdwg.mxu0
    %9739 = vmatpush.bf16.msra.mxu0 %v8965
    %9740 = vmatpush.bf16.msra.mxu0 %v8961
    %9741 = vmatpush.bf16.msra.mxu0 %v8957
    %9742 = vmatpush.bf16.msra.mxu0 %v8953
    %9743 = vmatpush.bf16.msra.mxu0 %v8949
    %9744 = vmatpush.bf16.msra.mxu0 %v8945
    %9745 = vmatpush.bf16.msra.mxu0 %v8941
    %9746 = vmatpush.bf16.msra.mxu0 %v8937
    %9747 = vmatmul.bf16.gmra.mxu0 %v7861
    %v9748 = vpop.f32.mrf.mxu0
    %v9749 = vadd.f32 %v9736, %v9748
    %v9750 = vpop.f32.mrf.mxu0
    %9751 = vdwg.mxu0
    %9752 = vmatpush.bf16.msra.mxu0 %v8997
    %9753 = vmatpush.bf16.msra.mxu0 %v8993
    %9754 = vmatpush.bf16.msra.mxu0 %v8989
    %9755 = vmatpush.bf16.msra.mxu0 %v8985
    %9756 = vmatpush.bf16.msra.mxu0 %v8981
    %9757 = vmatpush.bf16.msra.mxu0 %v8977
    %9758 = vmatpush.bf16.msra.mxu0 %v8973
    %9759 = vmatpush.bf16.msra.mxu0 %v8969
    %9760 = vmatmul.bf16.gmra.mxu0 %v7862
    %v9761 = vpop.f32.mrf.mxu0
    %v9762 = vadd.f32 %v9749, %v9761
    %v9763 = vpop.f32.mrf.mxu0
    %9764 = vdwg.mxu0
    %9765 = vmatpush.bf16.msra.mxu0 %v9029
    %9766 = vmatpush.bf16.msra.mxu0 %v9025
    %9767 = vmatpush.bf16.msra.mxu0 %v9021
    %9768 = vmatpush.bf16.msra.mxu0 %v9017
    %9769 = vmatpush.bf16.msra.mxu0 %v9013
    %9770 = vmatpush.bf16.msra.mxu0 %v9009
    %9771 = vmatpush.bf16.msra.mxu0 %v9005
    %9772 = vmatpush.bf16.msra.mxu0 %v9001
    %9773 = vmatmul.bf16.gmra.mxu0 %v7863
    %v9774 = vpop.f32.mrf.mxu0
    %v9775 = vadd.f32 %v9762, %v9774
    %v9776 = vpop.f32.mrf.mxu0
    %9777 = vdwg.mxu0
    %9778 = vmatpush.bf16.msra.mxu0 %v9061
    %9779 = vmatpush.bf16.msra.mxu0 %v9057
    %9780 = vmatpush.bf16.msra.mxu0 %v9053
    %9781 = vmatpush.bf16.msra.mxu0 %v9049
    %9782 = vmatpush.bf16.msra.mxu0 %v9045
    %9783 = vmatpush.bf16.msra.mxu0 %v9041
    %9784 = vmatpush.bf16.msra.mxu0 %v9037
    %9785 = vmatpush.bf16.msra.mxu0 %v9033
    %9786 = vmatmul.bf16.gmra.mxu0 %v7864
    %v9787 = vpop.f32.mrf.mxu0
    %v9788 = vadd.f32 %v9775, %v9787
    %v9789 = vpop.f32.mrf.mxu0
    %9790 = vdwg.mxu0
    %9791 = vmatpush.bf16.msra.mxu0 %v9093
    %9792 = vmatpush.bf16.msra.mxu0 %v9089
    %9793 = vmatpush.bf16.msra.mxu0 %v9085
    %9794 = vmatpush.bf16.msra.mxu0 %v9081
    %9795 = vmatpush.bf16.msra.mxu0 %v9077
    %9796 = vmatpush.bf16.msra.mxu0 %v9073
    %9797 = vmatpush.bf16.msra.mxu0 %v9069
    %9798 = vmatpush.bf16.msra.mxu0 %v9065
    %9799 = vmatmul.bf16.gmra.mxu0 %v7865
    %v9800 = vpop.f32.mrf.mxu0
    %v9801 = vadd.f32 %v9788, %v9800
    %v9802 = vpop.f32.mrf.mxu0
    %9803 = vdwg.mxu0
    %9804 = vmatpush.bf16.msra.mxu0 %v9125
    %9805 = vmatpush.bf16.msra.mxu0 %v9121
    %9806 = vmatpush.bf16.msra.mxu0 %v9117
    %9807 = vmatpush.bf16.msra.mxu0 %v9113
    %9808 = vmatpush.bf16.msra.mxu0 %v9109
    %9809 = vmatpush.bf16.msra.mxu0 %v9105
    %9810 = vmatpush.bf16.msra.mxu0 %v9101
    %9811 = vmatpush.bf16.msra.mxu0 %v9097
    %9812 = vmatmul.bf16.gmra.mxu0 %v7866
    %v9813 = vpop.f32.mrf.mxu0
    %v9814 = vadd.f32 %v9801, %v9813
    %v9815 = vpop.f32.mrf.mxu0
    %9816 = vdwg.mxu0
    %9817 = vmatpush.bf16.msra.mxu0 %v9157
    %9818 = vmatpush.bf16.msra.mxu0 %v9153
    %9819 = vmatpush.bf16.msra.mxu0 %v9149
    %9820 = vmatpush.bf16.msra.mxu0 %v9145
    %9821 = vmatpush.bf16.msra.mxu0 %v9141
    %9822 = vmatpush.bf16.msra.mxu0 %v9137
    %9823 = vmatpush.bf16.msra.mxu0 %v9133
    %9824 = vmatpush.bf16.msra.mxu0 %v9129
    %9825 = vmatmul.bf16.gmra.mxu0 %v7867
    %v9826 = vpop.f32.mrf.mxu0
    %v9827 = vadd.f32 %v9814, %v9826
    %v9828 = vpop.f32.mrf.mxu0
    %9829 = vdwg.mxu0
    %v9830 = vmax.f32 %v9515, 0.0
    %v9831 = vmax.f32 %v9619, 0.0
    %v9832 = vmax.f32 %v9723, 0.0
    %v9833 = vmax.f32 %v9827, 0.0
    %v9834 = vpack.c.bf16 %v9830, %v9830
    %v9835 = vpack.c.bf16 %v9831, %v9831
    %v9836 = vpack.c.bf16 %v9832, %v9832
    %v9837 = vpack.c.bf16 %v9833, %v9833
    %v9838 = vld [vmem:[%s15] sm:$0xff]
    %v9839 = vld [vmem:[%s15 + $0x8] sm:$0xff]
    %v9840 = vld [vmem:[%s15 + $0x10] sm:$0xff]
    %v9841 = vld [vmem:[%s15 + $0x18] sm:$0xff]
    %v9842 = vld [vmem:[%s15 + $0x20] sm:$0xff]
    %v9843 = vld [vmem:[%s15 + $0x28] sm:$0xff]
    %v9844 = vld [vmem:[%s15 + $0x30] sm:$0xff]
    %v9845 = vld [vmem:[%s15 + $0x38] sm:$0xff]
    %v9846 = vld [vmem:[%s15 + $0x40] sm:$0xff]
    %v9847 = vld [vmem:[%s15 + $0x48] sm:$0xff]
    %v9848 = vld [vmem:[%s15 + $0x50] sm:$0xff]
    %v9849 = vld [vmem:[%s15 + $0x58] sm:$0xff]
    %v9850 = vld [vmem:[%s15 + $0x60] sm:$0xff]
    %v9851 = vld [vmem:[%s15 + $0x68] sm:$0xff]
    %v9852 = vld [vmem:[%s15 + $0x70] sm:$0xff]
    %v9853 = vld [vmem:[%s15 + $0x78] sm:$0xff]
    %v9854 = vld [vmem:[%s15 + $0x80] sm:$0xff]
    %v9855 = vld [vmem:[%s15 + $0x88] sm:$0xff]
    %v9856 = vld [vmem:[%s15 + $0x90] sm:$0xff]
    %v9857 = vld [vmem:[%s15 + $0x98] sm:$0xff]
    %v9858 = vld [vmem:[%s15 + $0xa0] sm:$0xff]
    %v9859 = vld [vmem:[%s15 + $0xa8] sm:$0xff]
    %v9860 = vld [vmem:[%s15 + $0xb0] sm:$0xff]
    %v9861 = vld [vmem:[%s15 + $0xb8] sm:$0xff]
    %v9862 = vld [vmem:[%s15 + $0xc0] sm:$0xff]
    %v9863 = vld [vmem:[%s15 + $0xc8] sm:$0xff]
    %v9864 = vld [vmem:[%s15 + $0xd0] sm:$0xff]
    %v9865 = vld [vmem:[%s15 + $0xd8] sm:$0xff]
    %v9866 = vld [vmem:[%s15 + $0xe0] sm:$0xff]
    %v9867 = vld [vmem:[%s15 + $0xe8] sm:$0xff]
    %v9868 = vld [vmem:[%s15 + $0xf0] sm:$0xff]
    %v9869 = vld [vmem:[%s15 + $0xf8] sm:$0xff]
    %v9870 = vld [vmem:[%s15 + $0x100] sm:$0xff]
    %v9871 = vld [vmem:[%s15 + $0x108] sm:$0xff]
    %v9872 = vld [vmem:[%s15 + $0x110] sm:$0xff]
    %v9873 = vld [vmem:[%s15 + $0x118] sm:$0xff]
    %v9874 = vld [vmem:[%s15 + $0x120] sm:$0xff]
    %v9875 = vld [vmem:[%s15 + $0x128] sm:$0xff]
    %v9876 = vld [vmem:[%s15 + $0x130] sm:$0xff]
    %v9877 = vld [vmem:[%s15 + $0x138] sm:$0xff]
    %v9878 = vld [vmem:[%s15 + $0x140] sm:$0xff]
    %v9879 = vld [vmem:[%s15 + $0x148] sm:$0xff]
    %v9880 = vld [vmem:[%s15 + $0x150] sm:$0xff]
    %v9881 = vld [vmem:[%s15 + $0x158] sm:$0xff]
    %v9882 = vld [vmem:[%s15 + $0x160] sm:$0xff]
    %v9883 = vld [vmem:[%s15 + $0x168] sm:$0xff]
    %v9884 = vld [vmem:[%s15 + $0x170] sm:$0xff]
    %v9885 = vld [vmem:[%s15 + $0x178] sm:$0xff]
    %v9886 = vld [vmem:[%s15 + $0x180] sm:$0xff]
    %v9887 = vld [vmem:[%s15 + $0x188] sm:$0xff]
    %v9888 = vld [vmem:[%s15 + $0x190] sm:$0xff]
    %v9889 = vld [vmem:[%s15 + $0x198] sm:$0xff]
    %v9890 = vld [vmem:[%s15 + $0x1a0] sm:$0xff]
    %v9891 = vld [vmem:[%s15 + $0x1a8] sm:$0xff]
    %v9892 = vld [vmem:[%s15 + $0x1b0] sm:$0xff]
    %v9893 = vld [vmem:[%s15 + $0x1b8] sm:$0xff]
    %v9894 = vld [vmem:[%s15 + $0x1c0] sm:$0xff]
    %v9895 = vld [vmem:[%s15 + $0x1c8] sm:$0xff]
    %v9896 = vld [vmem:[%s15 + $0x1d0] sm:$0xff]
    %v9897 = vld [vmem:[%s15 + $0x1d8] sm:$0xff]
    %v9898 = vld [vmem:[%s15 + $0x1e0] sm:$0xff]
    %v9899 = vld [vmem:[%s15 + $0x1e8] sm:$0xff]
    %v9900 = vld [vmem:[%s15 + $0x1f0] sm:$0xff]
    %v9901 = vld [vmem:[%s15 + $0x1f8] sm:$0xff]
    %v9902 = vld [vmem:[#allocation17] sm:$0x3]
    %v9904 = vperm.slane %v9902, 0
    %v9905 = vperm.slane %v9902, 1
    %v9972 = vunpack.c.l.b16 %v9838
    %v9973 = vunpack.c.h.b16 %v9838
    %v9974 = vunpack.c.l.b16 %v9839
    %v9975 = vunpack.c.h.b16 %v9839
    %v9976 = vunpack.c.l.b16 %v9840
    %v9977 = vunpack.c.h.b16 %v9840
    %v9978 = vunpack.c.l.b16 %v9841
    %v9979 = vunpack.c.h.b16 %v9841
    %v9980 = vunpack.c.l.b16 %v9842
    %v9981 = vunpack.c.h.b16 %v9842
    %v9982 = vunpack.c.l.b16 %v9843
    %v9983 = vunpack.c.h.b16 %v9843
    %v9984 = vunpack.c.l.b16 %v9844
    %v9985 = vunpack.c.h.b16 %v9844
    %v9986 = vunpack.c.l.b16 %v9845
    %v9987 = vunpack.c.h.b16 %v9845
    %v9988 = vunpack.c.l.b16 %v9846
    %v9989 = vunpack.c.h.b16 %v9846
    %v9990 = vunpack.c.l.b16 %v9847
    %v9991 = vunpack.c.h.b16 %v9847
    %v9992 = vunpack.c.l.b16 %v9848
    %v9993 = vunpack.c.h.b16 %v9848
    %v9994 = vunpack.c.l.b16 %v9849
    %v9995 = vunpack.c.h.b16 %v9849
    %v9996 = vunpack.c.l.b16 %v9850
    %v9997 = vunpack.c.h.b16 %v9850
    %v9998 = vunpack.c.l.b16 %v9851
    %v9999 = vunpack.c.h.b16 %v9851
    %v10000 = vunpack.c.l.b16 %v9852
    %v10001 = vunpack.c.h.b16 %v9852
    %v10002 = vunpack.c.l.b16 %v9853
    %v10003 = vunpack.c.h.b16 %v9853
    %v10004 = vunpack.c.l.b16 %v9854
    %v10005 = vunpack.c.h.b16 %v9854
    %v10006 = vunpack.c.l.b16 %v9855
    %v10007 = vunpack.c.h.b16 %v9855
    %v10008 = vunpack.c.l.b16 %v9856
    %v10009 = vunpack.c.h.b16 %v9856
    %v10010 = vunpack.c.l.b16 %v9857
    %v10011 = vunpack.c.h.b16 %v9857
    %v10012 = vunpack.c.l.b16 %v9858
    %v10013 = vunpack.c.h.b16 %v9858
    %v10014 = vunpack.c.l.b16 %v9859
    %v10015 = vunpack.c.h.b16 %v9859
    %v10016 = vunpack.c.l.b16 %v9860
    %v10017 = vunpack.c.h.b16 %v9860
    %v10018 = vunpack.c.l.b16 %v9861
    %v10019 = vunpack.c.h.b16 %v9861
    %v10020 = vunpack.c.l.b16 %v9862
    %v10021 = vunpack.c.h.b16 %v9862
    %v10022 = vunpack.c.l.b16 %v9863
    %v10023 = vunpack.c.h.b16 %v9863
    %v10024 = vunpack.c.l.b16 %v9864
    %v10025 = vunpack.c.h.b16 %v9864
    %v10026 = vunpack.c.l.b16 %v9865
    %v10027 = vunpack.c.h.b16 %v9865
    %v10028 = vunpack.c.l.b16 %v9866
    %v10029 = vunpack.c.h.b16 %v9866
    %v10030 = vunpack.c.l.b16 %v9867
    %v10031 = vunpack.c.h.b16 %v9867
    %v10032 = vunpack.c.l.b16 %v9868
    %v10033 = vunpack.c.h.b16 %v9868
    %v10034 = vunpack.c.l.b16 %v9869
    %v10035 = vunpack.c.h.b16 %v9869
    %v10036 = vunpack.c.l.b16 %v9870
    %v10037 = vunpack.c.h.b16 %v9870
    %v10038 = vunpack.c.l.b16 %v9871
    %v10039 = vunpack.c.h.b16 %v9871
    %v10040 = vunpack.c.l.b16 %v9872
    %v10041 = vunpack.c.h.b16 %v9872
    %v10042 = vunpack.c.l.b16 %v9873
    %v10043 = vunpack.c.h.b16 %v9873
    %v10044 = vunpack.c.l.b16 %v9874
    %v10045 = vunpack.c.h.b16 %v9874
    %v10046 = vunpack.c.l.b16 %v9875
    %v10047 = vunpack.c.h.b16 %v9875
    %v10048 = vunpack.c.l.b16 %v9876
    %v10049 = vunpack.c.h.b16 %v9876
    %v10050 = vunpack.c.l.b16 %v9877
    %v10051 = vunpack.c.h.b16 %v9877
    %v10052 = vunpack.c.l.b16 %v9878
    %v10053 = vunpack.c.h.b16 %v9878
    %v10054 = vunpack.c.l.b16 %v9879
    %v10055 = vunpack.c.h.b16 %v9879
    %v10056 = vunpack.c.l.b16 %v9880
    %v10057 = vunpack.c.h.b16 %v9880
    %v10058 = vunpack.c.l.b16 %v9881
    %v10059 = vunpack.c.h.b16 %v9881
    %v10060 = vunpack.c.l.b16 %v9882
    %v10061 = vunpack.c.h.b16 %v9882
    %v10062 = vunpack.c.l.b16 %v9883
    %v10063 = vunpack.c.h.b16 %v9883
    %v10064 = vunpack.c.l.b16 %v9884
    %v10065 = vunpack.c.h.b16 %v9884
    %v10066 = vunpack.c.l.b16 %v9885
    %v10067 = vunpack.c.h.b16 %v9885
    %v10068 = vunpack.c.l.b16 %v9886
    %v10069 = vunpack.c.h.b16 %v9886
    %v10070 = vunpack.c.l.b16 %v9887
    %v10071 = vunpack.c.h.b16 %v9887
    %v10072 = vunpack.c.l.b16 %v9888
    %v10073 = vunpack.c.h.b16 %v9888
    %v10074 = vunpack.c.l.b16 %v9889
    %v10075 = vunpack.c.h.b16 %v9889
    %v10076 = vunpack.c.l.b16 %v9890
    %v10077 = vunpack.c.h.b16 %v9890
    %v10078 = vunpack.c.l.b16 %v9891
    %v10079 = vunpack.c.h.b16 %v9891
    %v10080 = vunpack.c.l.b16 %v9892
    %v10081 = vunpack.c.h.b16 %v9892
    %v10082 = vunpack.c.l.b16 %v9893
    %v10083 = vunpack.c.h.b16 %v9893
    %v10084 = vunpack.c.l.b16 %v9894
    %v10085 = vunpack.c.h.b16 %v9894
    %v10086 = vunpack.c.l.b16 %v9895
    %v10087 = vunpack.c.h.b16 %v9895
    %v10088 = vunpack.c.l.b16 %v9896
    %v10089 = vunpack.c.h.b16 %v9896
    %v10090 = vunpack.c.l.b16 %v9897
    %v10091 = vunpack.c.h.b16 %v9897
    %v10092 = vunpack.c.l.b16 %v9898
    %v10093 = vunpack.c.h.b16 %v9898
    %v10094 = vunpack.c.l.b16 %v9899
    %v10095 = vunpack.c.h.b16 %v9899
    %v10096 = vunpack.c.l.b16 %v9900
    %v10097 = vunpack.c.h.b16 %v9900
    %v10098 = vunpack.c.l.b16 %v9901
    %v10099 = vunpack.c.h.b16 %v9901
    %v10100 = vpack.c.b16 %v9974, %v9972
    %v10101 = vpack.c.b16 %v9975, %v9973
    %v10102 = vpack.c.b16 %v9978, %v9976
    %v10103 = vpack.c.b16 %v9979, %v9977
    %v10104 = vpack.c.b16 %v9982, %v9980
    %v10105 = vpack.c.b16 %v9983, %v9981
    %v10106 = vpack.c.b16 %v9986, %v9984
    %v10107 = vpack.c.b16 %v9987, %v9985
    %v10108 = vpack.c.b16 %v9990, %v9988
    %v10109 = vpack.c.b16 %v9991, %v9989
    %v10110 = vpack.c.b16 %v9994, %v9992
    %v10111 = vpack.c.b16 %v9995, %v9993
    %v10112 = vpack.c.b16 %v9998, %v9996
    %v10113 = vpack.c.b16 %v9999, %v9997
    %v10114 = vpack.c.b16 %v10002, %v10000
    %v10115 = vpack.c.b16 %v10003, %v10001
    %v10116 = vpack.c.b16 %v10006, %v10004
    %v10117 = vpack.c.b16 %v10007, %v10005
    %v10118 = vpack.c.b16 %v10010, %v10008
    %v10119 = vpack.c.b16 %v10011, %v10009
    %v10120 = vpack.c.b16 %v10014, %v10012
    %v10121 = vpack.c.b16 %v10015, %v10013
    %v10122 = vpack.c.b16 %v10018, %v10016
    %v10123 = vpack.c.b16 %v10019, %v10017
    %v10124 = vpack.c.b16 %v10022, %v10020
    %v10125 = vpack.c.b16 %v10023, %v10021
    %v10126 = vpack.c.b16 %v10026, %v10024
    %v10127 = vpack.c.b16 %v10027, %v10025
    %v10128 = vpack.c.b16 %v10030, %v10028
    %v10129 = vpack.c.b16 %v10031, %v10029
    %v10130 = vpack.c.b16 %v10034, %v10032
    %v10131 = vpack.c.b16 %v10035, %v10033
    %v10132 = vpack.c.b16 %v10038, %v10036
    %v10133 = vpack.c.b16 %v10039, %v10037
    %v10134 = vpack.c.b16 %v10042, %v10040
    %v10135 = vpack.c.b16 %v10043, %v10041
    %v10136 = vpack.c.b16 %v10046, %v10044
    %v10137 = vpack.c.b16 %v10047, %v10045
    %v10138 = vpack.c.b16 %v10050, %v10048
    %v10139 = vpack.c.b16 %v10051, %v10049
    %v10140 = vpack.c.b16 %v10054, %v10052
    %v10141 = vpack.c.b16 %v10055, %v10053
    %v10142 = vpack.c.b16 %v10058, %v10056
    %v10143 = vpack.c.b16 %v10059, %v10057
    %v10144 = vpack.c.b16 %v10062, %v10060
    %v10145 = vpack.c.b16 %v10063, %v10061
    %v10146 = vpack.c.b16 %v10066, %v10064
    %v10147 = vpack.c.b16 %v10067, %v10065
    %v10148 = vpack.c.b16 %v10070, %v10068
    %v10149 = vpack.c.b16 %v10071, %v10069
    %v10150 = vpack.c.b16 %v10074, %v10072
    %v10151 = vpack.c.b16 %v10075, %v10073
    %v10152 = vpack.c.b16 %v10078, %v10076
    %v10153 = vpack.c.b16 %v10079, %v10077
    %v10154 = vpack.c.b16 %v10082, %v10080
    %v10155 = vpack.c.b16 %v10083, %v10081
    %v10156 = vpack.c.b16 %v10086, %v10084
    %v10157 = vpack.c.b16 %v10087, %v10085
    %v10158 = vpack.c.b16 %v10090, %v10088
    %v10159 = vpack.c.b16 %v10091, %v10089
    %v10160 = vpack.c.b16 %v10094, %v10092
    %v10161 = vpack.c.b16 %v10095, %v10093
    %v10162 = vpack.c.b16 %v10098, %v10096
    %v10163 = vpack.c.b16 %v10099, %v10097
    %10228 = vmatpush.bf16.msra.mxu0 %v10114
    %10229 = vmatpush.bf16.msra.mxu0 %v10112
    %10230 = vmatpush.bf16.msra.mxu0 %v10110
    %10231 = vmatpush.bf16.msra.mxu0 %v10108
    %10232 = vmatpush.bf16.msra.mxu0 %v10106
    %10233 = vmatpush.bf16.msra.mxu0 %v10104
    %10234 = vmatpush.bf16.msra.mxu0 %v10102
    %10235 = vmatpush.bf16.msra.mxu0 %v10100
    %10236 = vmatmul.bf16.gmra.mxu0 %v9834
    %v10237 = vpop.f32.mrf.mxu0
    %v10238 = vadd.f32 %v9904, %v10237
    %v10239 = vpop.f32.mrf.mxu0
    %10240 = vdwg.mxu0
    %10241 = vmatpush.bf16.msra.mxu0 %v10130
    %10242 = vmatpush.bf16.msra.mxu0 %v10128
    %10243 = vmatpush.bf16.msra.mxu0 %v10126
    %10244 = vmatpush.bf16.msra.mxu0 %v10124
    %10245 = vmatpush.bf16.msra.mxu0 %v10122
    %10246 = vmatpush.bf16.msra.mxu0 %v10120
    %10247 = vmatpush.bf16.msra.mxu0 %v10118
    %10248 = vmatpush.bf16.msra.mxu0 %v10116
    %10249 = vmatmul.bf16.gmra.mxu0 %v9835
    %v10250 = vpop.f32.mrf.mxu0
    %v10251 = vadd.f32 %v10238, %v10250
    %v10252 = vpop.f32.mrf.mxu0
    %10253 = vdwg.mxu0
    %10254 = vmatpush.bf16.msra.mxu0 %v10146
    %10255 = vmatpush.bf16.msra.mxu0 %v10144
    %10256 = vmatpush.bf16.msra.mxu0 %v10142
    %10257 = vmatpush.bf16.msra.mxu0 %v10140
    %10258 = vmatpush.bf16.msra.mxu0 %v10138
    %10259 = vmatpush.bf16.msra.mxu0 %v10136
    %10260 = vmatpush.bf16.msra.mxu0 %v10134
    %10261 = vmatpush.bf16.msra.mxu0 %v10132
    %10262 = vmatmul.bf16.gmra.mxu0 %v9836
    %v10263 = vpop.f32.mrf.mxu0
    %v10264 = vadd.f32 %v10251, %v10263
    %v10265 = vpop.f32.mrf.mxu0
    %10266 = vdwg.mxu0
    %10267 = vmatpush.bf16.msra.mxu0 %v10162
    %10268 = vmatpush.bf16.msra.mxu0 %v10160
    %10269 = vmatpush.bf16.msra.mxu0 %v10158
    %10270 = vmatpush.bf16.msra.mxu0 %v10156
    %10271 = vmatpush.bf16.msra.mxu0 %v10154
    %10272 = vmatpush.bf16.msra.mxu0 %v10152
    %10273 = vmatpush.bf16.msra.mxu0 %v10150
    %10274 = vmatpush.bf16.msra.mxu0 %v10148
    %10275 = vmatmul.bf16.gmra.mxu0 %v9837
    %v10276 = vpop.f32.mrf.mxu0
    %v10277 = vadd.f32 %v10264, %v10276
    %v10278 = vpop.f32.mrf.mxu0
    %10279 = vdwg.mxu0
    %10280 = vmatpush.bf16.msra.mxu0 %v10115
    %10281 = vmatpush.bf16.msra.mxu0 %v10113
    %10282 = vmatpush.bf16.msra.mxu0 %v10111
    %10283 = vmatpush.bf16.msra.mxu0 %v10109
    %10284 = vmatpush.bf16.msra.mxu0 %v10107
    %10285 = vmatpush.bf16.msra.mxu0 %v10105
    %10286 = vmatpush.bf16.msra.mxu0 %v10103
    %10287 = vmatpush.bf16.msra.mxu0 %v10101
    %10288 = vmatmul.bf16.gmra.mxu0 %v9834
    %v10289 = vpop.f32.mrf.mxu0
    %v10290 = vadd.f32 %v9905, %v10289
    %v10291 = vpop.f32.mrf.mxu0
    %10292 = vdwg.mxu0
    %10293 = vmatpush.bf16.msra.mxu0 %v10131
    %10294 = vmatpush.bf16.msra.mxu0 %v10129
    %10295 = vmatpush.bf16.msra.mxu0 %v10127
    %10296 = vmatpush.bf16.msra.mxu0 %v10125
    %10297 = vmatpush.bf16.msra.mxu0 %v10123
    %10298 = vmatpush.bf16.msra.mxu0 %v10121
    %10299 = vmatpush.bf16.msra.mxu0 %v10119
    %10300 = vmatpush.bf16.msra.mxu0 %v10117
    %10301 = vmatmul.bf16.gmra.mxu0 %v9835
    %v10302 = vpop.f32.mrf.mxu0
    %v10303 = vadd.f32 %v10290, %v10302
    %v10304 = vpop.f32.mrf.mxu0
    %10305 = vdwg.mxu0
    %10306 = vmatpush.bf16.msra.mxu0 %v10147
    %10307 = vmatpush.bf16.msra.mxu0 %v10145
    %10308 = vmatpush.bf16.msra.mxu0 %v10143
    %10309 = vmatpush.bf16.msra.mxu0 %v10141
    %10310 = vmatpush.bf16.msra.mxu0 %v10139
    %10311 = vmatpush.bf16.msra.mxu0 %v10137
    %10312 = vmatpush.bf16.msra.mxu0 %v10135
    %10313 = vmatpush.bf16.msra.mxu0 %v10133
    %10314 = vmatmul.bf16.gmra.mxu0 %v9836
    %v10315 = vpop.f32.mrf.mxu0
    %v10316 = vadd.f32 %v10303, %v10315
    %v10317 = vpop.f32.mrf.mxu0
    %10318 = vdwg.mxu0
    %10319 = vmatpush.bf16.msra.mxu0 %v10163
    %10320 = vmatpush.bf16.msra.mxu0 %v10161
    %10321 = vmatpush.bf16.msra.mxu0 %v10159
    %10322 = vmatpush.bf16.msra.mxu0 %v10157
    %10323 = vmatpush.bf16.msra.mxu0 %v10155
    %10324 = vmatpush.bf16.msra.mxu0 %v10153
    %10325 = vmatpush.bf16.msra.mxu0 %v10151
    %10326 = vmatpush.bf16.msra.mxu0 %v10149
    %10327 = vmatmul.bf16.gmra.mxu0 %v9837
    %v10328 = vpop.f32.mrf.mxu0
    %v10329 = vadd.f32 %v10316, %v10328
    %v10330 = vpop.f32.mrf.mxu0
    %10331 = vdwg.mxu0
    %10332 = vst [vmem:[%s18] sm:$0xff] %v10277
    %10333 = vst [vmem:[%s18 + $0x8] sm:$0xff] %v10329
    // Predicated region
    $region98: #{emo_speech_auth_forward.1} parent=1 // pred_check
      _
    $region99: #{emo_speech_auth_forward.1} parent=1 // pred_check_branch
      %10335 = sbr.rel (0) target = $region101
    $region100: #{emo_speech_auth_forward.1} parent=1 // pred_region
      _
    $region101: #{emo_speech_auth_forward.1} parent=1 // pred_fallthru
      _
    // Predicated region
    $region102: #{emo_speech_auth_forward.1} parent=1 // pred_check
      _
    $region103: #{emo_speech_auth_forward.1} parent=1 // pred_check_branch
      %10337 = sbr.rel (0) target = $region105
    $region104: #{emo_speech_auth_forward.1} parent=1 // pred_region
      _
    $region105: #{emo_speech_auth_forward.1} parent=1 // pred_fallthru
      _
    // Predicated region
    $region106: #{emo_speech_auth_forward.1} parent=1 // pred_check
      _
    $region107: #{emo_speech_auth_forward.1} parent=1 // pred_check_branch
      %10339 = sbr.rel (0) target = $region109
    $region108: #{emo_speech_auth_forward.1} parent=1 // pred_region
      _
    $region109: #{emo_speech_auth_forward.1} parent=1 // pred_fallthru
      _
    // Predicated region
    $region110: #{emo_speech_auth_forward.1} parent=1 // pred_check
      _
    $region111: #{emo_speech_auth_forward.1} parent=1 // pred_check_branch
      %10341 = sbr.rel (0) target = $region113
    $region112: #{emo_speech_auth_forward.1} parent=1 // pred_region
      _
    $region113: #{emo_speech_auth_forward.1} parent=1 // pred_fallthru
      _
    %10342 = vsyncpa [#allocation8], 1
    %10343 = vsyncpa [#allocation10], 1
    %10344 = vsyncpa [#allocation13], 1
    %10345 = vsyncpa [#allocation16], 1

</llo_original>
